<compile_context>
chip_gen: v5e
topology: v5e:2x2
jax: 0.10.0
libtpu: 0.0.40
codegen_flags: <defaults>
</compile_context>

<pallas_src>
import jax
import jax.numpy as jnp
import numpy as np
from jax.experimental import pallas as pl
from jax.experimental.pallas import tpu as pltpu

KERNELS = (5, 9, 13)     # SPP pool sizes; cascade decomposition assumes 9=5∘5, 13=5∘5∘5
POOL_K = 5               # base pool of the SPPF cascade
PAD = POOL_K // 2        # 2 : halo needed per cascade stage
NEG = -1e30              # stands in for the -inf pad value of max pooling (SiLU >= -0.28)
BN_EPS = 1e-5


def _spp_kernel(x_ref, w1_ref, s1_ref, b1_ref, w2_ref, s2_ref, b2_ref,
                o_ref, padw_ref, cat_ref):
    # x_ref   : (1, H*W, Cin)        bf16  one image, NHWC flattened over (H, W)
    # w1_ref  : (Cin, Cmid)          bf16  cv1 1x1 conv weight (transposed for x @ w)
    # s1/b1   : (1, Cmid)            f32   folded BN1 scale / shift
    # w2_ref  : (4*Cmid, Cout)       bf16  cv2 1x1 conv weight
    # s2/b2   : (1, Cout)            f32   folded BN2 scale / shift
    # o_ref   : (1, H*W, Cout)       bf16  output block
    # padw_ref: (H, W+2*PAD, Cmid)   bf16  VMEM scratch, -inf-padded along W only
    # cat_ref : (H*W, 4*Cmid)        bf16  VMEM concat scratch feeding the fused cv2 matmul
    _, HW, _ = x_ref.shape
    Cmid = w1_ref.shape[1]
    H = padw_ref.shape[0]
    W = padw_ref.shape[1] - 2 * PAD

    # ---- -inf W borders of the pooling scratch (border-only writes; interior is fully
    #      overwritten below every cascade stage).  Re-done every grid step so per-core
    #      scratch stays correct when the batch axis is sharded across TensorCores. ----
    neg_w = jnp.full((H, PAD, Cmid), NEG, dtype=padw_ref.dtype)
    padw_ref[:, 0:PAD, :] = neg_w
    padw_ref[:, PAD + W:2 * PAD + W, :] = neg_w

    # ---- cv1: 1x1 conv (bf16 MXU matmul, f32 accumulate) + folded BN + SiLU (f32) ----
    y1 = jnp.dot(x_ref[0], w1_ref[...], preferred_element_type=jnp.float32)
    y1 = y1 * s1_ref[...] + b1_ref[...]
    y1 = y1 * jax.nn.sigmoid(y1)                         # (H*W, Cmid) f32
    y1b = y1.astype(cat_ref.dtype)                       # single cast to bf16

    cat_ref[:, 0:Cmid] = y1b

    # ---- SPPF cascade in bf16: pool5, pool5^2 (== pool9), pool5^3 (== pool13) ----
    # Each stage: separable stride-1 "same" max pool with -inf padding.
    neg_rows = jnp.full((PAD, W, Cmid), NEG, dtype=cat_ref.dtype)   # hoisted constant
    cur = y1b.reshape(H, W, Cmid)
    for i in range(len(KERNELS)):
        # W direction: shifted loads from the W-padded VMEM scratch (borders stay NEG).
        padw_ref[:, PAD:PAD + W, :] = cur
        tw = padw_ref[:, 0:W, :]
        for dx in range(1, 2 * PAD + 1):
            tw = jnp.maximum(tw, padw_ref[:, dx:dx + W, :])
        # H direction: on values.  H is the leading (untiled) axis, so these static slices
        # are vreg re-indexing, not VMEM round-trips -- no padded-H scratch needed.
        padded = jnp.concatenate([neg_rows, tw, neg_rows], axis=0)  # (H+2*PAD, W, Cmid)
        th = padded[0:H]
        for dy in range(1, 2 * PAD + 1):
            th = jnp.maximum(th, padded[dy:dy + H])
        cur = th
        cat_ref[:, (i + 1) * Cmid:(i + 2) * Cmid] = cur.reshape(HW, Cmid)

    # ---- cv2: single fused MXU matmul over the concatenated features + folded BN + SiLU ----
    y2 = jnp.dot(cat_ref[...], w2_ref[...], preferred_element_type=jnp.float32)
    y2 = y2 * s2_ref[...] + b2_ref[...]
    y2 = y2 * jax.nn.sigmoid(y2)                         # (H*W, Cout) f32
    o_ref[0] = y2.astype(o_ref.dtype)                    # bf16 writeback (halved HBM traffic)


def spp_search_forward(x_nchw, params):
    """x_nchw: (N, Cin, H, W) float32. Returns (N, Cout, H, W) float32."""
    w1, s1, b1, w2, s2, b2 = params
    N, Cin, H, W = x_nchw.shape
    Cmid = w1.shape[1]
    Cout = w2.shape[1]

    # NCHW -> NHWC -> flat (N, H*W, Cin); bf16 operands for the MXU matmuls.
    x = jnp.transpose(x_nchw, (0, 2, 3, 1)).reshape(N, H * W, Cin).astype(jnp.bfloat16)
    w1b = w1.astype(jnp.bfloat16)
    w2b = w2.astype(jnp.bfloat16)

    # Per-image VMEM working set: double-buffered bf16 input/output blocks + resident
    # (double-buffered) weights & BN params + padw/cat scratch.  Set the scoped limit
    # explicitly (v5e default is only 16 MiB); clamp well under physical VMEM.
    est = (2 * H * W * Cin * 2                       # input block, double-buffered, bf16
           + 2 * H * W * Cout * 2                    # output block, double-buffered, bf16
           + 2 * (Cin * Cmid + 4 * Cmid * Cout) * 2  # weights, bf16
           + 2 * 2 * (Cmid + Cout) * 4               # BN scale/shift, f32
           + H * (W + 2 * PAD) * Cmid * 2            # W-padded pooling scratch, bf16
           + H * W * 4 * Cmid * 2)                   # concat scratch, bf16
    vmem_limit = int(min(100 * 1024 * 1024, max(32 * 1024 * 1024, 2 * est)))

    # TODO(synk): for production SPP shapes (e.g. 64x64x512 on v7x's 64 MiB VMEM) add an
    # H-tiled grid axis (marked "parallel") with a 6-row halo on the cv1 output so a tile
    # fits VMEM and both TensorCores get work at batch 1; channel widths should also be
    # chosen as multiples of 128 (256 on v6e/v7x) for lane-dense stores and a full MXU.
    out_flat = pl.pallas_call(
        _spp_kernel,
        out_shape=jax.ShapeDtypeStruct((N, H * W, Cout), jnp.bfloat16),
        grid_spec=pltpu.PrefetchScalarGridSpec(
            num_scalar_prefetch=0,
            grid=(N,),
            in_specs=[
                pl.BlockSpec((1, H * W, Cin), lambda n: (n, 0, 0)),
                pl.BlockSpec((Cin, Cmid), lambda n: (0, 0)),
                pl.BlockSpec((1, Cmid), lambda n: (0, 0)),
                pl.BlockSpec((1, Cmid), lambda n: (0, 0)),
                pl.BlockSpec((4 * Cmid, Cout), lambda n: (0, 0)),
                pl.BlockSpec((1, Cout), lambda n: (0, 0)),
                pl.BlockSpec((1, Cout), lambda n: (0, 0)),
            ],
            out_specs=pl.BlockSpec((1, H * W, Cout), lambda n: (n, 0, 0)),
            scratch_shapes=[
                pltpu.VMEM((H, W + 2 * PAD, Cmid), jnp.bfloat16),   # W-padded pooling buffer
                pltpu.VMEM((H * W, 4 * Cmid), jnp.bfloat16),        # concat feeding fused cv2
            ],
        ),
        compiler_params=pltpu.CompilerParams(
            dimension_semantics=("parallel",),
            vmem_limit_bytes=vmem_limit,
        ),
    )(x, w1b, s1, b1, w2b, s2, b2)

    out = out_flat.reshape(N, H, W, Cout)
    # Upcast at the boundary to keep the module's f32 output contract (consumers that can
    # take bf16 directly should skip this cast and keep the halved HBM footprint).
    return jnp.transpose(out, (0, 3, 1, 2)).astype(jnp.float32)


def init_params(key, in_channel, out_channel, expansion=0.5):
    """Deterministic synthetic parameters matching SPP_search's shapes (inference-mode BN folded)."""
    c_ = int(in_channel * expansion)
    cat_c = c_ * (len(KERNELS) + 1)
    ks = jax.random.split(key, 10)

    def fold_bn(kg, kb, km, kv, c):
        g = 1.0 + 0.1 * jax.random.normal(kg, (c,))
        beta = 0.1 * jax.random.normal(kb, (c,))
        mean = 0.1 * jax.random.normal(km, (c,))
        var = jax.random.uniform(kv, (c,), minval=0.5, maxval=1.5)
        scale = g / jnp.sqrt(var + BN_EPS)
        shift = beta - mean * scale
        return scale.reshape(1, c), shift.reshape(1, c)

    # cv1 weight: PyTorch (c_, Cin, 1, 1), kaiming_normal fan_in -> stored as (Cin, c_)
    w1 = (jax.random.normal(ks[0], (c_, in_channel)) * np.sqrt(2.0 / in_channel)).T
    s1, b1 = fold_bn(ks[1], ks[2], ks[3], ks[4], c_)
    # cv2 weight: PyTorch (Cout, 4*c_, 1, 1) -> stored as (4*c_, Cout)
    w2 = (jax.random.normal(ks[5], (out_channel, cat_c)) * np.sqrt(2.0 / cat_c)).T
    s2, b2 = fold_bn(ks[6], ks[7], ks[8], ks[9], out_channel)
    return tuple(p.astype(jnp.float32) for p in (w1, s1, b1, w2, s2, b2))


def ref_spp(x_nchw, params):
    """Pure-JAX f32 reference (true module semantics) for validation."""
    w1, s1, b1, w2, s2, b2 = params
    x = jnp.transpose(x_nchw, (0, 2, 3, 1)).astype(jnp.float32)
    y1 = jnp.einsum('nhwc,cd->nhwd', x, w1)
    y1 = y1 * s1.reshape(1, 1, 1, -1) + b1.reshape(1, 1, 1, -1)
    y1 = y1 * jax.nn.sigmoid(y1)
    feats = [y1]
    for k in KERNELS:
        p = k // 2
        pooled = jax.lax.reduce_window(
            y1, -jnp.inf, jax.lax.max,
            window_dimensions=(1, k, k, 1), window_strides=(1, 1, 1, 1),
            padding=((0, 0), (p, p), (p, p), (0, 0)))
        feats.append(pooled)
    cat = jnp.concatenate(feats, axis=-1)
    y2 = jnp.einsum('nhwc,cd->nhwd', cat, w2)
    y2 = y2 * s2.reshape(1, 1, 1, -1) + b2.reshape(1, 1, 1, -1)
    y2 = y2 * jax.nn.sigmoid(y2)
    return jnp.transpose(y2, (0, 3, 1, 2))


if __name__ == "__main__":
    key = jax.random.PRNGKey(0)
    kx, kp = jax.random.split(key)

    N, Cin, H, W = 2, 32, 16, 16
    Cout = 32                                   # SPP_search(in_channel=32, out_channel=32)
    x = jax.random.normal(kx, (N, Cin, H, W), dtype=jnp.float32)
    params = init_params(kp, Cin, Cout, expansion=0.5)

    # Round x and the conv weights to bf16-representable values so the f32 reference and
    # the bf16-MXU kernel see identical operands (isolates kernel correctness from the
    # wrapper's bf16 input quantization).
    q = lambda a: a.astype(jnp.bfloat16).astype(jnp.float32)
    x = q(x)
    w1, s1, b1, w2, s2, b2 = params
    params = (q(w1), s1, b1, q(w2), s2, b2)

    out = spp_search_forward(x, params)
    out = jax.block_until_ready(out)

    ref = ref_spp(x, params)
    # Loose tolerance is intentional: the kernel uses bf16 MXU operands, bf16 pooled
    # features feeding cv2, and a bf16 output writeback (all documented design choices).
    np.testing.assert_allclose(np.asarray(out), np.asarray(ref), rtol=2e-2, atol=2e-2)
    print("KERNEL_OK")
</pallas_src>

<mosaic_0001>
module attributes {stable_mosaic.version = 11 : i64} {
  func.func @_spp_kernel(%arg0: i32, %arg1: memref<1x256x32xbf16, #tpu.memory_space<vmem>>, %arg2: memref<32x16xbf16, #tpu.memory_space<vmem>>, %arg3: memref<1x16xf32, #tpu.memory_space<vmem>>, %arg4: memref<1x16xf32, #tpu.memory_space<vmem>>, %arg5: memref<64x32xbf16, #tpu.memory_space<vmem>>, %arg6: memref<1x32xf32, #tpu.memory_space<vmem>>, %arg7: memref<1x32xf32, #tpu.memory_space<vmem>>, %arg8: memref<1x256x32xbf16, #tpu.memory_space<vmem>>, %arg9: memref<16x20x16xbf16, #tpu.memory_space<vmem>>, %arg10: memref<256x64xbf16, #tpu.memory_space<vmem>>) attributes {dimension_semantics = [#tpu.dimension_semantics<parallel>], iteration_bounds = array<i64: 2>, scalar_prefetch = 0 : i64, scratch_operands = 2 : i64, tpu.core_type = #tpu.core_type<tc>, window_params = [{transform_indices = @transform_0, window_bounds = array<i64: 1, 256, 32>}, {pipeline_mode = #tpu.pipeline_mode<synchronous>, transform_indices = @transform_1, window_bounds = array<i64: 32, 16>}, {pipeline_mode = #tpu.pipeline_mode<synchronous>, transform_indices = @transform_2, window_bounds = array<i64: 1, 16>}, {pipeline_mode = #tpu.pipeline_mode<synchronous>, transform_indices = @transform_3, window_bounds = array<i64: 1, 16>}, {pipeline_mode = #tpu.pipeline_mode<synchronous>, transform_indices = @transform_4, window_bounds = array<i64: 64, 32>}, {pipeline_mode = #tpu.pipeline_mode<synchronous>, transform_indices = @transform_5, window_bounds = array<i64: 1, 32>}, {pipeline_mode = #tpu.pipeline_mode<synchronous>, transform_indices = @transform_6, window_bounds = array<i64: 1, 32>}, {transform_indices = @transform_7, window_bounds = array<i64: 1, 256, 32>}]} {
    %cst = arith.constant -1.000260e+30 : bf16
    %0 = vector.broadcast %cst : bf16 to vector<16x2x16xbf16>
    %c0 = arith.constant 0 : index
    %c0_0 = arith.constant 0 : index
    %c0_1 = arith.constant 0 : index
    %1 = vector.load %arg9[%c0, %c0_0, %c0_1] : memref<16x20x16xbf16, #tpu.memory_space<vmem>>, vector<16x2x16xbf16>
    tpu.vector_store %arg9[%c0, %c0_0, %c0_1], %0 {strides = array<i32>} : memref<16x20x16xbf16, #tpu.memory_space<vmem>>, vector<16x2x16xbf16>,
    %c0_2 = arith.constant 0 : index
    %c18 = arith.constant 18 : index
    %c0_3 = arith.constant 0 : index
    %2 = vector.load %arg9[%c0_2, %c18, %c0_3] : memref<16x20x16xbf16, #tpu.memory_space<vmem>>, vector<16x2x16xbf16>
    tpu.vector_store %arg9[%c0_2, %c18, %c0_3], %0 {strides = array<i32>} : memref<16x20x16xbf16, #tpu.memory_space<vmem>>, vector<16x2x16xbf16>,
    %c0_4 = arith.constant 0 : index
    %c0_5 = arith.constant 0 : index
    %c0_6 = arith.constant 0 : index
    %3 = vector.load %arg1[%c0_4, %c0_5, %c0_6] : memref<1x256x32xbf16, #tpu.memory_space<vmem>>, vector<1x256x32xbf16>
    %4 = vector.shape_cast %3 : vector<1x256x32xbf16> to vector<256x32xbf16>
    %c0_7 = arith.constant 0 : index
    %c0_8 = arith.constant 0 : index
    %5 = vector.load %arg2[%c0_7, %c0_8] : memref<32x16xbf16, #tpu.memory_space<vmem>>, vector<32x16xbf16>
    %cst_9 = arith.constant dense<0.000000e+00> : vector<256x16xf32>
    %6 = tpu.matmul %4, %5, %cst_9 {dimension_numbers = #tpu.dot_dimension_numbers<[1], [0], [0], [1], [0, 0, 1, 1], [], []>} : vector<256x32xbf16>, vector<32x16xbf16>, vector<256x16xf32> -> vector<256x16xf32>
    %c0_10 = arith.constant 0 : index
    %c0_11 = arith.constant 0 : index
    %7 = vector.load %arg3[%c0_10, %c0_11] : memref<1x16xf32, #tpu.memory_space<vmem>>, vector<1x16xf32>
    %8 = vector.broadcast %7 : vector<1x16xf32> to vector<256x16xf32>
    %9 = arith.mulf %6, %8 : vector<256x16xf32>
    %c0_12 = arith.constant 0 : index
    %c0_13 = arith.constant 0 : index
    %10 = vector.load %arg4[%c0_12, %c0_13] : memref<1x16xf32, #tpu.memory_space<vmem>>, vector<1x16xf32>
    %11 = vector.broadcast %10 : vector<1x16xf32> to vector<256x16xf32>
    %12 = arith.addf %9, %11 : vector<256x16xf32>
    %13 = arith.negf %12 : vector<256x16xf32>
    %14 = math.exp %13 : vector<256x16xf32>
    %cst_14 = arith.constant 1.000000e+00 : f32
    %15 = vector.broadcast %cst_14 : f32 to vector<256x16xf32>
    %16 = arith.addf %15, %14 : vector<256x16xf32>
    %17 = arith.divf %15, %16 : vector<256x16xf32>
    %18 = arith.mulf %12, %17 : vector<256x16xf32>
    %19 = arith.truncf %18 : vector<256x16xf32> to vector<256x16xbf16>
    %c0_15 = arith.constant 0 : index
    %c0_16 = arith.constant 0 : index
    %20 = vector.load %arg10[%c0_15, %c0_16] : memref<256x64xbf16, #tpu.memory_space<vmem>>, vector<256x16xbf16>
    tpu.vector_store %arg10[%c0_15, %c0_16], %19 {strides = array<i32>} : memref<256x64xbf16, #tpu.memory_space<vmem>>, vector<256x16xbf16>,
    %cst_17 = arith.constant -1.000260e+30 : bf16
    %21 = vector.broadcast %cst_17 : bf16 to vector<2x16x16xbf16>
    %22 = vector.shape_cast %19 : vector<256x16xbf16> to vector<16x16x16xbf16>
    %c0_18 = arith.constant 0 : index
    %c2 = arith.constant 2 : index
    %c0_19 = arith.constant 0 : index
    %23 = vector.load %arg9[%c0_18, %c2, %c0_19] : memref<16x20x16xbf16, #tpu.memory_space<vmem>>, vector<16x16x16xbf16>
    tpu.vector_store %arg9[%c0_18, %c2, %c0_19], %22 {strides = array<i32>} : memref<16x20x16xbf16, #tpu.memory_space<vmem>>, vector<16x16x16xbf16>,
    %c0_20 = arith.constant 0 : index
    %c0_21 = arith.constant 0 : index
    %c0_22 = arith.constant 0 : index
    %24 = vector.load %arg9[%c0_20, %c0_21, %c0_22] : memref<16x20x16xbf16, #tpu.memory_space<vmem>>, vector<16x16x16xbf16>
    %c0_23 = arith.constant 0 : index
    %c1 = arith.constant 1 : index
    %c0_24 = arith.constant 0 : index
    %25 = vector.load %arg9[%c0_23, %c1, %c0_24] : memref<16x20x16xbf16, #tpu.memory_space<vmem>>, vector<16x16x16xbf16>
    %26 = arith.maximumf %24, %25 : vector<16x16x16xbf16>
    %c0_25 = arith.constant 0 : index
    %c2_26 = arith.constant 2 : index
    %c0_27 = arith.constant 0 : index
    %27 = vector.load %arg9[%c0_25, %c2_26, %c0_27] : memref<16x20x16xbf16, #tpu.memory_space<vmem>>, vector<16x16x16xbf16>
    %28 = arith.maximumf %26, %27 : vector<16x16x16xbf16>
    %c0_28 = arith.constant 0 : index
    %c3 = arith.constant 3 : index
    %c0_29 = arith.constant 0 : index
    %29 = vector.load %arg9[%c0_28, %c3, %c0_29] : memref<16x20x16xbf16, #tpu.memory_space<vmem>>, vector<16x16x16xbf16>
    %30 = arith.maximumf %28, %29 : vector<16x16x16xbf16>
    %c0_30 = arith.constant 0 : index
    %c4 = arith.constant 4 : index
    %c0_31 = arith.constant 0 : index
    %31 = vector.load %arg9[%c0_30, %c4, %c0_31] : memref<16x20x16xbf16, #tpu.memory_space<vmem>>, vector<16x16x16xbf16>
    %32 = arith.maximumf %30, %31 : vector<16x16x16xbf16>
    %33 = tpu.concatenate %21, %32, %21 in 0 : vector<2x16x16xbf16>, vector<16x16x16xbf16>, vector<2x16x16xbf16> -> vector<20x16x16xbf16>
    %34 = vector.extract_strided_slice %33 {offsets = [0, 0, 0], sizes = [16, 16, 16], strides = [1, 1, 1]} : vector<20x16x16xbf16> to vector<16x16x16xbf16>
    %35 = vector.extract_strided_slice %33 {offsets = [1, 0, 0], sizes = [16, 16, 16], strides = [1, 1, 1]} : vector<20x16x16xbf16> to vector<16x16x16xbf16>
    %36 = arith.maximumf %34, %35 : vector<16x16x16xbf16>
    %37 = vector.extract_strided_slice %33 {offsets = [2, 0, 0], sizes = [16, 16, 16], strides = [1, 1, 1]} : vector<20x16x16xbf16> to vector<16x16x16xbf16>
    %38 = arith.maximumf %36, %37 : vector<16x16x16xbf16>
    %39 = vector.extract_strided_slice %33 {offsets = [3, 0, 0], sizes = [16, 16, 16], strides = [1, 1, 1]} : vector<20x16x16xbf16> to vector<16x16x16xbf16>
    %40 = arith.maximumf %38, %39 : vector<16x16x16xbf16>
    %41 = vector.extract_strided_slice %33 {offsets = [4, 0, 0], sizes = [16, 16, 16], strides = [1, 1, 1]} : vector<20x16x16xbf16> to vector<16x16x16xbf16>
    %42 = arith.maximumf %40, %41 : vector<16x16x16xbf16>
    %43 = vector.shape_cast %42 : vector<16x16x16xbf16> to vector<256x16xbf16>
    %c0_32 = arith.constant 0 : index
    %c16 = arith.constant 16 : index
    %44 = vector.load %arg10[%c0_32, %c16] : memref<256x64xbf16, #tpu.memory_space<vmem>>, vector<256x16xbf16>
    tpu.vector_store %arg10[%c0_32, %c16], %43 {strides = array<i32>} : memref<256x64xbf16, #tpu.memory_space<vmem>>, vector<256x16xbf16>,
    %c0_33 = arith.constant 0 : index
    %c2_34 = arith.constant 2 : index
    %c0_35 = arith.constant 0 : index
    %45 = vector.load %arg9[%c0_33, %c2_34, %c0_35] : memref<16x20x16xbf16, #tpu.memory_space<vmem>>, vector<16x16x16xbf16>
    tpu.vector_store %arg9[%c0_33, %c2_34, %c0_35], %42 {strides = array<i32>} : memref<16x20x16xbf16, #tpu.memory_space<vmem>>, vector<16x16x16xbf16>,
    %c0_36 = arith.constant 0 : index
    %c0_37 = arith.constant 0 : index
    %c0_38 = arith.constant 0 : index
    %46 = vector.load %arg9[%c0_36, %c0_37, %c0_38] : memref<16x20x16xbf16, #tpu.memory_space<vmem>>, vector<16x16x16xbf16>
    %c0_39 = arith.constant 0 : index
    %c1_40 = arith.constant 1 : index
    %c0_41 = arith.constant 0 : index
    %47 = vector.load %arg9[%c0_39, %c1_40, %c0_41] : memref<16x20x16xbf16, #tpu.memory_space<vmem>>, vector<16x16x16xbf16>
    %48 = arith.maximumf %46, %47 : vector<16x16x16xbf16>
    %c0_42 = arith.constant 0 : index
    %c2_43 = arith.constant 2 : index
    %c0_44 = arith.constant 0 : index
    %49 = vector.load %arg9[%c0_42, %c2_43, %c0_44] : memref<16x20x16xbf16, #tpu.memory_space<vmem>>, vector<16x16x16xbf16>
    %50 = arith.maximumf %48, %49 : vector<16x16x16xbf16>
    %c0_45 = arith.constant 0 : index
    %c3_46 = arith.constant 3 : index
    %c0_47 = arith.constant 0 : index
    %51 = vector.load %arg9[%c0_45, %c3_46, %c0_47] : memref<16x20x16xbf16, #tpu.memory_space<vmem>>, vector<16x16x16xbf16>
    %52 = arith.maximumf %50, %51 : vector<16x16x16xbf16>
    %c0_48 = arith.constant 0 : index
    %c4_49 = arith.constant 4 : index
    %c0_50 = arith.constant 0 : index
    %53 = vector.load %arg9[%c0_48, %c4_49, %c0_50] : memref<16x20x16xbf16, #tpu.memory_space<vmem>>, vector<16x16x16xbf16>
    %54 = arith.maximumf %52, %53 : vector<16x16x16xbf16>
    %55 = tpu.concatenate %21, %54, %21 in 0 : vector<2x16x16xbf16>, vector<16x16x16xbf16>, vector<2x16x16xbf16> -> vector<20x16x16xbf16>
    %56 = vector.extract_strided_slice %55 {offsets = [0, 0, 0], sizes = [16, 16, 16], strides = [1, 1, 1]} : vector<20x16x16xbf16> to vector<16x16x16xbf16>
    %57 = vector.extract_strided_slice %55 {offsets = [1, 0, 0], sizes = [16, 16, 16], strides = [1, 1, 1]} : vector<20x16x16xbf16> to vector<16x16x16xbf16>
    %58 = arith.maximumf %56, %57 : vector<16x16x16xbf16>
    %59 = vector.extract_strided_slice %55 {offsets = [2, 0, 0], sizes = [16, 16, 16], strides = [1, 1, 1]} : vector<20x16x16xbf16> to vector<16x16x16xbf16>
    %60 = arith.maximumf %58, %59 : vector<16x16x16xbf16>
    %61 = vector.extract_strided_slice %55 {offsets = [3, 0, 0], sizes = [16, 16, 16], strides = [1, 1, 1]} : vector<20x16x16xbf16> to vector<16x16x16xbf16>
    %62 = arith.maximumf %60, %61 : vector<16x16x16xbf16>
    %63 = vector.extract_strided_slice %55 {offsets = [4, 0, 0], sizes = [16, 16, 16], strides = [1, 1, 1]} : vector<20x16x16xbf16> to vector<16x16x16xbf16>
    %64 = arith.maximumf %62, %63 : vector<16x16x16xbf16>
    %65 = vector.shape_cast %64 : vector<16x16x16xbf16> to vector<256x16xbf16>
    %c0_51 = arith.constant 0 : index
    %c32 = arith.constant 32 : index
    %66 = vector.load %arg10[%c0_51, %c32] : memref<256x64xbf16, #tpu.memory_space<vmem>>, vector<256x16xbf16>
    tpu.vector_store %arg10[%c0_51, %c32], %65 {strides = array<i32>} : memref<256x64xbf16, #tpu.memory_space<vmem>>, vector<256x16xbf16>,
    %c0_52 = arith.constant 0 : index
    %c2_53 = arith.constant 2 : index
    %c0_54 = arith.constant 0 : index
    %67 = vector.load %arg9[%c0_52, %c2_53, %c0_54] : memref<16x20x16xbf16, #tpu.memory_space<vmem>>, vector<16x16x16xbf16>
    tpu.vector_store %arg9[%c0_52, %c2_53, %c0_54], %64 {strides = array<i32>} : memref<16x20x16xbf16, #tpu.memory_space<vmem>>, vector<16x16x16xbf16>,
    %c0_55 = arith.constant 0 : index
    %c0_56 = arith.constant 0 : index
    %c0_57 = arith.constant 0 : index
    %68 = vector.load %arg9[%c0_55, %c0_56, %c0_57] : memref<16x20x16xbf16, #tpu.memory_space<vmem>>, vector<16x16x16xbf16>
    %c0_58 = arith.constant 0 : index
    %c1_59 = arith.constant 1 : index
    %c0_60 = arith.constant 0 : index
    %69 = vector.load %arg9[%c0_58, %c1_59, %c0_60] : memref<16x20x16xbf16, #tpu.memory_space<vmem>>, vector<16x16x16xbf16>
    %70 = arith.maximumf %68, %69 : vector<16x16x16xbf16>
    %c0_61 = arith.constant 0 : index
    %c2_62 = arith.constant 2 : index
    %c0_63 = arith.constant 0 : index
    %71 = vector.load %arg9[%c0_61, %c2_62, %c0_63] : memref<16x20x16xbf16, #tpu.memory_space<vmem>>, vector<16x16x16xbf16>
    %72 = arith.maximumf %70, %71 : vector<16x16x16xbf16>
    %c0_64 = arith.constant 0 : index
    %c3_65 = arith.constant 3 : index
    %c0_66 = arith.constant 0 : index
    %73 = vector.load %arg9[%c0_64, %c3_65, %c0_66] : memref<16x20x16xbf16, #tpu.memory_space<vmem>>, vector<16x16x16xbf16>
    %74 = arith.maximumf %72, %73 : vector<16x16x16xbf16>
    %c0_67 = arith.constant 0 : index
    %c4_68 = arith.constant 4 : index
    %c0_69 = arith.constant 0 : index
    %75 = vector.load %arg9[%c0_67, %c4_68, %c0_69] : memref<16x20x16xbf16, #tpu.memory_space<vmem>>, vector<16x16x16xbf16>
    %76 = arith.maximumf %74, %75 : vector<16x16x16xbf16>
    %77 = tpu.concatenate %21, %76, %21 in 0 : vector<2x16x16xbf16>, vector<16x16x16xbf16>, vector<2x16x16xbf16> -> vector<20x16x16xbf16>
    %78 = vector.extract_strided_slice %77 {offsets = [0, 0, 0], sizes = [16, 16, 16], strides = [1, 1, 1]} : vector<20x16x16xbf16> to vector<16x16x16xbf16>
    %79 = vector.extract_strided_slice %77 {offsets = [1, 0, 0], sizes = [16, 16, 16], strides = [1, 1, 1]} : vector<20x16x16xbf16> to vector<16x16x16xbf16>
    %80 = arith.maximumf %78, %79 : vector<16x16x16xbf16>
    %81 = vector.extract_strided_slice %77 {offsets = [2, 0, 0], sizes = [16, 16, 16], strides = [1, 1, 1]} : vector<20x16x16xbf16> to vector<16x16x16xbf16>
    %82 = arith.maximumf %80, %81 : vector<16x16x16xbf16>
    %83 = vector.extract_strided_slice %77 {offsets = [3, 0, 0], sizes = [16, 16, 16], strides = [1, 1, 1]} : vector<20x16x16xbf16> to vector<16x16x16xbf16>
    %84 = arith.maximumf %82, %83 : vector<16x16x16xbf16>
    %85 = vector.extract_strided_slice %77 {offsets = [4, 0, 0], sizes = [16, 16, 16], strides = [1, 1, 1]} : vector<20x16x16xbf16> to vector<16x16x16xbf16>
    %86 = arith.maximumf %84, %85 : vector<16x16x16xbf16>
    %87 = vector.shape_cast %86 : vector<16x16x16xbf16> to vector<256x16xbf16>
    %c0_70 = arith.constant 0 : index
    %c48 = arith.constant 48 : index
    %88 = vector.load %arg10[%c0_70, %c48] : memref<256x64xbf16, #tpu.memory_space<vmem>>, vector<256x16xbf16>
    tpu.vector_store %arg10[%c0_70, %c48], %87 {strides = array<i32>} : memref<256x64xbf16, #tpu.memory_space<vmem>>, vector<256x16xbf16>,
    %c0_71 = arith.constant 0 : index
    %c0_72 = arith.constant 0 : index
    %89 = vector.load %arg10[%c0_71, %c0_72] : memref<256x64xbf16, #tpu.memory_space<vmem>>, vector<256x64xbf16>
    %c0_73 = arith.constant 0 : index
    %c0_74 = arith.constant 0 : index
    %90 = vector.load %arg5[%c0_73, %c0_74] : memref<64x32xbf16, #tpu.memory_space<vmem>>, vector<64x32xbf16>
    %cst_75 = arith.constant dense<0.000000e+00> : vector<256x32xf32>
    %91 = tpu.matmul %89, %90, %cst_75 {dimension_numbers = #tpu.dot_dimension_numbers<[1], [0], [0], [1], [0, 0, 1, 1], [], []>} : vector<256x64xbf16>, vector<64x32xbf16>, vector<256x32xf32> -> vector<256x32xf32>
    %c0_76 = arith.constant 0 : index
    %c0_77 = arith.constant 0 : index
    %92 = vector.load %arg6[%c0_76, %c0_77] : memref<1x32xf32, #tpu.memory_space<vmem>>, vector<1x32xf32>
    %93 = vector.broadcast %92 : vector<1x32xf32> to vector<256x32xf32>
    %94 = arith.mulf %91, %93 : vector<256x32xf32>
    %c0_78 = arith.constant 0 : index
    %c0_79 = arith.constant 0 : index
    %95 = vector.load %arg7[%c0_78, %c0_79] : memref<1x32xf32, #tpu.memory_space<vmem>>, vector<1x32xf32>
    %96 = vector.broadcast %95 : vector<1x32xf32> to vector<256x32xf32>
    %97 = arith.addf %94, %96 : vector<256x32xf32>
    %98 = arith.negf %97 : vector<256x32xf32>
    %99 = math.exp %98 : vector<256x32xf32>
    %cst_80 = arith.constant 1.000000e+00 : f32
    %100 = vector.broadcast %cst_80 : f32 to vector<256x32xf32>
    %101 = arith.addf %100, %99 : vector<256x32xf32>
    %102 = arith.divf %100, %101 : vector<256x32xf32>
    %103 = arith.mulf %97, %102 : vector<256x32xf32>
    %104 = arith.truncf %103 : vector<256x32xf32> to vector<256x32xbf16>
    %c0_81 = arith.constant 0 : index
    %c0_82 = arith.constant 0 : index
    %c0_83 = arith.constant 0 : index
    %105 = vector.load %arg8[%c0_81, %c0_82, %c0_83] : memref<1x256x32xbf16, #tpu.memory_space<vmem>>, vector<1x256x32xbf16>
    %106 = vector.shape_cast %105 : vector<1x256x32xbf16> to vector<256x32xbf16>
    %107 = vector.shape_cast %104 : vector<256x32xbf16> to vector<1x256x32xbf16>
    tpu.vector_store %arg8[%c0_81, %c0_82, %c0_83], %107 {strides = array<i32>} : memref<1x256x32xbf16, #tpu.memory_space<vmem>>, vector<1x256x32xbf16>,
    return
  }
  func.func @transform_0(%arg0: i32) -> (i32, i32, i32) {
    %c0_i32 = arith.constant 0 : i32
    %c0_i32_0 = arith.constant 0 : i32
    %c0_i32_1 = arith.constant 0 : i32
    return %arg0, %c0_i32, %c0_i32_0 : i32, i32, i32
  }
  func.func @transform_1(%arg0: i32) -> (i32, i32) {
    %c0_i32 = arith.constant 0 : i32
    %c0_i32_0 = arith.constant 0 : i32
    %c0_i32_1 = arith.constant 0 : i32
    return %c0_i32, %c0_i32_0 : i32, i32
  }
  func.func @transform_2(%arg0: i32) -> (i32, i32) {
    %c0_i32 = arith.constant 0 : i32
    %c0_i32_0 = arith.constant 0 : i32
    %c0_i32_1 = arith.constant 0 : i32
    return %c0_i32, %c0_i32_0 : i32, i32
  }
  func.func @transform_3(%arg0: i32) -> (i32, i32) {
    %c0_i32 = arith.constant 0 : i32
    %c0_i32_0 = arith.constant 0 : i32
    %c0_i32_1 = arith.constant 0 : i32
    return %c0_i32, %c0_i32_0 : i32, i32
  }
  func.func @transform_4(%arg0: i32) -> (i32, i32) {
    %c0_i32 = arith.constant 0 : i32
    %c0_i32_0 = arith.constant 0 : i32
    %c0_i32_1 = arith.constant 0 : i32
    return %c0_i32, %c0_i32_0 : i32, i32
  }
  func.func @transform_5(%arg0: i32) -> (i32, i32) {
    %c0_i32 = arith.constant 0 : i32
    %c0_i32_0 = arith.constant 0 : i32
    %c0_i32_1 = arith.constant 0 : i32
    return %c0_i32, %c0_i32_0 : i32, i32
  }
  func.func @transform_6(%arg0: i32) -> (i32, i32) {
    %c0_i32 = arith.constant 0 : i32
    %c0_i32_0 = arith.constant 0 : i32
    %c0_i32_1 = arith.constant 0 : i32
    return %c0_i32, %c0_i32_0 : i32, i32
  }
  func.func @transform_7(%arg0: i32) -> (i32, i32, i32) {
    %c0_i32 = arith.constant 0 : i32
    %c0_i32_0 = arith.constant 0 : i32
    %c0_i32_1 = arith.constant 0 : i32
    return %arg0, %c0_i32, %c0_i32_0 : i32, i32, i32
  }
}

</mosaic_0001>

<llo_original>
// kernel: tpu_custom_call.1
$region0: #{tpu_custom_call.1}
  #allocation0 [shape = 'u32[]', space=smem, size = 0x4, offset = 0x4, fixed_abs, tag = 'smem constant byte address 0x4 - core index']
  #allocation1 [shape = 'u32[72,128]{1,0:T(1,128)}', space=vmem, size = 0x9000, scoped, tag = 'internal scratch']
  #allocation2 [shape = 'bf16[16,20,16]{2,1,0:T(8,128)(2,1)}', space=vmem, size = 0x18000, scoped, tag = 'scratch operand']
  #allocation3 [shape = 'bf16[256,64]{1,0:T(8,128)(2,1)}', space=vmem, size = 0x10000, scoped, tag = 'scratch operand']
  %s0 = inlined_call_operand.vmem [shape: bf16[2,256,32], index: 0, kind: input, shape index: {}]
  %s1 = inlined_call_operand.vmem [shape: bf16[32,16], index: 1, kind: input, shape index: {}]
  %s2 = inlined_call_operand.vmem [shape: f32[1,16], index: 2, kind: input, shape index: {}]
  %s3 = inlined_call_operand.vmem [shape: f32[1,16], index: 3, kind: input, shape index: {}]
  %s4 = inlined_call_operand.vmem [shape: bf16[64,32], index: 4, kind: input, shape index: {}]
  %s5 = inlined_call_operand.vmem [shape: f32[1,32], index: 5, kind: input, shape index: {}]
  %s6 = inlined_call_operand.vmem [shape: f32[1,32], index: 6, kind: input, shape index: {}]
  %s7 = inlined_call_operand.vmem [shape: bf16[2,256,32], index: 7, kind: output, shape index: {}]
  %s8 = sld [smem:[#allocation0]]
  $region61: #{tpu_custom_call.1} parent=0
    _
  %s10 = ssub.s32 1, %s8
  %s11 = scalar_select 0, %s10, %s8
  loop: start=0, step=1, limit=4
  $region2: #{tpu_custom_call.1} parent=0 // loop_pre_header
    _
  $region3: #{tpu_custom_call.1} parent=0 // loop_header
    %s13 = sphi 0, %s17
    %p14 = scmp.ge.s32.totalorder %s13, 4
    %s23 = sphi 0, %s25
    %s26 = sphi 0, %s23
    %s27 = sphi 0, %s26
    %s43 = sphi 0, %s27
    %s47 = sphi 0, %s47
    %s49 = sphi 0, %s47
    %s50 = sphi 0, %s49
    %s64 = sphi 0, %s50
    %s68 = sphi 0, %s68
    %s70 = sphi 0, %s68
    %s71 = sphi 0, %s70
    %s85 = sphi 0, %s71
    %s89 = sphi 0, %s89
    %s91 = sphi 0, %s89
    %s92 = sphi 0, %s91
    %s106 = sphi 0, %s92
    %s110 = sphi 0, %s110
    %s112 = sphi 0, %s110
    %s113 = sphi 0, %s112
    %s127 = sphi 0, %s113
    %s131 = sphi 0, %s131
    %s133 = sphi 0, %s131
    %s134 = sphi 0, %s133
    %s148 = sphi 0, %s134
    %s152 = sphi 0, %s152
    %s154 = sphi 0, %s152
    %s155 = sphi 0, %s154
    %s169 = sphi 0, %s155
    %s175 = sphi 0, %s177
    %s178 = sphi 0, %s175
    %s179 = sphi 0, %s178
    %s195 = sphi 0, %s179
  $region4: #{tpu_custom_call.1} parent=0 // loop_header_branch
    %16 = sbr.rel (%p14) target = $region8
  $region5: #{tpu_custom_call.1} parent=0 // loop_body
    %s18 = ssub.s32 %s13, 1
    %s19 = ssub.s32 %s13, 2
    %s20 = sadd.s32 %s13, 1
    %s21 = ssub.s32 %s13, %s20
    %p22 = scmp.eq.s32.totalorder %s21, 0
    %s24 = sadd.s32 %s23, 1
    %s25 = scalar_select %p22, %s23, %s24
    %p28 = pneg %p22
    %p29 = scmp.eq.s32.totalorder %s13, 1
    %p30 = por %p28, %p29
    %p31 = scmp.ne.s32.totalorder %s23, %s26
    %p32 = scmp.eq.s32.totalorder %s13, 0
    %p33 = por %p31, %p32
    %p34 = scmp.ne.s32.totalorder %s23, %s26
    %p35 = scmp.eq.s32.totalorder %s18, 1
    %p36 = por %p34, %p35
    %p37 = scmp.ne.s32.totalorder %s26, %s27
    %p38 = scmp.eq.s32.totalorder %s18, 0
    %p39 = por %p37, %p38
    %p40 = scmp.ne.s32.totalorder %s26, %s27
    %p41 = scmp.eq.s32.totalorder %s19, 1
    %p42 = por %p40, %p41
    %p44 = scmp.ne.s32.totalorder %s27, %s43
    %p45 = scmp.eq.s32.totalorder %s19, 0
    %p46 = por %p44, %p45
    %s48 = sadd.s32 %s47, 1
    %p51 = scmp.eq.s32.totalorder %s13, 1
    %p52 = scmp.ne.s32.totalorder %s47, %s49
    %p53 = scmp.eq.s32.totalorder %s13, 0
    %p54 = por %p52, %p53
    %p55 = scmp.ne.s32.totalorder %s47, %s49
    %p56 = scmp.eq.s32.totalorder %s18, 1
    %p57 = por %p55, %p56
    %p58 = scmp.ne.s32.totalorder %s49, %s50
    %p59 = scmp.eq.s32.totalorder %s18, 0
    %p60 = por %p58, %p59
    %p61 = scmp.ne.s32.totalorder %s49, %s50
    %p62 = scmp.eq.s32.totalorder %s19, 1
    %p63 = por %p61, %p62
    %p65 = scmp.ne.s32.totalorder %s50, %s64
    %p66 = scmp.eq.s32.totalorder %s19, 0
    %p67 = por %p65, %p66
    %s69 = sadd.s32 %s68, 1
    %p72 = scmp.eq.s32.totalorder %s13, 1
    %p73 = scmp.ne.s32.totalorder %s68, %s70
    %p74 = scmp.eq.s32.totalorder %s13, 0
    %p75 = por %p73, %p74
    %p76 = scmp.ne.s32.totalorder %s68, %s70
    %p77 = scmp.eq.s32.totalorder %s18, 1
    %p78 = por %p76, %p77
    %p79 = scmp.ne.s32.totalorder %s70, %s71
    %p80 = scmp.eq.s32.totalorder %s18, 0
    %p81 = por %p79, %p80
    %p82 = scmp.ne.s32.totalorder %s70, %s71
    %p83 = scmp.eq.s32.totalorder %s19, 1
    %p84 = por %p82, %p83
    %p86 = scmp.ne.s32.totalorder %s71, %s85
    %p87 = scmp.eq.s32.totalorder %s19, 0
    %p88 = por %p86, %p87
    %s90 = sadd.s32 %s89, 1
    %p93 = scmp.eq.s32.totalorder %s13, 1
    %p94 = scmp.ne.s32.totalorder %s89, %s91
    %p95 = scmp.eq.s32.totalorder %s13, 0
    %p96 = por %p94, %p95
    %p97 = scmp.ne.s32.totalorder %s89, %s91
    %p98 = scmp.eq.s32.totalorder %s18, 1
    %p99 = por %p97, %p98
    %p100 = scmp.ne.s32.totalorder %s91, %s92
    %p101 = scmp.eq.s32.totalorder %s18, 0
    %p102 = por %p100, %p101
    %p103 = scmp.ne.s32.totalorder %s91, %s92
    %p104 = scmp.eq.s32.totalorder %s19, 1
    %p105 = por %p103, %p104
    %p107 = scmp.ne.s32.totalorder %s92, %s106
    %p108 = scmp.eq.s32.totalorder %s19, 0
    %p109 = por %p107, %p108
    %s111 = sadd.s32 %s110, 1
    %p114 = scmp.eq.s32.totalorder %s13, 1
    %p115 = scmp.ne.s32.totalorder %s110, %s112
    %p116 = scmp.eq.s32.totalorder %s13, 0
    %p117 = por %p115, %p116
    %p118 = scmp.ne.s32.totalorder %s110, %s112
    %p119 = scmp.eq.s32.totalorder %s18, 1
    %p120 = por %p118, %p119
    %p121 = scmp.ne.s32.totalorder %s112, %s113
    %p122 = scmp.eq.s32.totalorder %s18, 0
    %p123 = por %p121, %p122
    %p124 = scmp.ne.s32.totalorder %s112, %s113
    %p125 = scmp.eq.s32.totalorder %s19, 1
    %p126 = por %p124, %p125
    %p128 = scmp.ne.s32.totalorder %s113, %s127
    %p129 = scmp.eq.s32.totalorder %s19, 0
    %p130 = por %p128, %p129
    %s132 = sadd.s32 %s131, 1
    %p135 = scmp.eq.s32.totalorder %s13, 1
    %p136 = scmp.ne.s32.totalorder %s131, %s133
    %p137 = scmp.eq.s32.totalorder %s13, 0
    %p138 = por %p136, %p137
    %p139 = scmp.ne.s32.totalorder %s131, %s133
    %p140 = scmp.eq.s32.totalorder %s18, 1
    %p141 = por %p139, %p140
    %p142 = scmp.ne.s32.totalorder %s133, %s134
    %p143 = scmp.eq.s32.totalorder %s18, 0
    %p144 = por %p142, %p143
    %p145 = scmp.ne.s32.totalorder %s133, %s134
    %p146 = scmp.eq.s32.totalorder %s19, 1
    %p147 = por %p145, %p146
    %p149 = scmp.ne.s32.totalorder %s134, %s148
    %p150 = scmp.eq.s32.totalorder %s19, 0
    %p151 = por %p149, %p150
    %s153 = sadd.s32 %s152, 1
    %p156 = scmp.eq.s32.totalorder %s13, 1
    %p157 = scmp.ne.s32.totalorder %s152, %s154
    %p158 = scmp.eq.s32.totalorder %s13, 0
    %p159 = por %p157, %p158
    %p160 = scmp.ne.s32.totalorder %s152, %s154
    %p161 = scmp.eq.s32.totalorder %s18, 1
    %p162 = por %p160, %p161
    %p163 = scmp.ne.s32.totalorder %s154, %s155
    %p164 = scmp.eq.s32.totalorder %s18, 0
    %p165 = por %p163, %p164
    %p166 = scmp.ne.s32.totalorder %s154, %s155
    %p167 = scmp.eq.s32.totalorder %s19, 1
    %p168 = por %p166, %p167
    %p170 = scmp.ne.s32.totalorder %s155, %s169
    %p171 = scmp.eq.s32.totalorder %s19, 0
    %p172 = por %p170, %p171
    %s173 = ssub.s32 %s13, %s20
    %p174 = scmp.eq.s32.totalorder %s173, 0
    %s176 = sadd.s32 %s175, 1
    %s177 = scalar_select %p174, %s175, %s176
    %p180 = pneg %p174
    %p181 = scmp.eq.s32.totalorder %s13, 1
    %p182 = por %p180, %p181
    %p183 = scmp.ne.s32.totalorder %s175, %s178
    %p184 = scmp.eq.s32.totalorder %s13, 0
    %p185 = por %p183, %p184
    %p186 = scmp.ne.s32.totalorder %s175, %s178
    %p187 = scmp.eq.s32.totalorder %s18, 1
    %p188 = por %p186, %p187
    %p189 = scmp.ne.s32.totalorder %s178, %s179
    %p190 = scmp.eq.s32.totalorder %s18, 0
    %p191 = por %p189, %p190
    %p192 = scmp.ne.s32.totalorder %s178, %s179
    %p193 = scmp.eq.s32.totalorder %s19, 1
    %p194 = por %p192, %p193
    %p196 = scmp.ne.s32.totalorder %s179, %s195
    %p197 = scmp.eq.s32.totalorder %s19, 0
    %p198 = por %p196, %p197
    %p199 = scmp.le.s32.totalorder 1, %s13
    %p200 = scmp.lt.s32.totalorder %s13, 3
    %p201 = pnand %p199, %p200
    %p202 = pneg %p201
    // Predicated region
    $region9: #{tpu_custom_call.1} parent=5 // pred_check
      _
    $region10: #{tpu_custom_call.1} parent=5 // pred_check_branch
      %204 = sbr.rel (%p201) target = $region12
    $region11: #{tpu_custom_call.1} parent=5 // pred_region
      %s205 = ssub.s32 %s13, 1
      // Predicated region
      $region13: #{tpu_custom_call.1} parent=11 // pred_check
        %p206 = pneg %p60
      $region14: #{tpu_custom_call.1} parent=11 // pred_check_branch
        %208 = sbr.rel (%p206) target = $region16
      $region15: #{tpu_custom_call.1} parent=11 // pred_region
        _
      $region16: #{tpu_custom_call.1} parent=11 // pred_fallthru
        _
      // Predicated region
      $region17: #{tpu_custom_call.1} parent=11 // pred_check
        %p209 = pneg %p81
      $region18: #{tpu_custom_call.1} parent=11 // pred_check_branch
        %211 = sbr.rel (%p209) target = $region20
      $region19: #{tpu_custom_call.1} parent=11 // pred_region
        _
      $region20: #{tpu_custom_call.1} parent=11 // pred_fallthru
        _
      // Predicated region
      $region21: #{tpu_custom_call.1} parent=11 // pred_check
        %p212 = pneg %p102
      $region22: #{tpu_custom_call.1} parent=11 // pred_check_branch
        %214 = sbr.rel (%p212) target = $region24
      $region23: #{tpu_custom_call.1} parent=11 // pred_region
        _
      $region24: #{tpu_custom_call.1} parent=11 // pred_fallthru
        _
      // Predicated region
      $region25: #{tpu_custom_call.1} parent=11 // pred_check
        %p215 = pneg %p123
      $region26: #{tpu_custom_call.1} parent=11 // pred_check_branch
        %217 = sbr.rel (%p215) target = $region28
      $region27: #{tpu_custom_call.1} parent=11 // pred_region
        _
      $region28: #{tpu_custom_call.1} parent=11 // pred_fallthru
        _
      // Predicated region
      $region29: #{tpu_custom_call.1} parent=11 // pred_check
        %p218 = pneg %p144
      $region30: #{tpu_custom_call.1} parent=11 // pred_check_branch
        %220 = sbr.rel (%p218) target = $region32
      $region31: #{tpu_custom_call.1} parent=11 // pred_region
        _
      $region32: #{tpu_custom_call.1} parent=11 // pred_fallthru
        _
      // Predicated region
      $region33: #{tpu_custom_call.1} parent=11 // pred_check
        %p221 = pneg %p165
      $region34: #{tpu_custom_call.1} parent=11 // pred_check_branch
        %223 = sbr.rel (%p221) target = $region36
      $region35: #{tpu_custom_call.1} parent=11 // pred_region
        _
      $region36: #{tpu_custom_call.1} parent=11 // pred_fallthru
        _
    $region12: #{tpu_custom_call.1} parent=5 // pred_fallthru
      _
    %p224 = scmp.lt.s32.totalorder %s13, 2
    // Predicated region
    $region37: #{tpu_custom_call.1} parent=5 // pred_check
      %p225 = pneg %p224
    $region38: #{tpu_custom_call.1} parent=5 // pred_check_branch
      %227 = sbr.rel (%p225) target = $region40
    $region39: #{tpu_custom_call.1} parent=5 // pred_region
      // Predicated region
      $region41: #{tpu_custom_call.1} parent=39 // pred_check
        %p228 = pneg %p33
      $region42: #{tpu_custom_call.1} parent=39 // pred_check_branch
        %230 = sbr.rel (%p228) target = $region44
      $region43: #{tpu_custom_call.1} parent=39 // pred_region
        %p231 = scmp.lt.s32.totalorder %s13, 1
        %s232 = scalar_select %p231, %s13, 1
        %s233 = smul.addr %s232, 32
        %s234 = smul.addr %s233, 4
        %s235 = scalar_lea.vmem %s0, %s234
      $region44: #{tpu_custom_call.1} parent=39 // pred_fallthru
        _
    $region40: #{tpu_custom_call.1} parent=5 // pred_fallthru
      _
    %p236 = scmp.le.s32.totalorder 1, %s13
    %p237 = scmp.lt.s32.totalorder %s13, 3
    %p238 = pnand %p236, %p237
    %p239 = pneg %p238
    // Predicated region
    $region45: #{tpu_custom_call.1} parent=5 // pred_check
      _
    $region46: #{tpu_custom_call.1} parent=5 // pred_check_branch
      %241 = sbr.rel (%p238) target = $region48
    $region47: #{tpu_custom_call.1} parent=5 // pred_region
      %s242 = ssub.s32 %s13, 1
      %p243 = scmp.lt.s32.totalorder %s18, 1
      %s244 = scalar_select %p243, %s18, 1
      %s245 = smul.addr %s244, 32
      %s246 = smul.addr %s245, 4
      %s247 = scalar_lea.vmem %s0, %s246
      %p248 = pneg %p39
      %p249 = pneg %p36
      %p250 = pneg %p60
      %p251 = pneg %p57
      %p252 = pneg %p81
      %p253 = pneg %p78
      %p254 = pneg %p102
      %p255 = pneg %p99
      %p256 = pneg %p123
      %p257 = pneg %p120
      %p258 = pneg %p144
      %p259 = pneg %p141
      %p260 = pneg %p165
      %p261 = pneg %p162
      %p262 = pneg %p191
      %p263 = pneg %p188
      %p264 = scmp.lt.s32.totalorder %s18, 1
      %s265 = scalar_select %p264, %s18, 1
      %s266 = smul.addr %s265, 32
      %s267 = smul.addr %s266, 4
      %s268 = scalar_lea.vmem %s7, %s267
      %p269 = scmp.lt.s32.totalorder %s18, 1
      %s270 = scalar_select %p269, %s18, 1
      %s271 = smul.addr %s270, 32
      %s272 = smul.addr %s271, 4
      %s273 = scalar_lea.vmem %s0, %s272
      %p274 = scmp.lt.s32.totalorder %s18, 1
      %s275 = scalar_select %p274, %s18, 1
      %s276 = smul.addr %s275, 32
      %s277 = smul.addr %s276, 4
      %s278 = scalar_lea.vmem %s7, %s277
      %vm281 = vcmask 122880
      %282 = vst.msk [vmem:[#allocation2] sm:$0x1] %vm281, 4048220490
      %283 = vst.msk [vmem:[#allocation2 + $0xc] sm:$0x1] %vm281, 4048220490
      %284 = vst.msk [vmem:[#allocation2 + $0x18] sm:$0x1] %vm281, 4048220490
      %285 = vst.msk [vmem:[#allocation2 + $0x24] sm:$0x1] %vm281, 4048220490
      %286 = vst.msk [vmem:[#allocation2 + $0x30] sm:$0x1] %vm281, 4048220490
      %287 = vst.msk [vmem:[#allocation2 + $0x3c] sm:$0x1] %vm281, 4048220490
      %288 = vst.msk [vmem:[#allocation2 + $0x48] sm:$0x1] %vm281, 4048220490
      %289 = vst.msk [vmem:[#allocation2 + $0x54] sm:$0x1] %vm281, 4048220490
      %290 = vst.msk [vmem:[#allocation2 + $0x60] sm:$0x1] %vm281, 4048220490
      %291 = vst.msk [vmem:[#allocation2 + $0x6c] sm:$0x1] %vm281, 4048220490
      %292 = vst.msk [vmem:[#allocation2 + $0x78] sm:$0x1] %vm281, 4048220490
      %293 = vst.msk [vmem:[#allocation2 + $0x84] sm:$0x1] %vm281, 4048220490
      %294 = vst.msk [vmem:[#allocation2 + $0x90] sm:$0x1] %vm281, 4048220490
      %295 = vst.msk [vmem:[#allocation2 + $0x9c] sm:$0x1] %vm281, 4048220490
      %296 = vst.msk [vmem:[#allocation2 + $0xa8] sm:$0x1] %vm281, 4048220490
      %297 = vst.msk [vmem:[#allocation2 + $0xb4] sm:$0x1] %vm281, 4048220490
      %vm298 = vcmask 123905
      %299 = vst.msk [vmem:[#allocation2 + $0x8] sm:$0x2] %vm298, 4048220490
      %300 = vst.msk [vmem:[#allocation2 + $0x14] sm:$0x2] %vm298, 4048220490
      %301 = vst.msk [vmem:[#allocation2 + $0x20] sm:$0x2] %vm298, 4048220490
      %302 = vst.msk [vmem:[#allocation2 + $0x2c] sm:$0x2] %vm298, 4048220490
      %303 = vst.msk [vmem:[#allocation2 + $0x38] sm:$0x2] %vm298, 4048220490
      %304 = vst.msk [vmem:[#allocation2 + $0x44] sm:$0x2] %vm298, 4048220490
      %305 = vst.msk [vmem:[#allocation2 + $0x50] sm:$0x2] %vm298, 4048220490
      %306 = vst.msk [vmem:[#allocation2 + $0x5c] sm:$0x2] %vm298, 4048220490
      %307 = vst.msk [vmem:[#allocation2 + $0x68] sm:$0x2] %vm298, 4048220490
      %308 = vst.msk [vmem:[#allocation2 + $0x74] sm:$0x2] %vm298, 4048220490
      %309 = vst.msk [vmem:[#allocation2 + $0x80] sm:$0x2] %vm298, 4048220490
      %310 = vst.msk [vmem:[#allocation2 + $0x8c] sm:$0x2] %vm298, 4048220490
      %311 = vst.msk [vmem:[#allocation2 + $0x98] sm:$0x2] %vm298, 4048220490
      %312 = vst.msk [vmem:[#allocation2 + $0xa4] sm:$0x2] %vm298, 4048220490
      %313 = vst.msk [vmem:[#allocation2 + $0xb0] sm:$0x2] %vm298, 4048220490
      %314 = vst.msk [vmem:[#allocation2 + $0xbc] sm:$0x2] %vm298, 4048220490
      %v315 = vld [vmem:[%s273] sm:$0xf]
      %v316 = vld [vmem:[%s273 + $0x4] sm:$0xf]
      %v317 = vld [vmem:[%s273 + $0x8] sm:$0xf]
      %v318 = vld [vmem:[%s273 + $0xc] sm:$0xf]
      %v319 = vld [vmem:[%s273 + $0x10] sm:$0xf]
      %v320 = vld [vmem:[%s273 + $0x14] sm:$0xf]
      %v321 = vld [vmem:[%s273 + $0x18] sm:$0xf]
      %v322 = vld [vmem:[%s273 + $0x1c] sm:$0xf]
      %v323 = vld [vmem:[%s273 + $0x20] sm:$0xf]
      %v324 = vld [vmem:[%s273 + $0x24] sm:$0xf]
      %v325 = vld [vmem:[%s273 + $0x28] sm:$0xf]
      %v326 = vld [vmem:[%s273 + $0x2c] sm:$0xf]
      %v327 = vld [vmem:[%s273 + $0x30] sm:$0xf]
      %v328 = vld [vmem:[%s273 + $0x34] sm:$0xf]
      %v329 = vld [vmem:[%s273 + $0x38] sm:$0xf]
      %v330 = vld [vmem:[%s273 + $0x3c] sm:$0xf]
      %v331 = vld [vmem:[%s273 + $0x40] sm:$0xf]
      %v332 = vld [vmem:[%s273 + $0x44] sm:$0xf]
      %v333 = vld [vmem:[%s273 + $0x48] sm:$0xf]
      %v334 = vld [vmem:[%s273 + $0x4c] sm:$0xf]
      %v335 = vld [vmem:[%s273 + $0x50] sm:$0xf]
      %v336 = vld [vmem:[%s273 + $0x54] sm:$0xf]
      %v337 = vld [vmem:[%s273 + $0x58] sm:$0xf]
      %v338 = vld [vmem:[%s273 + $0x5c] sm:$0xf]
      %v339 = vld [vmem:[%s273 + $0x60] sm:$0xf]
      %v340 = vld [vmem:[%s273 + $0x64] sm:$0xf]
      %v341 = vld [vmem:[%s273 + $0x68] sm:$0xf]
      %v342 = vld [vmem:[%s273 + $0x6c] sm:$0xf]
      %v343 = vld [vmem:[%s273 + $0x70] sm:$0xf]
      %v344 = vld [vmem:[%s273 + $0x74] sm:$0xf]
      %v345 = vld [vmem:[%s273 + $0x78] sm:$0xf]
      %v346 = vld [vmem:[%s273 + $0x7c] sm:$0xf]
      %v347 = vld [vmem:[%s1] sm:$0xf]
      %v348 = vld [vmem:[%s1 + $0x4] sm:$0xf]
      %v349 = vld [vmem:[%s1 + $0x8] sm:$0xf]
      %v350 = vld [vmem:[%s1 + $0xc] sm:$0xf]
      %v383 = vunpack.c.l.b16 %v315
      %v384 = vunpack.c.l.b16 %v316
      %v385 = vunpack.c.l.b16 %v317
      %v386 = vunpack.c.l.b16 %v318
      %v387 = vunpack.c.l.b16 %v319
      %v388 = vunpack.c.l.b16 %v320
      %v389 = vunpack.c.l.b16 %v321
      %v390 = vunpack.c.l.b16 %v322
      %v391 = vunpack.c.l.b16 %v323
      %v392 = vunpack.c.l.b16 %v324
      %v393 = vunpack.c.l.b16 %v325
      %v394 = vunpack.c.l.b16 %v326
      %v395 = vunpack.c.l.b16 %v327
      %v396 = vunpack.c.l.b16 %v328
      %v397 = vunpack.c.l.b16 %v329
      %v398 = vunpack.c.l.b16 %v330
      %v399 = vunpack.c.l.b16 %v331
      %v400 = vunpack.c.l.b16 %v332
      %v401 = vunpack.c.l.b16 %v333
      %v402 = vunpack.c.l.b16 %v334
      %v403 = vunpack.c.l.b16 %v335
      %v404 = vunpack.c.l.b16 %v336
      %v405 = vunpack.c.l.b16 %v337
      %v406 = vunpack.c.l.b16 %v338
      %v407 = vunpack.c.l.b16 %v339
      %v408 = vunpack.c.l.b16 %v340
      %v409 = vunpack.c.l.b16 %v341
      %v410 = vunpack.c.l.b16 %v342
      %v411 = vunpack.c.l.b16 %v343
      %v412 = vunpack.c.l.b16 %v344
      %v413 = vunpack.c.l.b16 %v345
      %v414 = vunpack.c.l.b16 %v346
      %v415 = vpack.c.b16 %v384, %v383
      %v416 = vpack.c.b16 %v386, %v385
      %v417 = vpack.c.b16 %v388, %v387
      %v418 = vpack.c.b16 %v390, %v389
      %v419 = vpack.c.b16 %v392, %v391
      %v420 = vpack.c.b16 %v394, %v393
      %v421 = vpack.c.b16 %v396, %v395
      %v422 = vpack.c.b16 %v398, %v397
      %v423 = vpack.c.b16 %v400, %v399
      %v424 = vpack.c.b16 %v402, %v401
      %v425 = vpack.c.b16 %v404, %v403
      %v426 = vpack.c.b16 %v406, %v405
      %v427 = vpack.c.b16 %v408, %v407
      %v428 = vpack.c.b16 %v410, %v409
      %v429 = vpack.c.b16 %v412, %v411
      %v430 = vpack.c.b16 %v414, %v413
      %v435 = vunpack.c.l.b16 %v347
      %v436 = vunpack.c.l.b16 %v348
      %v437 = vunpack.c.l.b16 %v349
      %v438 = vunpack.c.l.b16 %v350
      %v439 = vpack.c.b16 %v436, %v435
      %v440 = vpack.c.b16 %v438, %v437
      %vm443 = vcmask 261120
      %v445 = vsel %vm443, %v415, 0
      %v448 = vsel %vm443, %v416, 0
      %v451 = vsel %vm443, %v417, 0
      %v454 = vsel %vm443, %v418, 0
      %v457 = vsel %vm443, %v419, 0
      %v460 = vsel %vm443, %v420, 0
      %v463 = vsel %vm443, %v421, 0
      %v466 = vsel %vm443, %v422, 0
      %v469 = vsel %vm443, %v423, 0
      %v472 = vsel %vm443, %v424, 0
      %v475 = vsel %vm443, %v425, 0
      %v478 = vsel %vm443, %v426, 0
      %v481 = vsel %vm443, %v427, 0
      %v484 = vsel %vm443, %v428, 0
      %v487 = vsel %vm443, %v429, 0
      %v490 = vsel %vm443, %v430, 0
      %492 = vmatpush.bf16.msra.mxu0 0
      %493 = vmatpush.bf16.msra.mxu0 0
      %494 = vmatpush.bf16.msra.mxu0 0
      %495 = vmatpush.bf16.msra.mxu0 0
      %496 = vmatpush.bf16.msra.mxu0 0
      %497 = vmatpush.bf16.msra.mxu0 0
      %498 = vmatpush.bf16.msra.mxu0 %v440
      %499 = vmatpush.bf16.msra.mxu0 %v439
      %500 = vmatmul.bf16.gmra.mxu0 %v445
      %v501 = vpop.f32.mrf.mxu0
      %v502 = vadd.f32 0.0, %v501
      %v503 = vpop.f32.mrf.mxu0
      %v504 = vadd.f32 0.0, %v503
      %505 = vmatmul.bf16.gmra.mxu0 %v448
      %v506 = vpop.f32.mrf.mxu0
      %v507 = vadd.f32 0.0, %v506
      %v508 = vpop.f32.mrf.mxu0
      %v509 = vadd.f32 0.0, %v508
      %510 = vmatmul.bf16.gmra.mxu0 %v451
      %v511 = vpop.f32.mrf.mxu0
      %v512 = vadd.f32 0.0, %v511
      %v513 = vpop.f32.mrf.mxu0
      %v514 = vadd.f32 0.0, %v513
      %515 = vmatmul.bf16.gmra.mxu0 %v454
      %v516 = vpop.f32.mrf.mxu0
      %v517 = vadd.f32 0.0, %v516
      %v518 = vpop.f32.mrf.mxu0
      %v519 = vadd.f32 0.0, %v518
      %520 = vmatmul.bf16.gmra.mxu0 %v457
      %v521 = vpop.f32.mrf.mxu0
      %v522 = vadd.f32 0.0, %v521
      %v523 = vpop.f32.mrf.mxu0
      %v524 = vadd.f32 0.0, %v523
      %525 = vmatmul.bf16.gmra.mxu0 %v460
      %v526 = vpop.f32.mrf.mxu0
      %v527 = vadd.f32 0.0, %v526
      %v528 = vpop.f32.mrf.mxu0
      %v529 = vadd.f32 0.0, %v528
      %530 = vmatmul.bf16.gmra.mxu0 %v463
      %v531 = vpop.f32.mrf.mxu0
      %v532 = vadd.f32 0.0, %v531
      %v533 = vpop.f32.mrf.mxu0
      %v534 = vadd.f32 0.0, %v533
      %535 = vmatmul.bf16.gmra.mxu0 %v466
      %v536 = vpop.f32.mrf.mxu0
      %v537 = vadd.f32 0.0, %v536
      %v538 = vpop.f32.mrf.mxu0
      %v539 = vadd.f32 0.0, %v538
      %540 = vmatmul.bf16.gmra.mxu0 %v469
      %v541 = vpop.f32.mrf.mxu0
      %v542 = vadd.f32 0.0, %v541
      %v543 = vpop.f32.mrf.mxu0
      %v544 = vadd.f32 0.0, %v543
      %545 = vmatmul.bf16.gmra.mxu0 %v472
      %v546 = vpop.f32.mrf.mxu0
      %v547 = vadd.f32 0.0, %v546
      %v548 = vpop.f32.mrf.mxu0
      %v549 = vadd.f32 0.0, %v548
      %550 = vmatmul.bf16.gmra.mxu0 %v475
      %v551 = vpop.f32.mrf.mxu0
      %v552 = vadd.f32 0.0, %v551
      %v553 = vpop.f32.mrf.mxu0
      %v554 = vadd.f32 0.0, %v553
      %555 = vmatmul.bf16.gmra.mxu0 %v478
      %v556 = vpop.f32.mrf.mxu0
      %v557 = vadd.f32 0.0, %v556
      %v558 = vpop.f32.mrf.mxu0
      %v559 = vadd.f32 0.0, %v558
      %560 = vmatmul.bf16.gmra.mxu0 %v481
      %v561 = vpop.f32.mrf.mxu0
      %v562 = vadd.f32 0.0, %v561
      %v563 = vpop.f32.mrf.mxu0
      %v564 = vadd.f32 0.0, %v563
      %565 = vmatmul.bf16.gmra.mxu0 %v484
      %v566 = vpop.f32.mrf.mxu0
      %v567 = vadd.f32 0.0, %v566
      %v568 = vpop.f32.mrf.mxu0
      %v569 = vadd.f32 0.0, %v568
      %570 = vmatmul.bf16.gmra.mxu0 %v487
      %v571 = vpop.f32.mrf.mxu0
      %v572 = vadd.f32 0.0, %v571
      %v573 = vpop.f32.mrf.mxu0
      %v574 = vadd.f32 0.0, %v573
      %575 = vmatmul.bf16.gmra.mxu0 %v490
      %v576 = vpop.f32.mrf.mxu0
      %v577 = vadd.f32 0.0, %v576
      %v578 = vpop.f32.mrf.mxu0
      %v579 = vadd.f32 0.0, %v578
      %580 = vdwg.mxu0
      %v581 = vld [vmem:[%s2] sm:$0x1]
      %v583 = vperm.slane %v581, 0
      %v585 = vmul.f32 %v502, %v583
      %v586 = vmul.f32 %v504, %v583
      %v587 = vmul.f32 %v507, %v583
      %v588 = vmul.f32 %v509, %v583
      %v589 = vmul.f32 %v512, %v583
      %v590 = vmul.f32 %v514, %v583
      %v591 = vmul.f32 %v517, %v583
      %v592 = vmul.f32 %v519, %v583
      %v593 = vmul.f32 %v522, %v583
      %v594 = vmul.f32 %v524, %v583
      %v595 = vmul.f32 %v527, %v583
      %v596 = vmul.f32 %v529, %v583
      %v597 = vmul.f32 %v532, %v583
      %v598 = vmul.f32 %v534, %v583
      %v599 = vmul.f32 %v537, %v583
      %v600 = vmul.f32 %v539, %v583
      %v601 = vmul.f32 %v542, %v583
      %v602 = vmul.f32 %v544, %v583
      %v603 = vmul.f32 %v547, %v583
      %v604 = vmul.f32 %v549, %v583
      %v605 = vmul.f32 %v552, %v583
      %v606 = vmul.f32 %v554, %v583
      %v607 = vmul.f32 %v557, %v583
      %v608 = vmul.f32 %v559, %v583
      %v609 = vmul.f32 %v562, %v583
      %v610 = vmul.f32 %v564, %v583
      %v611 = vmul.f32 %v567, %v583
      %v612 = vmul.f32 %v569, %v583
      %v613 = vmul.f32 %v572, %v583
      %v614 = vmul.f32 %v574, %v583
      %v615 = vmul.f32 %v577, %v583
      %v616 = vmul.f32 %v579, %v583
      %v617 = vld [vmem:[%s3] sm:$0x1]
      %v619 = vperm.slane %v617, 0
      %v621 = vadd.f32 %v585, %v619
      %v622 = vadd.f32 %v586, %v619
      %v623 = vadd.f32 %v587, %v619
      %v624 = vadd.f32 %v588, %v619
      %v625 = vadd.f32 %v589, %v619
      %v626 = vadd.f32 %v590, %v619
      %v627 = vadd.f32 %v591, %v619
      %v628 = vadd.f32 %v592, %v619
      %v629 = vadd.f32 %v593, %v619
      %v630 = vadd.f32 %v594, %v619
      %v631 = vadd.f32 %v595, %v619
      %v632 = vadd.f32 %v596, %v619
      %v633 = vadd.f32 %v597, %v619
      %v634 = vadd.f32 %v598, %v619
      %v635 = vadd.f32 %v599, %v619
      %v636 = vadd.f32 %v600, %v619
      %v637 = vadd.f32 %v601, %v619
      %v638 = vadd.f32 %v602, %v619
      %v639 = vadd.f32 %v603, %v619
      %v640 = vadd.f32 %v604, %v619
      %v641 = vadd.f32 %v605, %v619
      %v642 = vadd.f32 %v606, %v619
      %v643 = vadd.f32 %v607, %v619
      %v644 = vadd.f32 %v608, %v619
      %v645 = vadd.f32 %v609, %v619
      %v646 = vadd.f32 %v610, %v619
      %v647 = vadd.f32 %v611, %v619
      %v648 = vadd.f32 %v612, %v619
      %v649 = vadd.f32 %v613, %v619
      %v650 = vadd.f32 %v614, %v619
      %v651 = vadd.f32 %v615, %v619
      %v652 = vadd.f32 %v616, %v619
      %v653 = vxor.u32 %v621, 2147483648
      %v654 = vxor.u32 %v622, 2147483648
      %v655 = vxor.u32 %v623, 2147483648
      %v656 = vxor.u32 %v624, 2147483648
      %v657 = vxor.u32 %v625, 2147483648
      %v658 = vxor.u32 %v626, 2147483648
      %v659 = vxor.u32 %v627, 2147483648
      %v660 = vxor.u32 %v628, 2147483648
      %v661 = vxor.u32 %v629, 2147483648
      %v662 = vxor.u32 %v630, 2147483648
      %v663 = vxor.u32 %v631, 2147483648
      %v664 = vxor.u32 %v632, 2147483648
      %v665 = vxor.u32 %v633, 2147483648
      %v666 = vxor.u32 %v634, 2147483648
      %v667 = vxor.u32 %v635, 2147483648
      %v668 = vxor.u32 %v636, 2147483648
      %v669 = vxor.u32 %v637, 2147483648
      %v670 = vxor.u32 %v638, 2147483648
      %v671 = vxor.u32 %v639, 2147483648
      %v672 = vxor.u32 %v640, 2147483648
      %v673 = vxor.u32 %v641, 2147483648
      %v674 = vxor.u32 %v642, 2147483648
      %v675 = vxor.u32 %v643, 2147483648
      %v676 = vxor.u32 %v644, 2147483648
      %v677 = vxor.u32 %v645, 2147483648
      %v678 = vxor.u32 %v646, 2147483648
      %v679 = vxor.u32 %v647, 2147483648
      %v680 = vxor.u32 %v648, 2147483648
      %v681 = vxor.u32 %v649, 2147483648
      %v682 = vxor.u32 %v650, 2147483648
      %v683 = vxor.u32 %v651, 2147483648
      %v684 = vxor.u32 %v652, 2147483648
      %v685 = vmul.f32 %v653, 1.442695
      %v686 = vpow.pop %v685
      %v687 = vmul.f32 %v654, 1.442695
      %v688 = vpow.pop %v687
      %v689 = vmul.f32 %v655, 1.442695
      %v690 = vpow.pop %v689
      %v691 = vmul.f32 %v656, 1.442695
      %v692 = vpow.pop %v691
      %v693 = vmul.f32 %v657, 1.442695
      %v694 = vpow.pop %v693
      %v695 = vmul.f32 %v658, 1.442695
      %v696 = vpow.pop %v695
      %v697 = vmul.f32 %v659, 1.442695
      %v698 = vpow.pop %v697
      %v699 = vmul.f32 %v660, 1.442695
      %v700 = vpow.pop %v699
      %v701 = vmul.f32 %v661, 1.442695
      %v702 = vpow.pop %v701
      %v703 = vmul.f32 %v662, 1.442695
      %v704 = vpow.pop %v703
      %v705 = vmul.f32 %v663, 1.442695
      %v706 = vpow.pop %v705
      %v707 = vmul.f32 %v664, 1.442695
      %v708 = vpow.pop %v707
      %v709 = vmul.f32 %v665, 1.442695
      %v710 = vpow.pop %v709
      %v711 = vmul.f32 %v666, 1.442695
      %v712 = vpow.pop %v711
      %v713 = vmul.f32 %v667, 1.442695
      %v714 = vpow.pop %v713
      %v715 = vmul.f32 %v668, 1.442695
      %v716 = vpow.pop %v715
      %v717 = vmul.f32 %v669, 1.442695
      %v718 = vpow.pop %v717
      %v719 = vmul.f32 %v670, 1.442695
      %v720 = vpow.pop %v719
      %v721 = vmul.f32 %v671, 1.442695
      %v722 = vpow.pop %v721
      %v723 = vmul.f32 %v672, 1.442695
      %v724 = vpow.pop %v723
      %v725 = vmul.f32 %v673, 1.442695
      %v726 = vpow.pop %v725
      %v727 = vmul.f32 %v674, 1.442695
      %v728 = vpow.pop %v727
      %v729 = vmul.f32 %v675, 1.442695
      %v730 = vpow.pop %v729
      %v731 = vmul.f32 %v676, 1.442695
      %v732 = vpow.pop %v731
      %v733 = vmul.f32 %v677, 1.442695
      %v734 = vpow.pop %v733
      %v735 = vmul.f32 %v678, 1.442695
      %v736 = vpow.pop %v735
      %v737 = vmul.f32 %v679, 1.442695
      %v738 = vpow.pop %v737
      %v739 = vmul.f32 %v680, 1.442695
      %v740 = vpow.pop %v739
      %v741 = vmul.f32 %v681, 1.442695
      %v742 = vpow.pop %v741
      %v743 = vmul.f32 %v682, 1.442695
      %v744 = vpow.pop %v743
      %v745 = vmul.f32 %v683, 1.442695
      %v746 = vpow.pop %v745
      %v747 = vmul.f32 %v684, 1.442695
      %v748 = vpow.pop %v747
      %v749 = vadd.f32 %v686, 1.0
      %v750 = vadd.f32 %v688, 1.0
      %v751 = vadd.f32 %v690, 1.0
      %v752 = vadd.f32 %v692, 1.0
      %v753 = vadd.f32 %v694, 1.0
      %v754 = vadd.f32 %v696, 1.0
      %v755 = vadd.f32 %v698, 1.0
      %v756 = vadd.f32 %v700, 1.0
      %v757 = vadd.f32 %v702, 1.0
      %v758 = vadd.f32 %v704, 1.0
      %v759 = vadd.f32 %v706, 1.0
      %v760 = vadd.f32 %v708, 1.0
      %v761 = vadd.f32 %v710, 1.0
      %v762 = vadd.f32 %v712, 1.0
      %v763 = vadd.f32 %v714, 1.0
      %v764 = vadd.f32 %v716, 1.0
      %v765 = vadd.f32 %v718, 1.0
      %v766 = vadd.f32 %v720, 1.0
      %v767 = vadd.f32 %v722, 1.0
      %v768 = vadd.f32 %v724, 1.0
      %v769 = vadd.f32 %v726, 1.0
      %v770 = vadd.f32 %v728, 1.0
      %v771 = vadd.f32 %v730, 1.0
      %v772 = vadd.f32 %v732, 1.0
      %v773 = vadd.f32 %v734, 1.0
      %v774 = vadd.f32 %v736, 1.0
      %v775 = vadd.f32 %v738, 1.0
      %v776 = vadd.f32 %v740, 1.0
      %v777 = vadd.f32 %v742, 1.0
      %v778 = vadd.f32 %v744, 1.0
      %v779 = vadd.f32 %v746, 1.0
      %v780 = vadd.f32 %v748, 1.0
      %v781 = vrcp.pop %v749
      %v782 = vmul.f32 %v749, %v781
      %v783 = vsub.f32 1.0, %v782
      %v784 = vmul.f32 %v781, %v783
      %v785 = vadd.f32 %v781, %v784
      %vm786 = vweird.f32 %v749
      %vm787 = vweird.f32 %v781
      %vm788 = vmor %vm786, %vm787
      %v789 = vsel %vm788, %v781, %v785
      %v790 = vand.u32 2147483647, %v749
      %vm791 = vcmp.eq.f32.partialorder %v790, 8.507059e+37
      %v792 = vand.u32 %v749, 2147483648
      %v793 = vor.u32 1.1754944e-38, %v792
      %v794 = vsel %vm791, %v793, %v789
      %v795 = vmul.f32 1.0, %v794
      %v796 = vrcp.pop %v750
      %v797 = vmul.f32 %v750, %v796
      %v798 = vsub.f32 1.0, %v797
      %v799 = vmul.f32 %v796, %v798
      %v800 = vadd.f32 %v796, %v799
      %vm801 = vweird.f32 %v750
      %vm802 = vweird.f32 %v796
      %vm803 = vmor %vm801, %vm802
      %v804 = vsel %vm803, %v796, %v800
      %v805 = vand.u32 2147483647, %v750
      %vm806 = vcmp.eq.f32.partialorder %v805, 8.507059e+37
      %v807 = vand.u32 %v750, 2147483648
      %v808 = vor.u32 1.1754944e-38, %v807
      %v809 = vsel %vm806, %v808, %v804
      %v810 = vmul.f32 1.0, %v809
      %v811 = vrcp.pop %v751
      %v812 = vmul.f32 %v751, %v811
      %v813 = vsub.f32 1.0, %v812
      %v814 = vmul.f32 %v811, %v813
      %v815 = vadd.f32 %v811, %v814
      %vm816 = vweird.f32 %v751
      %vm817 = vweird.f32 %v811
      %vm818 = vmor %vm816, %vm817
      %v819 = vsel %vm818, %v811, %v815
      %v820 = vand.u32 2147483647, %v751
      %vm821 = vcmp.eq.f32.partialorder %v820, 8.507059e+37
      %v822 = vand.u32 %v751, 2147483648
      %v823 = vor.u32 1.1754944e-38, %v822
      %v824 = vsel %vm821, %v823, %v819
      %v825 = vmul.f32 1.0, %v824
      %v826 = vrcp.pop %v752
      %v827 = vmul.f32 %v752, %v826
      %v828 = vsub.f32 1.0, %v827
      %v829 = vmul.f32 %v826, %v828
      %v830 = vadd.f32 %v826, %v829
      %vm831 = vweird.f32 %v752
      %vm832 = vweird.f32 %v826
      %vm833 = vmor %vm831, %vm832
      %v834 = vsel %vm833, %v826, %v830
      %v835 = vand.u32 2147483647, %v752
      %vm836 = vcmp.eq.f32.partialorder %v835, 8.507059e+37
      %v837 = vand.u32 %v752, 2147483648
      %v838 = vor.u32 1.1754944e-38, %v837
      %v839 = vsel %vm836, %v838, %v834
      %v840 = vmul.f32 1.0, %v839
      %v841 = vrcp.pop %v753
      %v842 = vmul.f32 %v753, %v841
      %v843 = vsub.f32 1.0, %v842
      %v844 = vmul.f32 %v841, %v843
      %v845 = vadd.f32 %v841, %v844
      %vm846 = vweird.f32 %v753
      %vm847 = vweird.f32 %v841
      %vm848 = vmor %vm846, %vm847
      %v849 = vsel %vm848, %v841, %v845
      %v850 = vand.u32 2147483647, %v753
      %vm851 = vcmp.eq.f32.partialorder %v850, 8.507059e+37
      %v852 = vand.u32 %v753, 2147483648
      %v853 = vor.u32 1.1754944e-38, %v852
      %v854 = vsel %vm851, %v853, %v849
      %v855 = vmul.f32 1.0, %v854
      %v856 = vrcp.pop %v754
      %v857 = vmul.f32 %v754, %v856
      %v858 = vsub.f32 1.0, %v857
      %v859 = vmul.f32 %v856, %v858
      %v860 = vadd.f32 %v856, %v859
      %vm861 = vweird.f32 %v754
      %vm862 = vweird.f32 %v856
      %vm863 = vmor %vm861, %vm862
      %v864 = vsel %vm863, %v856, %v860
      %v865 = vand.u32 2147483647, %v754
      %vm866 = vcmp.eq.f32.partialorder %v865, 8.507059e+37
      %v867 = vand.u32 %v754, 2147483648
      %v868 = vor.u32 1.1754944e-38, %v867
      %v869 = vsel %vm866, %v868, %v864
      %v870 = vmul.f32 1.0, %v869
      %v871 = vrcp.pop %v755
      %v872 = vmul.f32 %v755, %v871
      %v873 = vsub.f32 1.0, %v872
      %v874 = vmul.f32 %v871, %v873
      %v875 = vadd.f32 %v871, %v874
      %vm876 = vweird.f32 %v755
      %vm877 = vweird.f32 %v871
      %vm878 = vmor %vm876, %vm877
      %v879 = vsel %vm878, %v871, %v875
      %v880 = vand.u32 2147483647, %v755
      %vm881 = vcmp.eq.f32.partialorder %v880, 8.507059e+37
      %v882 = vand.u32 %v755, 2147483648
      %v883 = vor.u32 1.1754944e-38, %v882
      %v884 = vsel %vm881, %v883, %v879
      %v885 = vmul.f32 1.0, %v884
      %v886 = vrcp.pop %v756
      %v887 = vmul.f32 %v756, %v886
      %v888 = vsub.f32 1.0, %v887
      %v889 = vmul.f32 %v886, %v888
      %v890 = vadd.f32 %v886, %v889
      %vm891 = vweird.f32 %v756
      %vm892 = vweird.f32 %v886
      %vm893 = vmor %vm891, %vm892
      %v894 = vsel %vm893, %v886, %v890
      %v895 = vand.u32 2147483647, %v756
      %vm896 = vcmp.eq.f32.partialorder %v895, 8.507059e+37
      %v897 = vand.u32 %v756, 2147483648
      %v898 = vor.u32 1.1754944e-38, %v897
      %v899 = vsel %vm896, %v898, %v894
      %v900 = vmul.f32 1.0, %v899
      %v901 = vrcp.pop %v757
      %v902 = vmul.f32 %v757, %v901
      %v903 = vsub.f32 1.0, %v902
      %v904 = vmul.f32 %v901, %v903
      %v905 = vadd.f32 %v901, %v904
      %vm906 = vweird.f32 %v757
      %vm907 = vweird.f32 %v901
      %vm908 = vmor %vm906, %vm907
      %v909 = vsel %vm908, %v901, %v905
      %v910 = vand.u32 2147483647, %v757
      %vm911 = vcmp.eq.f32.partialorder %v910, 8.507059e+37
      %v912 = vand.u32 %v757, 2147483648
      %v913 = vor.u32 1.1754944e-38, %v912
      %v914 = vsel %vm911, %v913, %v909
      %v915 = vmul.f32 1.0, %v914
      %v916 = vrcp.pop %v758
      %v917 = vmul.f32 %v758, %v916
      %v918 = vsub.f32 1.0, %v917
      %v919 = vmul.f32 %v916, %v918
      %v920 = vadd.f32 %v916, %v919
      %vm921 = vweird.f32 %v758
      %vm922 = vweird.f32 %v916
      %vm923 = vmor %vm921, %vm922
      %v924 = vsel %vm923, %v916, %v920
      %v925 = vand.u32 2147483647, %v758
      %vm926 = vcmp.eq.f32.partialorder %v925, 8.507059e+37
      %v927 = vand.u32 %v758, 2147483648
      %v928 = vor.u32 1.1754944e-38, %v927
      %v929 = vsel %vm926, %v928, %v924
      %v930 = vmul.f32 1.0, %v929
      %v931 = vrcp.pop %v759
      %v932 = vmul.f32 %v759, %v931
      %v933 = vsub.f32 1.0, %v932
      %v934 = vmul.f32 %v931, %v933
      %v935 = vadd.f32 %v931, %v934
      %vm936 = vweird.f32 %v759
      %vm937 = vweird.f32 %v931
      %vm938 = vmor %vm936, %vm937
      %v939 = vsel %vm938, %v931, %v935
      %v940 = vand.u32 2147483647, %v759
      %vm941 = vcmp.eq.f32.partialorder %v940, 8.507059e+37
      %v942 = vand.u32 %v759, 2147483648
      %v943 = vor.u32 1.1754944e-38, %v942
      %v944 = vsel %vm941, %v943, %v939
      %v945 = vmul.f32 1.0, %v944
      %v946 = vrcp.pop %v760
      %v947 = vmul.f32 %v760, %v946
      %v948 = vsub.f32 1.0, %v947
      %v949 = vmul.f32 %v946, %v948
      %v950 = vadd.f32 %v946, %v949
      %vm951 = vweird.f32 %v760
      %vm952 = vweird.f32 %v946
      %vm953 = vmor %vm951, %vm952
      %v954 = vsel %vm953, %v946, %v950
      %v955 = vand.u32 2147483647, %v760
      %vm956 = vcmp.eq.f32.partialorder %v955, 8.507059e+37
      %v957 = vand.u32 %v760, 2147483648
      %v958 = vor.u32 1.1754944e-38, %v957
      %v959 = vsel %vm956, %v958, %v954
      %v960 = vmul.f32 1.0, %v959
      %v961 = vrcp.pop %v761
      %v962 = vmul.f32 %v761, %v961
      %v963 = vsub.f32 1.0, %v962
      %v964 = vmul.f32 %v961, %v963
      %v965 = vadd.f32 %v961, %v964
      %vm966 = vweird.f32 %v761
      %vm967 = vweird.f32 %v961
      %vm968 = vmor %vm966, %vm967
      %v969 = vsel %vm968, %v961, %v965
      %v970 = vand.u32 2147483647, %v761
      %vm971 = vcmp.eq.f32.partialorder %v970, 8.507059e+37
      %v972 = vand.u32 %v761, 2147483648
      %v973 = vor.u32 1.1754944e-38, %v972
      %v974 = vsel %vm971, %v973, %v969
      %v975 = vmul.f32 1.0, %v974
      %v976 = vrcp.pop %v762
      %v977 = vmul.f32 %v762, %v976
      %v978 = vsub.f32 1.0, %v977
      %v979 = vmul.f32 %v976, %v978
      %v980 = vadd.f32 %v976, %v979
      %vm981 = vweird.f32 %v762
      %vm982 = vweird.f32 %v976
      %vm983 = vmor %vm981, %vm982
      %v984 = vsel %vm983, %v976, %v980
      %v985 = vand.u32 2147483647, %v762
      %vm986 = vcmp.eq.f32.partialorder %v985, 8.507059e+37
      %v987 = vand.u32 %v762, 2147483648
      %v988 = vor.u32 1.1754944e-38, %v987
      %v989 = vsel %vm986, %v988, %v984
      %v990 = vmul.f32 1.0, %v989
      %v991 = vrcp.pop %v763
      %v992 = vmul.f32 %v763, %v991
      %v993 = vsub.f32 1.0, %v992
      %v994 = vmul.f32 %v991, %v993
      %v995 = vadd.f32 %v991, %v994
      %vm996 = vweird.f32 %v763
      %vm997 = vweird.f32 %v991
      %vm998 = vmor %vm996, %vm997
      %v999 = vsel %vm998, %v991, %v995
      %v1000 = vand.u32 2147483647, %v763
      %vm1001 = vcmp.eq.f32.partialorder %v1000, 8.507059e+37
      %v1002 = vand.u32 %v763, 2147483648
      %v1003 = vor.u32 1.1754944e-38, %v1002
      %v1004 = vsel %vm1001, %v1003, %v999
      %v1005 = vmul.f32 1.0, %v1004
      %v1006 = vrcp.pop %v764
      %v1007 = vmul.f32 %v764, %v1006
      %v1008 = vsub.f32 1.0, %v1007
      %v1009 = vmul.f32 %v1006, %v1008
      %v1010 = vadd.f32 %v1006, %v1009
      %vm1011 = vweird.f32 %v764
      %vm1012 = vweird.f32 %v1006
      %vm1013 = vmor %vm1011, %vm1012
      %v1014 = vsel %vm1013, %v1006, %v1010
      %v1015 = vand.u32 2147483647, %v764
      %vm1016 = vcmp.eq.f32.partialorder %v1015, 8.507059e+37
      %v1017 = vand.u32 %v764, 2147483648
      %v1018 = vor.u32 1.1754944e-38, %v1017
      %v1019 = vsel %vm1016, %v1018, %v1014
      %v1020 = vmul.f32 1.0, %v1019
      %v1021 = vrcp.pop %v765
      %v1022 = vmul.f32 %v765, %v1021
      %v1023 = vsub.f32 1.0, %v1022
      %v1024 = vmul.f32 %v1021, %v1023
      %v1025 = vadd.f32 %v1021, %v1024
      %vm1026 = vweird.f32 %v765
      %vm1027 = vweird.f32 %v1021
      %vm1028 = vmor %vm1026, %vm1027
      %v1029 = vsel %vm1028, %v1021, %v1025
      %v1030 = vand.u32 2147483647, %v765
      %vm1031 = vcmp.eq.f32.partialorder %v1030, 8.507059e+37
      %v1032 = vand.u32 %v765, 2147483648
      %v1033 = vor.u32 1.1754944e-38, %v1032
      %v1034 = vsel %vm1031, %v1033, %v1029
      %v1035 = vmul.f32 1.0, %v1034
      %v1036 = vrcp.pop %v766
      %v1037 = vmul.f32 %v766, %v1036
      %v1038 = vsub.f32 1.0, %v1037
      %v1039 = vmul.f32 %v1036, %v1038
      %v1040 = vadd.f32 %v1036, %v1039
      %vm1041 = vweird.f32 %v766
      %vm1042 = vweird.f32 %v1036
      %vm1043 = vmor %vm1041, %vm1042
      %v1044 = vsel %vm1043, %v1036, %v1040
      %v1045 = vand.u32 2147483647, %v766
      %vm1046 = vcmp.eq.f32.partialorder %v1045, 8.507059e+37
      %v1047 = vand.u32 %v766, 2147483648
      %v1048 = vor.u32 1.1754944e-38, %v1047
      %v1049 = vsel %vm1046, %v1048, %v1044
      %v1050 = vmul.f32 1.0, %v1049
      %v1051 = vrcp.pop %v767
      %v1052 = vmul.f32 %v767, %v1051
      %v1053 = vsub.f32 1.0, %v1052
      %v1054 = vmul.f32 %v1051, %v1053
      %v1055 = vadd.f32 %v1051, %v1054
      %vm1056 = vweird.f32 %v767
      %vm1057 = vweird.f32 %v1051
      %vm1058 = vmor %vm1056, %vm1057
      %v1059 = vsel %vm1058, %v1051, %v1055
      %v1060 = vand.u32 2147483647, %v767
      %vm1061 = vcmp.eq.f32.partialorder %v1060, 8.507059e+37
      %v1062 = vand.u32 %v767, 2147483648
      %v1063 = vor.u32 1.1754944e-38, %v1062
      %v1064 = vsel %vm1061, %v1063, %v1059
      %v1065 = vmul.f32 1.0, %v1064
      %v1066 = vrcp.pop %v768
      %v1067 = vmul.f32 %v768, %v1066
      %v1068 = vsub.f32 1.0, %v1067
      %v1069 = vmul.f32 %v1066, %v1068
      %v1070 = vadd.f32 %v1066, %v1069
      %vm1071 = vweird.f32 %v768
      %vm1072 = vweird.f32 %v1066
      %vm1073 = vmor %vm1071, %vm1072
      %v1074 = vsel %vm1073, %v1066, %v1070
      %v1075 = vand.u32 2147483647, %v768
      %vm1076 = vcmp.eq.f32.partialorder %v1075, 8.507059e+37
      %v1077 = vand.u32 %v768, 2147483648
      %v1078 = vor.u32 1.1754944e-38, %v1077
      %v1079 = vsel %vm1076, %v1078, %v1074
      %v1080 = vmul.f32 1.0, %v1079
      %v1081 = vrcp.pop %v769
      %v1082 = vmul.f32 %v769, %v1081
      %v1083 = vsub.f32 1.0, %v1082
      %v1084 = vmul.f32 %v1081, %v1083
      %v1085 = vadd.f32 %v1081, %v1084
      %vm1086 = vweird.f32 %v769
      %vm1087 = vweird.f32 %v1081
      %vm1088 = vmor %vm1086, %vm1087
      %v1089 = vsel %vm1088, %v1081, %v1085
      %v1090 = vand.u32 2147483647, %v769
      %vm1091 = vcmp.eq.f32.partialorder %v1090, 8.507059e+37
      %v1092 = vand.u32 %v769, 2147483648
      %v1093 = vor.u32 1.1754944e-38, %v1092
      %v1094 = vsel %vm1091, %v1093, %v1089
      %v1095 = vmul.f32 1.0, %v1094
      %v1096 = vrcp.pop %v770
      %v1097 = vmul.f32 %v770, %v1096
      %v1098 = vsub.f32 1.0, %v1097
      %v1099 = vmul.f32 %v1096, %v1098
      %v1100 = vadd.f32 %v1096, %v1099
      %vm1101 = vweird.f32 %v770
      %vm1102 = vweird.f32 %v1096
      %vm1103 = vmor %vm1101, %vm1102
      %v1104 = vsel %vm1103, %v1096, %v1100
      %v1105 = vand.u32 2147483647, %v770
      %vm1106 = vcmp.eq.f32.partialorder %v1105, 8.507059e+37
      %v1107 = vand.u32 %v770, 2147483648
      %v1108 = vor.u32 1.1754944e-38, %v1107
      %v1109 = vsel %vm1106, %v1108, %v1104
      %v1110 = vmul.f32 1.0, %v1109
      %v1111 = vrcp.pop %v771
      %v1112 = vmul.f32 %v771, %v1111
      %v1113 = vsub.f32 1.0, %v1112
      %v1114 = vmul.f32 %v1111, %v1113
      %v1115 = vadd.f32 %v1111, %v1114
      %vm1116 = vweird.f32 %v771
      %vm1117 = vweird.f32 %v1111
      %vm1118 = vmor %vm1116, %vm1117
      %v1119 = vsel %vm1118, %v1111, %v1115
      %v1120 = vand.u32 2147483647, %v771
      %vm1121 = vcmp.eq.f32.partialorder %v1120, 8.507059e+37
      %v1122 = vand.u32 %v771, 2147483648
      %v1123 = vor.u32 1.1754944e-38, %v1122
      %v1124 = vsel %vm1121, %v1123, %v1119
      %v1125 = vmul.f32 1.0, %v1124
      %v1126 = vrcp.pop %v772
      %v1127 = vmul.f32 %v772, %v1126
      %v1128 = vsub.f32 1.0, %v1127
      %v1129 = vmul.f32 %v1126, %v1128
      %v1130 = vadd.f32 %v1126, %v1129
      %vm1131 = vweird.f32 %v772
      %vm1132 = vweird.f32 %v1126
      %vm1133 = vmor %vm1131, %vm1132
      %v1134 = vsel %vm1133, %v1126, %v1130
      %v1135 = vand.u32 2147483647, %v772
      %vm1136 = vcmp.eq.f32.partialorder %v1135, 8.507059e+37
      %v1137 = vand.u32 %v772, 2147483648
      %v1138 = vor.u32 1.1754944e-38, %v1137
      %v1139 = vsel %vm1136, %v1138, %v1134
      %v1140 = vmul.f32 1.0, %v1139
      %v1141 = vrcp.pop %v773
      %v1142 = vmul.f32 %v773, %v1141
      %v1143 = vsub.f32 1.0, %v1142
      %v1144 = vmul.f32 %v1141, %v1143
      %v1145 = vadd.f32 %v1141, %v1144
      %vm1146 = vweird.f32 %v773
      %vm1147 = vweird.f32 %v1141
      %vm1148 = vmor %vm1146, %vm1147
      %v1149 = vsel %vm1148, %v1141, %v1145
      %v1150 = vand.u32 2147483647, %v773
      %vm1151 = vcmp.eq.f32.partialorder %v1150, 8.507059e+37
      %v1152 = vand.u32 %v773, 2147483648
      %v1153 = vor.u32 1.1754944e-38, %v1152
      %v1154 = vsel %vm1151, %v1153, %v1149
      %v1155 = vmul.f32 1.0, %v1154
      %v1156 = vrcp.pop %v774
      %v1157 = vmul.f32 %v774, %v1156
      %v1158 = vsub.f32 1.0, %v1157
      %v1159 = vmul.f32 %v1156, %v1158
      %v1160 = vadd.f32 %v1156, %v1159
      %vm1161 = vweird.f32 %v774
      %vm1162 = vweird.f32 %v1156
      %vm1163 = vmor %vm1161, %vm1162
      %v1164 = vsel %vm1163, %v1156, %v1160
      %v1165 = vand.u32 2147483647, %v774
      %vm1166 = vcmp.eq.f32.partialorder %v1165, 8.507059e+37
      %v1167 = vand.u32 %v774, 2147483648
      %v1168 = vor.u32 1.1754944e-38, %v1167
      %v1169 = vsel %vm1166, %v1168, %v1164
      %v1170 = vmul.f32 1.0, %v1169
      %v1171 = vrcp.pop %v775
      %v1172 = vmul.f32 %v775, %v1171
      %v1173 = vsub.f32 1.0, %v1172
      %v1174 = vmul.f32 %v1171, %v1173
      %v1175 = vadd.f32 %v1171, %v1174
      %vm1176 = vweird.f32 %v775
      %vm1177 = vweird.f32 %v1171
      %vm1178 = vmor %vm1176, %vm1177
      %v1179 = vsel %vm1178, %v1171, %v1175
      %v1180 = vand.u32 2147483647, %v775
      %vm1181 = vcmp.eq.f32.partialorder %v1180, 8.507059e+37
      %v1182 = vand.u32 %v775, 2147483648
      %v1183 = vor.u32 1.1754944e-38, %v1182
      %v1184 = vsel %vm1181, %v1183, %v1179
      %v1185 = vmul.f32 1.0, %v1184
      %v1186 = vrcp.pop %v776
      %v1187 = vmul.f32 %v776, %v1186
      %v1188 = vsub.f32 1.0, %v1187
      %v1189 = vmul.f32 %v1186, %v1188
      %v1190 = vadd.f32 %v1186, %v1189
      %vm1191 = vweird.f32 %v776
      %vm1192 = vweird.f32 %v1186
      %vm1193 = vmor %vm1191, %vm1192
      %v1194 = vsel %vm1193, %v1186, %v1190
      %v1195 = vand.u32 2147483647, %v776
      %vm1196 = vcmp.eq.f32.partialorder %v1195, 8.507059e+37
      %v1197 = vand.u32 %v776, 2147483648
      %v1198 = vor.u32 1.1754944e-38, %v1197
      %v1199 = vsel %vm1196, %v1198, %v1194
      %v1200 = vmul.f32 1.0, %v1199
      %v1201 = vrcp.pop %v777
      %v1202 = vmul.f32 %v777, %v1201
      %v1203 = vsub.f32 1.0, %v1202
      %v1204 = vmul.f32 %v1201, %v1203
      %v1205 = vadd.f32 %v1201, %v1204
      %vm1206 = vweird.f32 %v777
      %vm1207 = vweird.f32 %v1201
      %vm1208 = vmor %vm1206, %vm1207
      %v1209 = vsel %vm1208, %v1201, %v1205
      %v1210 = vand.u32 2147483647, %v777
      %vm1211 = vcmp.eq.f32.partialorder %v1210, 8.507059e+37
      %v1212 = vand.u32 %v777, 2147483648
      %v1213 = vor.u32 1.1754944e-38, %v1212
      %v1214 = vsel %vm1211, %v1213, %v1209
      %v1215 = vmul.f32 1.0, %v1214
      %v1216 = vrcp.pop %v778
      %v1217 = vmul.f32 %v778, %v1216
      %v1218 = vsub.f32 1.0, %v1217
      %v1219 = vmul.f32 %v1216, %v1218
      %v1220 = vadd.f32 %v1216, %v1219
      %vm1221 = vweird.f32 %v778
      %vm1222 = vweird.f32 %v1216
      %vm1223 = vmor %vm1221, %vm1222
      %v1224 = vsel %vm1223, %v1216, %v1220
      %v1225 = vand.u32 2147483647, %v778
      %vm1226 = vcmp.eq.f32.partialorder %v1225, 8.507059e+37
      %v1227 = vand.u32 %v778, 2147483648
      %v1228 = vor.u32 1.1754944e-38, %v1227
      %v1229 = vsel %vm1226, %v1228, %v1224
      %v1230 = vmul.f32 1.0, %v1229
      %v1231 = vrcp.pop %v779
      %v1232 = vmul.f32 %v779, %v1231
      %v1233 = vsub.f32 1.0, %v1232
      %v1234 = vmul.f32 %v1231, %v1233
      %v1235 = vadd.f32 %v1231, %v1234
      %vm1236 = vweird.f32 %v779
      %vm1237 = vweird.f32 %v1231
      %vm1238 = vmor %vm1236, %vm1237
      %v1239 = vsel %vm1238, %v1231, %v1235
      %v1240 = vand.u32 2147483647, %v779
      %vm1241 = vcmp.eq.f32.partialorder %v1240, 8.507059e+37
      %v1242 = vand.u32 %v779, 2147483648
      %v1243 = vor.u32 1.1754944e-38, %v1242
      %v1244 = vsel %vm1241, %v1243, %v1239
      %v1245 = vmul.f32 1.0, %v1244
      %v1246 = vrcp.pop %v780
      %v1247 = vmul.f32 %v780, %v1246
      %v1248 = vsub.f32 1.0, %v1247
      %v1249 = vmul.f32 %v1246, %v1248
      %v1250 = vadd.f32 %v1246, %v1249
      %vm1251 = vweird.f32 %v780
      %vm1252 = vweird.f32 %v1246
      %vm1253 = vmor %vm1251, %vm1252
      %v1254 = vsel %vm1253, %v1246, %v1250
      %v1255 = vand.u32 2147483647, %v780
      %vm1256 = vcmp.eq.f32.partialorder %v1255, 8.507059e+37
      %v1257 = vand.u32 %v780, 2147483648
      %v1258 = vor.u32 1.1754944e-38, %v1257
      %v1259 = vsel %vm1256, %v1258, %v1254
      %v1260 = vmul.f32 1.0, %v1259
      %v1261 = vmul.f32 %v621, %v795
      %v1262 = vmul.f32 %v622, %v810
      %v1263 = vmul.f32 %v623, %v825
      %v1264 = vmul.f32 %v624, %v840
      %v1265 = vmul.f32 %v625, %v855
      %v1266 = vmul.f32 %v626, %v870
      %v1267 = vmul.f32 %v627, %v885
      %v1268 = vmul.f32 %v628, %v900
      %v1269 = vmul.f32 %v629, %v915
      %v1270 = vmul.f32 %v630, %v930
      %v1271 = vmul.f32 %v631, %v945
      %v1272 = vmul.f32 %v632, %v960
      %v1273 = vmul.f32 %v633, %v975
      %v1274 = vmul.f32 %v634, %v990
      %v1275 = vmul.f32 %v635, %v1005
      %v1276 = vmul.f32 %v636, %v1020
      %v1277 = vmul.f32 %v637, %v1035
      %v1278 = vmul.f32 %v638, %v1050
      %v1279 = vmul.f32 %v639, %v1065
      %v1280 = vmul.f32 %v640, %v1080
      %v1281 = vmul.f32 %v641, %v1095
      %v1282 = vmul.f32 %v642, %v1110
      %v1283 = vmul.f32 %v643, %v1125
      %v1284 = vmul.f32 %v644, %v1140
      %v1285 = vmul.f32 %v645, %v1155
      %v1286 = vmul.f32 %v646, %v1170
      %v1287 = vmul.f32 %v647, %v1185
      %v1288 = vmul.f32 %v648, %v1200
      %v1289 = vmul.f32 %v649, %v1215
      %v1290 = vmul.f32 %v650, %v1230
      %v1291 = vmul.f32 %v651, %v1245
      %v1292 = vmul.f32 %v652, %v1260
      %v1293 = vpack.c.bf16 %v1261, %v1261
      %v1294 = vpack.c.bf16 %v1262, %v1262
      %v1295 = vpack.c.bf16 %v1263, %v1263
      %v1296 = vpack.c.bf16 %v1264, %v1264
      %v1297 = vpack.c.bf16 %v1265, %v1265
      %v1298 = vpack.c.bf16 %v1266, %v1266
      %v1299 = vpack.c.bf16 %v1267, %v1267
      %v1300 = vpack.c.bf16 %v1268, %v1268
      %v1301 = vpack.c.bf16 %v1269, %v1269
      %v1302 = vpack.c.bf16 %v1270, %v1270
      %v1303 = vpack.c.bf16 %v1271, %v1271
      %v1304 = vpack.c.bf16 %v1272, %v1272
      %v1305 = vpack.c.bf16 %v1273, %v1273
      %v1306 = vpack.c.bf16 %v1274, %v1274
      %v1307 = vpack.c.bf16 %v1275, %v1275
      %v1308 = vpack.c.bf16 %v1276, %v1276
      %v1309 = vpack.c.bf16 %v1277, %v1277
      %v1310 = vpack.c.bf16 %v1278, %v1278
      %v1311 = vpack.c.bf16 %v1279, %v1279
      %v1312 = vpack.c.bf16 %v1280, %v1280
      %v1313 = vpack.c.bf16 %v1281, %v1281
      %v1314 = vpack.c.bf16 %v1282, %v1282
      %v1315 = vpack.c.bf16 %v1283, %v1283
      %v1316 = vpack.c.bf16 %v1284, %v1284
      %v1317 = vpack.c.bf16 %v1285, %v1285
      %v1318 = vpack.c.bf16 %v1286, %v1286
      %v1319 = vpack.c.bf16 %v1287, %v1287
      %v1320 = vpack.c.bf16 %v1288, %v1288
      %v1321 = vpack.c.bf16 %v1289, %v1289
      %v1322 = vpack.c.bf16 %v1290, %v1290
      %v1323 = vpack.c.bf16 %v1291, %v1291
      %v1324 = vpack.c.bf16 %v1292, %v1292
      %vm1325 = vcmask 125952
      %1326 = vst.msk [vmem:[#allocation3] sm:$0xf] %vm1325, %v1293
      %1327 = vst.msk [vmem:[#allocation3 + $0x4] sm:$0xf] %vm1325, %v1294
      %1328 = vst.msk [vmem:[#allocation3 + $0x8] sm:$0xf] %vm1325, %v1295
      %1329 = vst.msk [vmem:[#allocation3 + $0xc] sm:$0xf] %vm1325, %v1296
      %1330 = vst.msk [vmem:[#allocation3 + $0x10] sm:$0xf] %vm1325, %v1297
      %1331 = vst.msk [vmem:[#allocation3 + $0x14] sm:$0xf] %vm1325, %v1298
      %1332 = vst.msk [vmem:[#allocation3 + $0x18] sm:$0xf] %vm1325, %v1299
      %1333 = vst.msk [vmem:[#allocation3 + $0x1c] sm:$0xf] %vm1325, %v1300
      %1334 = vst.msk [vmem:[#allocation3 + $0x20] sm:$0xf] %vm1325, %v1301
      %1335 = vst.msk [vmem:[#allocation3 + $0x24] sm:$0xf] %vm1325, %v1302
      %1336 = vst.msk [vmem:[#allocation3 + $0x28] sm:$0xf] %vm1325, %v1303
      %1337 = vst.msk [vmem:[#allocation3 + $0x2c] sm:$0xf] %vm1325, %v1304
      %1338 = vst.msk [vmem:[#allocation3 + $0x30] sm:$0xf] %vm1325, %v1305
      %1339 = vst.msk [vmem:[#allocation3 + $0x34] sm:$0xf] %vm1325, %v1306
      %1340 = vst.msk [vmem:[#allocation3 + $0x38] sm:$0xf] %vm1325, %v1307
      %1341 = vst.msk [vmem:[#allocation3 + $0x3c] sm:$0xf] %vm1325, %v1308
      %1342 = vst.msk [vmem:[#allocation3 + $0x40] sm:$0xf] %vm1325, %v1309
      %1343 = vst.msk [vmem:[#allocation3 + $0x44] sm:$0xf] %vm1325, %v1310
      %1344 = vst.msk [vmem:[#allocation3 + $0x48] sm:$0xf] %vm1325, %v1311
      %1345 = vst.msk [vmem:[#allocation3 + $0x4c] sm:$0xf] %vm1325, %v1312
      %1346 = vst.msk [vmem:[#allocation3 + $0x50] sm:$0xf] %vm1325, %v1313
      %1347 = vst.msk [vmem:[#allocation3 + $0x54] sm:$0xf] %vm1325, %v1314
      %1348 = vst.msk [vmem:[#allocation3 + $0x58] sm:$0xf] %vm1325, %v1315
      %1349 = vst.msk [vmem:[#allocation3 + $0x5c] sm:$0xf] %vm1325, %v1316
      %1350 = vst.msk [vmem:[#allocation3 + $0x60] sm:$0xf] %vm1325, %v1317
      %1351 = vst.msk [vmem:[#allocation3 + $0x64] sm:$0xf] %vm1325, %v1318
      %1352 = vst.msk [vmem:[#allocation3 + $0x68] sm:$0xf] %vm1325, %v1319
      %1353 = vst.msk [vmem:[#allocation3 + $0x6c] sm:$0xf] %vm1325, %v1320
      %1354 = vst.msk [vmem:[#allocation3 + $0x70] sm:$0xf] %vm1325, %v1321
      %1355 = vst.msk [vmem:[#allocation3 + $0x74] sm:$0xf] %vm1325, %v1322
      %1356 = vst.msk [vmem:[#allocation3 + $0x78] sm:$0xf] %vm1325, %v1323
      %1357 = vst.msk [vmem:[#allocation3 + $0x7c] sm:$0xf] %vm1325, %v1324
      %vm1390 = vcmask 1040384
      %vm1391 = vcmask 1044484
      %vm1392 = vmor %vm1390, %vm1391
      %v1393 = vrot.slane %v1293, 7
      %v1394 = vrot.slane %v1393, 4
      %v1395 = vrot.slane %v1294, 7
      %v1396 = vsel %vm1392, %v1394, %v1395
      %v1397 = vrot.slane %v1395, 4
      %v1398 = vrot.slane %v1295, 7
      %v1399 = vrot.slane %v1398, 4
      %v1400 = vrot.slane %v1296, 7
      %v1401 = vsel %vm1392, %v1399, %v1400
      %v1402 = vrot.slane %v1400, 4
      %v1403 = vrot.slane %v1297, 7
      %v1404 = vrot.slane %v1403, 4
      %v1405 = vrot.slane %v1298, 7
      %v1406 = vsel %vm1392, %v1404, %v1405
      %v1407 = vrot.slane %v1405, 4
      %v1408 = vrot.slane %v1299, 7
      %v1409 = vrot.slane %v1408, 4
      %v1410 = vrot.slane %v1300, 7
      %v1411 = vsel %vm1392, %v1409, %v1410
      %v1412 = vrot.slane %v1410, 4
      %v1413 = vrot.slane %v1301, 7
      %v1414 = vrot.slane %v1413, 4
      %v1415 = vrot.slane %v1302, 7
      %v1416 = vsel %vm1392, %v1414, %v1415
      %v1417 = vrot.slane %v1415, 4
      %v1418 = vrot.slane %v1303, 7
      %v1419 = vrot.slane %v1418, 4
      %v1420 = vrot.slane %v1304, 7
      %v1421 = vsel %vm1392, %v1419, %v1420
      %v1422 = vrot.slane %v1420, 4
      %v1423 = vrot.slane %v1305, 7
      %v1424 = vrot.slane %v1423, 4
      %v1425 = vrot.slane %v1306, 7
      %v1426 = vsel %vm1392, %v1424, %v1425
      %v1427 = vrot.slane %v1425, 4
      %v1428 = vrot.slane %v1307, 7
      %v1429 = vrot.slane %v1428, 4
      %v1430 = vrot.slane %v1308, 7
      %v1431 = vsel %vm1392, %v1429, %v1430
      %v1432 = vrot.slane %v1430, 4
      %v1433 = vrot.slane %v1309, 7
      %v1434 = vrot.slane %v1433, 4
      %v1435 = vrot.slane %v1310, 7
      %v1436 = vsel %vm1392, %v1434, %v1435
      %v1437 = vrot.slane %v1435, 4
      %v1438 = vrot.slane %v1311, 7
      %v1439 = vrot.slane %v1438, 4
      %v1440 = vrot.slane %v1312, 7
      %v1441 = vsel %vm1392, %v1439, %v1440
      %v1442 = vrot.slane %v1440, 4
      %v1443 = vrot.slane %v1313, 7
      %v1444 = vrot.slane %v1443, 4
      %v1445 = vrot.slane %v1314, 7
      %v1446 = vsel %vm1392, %v1444, %v1445
      %v1447 = vrot.slane %v1445, 4
      %v1448 = vrot.slane %v1315, 7
      %v1449 = vrot.slane %v1448, 4
      %v1450 = vrot.slane %v1316, 7
      %v1451 = vsel %vm1392, %v1449, %v1450
      %v1452 = vrot.slane %v1450, 4
      %v1453 = vrot.slane %v1317, 7
      %v1454 = vrot.slane %v1453, 4
      %v1455 = vrot.slane %v1318, 7
      %v1456 = vsel %vm1392, %v1454, %v1455
      %v1457 = vrot.slane %v1455, 4
      %v1458 = vrot.slane %v1319, 7
      %v1459 = vrot.slane %v1458, 4
      %v1460 = vrot.slane %v1320, 7
      %v1461 = vsel %vm1392, %v1459, %v1460
      %v1462 = vrot.slane %v1460, 4
      %v1463 = vrot.slane %v1321, 7
      %v1464 = vrot.slane %v1463, 4
      %v1465 = vrot.slane %v1322, 7
      %v1466 = vsel %vm1392, %v1464, %v1465
      %v1467 = vrot.slane %v1465, 4
      %v1468 = vrot.slane %v1323, 7
      %v1469 = vrot.slane %v1468, 4
      %v1470 = vrot.slane %v1324, 7
      %v1471 = vsel %vm1392, %v1469, %v1470
      %v1472 = vrot.slane %v1470, 4
      %vm1521 = vcmask 125953
      %1522 = vst.msk [vmem:[#allocation2] sm:$0xe] %vm1521, %v1393
      %1523 = vst.msk [vmem:[#allocation2 + $0x4] sm:$0xf] %vm1325, %v1396
      %1524 = vst.msk [vmem:[#allocation2 + $0x8] sm:$0x1] %vm281, %v1397
      %1525 = vst.msk [vmem:[#allocation2 + $0xc] sm:$0xe] %vm1521, %v1398
      %1526 = vst.msk [vmem:[#allocation2 + $0x10] sm:$0xf] %vm1325, %v1401
      %1527 = vst.msk [vmem:[#allocation2 + $0x14] sm:$0x1] %vm281, %v1402
      %1528 = vst.msk [vmem:[#allocation2 + $0x18] sm:$0xe] %vm1521, %v1403
      %1529 = vst.msk [vmem:[#allocation2 + $0x1c] sm:$0xf] %vm1325, %v1406
      %1530 = vst.msk [vmem:[#allocation2 + $0x20] sm:$0x1] %vm281, %v1407
      %1531 = vst.msk [vmem:[#allocation2 + $0x24] sm:$0xe] %vm1521, %v1408
      %1532 = vst.msk [vmem:[#allocation2 + $0x28] sm:$0xf] %vm1325, %v1411
      %1533 = vst.msk [vmem:[#allocation2 + $0x2c] sm:$0x1] %vm281, %v1412
      %1534 = vst.msk [vmem:[#allocation2 + $0x30] sm:$0xe] %vm1521, %v1413
      %1535 = vst.msk [vmem:[#allocation2 + $0x34] sm:$0xf] %vm1325, %v1416
      %1536 = vst.msk [vmem:[#allocation2 + $0x38] sm:$0x1] %vm281, %v1417
      %1537 = vst.msk [vmem:[#allocation2 + $0x3c] sm:$0xe] %vm1521, %v1418
      %1538 = vst.msk [vmem:[#allocation2 + $0x40] sm:$0xf] %vm1325, %v1421
      %1539 = vst.msk [vmem:[#allocation2 + $0x44] sm:$0x1] %vm281, %v1422
      %1540 = vst.msk [vmem:[#allocation2 + $0x48] sm:$0xe] %vm1521, %v1423
      %1541 = vst.msk [vmem:[#allocation2 + $0x4c] sm:$0xf] %vm1325, %v1426
      %1542 = vst.msk [vmem:[#allocation2 + $0x50] sm:$0x1] %vm281, %v1427
      %1543 = vst.msk [vmem:[#allocation2 + $0x54] sm:$0xe] %vm1521, %v1428
      %1544 = vst.msk [vmem:[#allocation2 + $0x58] sm:$0xf] %vm1325, %v1431
      %1545 = vst.msk [vmem:[#allocation2 + $0x5c] sm:$0x1] %vm281, %v1432
      %1546 = vst.msk [vmem:[#allocation2 + $0x60] sm:$0xe] %vm1521, %v1433
      %1547 = vst.msk [vmem:[#allocation2 + $0x64] sm:$0xf] %vm1325, %v1436
      %1548 = vst.msk [vmem:[#allocation2 + $0x68] sm:$0x1] %vm281, %v1437
      %1549 = vst.msk [vmem:[#allocation2 + $0x6c] sm:$0xe] %vm1521, %v1438
      %1550 = vst.msk [vmem:[#allocation2 + $0x70] sm:$0xf] %vm1325, %v1441
      %1551 = vst.msk [vmem:[#allocation2 + $0x74] sm:$0x1] %vm281, %v1442
      %1552 = vst.msk [vmem:[#allocation2 + $0x78] sm:$0xe] %vm1521, %v1443
      %1553 = vst.msk [vmem:[#allocation2 + $0x7c] sm:$0xf] %vm1325, %v1446
      %1554 = vst.msk [vmem:[#allocation2 + $0x80] sm:$0x1] %vm281, %v1447
      %1555 = vst.msk [vmem:[#allocation2 + $0x84] sm:$0xe] %vm1521, %v1448
      %1556 = vst.msk [vmem:[#allocation2 + $0x88] sm:$0xf] %vm1325, %v1451
      %1557 = vst.msk [vmem:[#allocation2 + $0x8c] sm:$0x1] %vm281, %v1452
      %1558 = vst.msk [vmem:[#allocation2 + $0x90] sm:$0xe] %vm1521, %v1453
      %1559 = vst.msk [vmem:[#allocation2 + $0x94] sm:$0xf] %vm1325, %v1456
      %1560 = vst.msk [vmem:[#allocation2 + $0x98] sm:$0x1] %vm281, %v1457
      %1561 = vst.msk [vmem:[#allocation2 + $0x9c] sm:$0xe] %vm1521, %v1458
      %1562 = vst.msk [vmem:[#allocation2 + $0xa0] sm:$0xf] %vm1325, %v1461
      %1563 = vst.msk [vmem:[#allocation2 + $0xa4] sm:$0x1] %vm281, %v1462
      %1564 = vst.msk [vmem:[#allocation2 + $0xa8] sm:$0xe] %vm1521, %v1463
      %1565 = vst.msk [vmem:[#allocation2 + $0xac] sm:$0xf] %vm1325, %v1466
      %1566 = vst.msk [vmem:[#allocation2 + $0xb0] sm:$0x1] %vm281, %v1467
      %1567 = vst.msk [vmem:[#allocation2 + $0xb4] sm:$0xe] %vm1521, %v1468
      %1568 = vst.msk [vmem:[#allocation2 + $0xb8] sm:$0xf] %vm1325, %v1471
      %1569 = vst.msk [vmem:[#allocation2 + $0xbc] sm:$0x1] %vm281, %v1472
      %v1570 = vld [vmem:[#allocation2] sm:$0xf]
      %v1571 = vld [vmem:[#allocation2 + $0x4] sm:$0xf]
      %v1572 = vld [vmem:[#allocation2 + $0xc] sm:$0xf]
      %v1573 = vld [vmem:[#allocation2 + $0x10] sm:$0xf]
      %v1574 = vld [vmem:[#allocation2 + $0x18] sm:$0xf]
      %v1575 = vld [vmem:[#allocation2 + $0x1c] sm:$0xf]
      %v1576 = vld [vmem:[#allocation2 + $0x24] sm:$0xf]
      %v1577 = vld [vmem:[#allocation2 + $0x28] sm:$0xf]
      %v1578 = vld [vmem:[#allocation2 + $0x30] sm:$0xf]
      %v1579 = vld [vmem:[#allocation2 + $0x34] sm:$0xf]
      %v1580 = vld [vmem:[#allocation2 + $0x3c] sm:$0xf]
      %v1581 = vld [vmem:[#allocation2 + $0x40] sm:$0xf]
      %v1582 = vld [vmem:[#allocation2 + $0x48] sm:$0xf]
      %v1583 = vld [vmem:[#allocation2 + $0x4c] sm:$0xf]
      %v1584 = vld [vmem:[#allocation2 + $0x54] sm:$0xf]
      %v1585 = vld [vmem:[#allocation2 + $0x58] sm:$0xf]
      %v1586 = vld [vmem:[#allocation2 + $0x60] sm:$0xf]
      %v1587 = vld [vmem:[#allocation2 + $0x64] sm:$0xf]
      %v1588 = vld [vmem:[#allocation2 + $0x6c] sm:$0xf]
      %v1589 = vld [vmem:[#allocation2 + $0x70] sm:$0xf]
      %v1590 = vld [vmem:[#allocation2 + $0x78] sm:$0xf]
      %v1591 = vld [vmem:[#allocation2 + $0x7c] sm:$0xf]
      %v1592 = vld [vmem:[#allocation2 + $0x84] sm:$0xf]
      %v1593 = vld [vmem:[#allocation2 + $0x88] sm:$0xf]
      %v1594 = vld [vmem:[#allocation2 + $0x90] sm:$0xf]
      %v1595 = vld [vmem:[#allocation2 + $0x94] sm:$0xf]
      %v1596 = vld [vmem:[#allocation2 + $0x9c] sm:$0xf]
      %v1597 = vld [vmem:[#allocation2 + $0xa0] sm:$0xf]
      %v1598 = vld [vmem:[#allocation2 + $0xa8] sm:$0xf]
      %v1599 = vld [vmem:[#allocation2 + $0xac] sm:$0xf]
      %v1600 = vld [vmem:[#allocation2 + $0xb4] sm:$0xf]
      %v1601 = vld [vmem:[#allocation2 + $0xb8] sm:$0xf]
      %v1602 = vld [vmem:[#allocation2 + $0x8] sm:$0x1]
      %v1603 = vld [vmem:[#allocation2 + $0x14] sm:$0x1]
      %v1604 = vld [vmem:[#allocation2 + $0x20] sm:$0x1]
      %v1605 = vld [vmem:[#allocation2 + $0x2c] sm:$0x1]
      %v1606 = vld [vmem:[#allocation2 + $0x38] sm:$0x1]
      %v1607 = vld [vmem:[#allocation2 + $0x44] sm:$0x1]
      %v1608 = vld [vmem:[#allocation2 + $0x50] sm:$0x1]
      %v1609 = vld [vmem:[#allocation2 + $0x5c] sm:$0x1]
      %v1610 = vld [vmem:[#allocation2 + $0x68] sm:$0x1]
      %v1611 = vld [vmem:[#allocation2 + $0x74] sm:$0x1]
      %v1612 = vld [vmem:[#allocation2 + $0x80] sm:$0x1]
      %v1613 = vld [vmem:[#allocation2 + $0x8c] sm:$0x1]
      %v1614 = vld [vmem:[#allocation2 + $0x98] sm:$0x1]
      %v1615 = vld [vmem:[#allocation2 + $0xa4] sm:$0x1]
      %v1616 = vld [vmem:[#allocation2 + $0xb0] sm:$0x1]
      %v1617 = vld [vmem:[#allocation2 + $0xbc] sm:$0x1]
      %v1618 = vunpack.c.l.bf16 %v1570
      %v1619 = vunpack.c.l.bf16 %v1571
      %v1620 = vunpack.c.l.bf16 %v1572
      %v1621 = vunpack.c.l.bf16 %v1573
      %v1622 = vunpack.c.l.bf16 %v1574
      %v1623 = vunpack.c.l.bf16 %v1575
      %v1624 = vunpack.c.l.bf16 %v1576
      %v1625 = vunpack.c.l.bf16 %v1577
      %v1626 = vunpack.c.l.bf16 %v1578
      %v1627 = vunpack.c.l.bf16 %v1579
      %v1628 = vunpack.c.l.bf16 %v1580
      %v1629 = vunpack.c.l.bf16 %v1581
      %v1630 = vunpack.c.l.bf16 %v1582
      %v1631 = vunpack.c.l.bf16 %v1583
      %v1632 = vunpack.c.l.bf16 %v1584
      %v1633 = vunpack.c.l.bf16 %v1585
      %v1634 = vunpack.c.l.bf16 %v1586
      %v1635 = vunpack.c.l.bf16 %v1587
      %v1636 = vunpack.c.l.bf16 %v1588
      %v1637 = vunpack.c.l.bf16 %v1589
      %v1638 = vunpack.c.l.bf16 %v1590
      %v1639 = vunpack.c.l.bf16 %v1591
      %v1640 = vunpack.c.l.bf16 %v1592
      %v1641 = vunpack.c.l.bf16 %v1593
      %v1642 = vunpack.c.l.bf16 %v1594
      %v1643 = vunpack.c.l.bf16 %v1595
      %v1644 = vunpack.c.l.bf16 %v1596
      %v1645 = vunpack.c.l.bf16 %v1597
      %v1646 = vunpack.c.l.bf16 %v1598
      %v1647 = vunpack.c.l.bf16 %v1599
      %v1648 = vunpack.c.l.bf16 %v1600
      %v1649 = vunpack.c.l.bf16 %v1601
      %v1650 = vunpack.c.l.bf16 %v1602
      %v1651 = vunpack.c.l.bf16 %v1603
      %v1652 = vunpack.c.l.bf16 %v1604
      %v1653 = vunpack.c.l.bf16 %v1605
      %v1654 = vunpack.c.l.bf16 %v1606
      %v1655 = vunpack.c.l.bf16 %v1607
      %v1656 = vunpack.c.l.bf16 %v1608
      %v1657 = vunpack.c.l.bf16 %v1609
      %v1658 = vunpack.c.l.bf16 %v1610
      %v1659 = vunpack.c.l.bf16 %v1611
      %v1660 = vunpack.c.l.bf16 %v1612
      %v1661 = vunpack.c.l.bf16 %v1613
      %v1662 = vunpack.c.l.bf16 %v1614
      %v1663 = vunpack.c.l.bf16 %v1615
      %v1664 = vunpack.c.l.bf16 %v1616
      %v1665 = vunpack.c.l.bf16 %v1617
      %vm1714 = vcmask 1046528
      %v1715 = vrot.slane %v1618, 1
      %v1716 = vrot.slane %v1619, 1
      %v1717 = vsel %vm1714, %v1715, %v1716
      %v1718 = vrot.slane %v1650, 1
      %v1719 = vsel %vm1714, %v1716, %v1718
      %v1720 = vrot.slane %v1620, 1
      %v1721 = vrot.slane %v1621, 1
      %v1722 = vsel %vm1714, %v1720, %v1721
      %v1723 = vrot.slane %v1651, 1
      %v1724 = vsel %vm1714, %v1721, %v1723
      %v1725 = vrot.slane %v1622, 1
      %v1726 = vrot.slane %v1623, 1
      %v1727 = vsel %vm1714, %v1725, %v1726
      %v1728 = vrot.slane %v1652, 1
      %v1729 = vsel %vm1714, %v1726, %v1728
      %v1730 = vrot.slane %v1624, 1
      %v1731 = vrot.slane %v1625, 1
      %v1732 = vsel %vm1714, %v1730, %v1731
      %v1733 = vrot.slane %v1653, 1
      %v1734 = vsel %vm1714, %v1731, %v1733
      %v1735 = vrot.slane %v1626, 1
      %v1736 = vrot.slane %v1627, 1
      %v1737 = vsel %vm1714, %v1735, %v1736
      %v1738 = vrot.slane %v1654, 1
      %v1739 = vsel %vm1714, %v1736, %v1738
      %v1740 = vrot.slane %v1628, 1
      %v1741 = vrot.slane %v1629, 1
      %v1742 = vsel %vm1714, %v1740, %v1741
      %v1743 = vrot.slane %v1655, 1
      %v1744 = vsel %vm1714, %v1741, %v1743
      %v1745 = vrot.slane %v1630, 1
      %v1746 = vrot.slane %v1631, 1
      %v1747 = vsel %vm1714, %v1745, %v1746
      %v1748 = vrot.slane %v1656, 1
      %v1749 = vsel %vm1714, %v1746, %v1748
      %v1750 = vrot.slane %v1632, 1
      %v1751 = vrot.slane %v1633, 1
      %v1752 = vsel %vm1714, %v1750, %v1751
      %v1753 = vrot.slane %v1657, 1
      %v1754 = vsel %vm1714, %v1751, %v1753
      %v1755 = vrot.slane %v1634, 1
      %v1756 = vrot.slane %v1635, 1
      %v1757 = vsel %vm1714, %v1755, %v1756
      %v1758 = vrot.slane %v1658, 1
      %v1759 = vsel %vm1714, %v1756, %v1758
      %v1760 = vrot.slane %v1636, 1
      %v1761 = vrot.slane %v1637, 1
      %v1762 = vsel %vm1714, %v1760, %v1761
      %v1763 = vrot.slane %v1659, 1
      %v1764 = vsel %vm1714, %v1761, %v1763
      %v1765 = vrot.slane %v1638, 1
      %v1766 = vrot.slane %v1639, 1
      %v1767 = vsel %vm1714, %v1765, %v1766
      %v1768 = vrot.slane %v1660, 1
      %v1769 = vsel %vm1714, %v1766, %v1768
      %v1770 = vrot.slane %v1640, 1
      %v1771 = vrot.slane %v1641, 1
      %v1772 = vsel %vm1714, %v1770, %v1771
      %v1773 = vrot.slane %v1661, 1
      %v1774 = vsel %vm1714, %v1771, %v1773
      %v1775 = vrot.slane %v1642, 1
      %v1776 = vrot.slane %v1643, 1
      %v1777 = vsel %vm1714, %v1775, %v1776
      %v1778 = vrot.slane %v1662, 1
      %v1779 = vsel %vm1714, %v1776, %v1778
      %v1780 = vrot.slane %v1644, 1
      %v1781 = vrot.slane %v1645, 1
      %v1782 = vsel %vm1714, %v1780, %v1781
      %v1783 = vrot.slane %v1663, 1
      %v1784 = vsel %vm1714, %v1781, %v1783
      %v1785 = vrot.slane %v1646, 1
      %v1786 = vrot.slane %v1647, 1
      %v1787 = vsel %vm1714, %v1785, %v1786
      %v1788 = vrot.slane %v1664, 1
      %v1789 = vsel %vm1714, %v1786, %v1788
      %v1790 = vrot.slane %v1648, 1
      %v1791 = vrot.slane %v1649, 1
      %v1792 = vsel %vm1714, %v1790, %v1791
      %v1793 = vrot.slane %v1665, 1
      %v1794 = vsel %vm1714, %v1791, %v1793
      %v1827 = vmax.f32 %v1618, %v1717
      %v1828 = vmax.f32 %v1619, %v1719
      %v1829 = vmax.f32 %v1620, %v1722
      %v1830 = vmax.f32 %v1621, %v1724
      %v1831 = vmax.f32 %v1622, %v1727
      %v1832 = vmax.f32 %v1623, %v1729
      %v1833 = vmax.f32 %v1624, %v1732
      %v1834 = vmax.f32 %v1625, %v1734
      %v1835 = vmax.f32 %v1626, %v1737
      %v1836 = vmax.f32 %v1627, %v1739
      %v1837 = vmax.f32 %v1628, %v1742
      %v1838 = vmax.f32 %v1629, %v1744
      %v1839 = vmax.f32 %v1630, %v1747
      %v1840 = vmax.f32 %v1631, %v1749
      %v1841 = vmax.f32 %v1632, %v1752
      %v1842 = vmax.f32 %v1633, %v1754
      %v1843 = vmax.f32 %v1634, %v1757
      %v1844 = vmax.f32 %v1635, %v1759
      %v1845 = vmax.f32 %v1636, %v1762
      %v1846 = vmax.f32 %v1637, %v1764
      %v1847 = vmax.f32 %v1638, %v1767
      %v1848 = vmax.f32 %v1639, %v1769
      %v1849 = vmax.f32 %v1640, %v1772
      %v1850 = vmax.f32 %v1641, %v1774
      %v1851 = vmax.f32 %v1642, %v1777
      %v1852 = vmax.f32 %v1643, %v1779
      %v1853 = vmax.f32 %v1644, %v1782
      %v1854 = vmax.f32 %v1645, %v1784
      %v1855 = vmax.f32 %v1646, %v1787
      %v1856 = vmax.f32 %v1647, %v1789
      %v1857 = vmax.f32 %v1648, %v1792
      %v1858 = vmax.f32 %v1649, %v1794
      %v1859 = vpack.c.bf16 %v1827, %v1827
      %v1860 = vpack.c.bf16 %v1828, %v1828
      %v1861 = vpack.c.bf16 %v1829, %v1829
      %v1862 = vpack.c.bf16 %v1830, %v1830
      %v1863 = vpack.c.bf16 %v1831, %v1831
      %v1864 = vpack.c.bf16 %v1832, %v1832
      %v1865 = vpack.c.bf16 %v1833, %v1833
      %v1866 = vpack.c.bf16 %v1834, %v1834
      %v1867 = vpack.c.bf16 %v1835, %v1835
      %v1868 = vpack.c.bf16 %v1836, %v1836
      %v1869 = vpack.c.bf16 %v1837, %v1837
      %v1870 = vpack.c.bf16 %v1838, %v1838
      %v1871 = vpack.c.bf16 %v1839, %v1839
      %v1872 = vpack.c.bf16 %v1840, %v1840
      %v1873 = vpack.c.bf16 %v1841, %v1841
      %v1874 = vpack.c.bf16 %v1842, %v1842
      %v1875 = vpack.c.bf16 %v1843, %v1843
      %v1876 = vpack.c.bf16 %v1844, %v1844
      %v1877 = vpack.c.bf16 %v1845, %v1845
      %v1878 = vpack.c.bf16 %v1846, %v1846
      %v1879 = vpack.c.bf16 %v1847, %v1847
      %v1880 = vpack.c.bf16 %v1848, %v1848
      %v1881 = vpack.c.bf16 %v1849, %v1849
      %v1882 = vpack.c.bf16 %v1850, %v1850
      %v1883 = vpack.c.bf16 %v1851, %v1851
      %v1884 = vpack.c.bf16 %v1852, %v1852
      %v1885 = vpack.c.bf16 %v1853, %v1853
      %v1886 = vpack.c.bf16 %v1854, %v1854
      %v1887 = vpack.c.bf16 %v1855, %v1855
      %v1888 = vpack.c.bf16 %v1856, %v1856
      %v1889 = vpack.c.bf16 %v1857, %v1857
      %v1890 = vpack.c.bf16 %v1858, %v1858
      %v1891 = vld [vmem:[#allocation2] sm:$0xe]
      %v1892 = vld [vmem:[#allocation2 + $0xc] sm:$0xe]
      %v1893 = vld [vmem:[#allocation2 + $0x18] sm:$0xe]
      %v1894 = vld [vmem:[#allocation2 + $0x24] sm:$0xe]
      %v1895 = vld [vmem:[#allocation2 + $0x30] sm:$0xe]
      %v1896 = vld [vmem:[#allocation2 + $0x3c] sm:$0xe]
      %v1897 = vld [vmem:[#allocation2 + $0x48] sm:$0xe]
      %v1898 = vld [vmem:[#allocation2 + $0x54] sm:$0xe]
      %v1899 = vld [vmem:[#allocation2 + $0x60] sm:$0xe]
      %v1900 = vld [vmem:[#allocation2 + $0x6c] sm:$0xe]
      %v1901 = vld [vmem:[#allocation2 + $0x78] sm:$0xe]
      %v1902 = vld [vmem:[#allocation2 + $0x84] sm:$0xe]
      %v1903 = vld [vmem:[#allocation2 + $0x90] sm:$0xe]
      %v1904 = vld [vmem:[#allocation2 + $0x9c] sm:$0xe]
      %v1905 = vld [vmem:[#allocation2 + $0xa8] sm:$0xe]
      %v1906 = vld [vmem:[#allocation2 + $0xb4] sm:$0xe]
      %v1907 = vunpack.c.l.bf16 %v1859
      %v1908 = vunpack.c.l.bf16 %v1860
      %v1909 = vunpack.c.l.bf16 %v1861
      %v1910 = vunpack.c.l.bf16 %v1862
      %v1911 = vunpack.c.l.bf16 %v1863
      %v1912 = vunpack.c.l.bf16 %v1864
      %v1913 = vunpack.c.l.bf16 %v1865
      %v1914 = vunpack.c.l.bf16 %v1866
      %v1915 = vunpack.c.l.bf16 %v1867
      %v1916 = vunpack.c.l.bf16 %v1868
      %v1917 = vunpack.c.l.bf16 %v1869
      %v1918 = vunpack.c.l.bf16 %v1870
      %v1919 = vunpack.c.l.bf16 %v1871
      %v1920 = vunpack.c.l.bf16 %v1872
      %v1921 = vunpack.c.l.bf16 %v1873
      %v1922 = vunpack.c.l.bf16 %v1874
      %v1923 = vunpack.c.l.bf16 %v1875
      %v1924 = vunpack.c.l.bf16 %v1876
      %v1925 = vunpack.c.l.bf16 %v1877
      %v1926 = vunpack.c.l.bf16 %v1878
      %v1927 = vunpack.c.l.bf16 %v1879
      %v1928 = vunpack.c.l.bf16 %v1880
      %v1929 = vunpack.c.l.bf16 %v1881
      %v1930 = vunpack.c.l.bf16 %v1882
      %v1931 = vunpack.c.l.bf16 %v1883
      %v1932 = vunpack.c.l.bf16 %v1884
      %v1933 = vunpack.c.l.bf16 %v1885
      %v1934 = vunpack.c.l.bf16 %v1886
      %v1935 = vunpack.c.l.bf16 %v1887
      %v1936 = vunpack.c.l.bf16 %v1888
      %v1937 = vunpack.c.l.bf16 %v1889
      %v1938 = vunpack.c.l.bf16 %v1890
      %v1939 = vunpack.c.l.bf16 %v1891
      %v1940 = vunpack.c.l.bf16 %v1892
      %v1941 = vunpack.c.l.bf16 %v1893
      %v1942 = vunpack.c.l.bf16 %v1894
      %v1943 = vunpack.c.l.bf16 %v1895
      %v1944 = vunpack.c.l.bf16 %v1896
      %v1945 = vunpack.c.l.bf16 %v1897
      %v1946 = vunpack.c.l.bf16 %v1898
      %v1947 = vunpack.c.l.bf16 %v1899
      %v1948 = vunpack.c.l.bf16 %v1900
      %v1949 = vunpack.c.l.bf16 %v1901
      %v1950 = vunpack.c.l.bf16 %v1902
      %v1951 = vunpack.c.l.bf16 %v1903
      %v1952 = vunpack.c.l.bf16 %v1904
      %v1953 = vunpack.c.l.bf16 %v1905
      %v1954 = vunpack.c.l.bf16 %v1906
      %vm1971 = vcmask 1045504
      %v1972 = vrot.slane %v1939, 2
      %v1973 = vrot.slane %v1619, 2
      %v1974 = vsel %vm1971, %v1972, %v1973
      %v1975 = vrot.slane %v1650, 2
      %v1976 = vsel %vm1971, %v1973, %v1975
      %v1977 = vrot.slane %v1940, 2
      %v1978 = vrot.slane %v1621, 2
      %v1979 = vsel %vm1971, %v1977, %v1978
      %v1980 = vrot.slane %v1651, 2
      %v1981 = vsel %vm1971, %v1978, %v1980
      %v1982 = vrot.slane %v1941, 2
      %v1983 = vrot.slane %v1623, 2
      %v1984 = vsel %vm1971, %v1982, %v1983
      %v1985 = vrot.slane %v1652, 2
      %v1986 = vsel %vm1971, %v1983, %v1985
      %v1987 = vrot.slane %v1942, 2
      %v1988 = vrot.slane %v1625, 2
      %v1989 = vsel %vm1971, %v1987, %v1988
      %v1990 = vrot.slane %v1653, 2
      %v1991 = vsel %vm1971, %v1988, %v1990
      %v1992 = vrot.slane %v1943, 2
      %v1993 = vrot.slane %v1627, 2
      %v1994 = vsel %vm1971, %v1992, %v1993
      %v1995 = vrot.slane %v1654, 2
      %v1996 = vsel %vm1971, %v1993, %v1995
      %v1997 = vrot.slane %v1944, 2
      %v1998 = vrot.slane %v1629, 2
      %v1999 = vsel %vm1971, %v1997, %v1998
      %v2000 = vrot.slane %v1655, 2
      %v2001 = vsel %vm1971, %v1998, %v2000
      %v2002 = vrot.slane %v1945, 2
      %v2003 = vrot.slane %v1631, 2
      %v2004 = vsel %vm1971, %v2002, %v2003
      %v2005 = vrot.slane %v1656, 2
      %v2006 = vsel %vm1971, %v2003, %v2005
      %v2007 = vrot.slane %v1946, 2
      %v2008 = vrot.slane %v1633, 2
      %v2009 = vsel %vm1971, %v2007, %v2008
      %v2010 = vrot.slane %v1657, 2
      %v2011 = vsel %vm1971, %v2008, %v2010
      %v2012 = vrot.slane %v1947, 2
      %v2013 = vrot.slane %v1635, 2
      %v2014 = vsel %vm1971, %v2012, %v2013
      %v2015 = vrot.slane %v1658, 2
      %v2016 = vsel %vm1971, %v2013, %v2015
      %v2017 = vrot.slane %v1948, 2
      %v2018 = vrot.slane %v1637, 2
      %v2019 = vsel %vm1971, %v2017, %v2018
      %v2020 = vrot.slane %v1659, 2
      %v2021 = vsel %vm1971, %v2018, %v2020
      %v2022 = vrot.slane %v1949, 2
      %v2023 = vrot.slane %v1639, 2
      %v2024 = vsel %vm1971, %v2022, %v2023
      %v2025 = vrot.slane %v1660, 2
      %v2026 = vsel %vm1971, %v2023, %v2025
      %v2027 = vrot.slane %v1950, 2
      %v2028 = vrot.slane %v1641, 2
      %v2029 = vsel %vm1971, %v2027, %v2028
      %v2030 = vrot.slane %v1661, 2
      %v2031 = vsel %vm1971, %v2028, %v2030
      %v2032 = vrot.slane %v1951, 2
      %v2033 = vrot.slane %v1643, 2
      %v2034 = vsel %vm1971, %v2032, %v2033
      %v2035 = vrot.slane %v1662, 2
      %v2036 = vsel %vm1971, %v2033, %v2035
      %v2037 = vrot.slane %v1952, 2
      %v2038 = vrot.slane %v1645, 2
      %v2039 = vsel %vm1971, %v2037, %v2038
      %v2040 = vrot.slane %v1663, 2
      %v2041 = vsel %vm1971, %v2038, %v2040
      %v2042 = vrot.slane %v1953, 2
      %v2043 = vrot.slane %v1647, 2
      %v2044 = vsel %vm1971, %v2042, %v2043
      %v2045 = vrot.slane %v1664, 2
      %v2046 = vsel %vm1971, %v2043, %v2045
      %v2047 = vrot.slane %v1954, 2
      %v2048 = vrot.slane %v1649, 2
      %v2049 = vsel %vm1971, %v2047, %v2048
      %v2050 = vrot.slane %v1665, 2
      %v2051 = vsel %vm1971, %v2048, %v2050
      %v2084 = vmax.f32 %v1907, %v1974
      %v2085 = vmax.f32 %v1908, %v1976
      %v2086 = vmax.f32 %v1909, %v1979
      %v2087 = vmax.f32 %v1910, %v1981
      %v2088 = vmax.f32 %v1911, %v1984
      %v2089 = vmax.f32 %v1912, %v1986
      %v2090 = vmax.f32 %v1913, %v1989
      %v2091 = vmax.f32 %v1914, %v1991
      %v2092 = vmax.f32 %v1915, %v1994
      %v2093 = vmax.f32 %v1916, %v1996
      %v2094 = vmax.f32 %v1917, %v1999
      %v2095 = vmax.f32 %v1918, %v2001
      %v2096 = vmax.f32 %v1919, %v2004
      %v2097 = vmax.f32 %v1920, %v2006
      %v2098 = vmax.f32 %v1921, %v2009
      %v2099 = vmax.f32 %v1922, %v2011
      %v2100 = vmax.f32 %v1923, %v2014
      %v2101 = vmax.f32 %v1924, %v2016
      %v2102 = vmax.f32 %v1925, %v2019
      %v2103 = vmax.f32 %v1926, %v2021
      %v2104 = vmax.f32 %v1927, %v2024
      %v2105 = vmax.f32 %v1928, %v2026
      %v2106 = vmax.f32 %v1929, %v2029
      %v2107 = vmax.f32 %v1930, %v2031
      %v2108 = vmax.f32 %v1931, %v2034
      %v2109 = vmax.f32 %v1932, %v2036
      %v2110 = vmax.f32 %v1933, %v2039
      %v2111 = vmax.f32 %v1934, %v2041
      %v2112 = vmax.f32 %v1935, %v2044
      %v2113 = vmax.f32 %v1936, %v2046
      %v2114 = vmax.f32 %v1937, %v2049
      %v2115 = vmax.f32 %v1938, %v2051
      %v2116 = vpack.c.bf16 %v2084, %v2084
      %v2117 = vpack.c.bf16 %v2085, %v2085
      %v2118 = vpack.c.bf16 %v2086, %v2086
      %v2119 = vpack.c.bf16 %v2087, %v2087
      %v2120 = vpack.c.bf16 %v2088, %v2088
      %v2121 = vpack.c.bf16 %v2089, %v2089
      %v2122 = vpack.c.bf16 %v2090, %v2090
      %v2123 = vpack.c.bf16 %v2091, %v2091
      %v2124 = vpack.c.bf16 %v2092, %v2092
      %v2125 = vpack.c.bf16 %v2093, %v2093
      %v2126 = vpack.c.bf16 %v2094, %v2094
      %v2127 = vpack.c.bf16 %v2095, %v2095
      %v2128 = vpack.c.bf16 %v2096, %v2096
      %v2129 = vpack.c.bf16 %v2097, %v2097
      %v2130 = vpack.c.bf16 %v2098, %v2098
      %v2131 = vpack.c.bf16 %v2099, %v2099
      %v2132 = vpack.c.bf16 %v2100, %v2100
      %v2133 = vpack.c.bf16 %v2101, %v2101
      %v2134 = vpack.c.bf16 %v2102, %v2102
      %v2135 = vpack.c.bf16 %v2103, %v2103
      %v2136 = vpack.c.bf16 %v2104, %v2104
      %v2137 = vpack.c.bf16 %v2105, %v2105
      %v2138 = vpack.c.bf16 %v2106, %v2106
      %v2139 = vpack.c.bf16 %v2107, %v2107
      %v2140 = vpack.c.bf16 %v2108, %v2108
      %v2141 = vpack.c.bf16 %v2109, %v2109
      %v2142 = vpack.c.bf16 %v2110, %v2110
      %v2143 = vpack.c.bf16 %v2111, %v2111
      %v2144 = vpack.c.bf16 %v2112, %v2112
      %v2145 = vpack.c.bf16 %v2113, %v2113
      %v2146 = vpack.c.bf16 %v2114, %v2114
      %v2147 = vpack.c.bf16 %v2115, %v2115
      %v2148 = vld [vmem:[#allocation2 + $0x8] sm:$0x3]
      %v2149 = vld [vmem:[#allocation2 + $0x14] sm:$0x3]
      %v2150 = vld [vmem:[#allocation2 + $0x20] sm:$0x3]
      %v2151 = vld [vmem:[#allocation2 + $0x2c] sm:$0x3]
      %v2152 = vld [vmem:[#allocation2 + $0x38] sm:$0x3]
      %v2153 = vld [vmem:[#allocation2 + $0x44] sm:$0x3]
      %v2154 = vld [vmem:[#allocation2 + $0x50] sm:$0x3]
      %v2155 = vld [vmem:[#allocation2 + $0x5c] sm:$0x3]
      %v2156 = vld [vmem:[#allocation2 + $0x68] sm:$0x3]
      %v2157 = vld [vmem:[#allocation2 + $0x74] sm:$0x3]
      %v2158 = vld [vmem:[#allocation2 + $0x80] sm:$0x3]
      %v2159 = vld [vmem:[#allocation2 + $0x8c] sm:$0x3]
      %v2160 = vld [vmem:[#allocation2 + $0x98] sm:$0x3]
      %v2161 = vld [vmem:[#allocation2 + $0xa4] sm:$0x3]
      %v2162 = vld [vmem:[#allocation2 + $0xb0] sm:$0x3]
      %v2163 = vld [vmem:[#allocation2 + $0xbc] sm:$0x3]
      %v2164 = vunpack.c.l.bf16 %v2116
      %v2165 = vunpack.c.l.bf16 %v2117
      %v2166 = vunpack.c.l.bf16 %v2118
      %v2167 = vunpack.c.l.bf16 %v2119
      %v2168 = vunpack.c.l.bf16 %v2120
      %v2169 = vunpack.c.l.bf16 %v2121
      %v2170 = vunpack.c.l.bf16 %v2122
      %v2171 = vunpack.c.l.bf16 %v2123
      %v2172 = vunpack.c.l.bf16 %v2124
      %v2173 = vunpack.c.l.bf16 %v2125
      %v2174 = vunpack.c.l.bf16 %v2126
      %v2175 = vunpack.c.l.bf16 %v2127
      %v2176 = vunpack.c.l.bf16 %v2128
      %v2177 = vunpack.c.l.bf16 %v2129
      %v2178 = vunpack.c.l.bf16 %v2130
      %v2179 = vunpack.c.l.bf16 %v2131
      %v2180 = vunpack.c.l.bf16 %v2132
      %v2181 = vunpack.c.l.bf16 %v2133
      %v2182 = vunpack.c.l.bf16 %v2134
      %v2183 = vunpack.c.l.bf16 %v2135
      %v2184 = vunpack.c.l.bf16 %v2136
      %v2185 = vunpack.c.l.bf16 %v2137
      %v2186 = vunpack.c.l.bf16 %v2138
      %v2187 = vunpack.c.l.bf16 %v2139
      %v2188 = vunpack.c.l.bf16 %v2140
      %v2189 = vunpack.c.l.bf16 %v2141
      %v2190 = vunpack.c.l.bf16 %v2142
      %v2191 = vunpack.c.l.bf16 %v2143
      %v2192 = vunpack.c.l.bf16 %v2144
      %v2193 = vunpack.c.l.bf16 %v2145
      %v2194 = vunpack.c.l.bf16 %v2146
      %v2195 = vunpack.c.l.bf16 %v2147
      %v2196 = vunpack.c.l.bf16 %v2148
      %v2197 = vunpack.c.l.bf16 %v2149
      %v2198 = vunpack.c.l.bf16 %v2150
      %v2199 = vunpack.c.l.bf16 %v2151
      %v2200 = vunpack.c.l.bf16 %v2152
      %v2201 = vunpack.c.l.bf16 %v2153
      %v2202 = vunpack.c.l.bf16 %v2154
      %v2203 = vunpack.c.l.bf16 %v2155
      %v2204 = vunpack.c.l.bf16 %v2156
      %v2205 = vunpack.c.l.bf16 %v2157
      %v2206 = vunpack.c.l.bf16 %v2158
      %v2207 = vunpack.c.l.bf16 %v2159
      %v2208 = vunpack.c.l.bf16 %v2160
      %v2209 = vunpack.c.l.bf16 %v2161
      %v2210 = vunpack.c.l.bf16 %v2162
      %v2211 = vunpack.c.l.bf16 %v2163
      %vm2228 = vcmask 1044480
      %v2229 = vrot.slane %v1939, 3
      %v2230 = vrot.slane %v1619, 3
      %v2231 = vsel %vm2228, %v2229, %v2230
      %v2232 = vrot.slane %v2196, 3
      %v2233 = vsel %vm2228, %v2230, %v2232
      %v2234 = vrot.slane %v1940, 3
      %v2235 = vrot.slane %v1621, 3
      %v2236 = vsel %vm2228, %v2234, %v2235
      %v2237 = vrot.slane %v2197, 3
      %v2238 = vsel %vm2228, %v2235, %v2237
      %v2239 = vrot.slane %v1941, 3
      %v2240 = vrot.slane %v1623, 3
      %v2241 = vsel %vm2228, %v2239, %v2240
      %v2242 = vrot.slane %v2198, 3
      %v2243 = vsel %vm2228, %v2240, %v2242
      %v2244 = vrot.slane %v1942, 3
      %v2245 = vrot.slane %v1625, 3
      %v2246 = vsel %vm2228, %v2244, %v2245
      %v2247 = vrot.slane %v2199, 3
      %v2248 = vsel %vm2228, %v2245, %v2247
      %v2249 = vrot.slane %v1943, 3
      %v2250 = vrot.slane %v1627, 3
      %v2251 = vsel %vm2228, %v2249, %v2250
      %v2252 = vrot.slane %v2200, 3
      %v2253 = vsel %vm2228, %v2250, %v2252
      %v2254 = vrot.slane %v1944, 3
      %v2255 = vrot.slane %v1629, 3
      %v2256 = vsel %vm2228, %v2254, %v2255
      %v2257 = vrot.slane %v2201, 3
      %v2258 = vsel %vm2228, %v2255, %v2257
      %v2259 = vrot.slane %v1945, 3
      %v2260 = vrot.slane %v1631, 3
      %v2261 = vsel %vm2228, %v2259, %v2260
      %v2262 = vrot.slane %v2202, 3
      %v2263 = vsel %vm2228, %v2260, %v2262
      %v2264 = vrot.slane %v1946, 3
      %v2265 = vrot.slane %v1633, 3
      %v2266 = vsel %vm2228, %v2264, %v2265
      %v2267 = vrot.slane %v2203, 3
      %v2268 = vsel %vm2228, %v2265, %v2267
      %v2269 = vrot.slane %v1947, 3
      %v2270 = vrot.slane %v1635, 3
      %v2271 = vsel %vm2228, %v2269, %v2270
      %v2272 = vrot.slane %v2204, 3
      %v2273 = vsel %vm2228, %v2270, %v2272
      %v2274 = vrot.slane %v1948, 3
      %v2275 = vrot.slane %v1637, 3
      %v2276 = vsel %vm2228, %v2274, %v2275
      %v2277 = vrot.slane %v2205, 3
      %v2278 = vsel %vm2228, %v2275, %v2277
      %v2279 = vrot.slane %v1949, 3
      %v2280 = vrot.slane %v1639, 3
      %v2281 = vsel %vm2228, %v2279, %v2280
      %v2282 = vrot.slane %v2206, 3
      %v2283 = vsel %vm2228, %v2280, %v2282
      %v2284 = vrot.slane %v1950, 3
      %v2285 = vrot.slane %v1641, 3
      %v2286 = vsel %vm2228, %v2284, %v2285
      %v2287 = vrot.slane %v2207, 3
      %v2288 = vsel %vm2228, %v2285, %v2287
      %v2289 = vrot.slane %v1951, 3
      %v2290 = vrot.slane %v1643, 3
      %v2291 = vsel %vm2228, %v2289, %v2290
      %v2292 = vrot.slane %v2208, 3
      %v2293 = vsel %vm2228, %v2290, %v2292
      %v2294 = vrot.slane %v1952, 3
      %v2295 = vrot.slane %v1645, 3
      %v2296 = vsel %vm2228, %v2294, %v2295
      %v2297 = vrot.slane %v2209, 3
      %v2298 = vsel %vm2228, %v2295, %v2297
      %v2299 = vrot.slane %v1953, 3
      %v2300 = vrot.slane %v1647, 3
      %v2301 = vsel %vm2228, %v2299, %v2300
      %v2302 = vrot.slane %v2210, 3
      %v2303 = vsel %vm2228, %v2300, %v2302
      %v2304 = vrot.slane %v1954, 3
      %v2305 = vrot.slane %v1649, 3
      %v2306 = vsel %vm2228, %v2304, %v2305
      %v2307 = vrot.slane %v2211, 3
      %v2308 = vsel %vm2228, %v2305, %v2307
      %v2341 = vmax.f32 %v2164, %v2231
      %v2342 = vmax.f32 %v2165, %v2233
      %v2343 = vmax.f32 %v2166, %v2236
      %v2344 = vmax.f32 %v2167, %v2238
      %v2345 = vmax.f32 %v2168, %v2241
      %v2346 = vmax.f32 %v2169, %v2243
      %v2347 = vmax.f32 %v2170, %v2246
      %v2348 = vmax.f32 %v2171, %v2248
      %v2349 = vmax.f32 %v2172, %v2251
      %v2350 = vmax.f32 %v2173, %v2253
      %v2351 = vmax.f32 %v2174, %v2256
      %v2352 = vmax.f32 %v2175, %v2258
      %v2353 = vmax.f32 %v2176, %v2261
      %v2354 = vmax.f32 %v2177, %v2263
      %v2355 = vmax.f32 %v2178, %v2266
      %v2356 = vmax.f32 %v2179, %v2268
      %v2357 = vmax.f32 %v2180, %v2271
      %v2358 = vmax.f32 %v2181, %v2273
      %v2359 = vmax.f32 %v2182, %v2276
      %v2360 = vmax.f32 %v2183, %v2278
      %v2361 = vmax.f32 %v2184, %v2281
      %v2362 = vmax.f32 %v2185, %v2283
      %v2363 = vmax.f32 %v2186, %v2286
      %v2364 = vmax.f32 %v2187, %v2288
      %v2365 = vmax.f32 %v2188, %v2291
      %v2366 = vmax.f32 %v2189, %v2293
      %v2367 = vmax.f32 %v2190, %v2296
      %v2368 = vmax.f32 %v2191, %v2298
      %v2369 = vmax.f32 %v2192, %v2301
      %v2370 = vmax.f32 %v2193, %v2303
      %v2371 = vmax.f32 %v2194, %v2306
      %v2372 = vmax.f32 %v2195, %v2308
      %v2373 = vpack.c.bf16 %v2341, %v2341
      %v2374 = vpack.c.bf16 %v2342, %v2342
      %v2375 = vpack.c.bf16 %v2343, %v2343
      %v2376 = vpack.c.bf16 %v2344, %v2344
      %v2377 = vpack.c.bf16 %v2345, %v2345
      %v2378 = vpack.c.bf16 %v2346, %v2346
      %v2379 = vpack.c.bf16 %v2347, %v2347
      %v2380 = vpack.c.bf16 %v2348, %v2348
      %v2381 = vpack.c.bf16 %v2349, %v2349
      %v2382 = vpack.c.bf16 %v2350, %v2350
      %v2383 = vpack.c.bf16 %v2351, %v2351
      %v2384 = vpack.c.bf16 %v2352, %v2352
      %v2385 = vpack.c.bf16 %v2353, %v2353
      %v2386 = vpack.c.bf16 %v2354, %v2354
      %v2387 = vpack.c.bf16 %v2355, %v2355
      %v2388 = vpack.c.bf16 %v2356, %v2356
      %v2389 = vpack.c.bf16 %v2357, %v2357
      %v2390 = vpack.c.bf16 %v2358, %v2358
      %v2391 = vpack.c.bf16 %v2359, %v2359
      %v2392 = vpack.c.bf16 %v2360, %v2360
      %v2393 = vpack.c.bf16 %v2361, %v2361
      %v2394 = vpack.c.bf16 %v2362, %v2362
      %v2395 = vpack.c.bf16 %v2363, %v2363
      %v2396 = vpack.c.bf16 %v2364, %v2364
      %v2397 = vpack.c.bf16 %v2365, %v2365
      %v2398 = vpack.c.bf16 %v2366, %v2366
      %v2399 = vpack.c.bf16 %v2367, %v2367
      %v2400 = vpack.c.bf16 %v2368, %v2368
      %v2401 = vpack.c.bf16 %v2369, %v2369
      %v2402 = vpack.c.bf16 %v2370, %v2370
      %v2403 = vpack.c.bf16 %v2371, %v2371
      %v2404 = vpack.c.bf16 %v2372, %v2372
      %v2405 = vld [vmem:[#allocation2] sm:$0xc]
      %v2406 = vld [vmem:[#allocation2 + $0xc] sm:$0xc]
      %v2407 = vld [vmem:[#allocation2 + $0x18] sm:$0xc]
      %v2408 = vld [vmem:[#allocation2 + $0x24] sm:$0xc]
      %v2409 = vld [vmem:[#allocation2 + $0x30] sm:$0xc]
      %v2410 = vld [vmem:[#allocation2 + $0x3c] sm:$0xc]
      %v2411 = vld [vmem:[#allocation2 + $0x48] sm:$0xc]
      %v2412 = vld [vmem:[#allocation2 + $0x54] sm:$0xc]
      %v2413 = vld [vmem:[#allocation2 + $0x60] sm:$0xc]
      %v2414 = vld [vmem:[#allocation2 + $0x6c] sm:$0xc]
      %v2415 = vld [vmem:[#allocation2 + $0x78] sm:$0xc]
      %v2416 = vld [vmem:[#allocation2 + $0x84] sm:$0xc]
      %v2417 = vld [vmem:[#allocation2 + $0x90] sm:$0xc]
      %v2418 = vld [vmem:[#allocation2 + $0x9c] sm:$0xc]
      %v2419 = vld [vmem:[#allocation2 + $0xa8] sm:$0xc]
      %v2420 = vld [vmem:[#allocation2 + $0xb4] sm:$0xc]
      %v2421 = vunpack.c.l.bf16 %v2373
      %v2422 = vunpack.c.l.bf16 %v2374
      %v2423 = vunpack.c.l.bf16 %v2375
      %v2424 = vunpack.c.l.bf16 %v2376
      %v2425 = vunpack.c.l.bf16 %v2377
      %v2426 = vunpack.c.l.bf16 %v2378
      %v2427 = vunpack.c.l.bf16 %v2379
      %v2428 = vunpack.c.l.bf16 %v2380
      %v2429 = vunpack.c.l.bf16 %v2381
      %v2430 = vunpack.c.l.bf16 %v2382
      %v2431 = vunpack.c.l.bf16 %v2383
      %v2432 = vunpack.c.l.bf16 %v2384
      %v2433 = vunpack.c.l.bf16 %v2385
      %v2434 = vunpack.c.l.bf16 %v2386
      %v2435 = vunpack.c.l.bf16 %v2387
      %v2436 = vunpack.c.l.bf16 %v2388
      %v2437 = vunpack.c.l.bf16 %v2389
      %v2438 = vunpack.c.l.bf16 %v2390
      %v2439 = vunpack.c.l.bf16 %v2391
      %v2440 = vunpack.c.l.bf16 %v2392
      %v2441 = vunpack.c.l.bf16 %v2393
      %v2442 = vunpack.c.l.bf16 %v2394
      %v2443 = vunpack.c.l.bf16 %v2395
      %v2444 = vunpack.c.l.bf16 %v2396
      %v2445 = vunpack.c.l.bf16 %v2397
      %v2446 = vunpack.c.l.bf16 %v2398
      %v2447 = vunpack.c.l.bf16 %v2399
      %v2448 = vunpack.c.l.bf16 %v2400
      %v2449 = vunpack.c.l.bf16 %v2401
      %v2450 = vunpack.c.l.bf16 %v2402
      %v2451 = vunpack.c.l.bf16 %v2403
      %v2452 = vunpack.c.l.bf16 %v2404
      %v2453 = vunpack.c.l.bf16 %v2405
      %v2454 = vunpack.c.l.bf16 %v2406
      %v2455 = vunpack.c.l.bf16 %v2407
      %v2456 = vunpack.c.l.bf16 %v2408
      %v2457 = vunpack.c.l.bf16 %v2409
      %v2458 = vunpack.c.l.bf16 %v2410
      %v2459 = vunpack.c.l.bf16 %v2411
      %v2460 = vunpack.c.l.bf16 %v2412
      %v2461 = vunpack.c.l.bf16 %v2413
      %v2462 = vunpack.c.l.bf16 %v2414
      %v2463 = vunpack.c.l.bf16 %v2415
      %v2464 = vunpack.c.l.bf16 %v2416
      %v2465 = vunpack.c.l.bf16 %v2417
      %v2466 = vunpack.c.l.bf16 %v2418
      %v2467 = vunpack.c.l.bf16 %v2419
      %v2468 = vunpack.c.l.bf16 %v2420
      %vm2485 = vcmask 1043456
      %v2486 = vrot.slane %v2453, 4
      %v2487 = vrot.slane %v1619, 4
      %v2488 = vsel %vm2485, %v2486, %v2487
      %v2489 = vrot.slane %v2196, 4
      %v2490 = vsel %vm2485, %v2487, %v2489
      %v2491 = vrot.slane %v2454, 4
      %v2492 = vrot.slane %v1621, 4
      %v2493 = vsel %vm2485, %v2491, %v2492
      %v2494 = vrot.slane %v2197, 4
      %v2495 = vsel %vm2485, %v2492, %v2494
      %v2496 = vrot.slane %v2455, 4
      %v2497 = vrot.slane %v1623, 4
      %v2498 = vsel %vm2485, %v2496, %v2497
      %v2499 = vrot.slane %v2198, 4
      %v2500 = vsel %vm2485, %v2497, %v2499
      %v2501 = vrot.slane %v2456, 4
      %v2502 = vrot.slane %v1625, 4
      %v2503 = vsel %vm2485, %v2501, %v2502
      %v2504 = vrot.slane %v2199, 4
      %v2505 = vsel %vm2485, %v2502, %v2504
      %v2506 = vrot.slane %v2457, 4
      %v2507 = vrot.slane %v1627, 4
      %v2508 = vsel %vm2485, %v2506, %v2507
      %v2509 = vrot.slane %v2200, 4
      %v2510 = vsel %vm2485, %v2507, %v2509
      %v2511 = vrot.slane %v2458, 4
      %v2512 = vrot.slane %v1629, 4
      %v2513 = vsel %vm2485, %v2511, %v2512
      %v2514 = vrot.slane %v2201, 4
      %v2515 = vsel %vm2485, %v2512, %v2514
      %v2516 = vrot.slane %v2459, 4
      %v2517 = vrot.slane %v1631, 4
      %v2518 = vsel %vm2485, %v2516, %v2517
      %v2519 = vrot.slane %v2202, 4
      %v2520 = vsel %vm2485, %v2517, %v2519
      %v2521 = vrot.slane %v2460, 4
      %v2522 = vrot.slane %v1633, 4
      %v2523 = vsel %vm2485, %v2521, %v2522
      %v2524 = vrot.slane %v2203, 4
      %v2525 = vsel %vm2485, %v2522, %v2524
      %v2526 = vrot.slane %v2461, 4
      %v2527 = vrot.slane %v1635, 4
      %v2528 = vsel %vm2485, %v2526, %v2527
      %v2529 = vrot.slane %v2204, 4
      %v2530 = vsel %vm2485, %v2527, %v2529
      %v2531 = vrot.slane %v2462, 4
      %v2532 = vrot.slane %v1637, 4
      %v2533 = vsel %vm2485, %v2531, %v2532
      %v2534 = vrot.slane %v2205, 4
      %v2535 = vsel %vm2485, %v2532, %v2534
      %v2536 = vrot.slane %v2463, 4
      %v2537 = vrot.slane %v1639, 4
      %v2538 = vsel %vm2485, %v2536, %v2537
      %v2539 = vrot.slane %v2206, 4
      %v2540 = vsel %vm2485, %v2537, %v2539
      %v2541 = vrot.slane %v2464, 4
      %v2542 = vrot.slane %v1641, 4
      %v2543 = vsel %vm2485, %v2541, %v2542
      %v2544 = vrot.slane %v2207, 4
      %v2545 = vsel %vm2485, %v2542, %v2544
      %v2546 = vrot.slane %v2465, 4
      %v2547 = vrot.slane %v1643, 4
      %v2548 = vsel %vm2485, %v2546, %v2547
      %v2549 = vrot.slane %v2208, 4
      %v2550 = vsel %vm2485, %v2547, %v2549
      %v2551 = vrot.slane %v2466, 4
      %v2552 = vrot.slane %v1645, 4
      %v2553 = vsel %vm2485, %v2551, %v2552
      %v2554 = vrot.slane %v2209, 4
      %v2555 = vsel %vm2485, %v2552, %v2554
      %v2556 = vrot.slane %v2467, 4
      %v2557 = vrot.slane %v1647, 4
      %v2558 = vsel %vm2485, %v2556, %v2557
      %v2559 = vrot.slane %v2210, 4
      %v2560 = vsel %vm2485, %v2557, %v2559
      %v2561 = vrot.slane %v2468, 4
      %v2562 = vrot.slane %v1649, 4
      %v2563 = vsel %vm2485, %v2561, %v2562
      %v2564 = vrot.slane %v2211, 4
      %v2565 = vsel %vm2485, %v2562, %v2564
      %v2598 = vmax.f32 %v2421, %v2488
      %v2599 = vmax.f32 %v2422, %v2490
      %v2600 = vmax.f32 %v2423, %v2493
      %v2601 = vmax.f32 %v2424, %v2495
      %v2602 = vmax.f32 %v2425, %v2498
      %v2603 = vmax.f32 %v2426, %v2500
      %v2604 = vmax.f32 %v2427, %v2503
      %v2605 = vmax.f32 %v2428, %v2505
      %v2606 = vmax.f32 %v2429, %v2508
      %v2607 = vmax.f32 %v2430, %v2510
      %v2608 = vmax.f32 %v2431, %v2513
      %v2609 = vmax.f32 %v2432, %v2515
      %v2610 = vmax.f32 %v2433, %v2518
      %v2611 = vmax.f32 %v2434, %v2520
      %v2612 = vmax.f32 %v2435, %v2523
      %v2613 = vmax.f32 %v2436, %v2525
      %v2614 = vmax.f32 %v2437, %v2528
      %v2615 = vmax.f32 %v2438, %v2530
      %v2616 = vmax.f32 %v2439, %v2533
      %v2617 = vmax.f32 %v2440, %v2535
      %v2618 = vmax.f32 %v2441, %v2538
      %v2619 = vmax.f32 %v2442, %v2540
      %v2620 = vmax.f32 %v2443, %v2543
      %v2621 = vmax.f32 %v2444, %v2545
      %v2622 = vmax.f32 %v2445, %v2548
      %v2623 = vmax.f32 %v2446, %v2550
      %v2624 = vmax.f32 %v2447, %v2553
      %v2625 = vmax.f32 %v2448, %v2555
      %v2626 = vmax.f32 %v2449, %v2558
      %v2627 = vmax.f32 %v2450, %v2560
      %v2628 = vmax.f32 %v2451, %v2563
      %v2629 = vmax.f32 %v2452, %v2565
      %v2630 = vpack.c.bf16 %v2598, %v2598
      %v2631 = vpack.c.bf16 %v2599, %v2599
      %v2632 = vpack.c.bf16 %v2600, %v2600
      %v2633 = vpack.c.bf16 %v2601, %v2601
      %v2634 = vpack.c.bf16 %v2602, %v2602
      %v2635 = vpack.c.bf16 %v2603, %v2603
      %v2636 = vpack.c.bf16 %v2604, %v2604
      %v2637 = vpack.c.bf16 %v2605, %v2605
      %v2638 = vpack.c.bf16 %v2606, %v2606
      %v2639 = vpack.c.bf16 %v2607, %v2607
      %v2640 = vpack.c.bf16 %v2608, %v2608
      %v2641 = vpack.c.bf16 %v2609, %v2609
      %v2642 = vpack.c.bf16 %v2610, %v2610
      %v2643 = vpack.c.bf16 %v2611, %v2611
      %v2644 = vpack.c.bf16 %v2612, %v2612
      %v2645 = vpack.c.bf16 %v2613, %v2613
      %v2646 = vpack.c.bf16 %v2614, %v2614
      %v2647 = vpack.c.bf16 %v2615, %v2615
      %v2648 = vpack.c.bf16 %v2616, %v2616
      %v2649 = vpack.c.bf16 %v2617, %v2617
      %v2650 = vpack.c.bf16 %v2618, %v2618
      %v2651 = vpack.c.bf16 %v2619, %v2619
      %v2652 = vpack.c.bf16 %v2620, %v2620
      %v2653 = vpack.c.bf16 %v2621, %v2621
      %v2654 = vpack.c.bf16 %v2622, %v2622
      %v2655 = vpack.c.bf16 %v2623, %v2623
      %v2656 = vpack.c.bf16 %v2624, %v2624
      %v2657 = vpack.c.bf16 %v2625, %v2625
      %v2658 = vpack.c.bf16 %v2626, %v2626
      %v2659 = vpack.c.bf16 %v2627, %v2627
      %v2660 = vpack.c.bf16 %v2628, %v2628
      %v2661 = vpack.c.bf16 %v2629, %v2629
      %v2694 = vunpack.c.l.b16 %v2630
      %v2695 = vunpack.c.l.b16 %v2631
      %v2696 = vunpack.c.l.b16 %v2632
      %v2697 = vunpack.c.l.b16 %v2633
      %v2698 = vunpack.c.l.b16 %v2634
      %v2699 = vunpack.c.l.b16 %v2635
      %v2700 = vunpack.c.l.b16 %v2636
      %v2701 = vunpack.c.l.b16 %v2637
      %v2702 = vunpack.c.l.b16 %v2638
      %v2703 = vunpack.c.l.b16 %v2639
      %v2704 = vunpack.c.l.b16 %v2640
      %v2705 = vunpack.c.l.b16 %v2641
      %v2706 = vunpack.c.l.b16 %v2642
      %v2707 = vunpack.c.l.b16 %v2643
      %v2708 = vunpack.c.l.b16 %v2644
      %v2709 = vunpack.c.l.b16 %v2645
      %v2710 = vunpack.c.l.b16 %v2646
      %v2711 = vunpack.c.l.b16 %v2647
      %v2712 = vunpack.c.l.b16 %v2648
      %v2713 = vunpack.c.l.b16 %v2649
      %v2714 = vunpack.c.l.b16 %v2650
      %v2715 = vunpack.c.l.b16 %v2651
      %v2716 = vunpack.c.l.b16 %v2652
      %v2717 = vunpack.c.l.b16 %v2653
      %v2718 = vunpack.c.l.b16 %v2654
      %v2719 = vunpack.c.l.b16 %v2655
      %v2720 = vunpack.c.l.b16 %v2656
      %v2721 = vunpack.c.l.b16 %v2657
      %v2722 = vunpack.c.l.b16 %v2658
      %v2723 = vunpack.c.l.b16 %v2659
      %v2724 = vunpack.c.l.b16 %v2660
      %v2725 = vunpack.c.l.b16 %v2661
      %v2726 = vpack.c.b16 %v2695, %v2694
      %v2727 = vpack.c.b16 %v2697, %v2696
      %v2728 = vpack.c.b16 %v2699, %v2698
      %v2729 = vpack.c.b16 %v2701, %v2700
      %v2730 = vpack.c.b16 %v2703, %v2702
      %v2731 = vpack.c.b16 %v2705, %v2704
      %v2732 = vpack.c.b16 %v2707, %v2706
      %v2733 = vpack.c.b16 %v2709, %v2708
      %v2734 = vpack.c.b16 %v2711, %v2710
      %v2735 = vpack.c.b16 %v2713, %v2712
      %v2736 = vpack.c.b16 %v2715, %v2714
      %v2737 = vpack.c.b16 %v2717, %v2716
      %v2738 = vpack.c.b16 %v2719, %v2718
      %v2739 = vpack.c.b16 %v2721, %v2720
      %v2740 = vpack.c.b16 %v2723, %v2722
      %v2741 = vpack.c.b16 %v2725, %v2724
      %v2758 = vunpack.c.l.bf16 4048220490
      %v2759 = vunpack.c.h.bf16 4048220490
      %v2760 = vunpack.c.l.bf16 %v2726
      %v2761 = vunpack.c.h.bf16 %v2726
      %v2762 = vunpack.c.l.bf16 %v2727
      %v2763 = vunpack.c.h.bf16 %v2727
      %v2764 = vunpack.c.l.bf16 %v2728
      %v2765 = vunpack.c.h.bf16 %v2728
      %v2766 = vunpack.c.l.bf16 %v2729
      %v2767 = vunpack.c.h.bf16 %v2729
      %v2768 = vunpack.c.l.bf16 %v2730
      %v2769 = vunpack.c.h.bf16 %v2730
      %v2770 = vunpack.c.l.bf16 %v2731
      %v2771 = vunpack.c.h.bf16 %v2731
      %v2772 = vunpack.c.l.bf16 %v2732
      %v2773 = vunpack.c.h.bf16 %v2732
      %v2774 = vunpack.c.l.bf16 %v2733
      %v2775 = vunpack.c.h.bf16 %v2733
      %v2776 = vunpack.c.l.bf16 %v2734
      %v2777 = vunpack.c.h.bf16 %v2734
      %v2778 = vunpack.c.l.bf16 %v2735
      %v2779 = vunpack.c.h.bf16 %v2735
      %v2780 = vunpack.c.l.bf16 %v2736
      %v2781 = vunpack.c.h.bf16 %v2736
      %v2782 = vunpack.c.l.bf16 %v2737
      %v2783 = vunpack.c.h.bf16 %v2737
      %v2784 = vunpack.c.l.bf16 %v2738
      %v2785 = vunpack.c.h.bf16 %v2738
      %v2786 = vunpack.c.l.bf16 %v2739
      %v2787 = vunpack.c.h.bf16 %v2739
      %v2788 = vunpack.c.l.bf16 %v2740
      %v2789 = vunpack.c.h.bf16 %v2740
      %v2790 = vmax.f32 %v2758, %v2760
      %v2791 = vmax.f32 %v2759, %v2761
      %v2792 = vmax.f32 %v2760, %v2762
      %v2793 = vmax.f32 %v2761, %v2763
      %v2794 = vmax.f32 %v2762, %v2764
      %v2795 = vmax.f32 %v2763, %v2765
      %v2796 = vmax.f32 %v2764, %v2766
      %v2797 = vmax.f32 %v2765, %v2767
      %v2798 = vmax.f32 %v2766, %v2768
      %v2799 = vmax.f32 %v2767, %v2769
      %v2800 = vmax.f32 %v2768, %v2770
      %v2801 = vmax.f32 %v2769, %v2771
      %v2802 = vmax.f32 %v2770, %v2772
      %v2803 = vmax.f32 %v2771, %v2773
      %v2804 = vmax.f32 %v2772, %v2774
      %v2805 = vmax.f32 %v2773, %v2775
      %v2806 = vmax.f32 %v2774, %v2776
      %v2807 = vmax.f32 %v2775, %v2777
      %v2808 = vmax.f32 %v2776, %v2778
      %v2809 = vmax.f32 %v2777, %v2779
      %v2810 = vmax.f32 %v2778, %v2780
      %v2811 = vmax.f32 %v2779, %v2781
      %v2812 = vmax.f32 %v2780, %v2782
      %v2813 = vmax.f32 %v2781, %v2783
      %v2814 = vmax.f32 %v2782, %v2784
      %v2815 = vmax.f32 %v2783, %v2785
      %v2816 = vmax.f32 %v2784, %v2786
      %v2817 = vmax.f32 %v2785, %v2787
      %v2818 = vmax.f32 %v2786, %v2788
      %v2819 = vmax.f32 %v2787, %v2789
      %v2820 = vpack.c.bf16 %v2758, %v2758
      %v2821 = vpack.c.bf16 %v2759, %v2759
      %v2822 = vpack.c.bf16 %v2790, %v2790
      %v2823 = vpack.c.bf16 %v2791, %v2791
      %v2824 = vpack.c.bf16 %v2792, %v2792
      %v2825 = vpack.c.bf16 %v2793, %v2793
      %v2826 = vpack.c.bf16 %v2794, %v2794
      %v2827 = vpack.c.bf16 %v2795, %v2795
      %v2828 = vpack.c.bf16 %v2796, %v2796
      %v2829 = vpack.c.bf16 %v2797, %v2797
      %v2830 = vpack.c.bf16 %v2798, %v2798
      %v2831 = vpack.c.bf16 %v2799, %v2799
      %v2832 = vpack.c.bf16 %v2800, %v2800
      %v2833 = vpack.c.bf16 %v2801, %v2801
      %v2834 = vpack.c.bf16 %v2802, %v2802
      %v2835 = vpack.c.bf16 %v2803, %v2803
      %v2836 = vpack.c.bf16 %v2804, %v2804
      %v2837 = vpack.c.bf16 %v2805, %v2805
      %v2838 = vpack.c.bf16 %v2806, %v2806
      %v2839 = vpack.c.bf16 %v2807, %v2807
      %v2840 = vpack.c.bf16 %v2808, %v2808
      %v2841 = vpack.c.bf16 %v2809, %v2809
      %v2842 = vpack.c.bf16 %v2810, %v2810
      %v2843 = vpack.c.bf16 %v2811, %v2811
      %v2844 = vpack.c.bf16 %v2812, %v2812
      %v2845 = vpack.c.bf16 %v2813, %v2813
      %v2846 = vpack.c.bf16 %v2814, %v2814
      %v2847 = vpack.c.bf16 %v2815, %v2815
      %v2848 = vpack.c.bf16 %v2816, %v2816
      %v2849 = vpack.c.bf16 %v2817, %v2817
      %v2850 = vpack.c.bf16 %v2818, %v2818
      %v2851 = vpack.c.bf16 %v2819, %v2819
      %v2852 = vunpack.c.l.bf16 %v2820
      %v2853 = vunpack.c.l.bf16 %v2821
      %v2854 = vunpack.c.l.bf16 %v2822
      %v2855 = vunpack.c.l.bf16 %v2823
      %v2856 = vunpack.c.l.bf16 %v2824
      %v2857 = vunpack.c.l.bf16 %v2825
      %v2858 = vunpack.c.l.bf16 %v2826
      %v2859 = vunpack.c.l.bf16 %v2827
      %v2860 = vunpack.c.l.bf16 %v2828
      %v2861 = vunpack.c.l.bf16 %v2829
      %v2862 = vunpack.c.l.bf16 %v2830
      %v2863 = vunpack.c.l.bf16 %v2831
      %v2864 = vunpack.c.l.bf16 %v2832
      %v2865 = vunpack.c.l.bf16 %v2833
      %v2866 = vunpack.c.l.bf16 %v2834
      %v2867 = vunpack.c.l.bf16 %v2835
      %v2868 = vunpack.c.l.bf16 %v2836
      %v2869 = vunpack.c.l.bf16 %v2837
      %v2870 = vunpack.c.l.bf16 %v2838
      %v2871 = vunpack.c.l.bf16 %v2839
      %v2872 = vunpack.c.l.bf16 %v2840
      %v2873 = vunpack.c.l.bf16 %v2841
      %v2874 = vunpack.c.l.bf16 %v2842
      %v2875 = vunpack.c.l.bf16 %v2843
      %v2876 = vunpack.c.l.bf16 %v2844
      %v2877 = vunpack.c.l.bf16 %v2845
      %v2878 = vunpack.c.l.bf16 %v2846
      %v2879 = vunpack.c.l.bf16 %v2847
      %v2880 = vunpack.c.l.bf16 %v2848
      %v2881 = vunpack.c.l.bf16 %v2849
      %v2882 = vunpack.c.l.bf16 %v2850
      %v2883 = vunpack.c.l.bf16 %v2851
      %v2884 = vunpack.c.l.bf16 %v2741
      %v2885 = vunpack.c.h.bf16 %v2741
      %v2886 = vmax.f32 %v2852, %v2760
      %v2887 = vmax.f32 %v2853, %v2761
      %v2888 = vmax.f32 %v2854, %v2762
      %v2889 = vmax.f32 %v2855, %v2763
      %v2890 = vmax.f32 %v2856, %v2764
      %v2891 = vmax.f32 %v2857, %v2765
      %v2892 = vmax.f32 %v2858, %v2766
      %v2893 = vmax.f32 %v2859, %v2767
      %v2894 = vmax.f32 %v2860, %v2768
      %v2895 = vmax.f32 %v2861, %v2769
      %v2896 = vmax.f32 %v2862, %v2770
      %v2897 = vmax.f32 %v2863, %v2771
      %v2898 = vmax.f32 %v2864, %v2772
      %v2899 = vmax.f32 %v2865, %v2773
      %v2900 = vmax.f32 %v2866, %v2774
      %v2901 = vmax.f32 %v2867, %v2775
      %v2902 = vmax.f32 %v2868, %v2776
      %v2903 = vmax.f32 %v2869, %v2777
      %v2904 = vmax.f32 %v2870, %v2778
      %v2905 = vmax.f32 %v2871, %v2779
      %v2906 = vmax.f32 %v2872, %v2780
      %v2907 = vmax.f32 %v2873, %v2781
      %v2908 = vmax.f32 %v2874, %v2782
      %v2909 = vmax.f32 %v2875, %v2783
      %v2910 = vmax.f32 %v2876, %v2784
      %v2911 = vmax.f32 %v2877, %v2785
      %v2912 = vmax.f32 %v2878, %v2786
      %v2913 = vmax.f32 %v2879, %v2787
      %v2914 = vmax.f32 %v2880, %v2788
      %v2915 = vmax.f32 %v2881, %v2789
      %v2916 = vmax.f32 %v2882, %v2884
      %v2917 = vmax.f32 %v2883, %v2885
      %v2918 = vpack.c.bf16 %v2886, %v2886
      %v2919 = vpack.c.bf16 %v2887, %v2887
      %v2920 = vpack.c.bf16 %v2888, %v2888
      %v2921 = vpack.c.bf16 %v2889, %v2889
      %v2922 = vpack.c.bf16 %v2890, %v2890
      %v2923 = vpack.c.bf16 %v2891, %v2891
      %v2924 = vpack.c.bf16 %v2892, %v2892
      %v2925 = vpack.c.bf16 %v2893, %v2893
      %v2926 = vpack.c.bf16 %v2894, %v2894
      %v2927 = vpack.c.bf16 %v2895, %v2895
      %v2928 = vpack.c.bf16 %v2896, %v2896
      %v2929 = vpack.c.bf16 %v2897, %v2897
      %v2930 = vpack.c.bf16 %v2898, %v2898
      %v2931 = vpack.c.bf16 %v2899, %v2899
      %v2932 = vpack.c.bf16 %v2900, %v2900
      %v2933 = vpack.c.bf16 %v2901, %v2901
      %v2934 = vpack.c.bf16 %v2902, %v2902
      %v2935 = vpack.c.bf16 %v2903, %v2903
      %v2936 = vpack.c.bf16 %v2904, %v2904
      %v2937 = vpack.c.bf16 %v2905, %v2905
      %v2938 = vpack.c.bf16 %v2906, %v2906
      %v2939 = vpack.c.bf16 %v2907, %v2907
      %v2940 = vpack.c.bf16 %v2908, %v2908
      %v2941 = vpack.c.bf16 %v2909, %v2909
      %v2942 = vpack.c.bf16 %v2910, %v2910
      %v2943 = vpack.c.bf16 %v2911, %v2911
      %v2944 = vpack.c.bf16 %v2912, %v2912
      %v2945 = vpack.c.bf16 %v2913, %v2913
      %v2946 = vpack.c.bf16 %v2914, %v2914
      %v2947 = vpack.c.bf16 %v2915, %v2915
      %v2948 = vpack.c.bf16 %v2916, %v2916
      %v2949 = vpack.c.bf16 %v2917, %v2917
      %v2950 = vunpack.c.l.bf16 %v2918
      %v2951 = vunpack.c.l.bf16 %v2919
      %v2952 = vunpack.c.l.bf16 %v2920
      %v2953 = vunpack.c.l.bf16 %v2921
      %v2954 = vunpack.c.l.bf16 %v2922
      %v2955 = vunpack.c.l.bf16 %v2923
      %v2956 = vunpack.c.l.bf16 %v2924
      %v2957 = vunpack.c.l.bf16 %v2925
      %v2958 = vunpack.c.l.bf16 %v2926
      %v2959 = vunpack.c.l.bf16 %v2927
      %v2960 = vunpack.c.l.bf16 %v2928
      %v2961 = vunpack.c.l.bf16 %v2929
      %v2962 = vunpack.c.l.bf16 %v2930
      %v2963 = vunpack.c.l.bf16 %v2931
      %v2964 = vunpack.c.l.bf16 %v2932
      %v2965 = vunpack.c.l.bf16 %v2933
      %v2966 = vunpack.c.l.bf16 %v2934
      %v2967 = vunpack.c.l.bf16 %v2935
      %v2968 = vunpack.c.l.bf16 %v2936
      %v2969 = vunpack.c.l.bf16 %v2937
      %v2970 = vunpack.c.l.bf16 %v2938
      %v2971 = vunpack.c.l.bf16 %v2939
      %v2972 = vunpack.c.l.bf16 %v2940
      %v2973 = vunpack.c.l.bf16 %v2941
      %v2974 = vunpack.c.l.bf16 %v2942
      %v2975 = vunpack.c.l.bf16 %v2943
      %v2976 = vunpack.c.l.bf16 %v2944
      %v2977 = vunpack.c.l.bf16 %v2945
      %v2978 = vunpack.c.l.bf16 %v2946
      %v2979 = vunpack.c.l.bf16 %v2947
      %v2980 = vunpack.c.l.bf16 %v2948
      %v2981 = vunpack.c.l.bf16 %v2949
      %v2982 = vmax.f32 %v2950, %v2762
      %v2983 = vmax.f32 %v2951, %v2763
      %v2984 = vmax.f32 %v2952, %v2764
      %v2985 = vmax.f32 %v2953, %v2765
      %v2986 = vmax.f32 %v2954, %v2766
      %v2987 = vmax.f32 %v2955, %v2767
      %v2988 = vmax.f32 %v2956, %v2768
      %v2989 = vmax.f32 %v2957, %v2769
      %v2990 = vmax.f32 %v2958, %v2770
      %v2991 = vmax.f32 %v2959, %v2771
      %v2992 = vmax.f32 %v2960, %v2772
      %v2993 = vmax.f32 %v2961, %v2773
      %v2994 = vmax.f32 %v2962, %v2774
      %v2995 = vmax.f32 %v2963, %v2775
      %v2996 = vmax.f32 %v2964, %v2776
      %v2997 = vmax.f32 %v2965, %v2777
      %v2998 = vmax.f32 %v2966, %v2778
      %v2999 = vmax.f32 %v2967, %v2779
      %v3000 = vmax.f32 %v2968, %v2780
      %v3001 = vmax.f32 %v2969, %v2781
      %v3002 = vmax.f32 %v2970, %v2782
      %v3003 = vmax.f32 %v2971, %v2783
      %v3004 = vmax.f32 %v2972, %v2784
      %v3005 = vmax.f32 %v2973, %v2785
      %v3006 = vmax.f32 %v2974, %v2786
      %v3007 = vmax.f32 %v2975, %v2787
      %v3008 = vmax.f32 %v2976, %v2788
      %v3009 = vmax.f32 %v2977, %v2789
      %v3010 = vmax.f32 %v2978, %v2884
      %v3011 = vmax.f32 %v2979, %v2885
      %v3012 = vmax.f32 %v2980, %v2758
      %v3013 = vmax.f32 %v2981, %v2759
      %v3014 = vpack.c.bf16 %v2982, %v2982
      %v3015 = vpack.c.bf16 %v2983, %v2983
      %v3016 = vpack.c.bf16 %v2984, %v2984
      %v3017 = vpack.c.bf16 %v2985, %v2985
      %v3018 = vpack.c.bf16 %v2986, %v2986
      %v3019 = vpack.c.bf16 %v2987, %v2987
      %v3020 = vpack.c.bf16 %v2988, %v2988
      %v3021 = vpack.c.bf16 %v2989, %v2989
      %v3022 = vpack.c.bf16 %v2990, %v2990
      %v3023 = vpack.c.bf16 %v2991, %v2991
      %v3024 = vpack.c.bf16 %v2992, %v2992
      %v3025 = vpack.c.bf16 %v2993, %v2993
      %v3026 = vpack.c.bf16 %v2994, %v2994
      %v3027 = vpack.c.bf16 %v2995, %v2995
      %v3028 = vpack.c.bf16 %v2996, %v2996
      %v3029 = vpack.c.bf16 %v2997, %v2997
      %v3030 = vpack.c.bf16 %v2998, %v2998
      %v3031 = vpack.c.bf16 %v2999, %v2999
      %v3032 = vpack.c.bf16 %v3000, %v3000
      %v3033 = vpack.c.bf16 %v3001, %v3001
      %v3034 = vpack.c.bf16 %v3002, %v3002
      %v3035 = vpack.c.bf16 %v3003, %v3003
      %v3036 = vpack.c.bf16 %v3004, %v3004
      %v3037 = vpack.c.bf16 %v3005, %v3005
      %v3038 = vpack.c.bf16 %v3006, %v3006
      %v3039 = vpack.c.bf16 %v3007, %v3007
      %v3040 = vpack.c.bf16 %v3008, %v3008
      %v3041 = vpack.c.bf16 %v3009, %v3009
      %v3042 = vpack.c.bf16 %v3010, %v3010
      %v3043 = vpack.c.bf16 %v3011, %v3011
      %v3044 = vpack.c.bf16 %v3012, %v3012
      %v3045 = vpack.c.bf16 %v3013, %v3013
      %v3046 = vunpack.c.l.bf16 %v3014
      %v3047 = vunpack.c.l.bf16 %v3015
      %v3048 = vunpack.c.l.bf16 %v3016
      %v3049 = vunpack.c.l.bf16 %v3017
      %v3050 = vunpack.c.l.bf16 %v3018
      %v3051 = vunpack.c.l.bf16 %v3019
      %v3052 = vunpack.c.l.bf16 %v3020
      %v3053 = vunpack.c.l.bf16 %v3021
      %v3054 = vunpack.c.l.bf16 %v3022
      %v3055 = vunpack.c.l.bf16 %v3023
      %v3056 = vunpack.c.l.bf16 %v3024
      %v3057 = vunpack.c.l.bf16 %v3025
      %v3058 = vunpack.c.l.bf16 %v3026
      %v3059 = vunpack.c.l.bf16 %v3027
      %v3060 = vunpack.c.l.bf16 %v3028
      %v3061 = vunpack.c.l.bf16 %v3029
      %v3062 = vunpack.c.l.bf16 %v3030
      %v3063 = vunpack.c.l.bf16 %v3031
      %v3064 = vunpack.c.l.bf16 %v3032
      %v3065 = vunpack.c.l.bf16 %v3033
      %v3066 = vunpack.c.l.bf16 %v3034
      %v3067 = vunpack.c.l.bf16 %v3035
      %v3068 = vunpack.c.l.bf16 %v3036
      %v3069 = vunpack.c.l.bf16 %v3037
      %v3070 = vunpack.c.l.bf16 %v3038
      %v3071 = vunpack.c.l.bf16 %v3039
      %v3072 = vunpack.c.l.bf16 %v3040
      %v3073 = vunpack.c.l.bf16 %v3041
      %v3074 = vunpack.c.l.bf16 %v3042
      %v3075 = vunpack.c.l.bf16 %v3043
      %v3076 = vunpack.c.l.bf16 %v3044
      %v3077 = vunpack.c.l.bf16 %v3045
      %v3078 = vmax.f32 %v3046, %v2764
      %v3079 = vmax.f32 %v3047, %v2765
      %v3080 = vmax.f32 %v3048, %v2766
      %v3081 = vmax.f32 %v3049, %v2767
      %v3082 = vmax.f32 %v3050, %v2768
      %v3083 = vmax.f32 %v3051, %v2769
      %v3084 = vmax.f32 %v3052, %v2770
      %v3085 = vmax.f32 %v3053, %v2771
      %v3086 = vmax.f32 %v3054, %v2772
      %v3087 = vmax.f32 %v3055, %v2773
      %v3088 = vmax.f32 %v3056, %v2774
      %v3089 = vmax.f32 %v3057, %v2775
      %v3090 = vmax.f32 %v3058, %v2776
      %v3091 = vmax.f32 %v3059, %v2777
      %v3092 = vmax.f32 %v3060, %v2778
      %v3093 = vmax.f32 %v3061, %v2779
      %v3094 = vmax.f32 %v3062, %v2780
      %v3095 = vmax.f32 %v3063, %v2781
      %v3096 = vmax.f32 %v3064, %v2782
      %v3097 = vmax.f32 %v3065, %v2783
      %v3098 = vmax.f32 %v3066, %v2784
      %v3099 = vmax.f32 %v3067, %v2785
      %v3100 = vmax.f32 %v3068, %v2786
      %v3101 = vmax.f32 %v3069, %v2787
      %v3102 = vmax.f32 %v3070, %v2788
      %v3103 = vmax.f32 %v3071, %v2789
      %v3104 = vmax.f32 %v3072, %v2884
      %v3105 = vmax.f32 %v3073, %v2885
      %v3106 = vmax.f32 %v3074, %v2758
      %v3107 = vmax.f32 %v3075, %v2759
      %v3108 = vmax.f32 %v3076, %v2758
      %v3109 = vmax.f32 %v3077, %v2759
      %v3110 = vpack.c.bf16 %v3078, %v3078
      %v3111 = vpack.c.bf16 %v3079, %v3079
      %v3112 = vpack.c.bf16 %v3080, %v3080
      %v3113 = vpack.c.bf16 %v3081, %v3081
      %v3114 = vpack.c.bf16 %v3082, %v3082
      %v3115 = vpack.c.bf16 %v3083, %v3083
      %v3116 = vpack.c.bf16 %v3084, %v3084
      %v3117 = vpack.c.bf16 %v3085, %v3085
      %v3118 = vpack.c.bf16 %v3086, %v3086
      %v3119 = vpack.c.bf16 %v3087, %v3087
      %v3120 = vpack.c.bf16 %v3088, %v3088
      %v3121 = vpack.c.bf16 %v3089, %v3089
      %v3122 = vpack.c.bf16 %v3090, %v3090
      %v3123 = vpack.c.bf16 %v3091, %v3091
      %v3124 = vpack.c.bf16 %v3092, %v3092
      %v3125 = vpack.c.bf16 %v3093, %v3093
      %v3126 = vpack.c.bf16 %v3094, %v3094
      %v3127 = vpack.c.bf16 %v3095, %v3095
      %v3128 = vpack.c.bf16 %v3096, %v3096
      %v3129 = vpack.c.bf16 %v3097, %v3097
      %v3130 = vpack.c.bf16 %v3098, %v3098
      %v3131 = vpack.c.bf16 %v3099, %v3099
      %v3132 = vpack.c.bf16 %v3100, %v3100
      %v3133 = vpack.c.bf16 %v3101, %v3101
      %v3134 = vpack.c.bf16 %v3102, %v3102
      %v3135 = vpack.c.bf16 %v3103, %v3103
      %v3136 = vpack.c.bf16 %v3104, %v3104
      %v3137 = vpack.c.bf16 %v3105, %v3105
      %v3138 = vpack.c.bf16 %v3106, %v3106
      %v3139 = vpack.c.bf16 %v3107, %v3107
      %v3140 = vpack.c.bf16 %v3108, %v3108
      %v3141 = vpack.c.bf16 %v3109, %v3109
      %3174 = vrot.lane.b32.xlu0 %v3110, 16
      %v3175 = vpop.permute.xlu0 %3174
      %3176 = vrot.lane.b32.xlu0 %v3111, 16
      %v3177 = vpop.permute.xlu0 %3176
      %3178 = vrot.lane.b32.xlu0 %v3112, 16
      %v3179 = vpop.permute.xlu0 %3178
      %3180 = vrot.lane.b32.xlu0 %v3113, 16
      %v3181 = vpop.permute.xlu0 %3180
      %3182 = vrot.lane.b32.xlu0 %v3114, 16
      %v3183 = vpop.permute.xlu0 %3182
      %3184 = vrot.lane.b32.xlu0 %v3115, 16
      %v3185 = vpop.permute.xlu0 %3184
      %3186 = vrot.lane.b32.xlu0 %v3116, 16
      %v3187 = vpop.permute.xlu0 %3186
      %3188 = vrot.lane.b32.xlu0 %v3117, 16
      %v3189 = vpop.permute.xlu0 %3188
      %3190 = vrot.lane.b32.xlu0 %v3118, 16
      %v3191 = vpop.permute.xlu0 %3190
      %3192 = vrot.lane.b32.xlu0 %v3119, 16
      %v3193 = vpop.permute.xlu0 %3192
      %3194 = vrot.lane.b32.xlu0 %v3120, 16
      %v3195 = vpop.permute.xlu0 %3194
      %3196 = vrot.lane.b32.xlu0 %v3121, 16
      %v3197 = vpop.permute.xlu0 %3196
      %3198 = vrot.lane.b32.xlu0 %v3122, 16
      %v3199 = vpop.permute.xlu0 %3198
      %3200 = vrot.lane.b32.xlu0 %v3123, 16
      %v3201 = vpop.permute.xlu0 %3200
      %3202 = vrot.lane.b32.xlu0 %v3124, 16
      %v3203 = vpop.permute.xlu0 %3202
      %3204 = vrot.lane.b32.xlu0 %v3125, 16
      %v3205 = vpop.permute.xlu0 %3204
      %3206 = vrot.lane.b32.xlu0 %v3126, 16
      %v3207 = vpop.permute.xlu0 %3206
      %3208 = vrot.lane.b32.xlu0 %v3127, 16
      %v3209 = vpop.permute.xlu0 %3208
      %3210 = vrot.lane.b32.xlu0 %v3128, 16
      %v3211 = vpop.permute.xlu0 %3210
      %3212 = vrot.lane.b32.xlu0 %v3129, 16
      %v3213 = vpop.permute.xlu0 %3212
      %3214 = vrot.lane.b32.xlu0 %v3130, 16
      %v3215 = vpop.permute.xlu0 %3214
      %3216 = vrot.lane.b32.xlu0 %v3131, 16
      %v3217 = vpop.permute.xlu0 %3216
      %3218 = vrot.lane.b32.xlu0 %v3132, 16
      %v3219 = vpop.permute.xlu0 %3218
      %3220 = vrot.lane.b32.xlu0 %v3133, 16
      %v3221 = vpop.permute.xlu0 %3220
      %3222 = vrot.lane.b32.xlu0 %v3134, 16
      %v3223 = vpop.permute.xlu0 %3222
      %3224 = vrot.lane.b32.xlu0 %v3135, 16
      %v3225 = vpop.permute.xlu0 %3224
      %3226 = vrot.lane.b32.xlu0 %v3136, 16
      %v3227 = vpop.permute.xlu0 %3226
      %3228 = vrot.lane.b32.xlu0 %v3137, 16
      %v3229 = vpop.permute.xlu0 %3228
      %3230 = vrot.lane.b32.xlu0 %v3138, 16
      %v3231 = vpop.permute.xlu0 %3230
      %3232 = vrot.lane.b32.xlu0 %v3139, 16
      %v3233 = vpop.permute.xlu0 %3232
      %3234 = vrot.lane.b32.xlu0 %v3140, 16
      %v3235 = vpop.permute.xlu0 %3234
      %3236 = vrot.lane.b32.xlu0 %v3141, 16
      %v3237 = vpop.permute.xlu0 %3236
      %vm3270 = vcmask 257152
      %3271 = vst.msk [vmem:[#allocation3] sm:$0xf] %vm3270, %v3175
      %3272 = vst.msk [vmem:[#allocation3 + $0x4] sm:$0xf] %vm3270, %v3177
      %3273 = vst.msk [vmem:[#allocation3 + $0x8] sm:$0xf] %vm3270, %v3179
      %3274 = vst.msk [vmem:[#allocation3 + $0xc] sm:$0xf] %vm3270, %v3181
      %3275 = vst.msk [vmem:[#allocation3 + $0x10] sm:$0xf] %vm3270, %v3183
      %3276 = vst.msk [vmem:[#allocation3 + $0x14] sm:$0xf] %vm3270, %v3185
      %3277 = vst.msk [vmem:[#allocation3 + $0x18] sm:$0xf] %vm3270, %v3187
      %3278 = vst.msk [vmem:[#allocation3 + $0x1c] sm:$0xf] %vm3270, %v3189
      %3279 = vst.msk [vmem:[#allocation3 + $0x20] sm:$0xf] %vm3270, %v3191
      %3280 = vst.msk [vmem:[#allocation3 + $0x24] sm:$0xf] %vm3270, %v3193
      %3281 = vst.msk [vmem:[#allocation3 + $0x28] sm:$0xf] %vm3270, %v3195
      %3282 = vst.msk [vmem:[#allocation3 + $0x2c] sm:$0xf] %vm3270, %v3197
      %3283 = vst.msk [vmem:[#allocation3 + $0x30] sm:$0xf] %vm3270, %v3199
      %3284 = vst.msk [vmem:[#allocation3 + $0x34] sm:$0xf] %vm3270, %v3201
      %3285 = vst.msk [vmem:[#allocation3 + $0x38] sm:$0xf] %vm3270, %v3203
      %3286 = vst.msk [vmem:[#allocation3 + $0x3c] sm:$0xf] %vm3270, %v3205
      %3287 = vst.msk [vmem:[#allocation3 + $0x40] sm:$0xf] %vm3270, %v3207
      %3288 = vst.msk [vmem:[#allocation3 + $0x44] sm:$0xf] %vm3270, %v3209
      %3289 = vst.msk [vmem:[#allocation3 + $0x48] sm:$0xf] %vm3270, %v3211
      %3290 = vst.msk [vmem:[#allocation3 + $0x4c] sm:$0xf] %vm3270, %v3213
      %3291 = vst.msk [vmem:[#allocation3 + $0x50] sm:$0xf] %vm3270, %v3215
      %3292 = vst.msk [vmem:[#allocation3 + $0x54] sm:$0xf] %vm3270, %v3217
      %3293 = vst.msk [vmem:[#allocation3 + $0x58] sm:$0xf] %vm3270, %v3219
      %3294 = vst.msk [vmem:[#allocation3 + $0x5c] sm:$0xf] %vm3270, %v3221
      %3295 = vst.msk [vmem:[#allocation3 + $0x60] sm:$0xf] %vm3270, %v3223
      %3296 = vst.msk [vmem:[#allocation3 + $0x64] sm:$0xf] %vm3270, %v3225
      %3297 = vst.msk [vmem:[#allocation3 + $0x68] sm:$0xf] %vm3270, %v3227
      %3298 = vst.msk [vmem:[#allocation3 + $0x6c] sm:$0xf] %vm3270, %v3229
      %3299 = vst.msk [vmem:[#allocation3 + $0x70] sm:$0xf] %vm3270, %v3231
      %3300 = vst.msk [vmem:[#allocation3 + $0x74] sm:$0xf] %vm3270, %v3233
      %3301 = vst.msk [vmem:[#allocation3 + $0x78] sm:$0xf] %vm3270, %v3235
      %3302 = vst.msk [vmem:[#allocation3 + $0x7c] sm:$0xf] %vm3270, %v3237
      %v3303 = vrot.slane %v3110, 7
      %v3304 = vrot.slane %v3303, 4
      %v3305 = vrot.slane %v3111, 7
      %v3306 = vsel %vm1392, %v3304, %v3305
      %v3307 = vrot.slane %v3305, 4
      %v3308 = vrot.slane %v3112, 7
      %v3309 = vrot.slane %v3308, 4
      %v3310 = vrot.slane %v3113, 7
      %v3311 = vsel %vm1392, %v3309, %v3310
      %v3312 = vrot.slane %v3310, 4
      %v3313 = vrot.slane %v3114, 7
      %v3314 = vrot.slane %v3313, 4
      %v3315 = vrot.slane %v3115, 7
      %v3316 = vsel %vm1392, %v3314, %v3315
      %v3317 = vrot.slane %v3315, 4
      %v3318 = vrot.slane %v3116, 7
      %v3319 = vrot.slane %v3318, 4
      %v3320 = vrot.slane %v3117, 7
      %v3321 = vsel %vm1392, %v3319, %v3320
      %v3322 = vrot.slane %v3320, 4
      %v3323 = vrot.slane %v3118, 7
      %v3324 = vrot.slane %v3323, 4
      %v3325 = vrot.slane %v3119, 7
      %v3326 = vsel %vm1392, %v3324, %v3325
      %v3327 = vrot.slane %v3325, 4
      %v3328 = vrot.slane %v3120, 7
      %v3329 = vrot.slane %v3328, 4
      %v3330 = vrot.slane %v3121, 7
      %v3331 = vsel %vm1392, %v3329, %v3330
      %v3332 = vrot.slane %v3330, 4
      %v3333 = vrot.slane %v3122, 7
      %v3334 = vrot.slane %v3333, 4
      %v3335 = vrot.slane %v3123, 7
      %v3336 = vsel %vm1392, %v3334, %v3335
      %v3337 = vrot.slane %v3335, 4
      %v3338 = vrot.slane %v3124, 7
      %v3339 = vrot.slane %v3338, 4
      %v3340 = vrot.slane %v3125, 7
      %v3341 = vsel %vm1392, %v3339, %v3340
      %v3342 = vrot.slane %v3340, 4
      %v3343 = vrot.slane %v3126, 7
      %v3344 = vrot.slane %v3343, 4
      %v3345 = vrot.slane %v3127, 7
      %v3346 = vsel %vm1392, %v3344, %v3345
      %v3347 = vrot.slane %v3345, 4
      %v3348 = vrot.slane %v3128, 7
      %v3349 = vrot.slane %v3348, 4
      %v3350 = vrot.slane %v3129, 7
      %v3351 = vsel %vm1392, %v3349, %v3350
      %v3352 = vrot.slane %v3350, 4
      %v3353 = vrot.slane %v3130, 7
      %v3354 = vrot.slane %v3353, 4
      %v3355 = vrot.slane %v3131, 7
      %v3356 = vsel %vm1392, %v3354, %v3355
      %v3357 = vrot.slane %v3355, 4
      %v3358 = vrot.slane %v3132, 7
      %v3359 = vrot.slane %v3358, 4
      %v3360 = vrot.slane %v3133, 7
      %v3361 = vsel %vm1392, %v3359, %v3360
      %v3362 = vrot.slane %v3360, 4
      %v3363 = vrot.slane %v3134, 7
      %v3364 = vrot.slane %v3363, 4
      %v3365 = vrot.slane %v3135, 7
      %v3366 = vsel %vm1392, %v3364, %v3365
      %v3367 = vrot.slane %v3365, 4
      %v3368 = vrot.slane %v3136, 7
      %v3369 = vrot.slane %v3368, 4
      %v3370 = vrot.slane %v3137, 7
      %v3371 = vsel %vm1392, %v3369, %v3370
      %v3372 = vrot.slane %v3370, 4
      %v3373 = vrot.slane %v3138, 7
      %v3374 = vrot.slane %v3373, 4
      %v3375 = vrot.slane %v3139, 7
      %v3376 = vsel %vm1392, %v3374, %v3375
      %v3377 = vrot.slane %v3375, 4
      %v3378 = vrot.slane %v3140, 7
      %v3379 = vrot.slane %v3378, 4
      %v3380 = vrot.slane %v3141, 7
      %v3381 = vsel %vm1392, %v3379, %v3380
      %v3382 = vrot.slane %v3380, 4
      %3431 = vst.msk [vmem:[#allocation2] sm:$0xe] %vm1521, %v3303
      %3432 = vst.msk [vmem:[#allocation2 + $0x4] sm:$0xf] %vm1325, %v3306
      %3433 = vst.msk [vmem:[#allocation2 + $0x8] sm:$0x1] %vm281, %v3307
      %3434 = vst.msk [vmem:[#allocation2 + $0xc] sm:$0xe] %vm1521, %v3308
      %3435 = vst.msk [vmem:[#allocation2 + $0x10] sm:$0xf] %vm1325, %v3311
      %3436 = vst.msk [vmem:[#allocation2 + $0x14] sm:$0x1] %vm281, %v3312
      %3437 = vst.msk [vmem:[#allocation2 + $0x18] sm:$0xe] %vm1521, %v3313
      %3438 = vst.msk [vmem:[#allocation2 + $0x1c] sm:$0xf] %vm1325, %v3316
      %3439 = vst.msk [vmem:[#allocation2 + $0x20] sm:$0x1] %vm281, %v3317
      %3440 = vst.msk [vmem:[#allocation2 + $0x24] sm:$0xe] %vm1521, %v3318
      %3441 = vst.msk [vmem:[#allocation2 + $0x28] sm:$0xf] %vm1325, %v3321
      %3442 = vst.msk [vmem:[#allocation2 + $0x2c] sm:$0x1] %vm281, %v3322
      %3443 = vst.msk [vmem:[#allocation2 + $0x30] sm:$0xe] %vm1521, %v3323
      %3444 = vst.msk [vmem:[#allocation2 + $0x34] sm:$0xf] %vm1325, %v3326
      %3445 = vst.msk [vmem:[#allocation2 + $0x38] sm:$0x1] %vm281, %v3327
      %3446 = vst.msk [vmem:[#allocation2 + $0x3c] sm:$0xe] %vm1521, %v3328
      %3447 = vst.msk [vmem:[#allocation2 + $0x40] sm:$0xf] %vm1325, %v3331
      %3448 = vst.msk [vmem:[#allocation2 + $0x44] sm:$0x1] %vm281, %v3332
      %3449 = vst.msk [vmem:[#allocation2 + $0x48] sm:$0xe] %vm1521, %v3333
      %3450 = vst.msk [vmem:[#allocation2 + $0x4c] sm:$0xf] %vm1325, %v3336
      %3451 = vst.msk [vmem:[#allocation2 + $0x50] sm:$0x1] %vm281, %v3337
      %3452 = vst.msk [vmem:[#allocation2 + $0x54] sm:$0xe] %vm1521, %v3338
      %3453 = vst.msk [vmem:[#allocation2 + $0x58] sm:$0xf] %vm1325, %v3341
      %3454 = vst.msk [vmem:[#allocation2 + $0x5c] sm:$0x1] %vm281, %v3342
      %3455 = vst.msk [vmem:[#allocation2 + $0x60] sm:$0xe] %vm1521, %v3343
      %3456 = vst.msk [vmem:[#allocation2 + $0x64] sm:$0xf] %vm1325, %v3346
      %3457 = vst.msk [vmem:[#allocation2 + $0x68] sm:$0x1] %vm281, %v3347
      %3458 = vst.msk [vmem:[#allocation2 + $0x6c] sm:$0xe] %vm1521, %v3348
      %3459 = vst.msk [vmem:[#allocation2 + $0x70] sm:$0xf] %vm1325, %v3351
      %3460 = vst.msk [vmem:[#allocation2 + $0x74] sm:$0x1] %vm281, %v3352
      %3461 = vst.msk [vmem:[#allocation2 + $0x78] sm:$0xe] %vm1521, %v3353
      %3462 = vst.msk [vmem:[#allocation2 + $0x7c] sm:$0xf] %vm1325, %v3356
      %3463 = vst.msk [vmem:[#allocation2 + $0x80] sm:$0x1] %vm281, %v3357
      %3464 = vst.msk [vmem:[#allocation2 + $0x84] sm:$0xe] %vm1521, %v3358
      %3465 = vst.msk [vmem:[#allocation2 + $0x88] sm:$0xf] %vm1325, %v3361
      %3466 = vst.msk [vmem:[#allocation2 + $0x8c] sm:$0x1] %vm281, %v3362
      %3467 = vst.msk [vmem:[#allocation2 + $0x90] sm:$0xe] %vm1521, %v3363
      %3468 = vst.msk [vmem:[#allocation2 + $0x94] sm:$0xf] %vm1325, %v3366
      %3469 = vst.msk [vmem:[#allocation2 + $0x98] sm:$0x1] %vm281, %v3367
      %3470 = vst.msk [vmem:[#allocation2 + $0x9c] sm:$0xe] %vm1521, %v3368
      %3471 = vst.msk [vmem:[#allocation2 + $0xa0] sm:$0xf] %vm1325, %v3371
      %3472 = vst.msk [vmem:[#allocation2 + $0xa4] sm:$0x1] %vm281, %v3372
      %3473 = vst.msk [vmem:[#allocation2 + $0xa8] sm:$0xe] %vm1521, %v3373
      %3474 = vst.msk [vmem:[#allocation2 + $0xac] sm:$0xf] %vm1325, %v3376
      %3475 = vst.msk [vmem:[#allocation2 + $0xb0] sm:$0x1] %vm281, %v3377
      %3476 = vst.msk [vmem:[#allocation2 + $0xb4] sm:$0xe] %vm1521, %v3378
      %3477 = vst.msk [vmem:[#allocation2 + $0xb8] sm:$0xf] %vm1325, %v3381
      %3478 = vst.msk [vmem:[#allocation2 + $0xbc] sm:$0x1] %vm281, %v3382
      %v3479 = vld [vmem:[#allocation2] sm:$0xf]
      %v3480 = vld [vmem:[#allocation2 + $0x4] sm:$0xf]
      %v3481 = vld [vmem:[#allocation2 + $0xc] sm:$0xf]
      %v3482 = vld [vmem:[#allocation2 + $0x10] sm:$0xf]
      %v3483 = vld [vmem:[#allocation2 + $0x18] sm:$0xf]
      %v3484 = vld [vmem:[#allocation2 + $0x1c] sm:$0xf]
      %v3485 = vld [vmem:[#allocation2 + $0x24] sm:$0xf]
      %v3486 = vld [vmem:[#allocation2 + $0x28] sm:$0xf]
      %v3487 = vld [vmem:[#allocation2 + $0x30] sm:$0xf]
      %v3488 = vld [vmem:[#allocation2 + $0x34] sm:$0xf]
      %v3489 = vld [vmem:[#allocation2 + $0x3c] sm:$0xf]
      %v3490 = vld [vmem:[#allocation2 + $0x40] sm:$0xf]
      %v3491 = vld [vmem:[#allocation2 + $0x48] sm:$0xf]
      %v3492 = vld [vmem:[#allocation2 + $0x4c] sm:$0xf]
      %v3493 = vld [vmem:[#allocation2 + $0x54] sm:$0xf]
      %v3494 = vld [vmem:[#allocation2 + $0x58] sm:$0xf]
      %v3495 = vld [vmem:[#allocation2 + $0x60] sm:$0xf]
      %v3496 = vld [vmem:[#allocation2 + $0x64] sm:$0xf]
      %v3497 = vld [vmem:[#allocation2 + $0x6c] sm:$0xf]
      %v3498 = vld [vmem:[#allocation2 + $0x70] sm:$0xf]
      %v3499 = vld [vmem:[#allocation2 + $0x78] sm:$0xf]
      %v3500 = vld [vmem:[#allocation2 + $0x7c] sm:$0xf]
      %v3501 = vld [vmem:[#allocation2 + $0x84] sm:$0xf]
      %v3502 = vld [vmem:[#allocation2 + $0x88] sm:$0xf]
      %v3503 = vld [vmem:[#allocation2 + $0x90] sm:$0xf]
      %v3504 = vld [vmem:[#allocation2 + $0x94] sm:$0xf]
      %v3505 = vld [vmem:[#allocation2 + $0x9c] sm:$0xf]
      %v3506 = vld [vmem:[#allocation2 + $0xa0] sm:$0xf]
      %v3507 = vld [vmem:[#allocation2 + $0xa8] sm:$0xf]
      %v3508 = vld [vmem:[#allocation2 + $0xac] sm:$0xf]
      %v3509 = vld [vmem:[#allocation2 + $0xb4] sm:$0xf]
      %v3510 = vld [vmem:[#allocation2 + $0xb8] sm:$0xf]
      %v3511 = vld [vmem:[#allocation2 + $0x8] sm:$0x1]
      %v3512 = vld [vmem:[#allocation2 + $0x14] sm:$0x1]
      %v3513 = vld [vmem:[#allocation2 + $0x20] sm:$0x1]
      %v3514 = vld [vmem:[#allocation2 + $0x2c] sm:$0x1]
      %v3515 = vld [vmem:[#allocation2 + $0x38] sm:$0x1]
      %v3516 = vld [vmem:[#allocation2 + $0x44] sm:$0x1]
      %v3517 = vld [vmem:[#allocation2 + $0x50] sm:$0x1]
      %v3518 = vld [vmem:[#allocation2 + $0x5c] sm:$0x1]
      %v3519 = vld [vmem:[#allocation2 + $0x68] sm:$0x1]
      %v3520 = vld [vmem:[#allocation2 + $0x74] sm:$0x1]
      %v3521 = vld [vmem:[#allocation2 + $0x80] sm:$0x1]
      %v3522 = vld [vmem:[#allocation2 + $0x8c] sm:$0x1]
      %v3523 = vld [vmem:[#allocation2 + $0x98] sm:$0x1]
      %v3524 = vld [vmem:[#allocation2 + $0xa4] sm:$0x1]
      %v3525 = vld [vmem:[#allocation2 + $0xb0] sm:$0x1]
      %v3526 = vld [vmem:[#allocation2 + $0xbc] sm:$0x1]
      %v3527 = vunpack.c.l.bf16 %v3479
      %v3528 = vunpack.c.l.bf16 %v3480
      %v3529 = vunpack.c.l.bf16 %v3481
      %v3530 = vunpack.c.l.bf16 %v3482
      %v3531 = vunpack.c.l.bf16 %v3483
      %v3532 = vunpack.c.l.bf16 %v3484
      %v3533 = vunpack.c.l.bf16 %v3485
      %v3534 = vunpack.c.l.bf16 %v3486
      %v3535 = vunpack.c.l.bf16 %v3487
      %v3536 = vunpack.c.l.bf16 %v3488
      %v3537 = vunpack.c.l.bf16 %v3489
      %v3538 = vunpack.c.l.bf16 %v3490
      %v3539 = vunpack.c.l.bf16 %v3491
      %v3540 = vunpack.c.l.bf16 %v3492
      %v3541 = vunpack.c.l.bf16 %v3493
      %v3542 = vunpack.c.l.bf16 %v3494
      %v3543 = vunpack.c.l.bf16 %v3495
      %v3544 = vunpack.c.l.bf16 %v3496
      %v3545 = vunpack.c.l.bf16 %v3497
      %v3546 = vunpack.c.l.bf16 %v3498
      %v3547 = vunpack.c.l.bf16 %v3499
      %v3548 = vunpack.c.l.bf16 %v3500
      %v3549 = vunpack.c.l.bf16 %v3501
      %v3550 = vunpack.c.l.bf16 %v3502
      %v3551 = vunpack.c.l.bf16 %v3503
      %v3552 = vunpack.c.l.bf16 %v3504
      %v3553 = vunpack.c.l.bf16 %v3505
      %v3554 = vunpack.c.l.bf16 %v3506
      %v3555 = vunpack.c.l.bf16 %v3507
      %v3556 = vunpack.c.l.bf16 %v3508
      %v3557 = vunpack.c.l.bf16 %v3509
      %v3558 = vunpack.c.l.bf16 %v3510
      %v3559 = vunpack.c.l.bf16 %v3511
      %v3560 = vunpack.c.l.bf16 %v3512
      %v3561 = vunpack.c.l.bf16 %v3513
      %v3562 = vunpack.c.l.bf16 %v3514
      %v3563 = vunpack.c.l.bf16 %v3515
      %v3564 = vunpack.c.l.bf16 %v3516
      %v3565 = vunpack.c.l.bf16 %v3517
      %v3566 = vunpack.c.l.bf16 %v3518
      %v3567 = vunpack.c.l.bf16 %v3519
      %v3568 = vunpack.c.l.bf16 %v3520
      %v3569 = vunpack.c.l.bf16 %v3521
      %v3570 = vunpack.c.l.bf16 %v3522
      %v3571 = vunpack.c.l.bf16 %v3523
      %v3572 = vunpack.c.l.bf16 %v3524
      %v3573 = vunpack.c.l.bf16 %v3525
      %v3574 = vunpack.c.l.bf16 %v3526
      %v3623 = vrot.slane %v3527, 1
      %v3624 = vrot.slane %v3528, 1
      %v3625 = vsel %vm1714, %v3623, %v3624
      %v3626 = vrot.slane %v3559, 1
      %v3627 = vsel %vm1714, %v3624, %v3626
      %v3628 = vrot.slane %v3529, 1
      %v3629 = vrot.slane %v3530, 1
      %v3630 = vsel %vm1714, %v3628, %v3629
      %v3631 = vrot.slane %v3560, 1
      %v3632 = vsel %vm1714, %v3629, %v3631
      %v3633 = vrot.slane %v3531, 1
      %v3634 = vrot.slane %v3532, 1
      %v3635 = vsel %vm1714, %v3633, %v3634
      %v3636 = vrot.slane %v3561, 1
      %v3637 = vsel %vm1714, %v3634, %v3636
      %v3638 = vrot.slane %v3533, 1
      %v3639 = vrot.slane %v3534, 1
      %v3640 = vsel %vm1714, %v3638, %v3639
      %v3641 = vrot.slane %v3562, 1
      %v3642 = vsel %vm1714, %v3639, %v3641
      %v3643 = vrot.slane %v3535, 1
      %v3644 = vrot.slane %v3536, 1
      %v3645 = vsel %vm1714, %v3643, %v3644
      %v3646 = vrot.slane %v3563, 1
      %v3647 = vsel %vm1714, %v3644, %v3646
      %v3648 = vrot.slane %v3537, 1
      %v3649 = vrot.slane %v3538, 1
      %v3650 = vsel %vm1714, %v3648, %v3649
      %v3651 = vrot.slane %v3564, 1
      %v3652 = vsel %vm1714, %v3649, %v3651
      %v3653 = vrot.slane %v3539, 1
      %v3654 = vrot.slane %v3540, 1
      %v3655 = vsel %vm1714, %v3653, %v3654
      %v3656 = vrot.slane %v3565, 1
      %v3657 = vsel %vm1714, %v3654, %v3656
      %v3658 = vrot.slane %v3541, 1
      %v3659 = vrot.slane %v3542, 1
      %v3660 = vsel %vm1714, %v3658, %v3659
      %v3661 = vrot.slane %v3566, 1
      %v3662 = vsel %vm1714, %v3659, %v3661
      %v3663 = vrot.slane %v3543, 1
      %v3664 = vrot.slane %v3544, 1
      %v3665 = vsel %vm1714, %v3663, %v3664
      %v3666 = vrot.slane %v3567, 1
      %v3667 = vsel %vm1714, %v3664, %v3666
      %v3668 = vrot.slane %v3545, 1
      %v3669 = vrot.slane %v3546, 1
      %v3670 = vsel %vm1714, %v3668, %v3669
      %v3671 = vrot.slane %v3568, 1
      %v3672 = vsel %vm1714, %v3669, %v3671
      %v3673 = vrot.slane %v3547, 1
      %v3674 = vrot.slane %v3548, 1
      %v3675 = vsel %vm1714, %v3673, %v3674
      %v3676 = vrot.slane %v3569, 1
      %v3677 = vsel %vm1714, %v3674, %v3676
      %v3678 = vrot.slane %v3549, 1
      %v3679 = vrot.slane %v3550, 1
      %v3680 = vsel %vm1714, %v3678, %v3679
      %v3681 = vrot.slane %v3570, 1
      %v3682 = vsel %vm1714, %v3679, %v3681
      %v3683 = vrot.slane %v3551, 1
      %v3684 = vrot.slane %v3552, 1
      %v3685 = vsel %vm1714, %v3683, %v3684
      %v3686 = vrot.slane %v3571, 1
      %v3687 = vsel %vm1714, %v3684, %v3686
      %v3688 = vrot.slane %v3553, 1
      %v3689 = vrot.slane %v3554, 1
      %v3690 = vsel %vm1714, %v3688, %v3689
      %v3691 = vrot.slane %v3572, 1
      %v3692 = vsel %vm1714, %v3689, %v3691
      %v3693 = vrot.slane %v3555, 1
      %v3694 = vrot.slane %v3556, 1
      %v3695 = vsel %vm1714, %v3693, %v3694
      %v3696 = vrot.slane %v3573, 1
      %v3697 = vsel %vm1714, %v3694, %v3696
      %v3698 = vrot.slane %v3557, 1
      %v3699 = vrot.slane %v3558, 1
      %v3700 = vsel %vm1714, %v3698, %v3699
      %v3701 = vrot.slane %v3574, 1
      %v3702 = vsel %vm1714, %v3699, %v3701
      %v3735 = vmax.f32 %v3527, %v3625
      %v3736 = vmax.f32 %v3528, %v3627
      %v3737 = vmax.f32 %v3529, %v3630
      %v3738 = vmax.f32 %v3530, %v3632
      %v3739 = vmax.f32 %v3531, %v3635
      %v3740 = vmax.f32 %v3532, %v3637
      %v3741 = vmax.f32 %v3533, %v3640
      %v3742 = vmax.f32 %v3534, %v3642
      %v3743 = vmax.f32 %v3535, %v3645
      %v3744 = vmax.f32 %v3536, %v3647
      %v3745 = vmax.f32 %v3537, %v3650
      %v3746 = vmax.f32 %v3538, %v3652
      %v3747 = vmax.f32 %v3539, %v3655
      %v3748 = vmax.f32 %v3540, %v3657
      %v3749 = vmax.f32 %v3541, %v3660
      %v3750 = vmax.f32 %v3542, %v3662
      %v3751 = vmax.f32 %v3543, %v3665
      %v3752 = vmax.f32 %v3544, %v3667
      %v3753 = vmax.f32 %v3545, %v3670
      %v3754 = vmax.f32 %v3546, %v3672
      %v3755 = vmax.f32 %v3547, %v3675
      %v3756 = vmax.f32 %v3548, %v3677
      %v3757 = vmax.f32 %v3549, %v3680
      %v3758 = vmax.f32 %v3550, %v3682
      %v3759 = vmax.f32 %v3551, %v3685
      %v3760 = vmax.f32 %v3552, %v3687
      %v3761 = vmax.f32 %v3553, %v3690
      %v3762 = vmax.f32 %v3554, %v3692
      %v3763 = vmax.f32 %v3555, %v3695
      %v3764 = vmax.f32 %v3556, %v3697
      %v3765 = vmax.f32 %v3557, %v3700
      %v3766 = vmax.f32 %v3558, %v3702
      %v3767 = vpack.c.bf16 %v3735, %v3735
      %v3768 = vpack.c.bf16 %v3736, %v3736
      %v3769 = vpack.c.bf16 %v3737, %v3737
      %v3770 = vpack.c.bf16 %v3738, %v3738
      %v3771 = vpack.c.bf16 %v3739, %v3739
      %v3772 = vpack.c.bf16 %v3740, %v3740
      %v3773 = vpack.c.bf16 %v3741, %v3741
      %v3774 = vpack.c.bf16 %v3742, %v3742
      %v3775 = vpack.c.bf16 %v3743, %v3743
      %v3776 = vpack.c.bf16 %v3744, %v3744
      %v3777 = vpack.c.bf16 %v3745, %v3745
      %v3778 = vpack.c.bf16 %v3746, %v3746
      %v3779 = vpack.c.bf16 %v3747, %v3747
      %v3780 = vpack.c.bf16 %v3748, %v3748
      %v3781 = vpack.c.bf16 %v3749, %v3749
      %v3782 = vpack.c.bf16 %v3750, %v3750
      %v3783 = vpack.c.bf16 %v3751, %v3751
      %v3784 = vpack.c.bf16 %v3752, %v3752
      %v3785 = vpack.c.bf16 %v3753, %v3753
      %v3786 = vpack.c.bf16 %v3754, %v3754
      %v3787 = vpack.c.bf16 %v3755, %v3755
      %v3788 = vpack.c.bf16 %v3756, %v3756
      %v3789 = vpack.c.bf16 %v3757, %v3757
      %v3790 = vpack.c.bf16 %v3758, %v3758
      %v3791 = vpack.c.bf16 %v3759, %v3759
      %v3792 = vpack.c.bf16 %v3760, %v3760
      %v3793 = vpack.c.bf16 %v3761, %v3761
      %v3794 = vpack.c.bf16 %v3762, %v3762
      %v3795 = vpack.c.bf16 %v3763, %v3763
      %v3796 = vpack.c.bf16 %v3764, %v3764
      %v3797 = vpack.c.bf16 %v3765, %v3765
      %v3798 = vpack.c.bf16 %v3766, %v3766
      %v3799 = vld [vmem:[#allocation2] sm:$0xe]
      %v3800 = vld [vmem:[#allocation2 + $0xc] sm:$0xe]
      %v3801 = vld [vmem:[#allocation2 + $0x18] sm:$0xe]
      %v3802 = vld [vmem:[#allocation2 + $0x24] sm:$0xe]
      %v3803 = vld [vmem:[#allocation2 + $0x30] sm:$0xe]
      %v3804 = vld [vmem:[#allocation2 + $0x3c] sm:$0xe]
      %v3805 = vld [vmem:[#allocation2 + $0x48] sm:$0xe]
      %v3806 = vld [vmem:[#allocation2 + $0x54] sm:$0xe]
      %v3807 = vld [vmem:[#allocation2 + $0x60] sm:$0xe]
      %v3808 = vld [vmem:[#allocation2 + $0x6c] sm:$0xe]
      %v3809 = vld [vmem:[#allocation2 + $0x78] sm:$0xe]
      %v3810 = vld [vmem:[#allocation2 + $0x84] sm:$0xe]
      %v3811 = vld [vmem:[#allocation2 + $0x90] sm:$0xe]
      %v3812 = vld [vmem:[#allocation2 + $0x9c] sm:$0xe]
      %v3813 = vld [vmem:[#allocation2 + $0xa8] sm:$0xe]
      %v3814 = vld [vmem:[#allocation2 + $0xb4] sm:$0xe]
      %v3815 = vunpack.c.l.bf16 %v3767
      %v3816 = vunpack.c.l.bf16 %v3768
      %v3817 = vunpack.c.l.bf16 %v3769
      %v3818 = vunpack.c.l.bf16 %v3770
      %v3819 = vunpack.c.l.bf16 %v3771
      %v3820 = vunpack.c.l.bf16 %v3772
      %v3821 = vunpack.c.l.bf16 %v3773
      %v3822 = vunpack.c.l.bf16 %v3774
      %v3823 = vunpack.c.l.bf16 %v3775
      %v3824 = vunpack.c.l.bf16 %v3776
      %v3825 = vunpack.c.l.bf16 %v3777
      %v3826 = vunpack.c.l.bf16 %v3778
      %v3827 = vunpack.c.l.bf16 %v3779
      %v3828 = vunpack.c.l.bf16 %v3780
      %v3829 = vunpack.c.l.bf16 %v3781
      %v3830 = vunpack.c.l.bf16 %v3782
      %v3831 = vunpack.c.l.bf16 %v3783
      %v3832 = vunpack.c.l.bf16 %v3784
      %v3833 = vunpack.c.l.bf16 %v3785
      %v3834 = vunpack.c.l.bf16 %v3786
      %v3835 = vunpack.c.l.bf16 %v3787
      %v3836 = vunpack.c.l.bf16 %v3788
      %v3837 = vunpack.c.l.bf16 %v3789
      %v3838 = vunpack.c.l.bf16 %v3790
      %v3839 = vunpack.c.l.bf16 %v3791
      %v3840 = vunpack.c.l.bf16 %v3792
      %v3841 = vunpack.c.l.bf16 %v3793
      %v3842 = vunpack.c.l.bf16 %v3794
      %v3843 = vunpack.c.l.bf16 %v3795
      %v3844 = vunpack.c.l.bf16 %v3796
      %v3845 = vunpack.c.l.bf16 %v3797
      %v3846 = vunpack.c.l.bf16 %v3798
      %v3847 = vunpack.c.l.bf16 %v3799
      %v3848 = vunpack.c.l.bf16 %v3800
      %v3849 = vunpack.c.l.bf16 %v3801
      %v3850 = vunpack.c.l.bf16 %v3802
      %v3851 = vunpack.c.l.bf16 %v3803
      %v3852 = vunpack.c.l.bf16 %v3804
      %v3853 = vunpack.c.l.bf16 %v3805
      %v3854 = vunpack.c.l.bf16 %v3806
      %v3855 = vunpack.c.l.bf16 %v3807
      %v3856 = vunpack.c.l.bf16 %v3808
      %v3857 = vunpack.c.l.bf16 %v3809
      %v3858 = vunpack.c.l.bf16 %v3810
      %v3859 = vunpack.c.l.bf16 %v3811
      %v3860 = vunpack.c.l.bf16 %v3812
      %v3861 = vunpack.c.l.bf16 %v3813
      %v3862 = vunpack.c.l.bf16 %v3814
      %v3879 = vrot.slane %v3847, 2
      %v3880 = vrot.slane %v3528, 2
      %v3881 = vsel %vm1971, %v3879, %v3880
      %v3882 = vrot.slane %v3559, 2
      %v3883 = vsel %vm1971, %v3880, %v3882
      %v3884 = vrot.slane %v3848, 2
      %v3885 = vrot.slane %v3530, 2
      %v3886 = vsel %vm1971, %v3884, %v3885
      %v3887 = vrot.slane %v3560, 2
      %v3888 = vsel %vm1971, %v3885, %v3887
      %v3889 = vrot.slane %v3849, 2
      %v3890 = vrot.slane %v3532, 2
      %v3891 = vsel %vm1971, %v3889, %v3890
      %v3892 = vrot.slane %v3561, 2
      %v3893 = vsel %vm1971, %v3890, %v3892
      %v3894 = vrot.slane %v3850, 2
      %v3895 = vrot.slane %v3534, 2
      %v3896 = vsel %vm1971, %v3894, %v3895
      %v3897 = vrot.slane %v3562, 2
      %v3898 = vsel %vm1971, %v3895, %v3897
      %v3899 = vrot.slane %v3851, 2
      %v3900 = vrot.slane %v3536, 2
      %v3901 = vsel %vm1971, %v3899, %v3900
      %v3902 = vrot.slane %v3563, 2
      %v3903 = vsel %vm1971, %v3900, %v3902
      %v3904 = vrot.slane %v3852, 2
      %v3905 = vrot.slane %v3538, 2
      %v3906 = vsel %vm1971, %v3904, %v3905
      %v3907 = vrot.slane %v3564, 2
      %v3908 = vsel %vm1971, %v3905, %v3907
      %v3909 = vrot.slane %v3853, 2
      %v3910 = vrot.slane %v3540, 2
      %v3911 = vsel %vm1971, %v3909, %v3910
      %v3912 = vrot.slane %v3565, 2
      %v3913 = vsel %vm1971, %v3910, %v3912
      %v3914 = vrot.slane %v3854, 2
      %v3915 = vrot.slane %v3542, 2
      %v3916 = vsel %vm1971, %v3914, %v3915
      %v3917 = vrot.slane %v3566, 2
      %v3918 = vsel %vm1971, %v3915, %v3917
      %v3919 = vrot.slane %v3855, 2
      %v3920 = vrot.slane %v3544, 2
      %v3921 = vsel %vm1971, %v3919, %v3920
      %v3922 = vrot.slane %v3567, 2
      %v3923 = vsel %vm1971, %v3920, %v3922
      %v3924 = vrot.slane %v3856, 2
      %v3925 = vrot.slane %v3546, 2
      %v3926 = vsel %vm1971, %v3924, %v3925
      %v3927 = vrot.slane %v3568, 2
      %v3928 = vsel %vm1971, %v3925, %v3927
      %v3929 = vrot.slane %v3857, 2
      %v3930 = vrot.slane %v3548, 2
      %v3931 = vsel %vm1971, %v3929, %v3930
      %v3932 = vrot.slane %v3569, 2
      %v3933 = vsel %vm1971, %v3930, %v3932
      %v3934 = vrot.slane %v3858, 2
      %v3935 = vrot.slane %v3550, 2
      %v3936 = vsel %vm1971, %v3934, %v3935
      %v3937 = vrot.slane %v3570, 2
      %v3938 = vsel %vm1971, %v3935, %v3937
      %v3939 = vrot.slane %v3859, 2
      %v3940 = vrot.slane %v3552, 2
      %v3941 = vsel %vm1971, %v3939, %v3940
      %v3942 = vrot.slane %v3571, 2
      %v3943 = vsel %vm1971, %v3940, %v3942
      %v3944 = vrot.slane %v3860, 2
      %v3945 = vrot.slane %v3554, 2
      %v3946 = vsel %vm1971, %v3944, %v3945
      %v3947 = vrot.slane %v3572, 2
      %v3948 = vsel %vm1971, %v3945, %v3947
      %v3949 = vrot.slane %v3861, 2
      %v3950 = vrot.slane %v3556, 2
      %v3951 = vsel %vm1971, %v3949, %v3950
      %v3952 = vrot.slane %v3573, 2
      %v3953 = vsel %vm1971, %v3950, %v3952
      %v3954 = vrot.slane %v3862, 2
      %v3955 = vrot.slane %v3558, 2
      %v3956 = vsel %vm1971, %v3954, %v3955
      %v3957 = vrot.slane %v3574, 2
      %v3958 = vsel %vm1971, %v3955, %v3957
      %v3991 = vmax.f32 %v3815, %v3881
      %v3992 = vmax.f32 %v3816, %v3883
      %v3993 = vmax.f32 %v3817, %v3886
      %v3994 = vmax.f32 %v3818, %v3888
      %v3995 = vmax.f32 %v3819, %v3891
      %v3996 = vmax.f32 %v3820, %v3893
      %v3997 = vmax.f32 %v3821, %v3896
      %v3998 = vmax.f32 %v3822, %v3898
      %v3999 = vmax.f32 %v3823, %v3901
      %v4000 = vmax.f32 %v3824, %v3903
      %v4001 = vmax.f32 %v3825, %v3906
      %v4002 = vmax.f32 %v3826, %v3908
      %v4003 = vmax.f32 %v3827, %v3911
      %v4004 = vmax.f32 %v3828, %v3913
      %v4005 = vmax.f32 %v3829, %v3916
      %v4006 = vmax.f32 %v3830, %v3918
      %v4007 = vmax.f32 %v3831, %v3921
      %v4008 = vmax.f32 %v3832, %v3923
      %v4009 = vmax.f32 %v3833, %v3926
      %v4010 = vmax.f32 %v3834, %v3928
      %v4011 = vmax.f32 %v3835, %v3931
      %v4012 = vmax.f32 %v3836, %v3933
      %v4013 = vmax.f32 %v3837, %v3936
      %v4014 = vmax.f32 %v3838, %v3938
      %v4015 = vmax.f32 %v3839, %v3941
      %v4016 = vmax.f32 %v3840, %v3943
      %v4017 = vmax.f32 %v3841, %v3946
      %v4018 = vmax.f32 %v3842, %v3948
      %v4019 = vmax.f32 %v3843, %v3951
      %v4020 = vmax.f32 %v3844, %v3953
      %v4021 = vmax.f32 %v3845, %v3956
      %v4022 = vmax.f32 %v3846, %v3958
      %v4023 = vpack.c.bf16 %v3991, %v3991
      %v4024 = vpack.c.bf16 %v3992, %v3992
      %v4025 = vpack.c.bf16 %v3993, %v3993
      %v4026 = vpack.c.bf16 %v3994, %v3994
      %v4027 = vpack.c.bf16 %v3995, %v3995
      %v4028 = vpack.c.bf16 %v3996, %v3996
      %v4029 = vpack.c.bf16 %v3997, %v3997
      %v4030 = vpack.c.bf16 %v3998, %v3998
      %v4031 = vpack.c.bf16 %v3999, %v3999
      %v4032 = vpack.c.bf16 %v4000, %v4000
      %v4033 = vpack.c.bf16 %v4001, %v4001
      %v4034 = vpack.c.bf16 %v4002, %v4002
      %v4035 = vpack.c.bf16 %v4003, %v4003
      %v4036 = vpack.c.bf16 %v4004, %v4004
      %v4037 = vpack.c.bf16 %v4005, %v4005
      %v4038 = vpack.c.bf16 %v4006, %v4006
      %v4039 = vpack.c.bf16 %v4007, %v4007
      %v4040 = vpack.c.bf16 %v4008, %v4008
      %v4041 = vpack.c.bf16 %v4009, %v4009
      %v4042 = vpack.c.bf16 %v4010, %v4010
      %v4043 = vpack.c.bf16 %v4011, %v4011
      %v4044 = vpack.c.bf16 %v4012, %v4012
      %v4045 = vpack.c.bf16 %v4013, %v4013
      %v4046 = vpack.c.bf16 %v4014, %v4014
      %v4047 = vpack.c.bf16 %v4015, %v4015
      %v4048 = vpack.c.bf16 %v4016, %v4016
      %v4049 = vpack.c.bf16 %v4017, %v4017
      %v4050 = vpack.c.bf16 %v4018, %v4018
      %v4051 = vpack.c.bf16 %v4019, %v4019
      %v4052 = vpack.c.bf16 %v4020, %v4020
      %v4053 = vpack.c.bf16 %v4021, %v4021
      %v4054 = vpack.c.bf16 %v4022, %v4022
      %v4055 = vld [vmem:[#allocation2 + $0x8] sm:$0x3]
      %v4056 = vld [vmem:[#allocation2 + $0x14] sm:$0x3]
      %v4057 = vld [vmem:[#allocation2 + $0x20] sm:$0x3]
      %v4058 = vld [vmem:[#allocation2 + $0x2c] sm:$0x3]
      %v4059 = vld [vmem:[#allocation2 + $0x38] sm:$0x3]
      %v4060 = vld [vmem:[#allocation2 + $0x44] sm:$0x3]
      %v4061 = vld [vmem:[#allocation2 + $0x50] sm:$0x3]
      %v4062 = vld [vmem:[#allocation2 + $0x5c] sm:$0x3]
      %v4063 = vld [vmem:[#allocation2 + $0x68] sm:$0x3]
      %v4064 = vld [vmem:[#allocation2 + $0x74] sm:$0x3]
      %v4065 = vld [vmem:[#allocation2 + $0x80] sm:$0x3]
      %v4066 = vld [vmem:[#allocation2 + $0x8c] sm:$0x3]
      %v4067 = vld [vmem:[#allocation2 + $0x98] sm:$0x3]
      %v4068 = vld [vmem:[#allocation2 + $0xa4] sm:$0x3]
      %v4069 = vld [vmem:[#allocation2 + $0xb0] sm:$0x3]
      %v4070 = vld [vmem:[#allocation2 + $0xbc] sm:$0x3]
      %v4071 = vunpack.c.l.bf16 %v4023
      %v4072 = vunpack.c.l.bf16 %v4024
      %v4073 = vunpack.c.l.bf16 %v4025
      %v4074 = vunpack.c.l.bf16 %v4026
      %v4075 = vunpack.c.l.bf16 %v4027
      %v4076 = vunpack.c.l.bf16 %v4028
      %v4077 = vunpack.c.l.bf16 %v4029
      %v4078 = vunpack.c.l.bf16 %v4030
      %v4079 = vunpack.c.l.bf16 %v4031
      %v4080 = vunpack.c.l.bf16 %v4032
      %v4081 = vunpack.c.l.bf16 %v4033
      %v4082 = vunpack.c.l.bf16 %v4034
      %v4083 = vunpack.c.l.bf16 %v4035
      %v4084 = vunpack.c.l.bf16 %v4036
      %v4085 = vunpack.c.l.bf16 %v4037
      %v4086 = vunpack.c.l.bf16 %v4038
      %v4087 = vunpack.c.l.bf16 %v4039
      %v4088 = vunpack.c.l.bf16 %v4040
      %v4089 = vunpack.c.l.bf16 %v4041
      %v4090 = vunpack.c.l.bf16 %v4042
      %v4091 = vunpack.c.l.bf16 %v4043
      %v4092 = vunpack.c.l.bf16 %v4044
      %v4093 = vunpack.c.l.bf16 %v4045
      %v4094 = vunpack.c.l.bf16 %v4046
      %v4095 = vunpack.c.l.bf16 %v4047
      %v4096 = vunpack.c.l.bf16 %v4048
      %v4097 = vunpack.c.l.bf16 %v4049
      %v4098 = vunpack.c.l.bf16 %v4050
      %v4099 = vunpack.c.l.bf16 %v4051
      %v4100 = vunpack.c.l.bf16 %v4052
      %v4101 = vunpack.c.l.bf16 %v4053
      %v4102 = vunpack.c.l.bf16 %v4054
      %v4103 = vunpack.c.l.bf16 %v4055
      %v4104 = vunpack.c.l.bf16 %v4056
      %v4105 = vunpack.c.l.bf16 %v4057
      %v4106 = vunpack.c.l.bf16 %v4058
      %v4107 = vunpack.c.l.bf16 %v4059
      %v4108 = vunpack.c.l.bf16 %v4060
      %v4109 = vunpack.c.l.bf16 %v4061
      %v4110 = vunpack.c.l.bf16 %v4062
      %v4111 = vunpack.c.l.bf16 %v4063
      %v4112 = vunpack.c.l.bf16 %v4064
      %v4113 = vunpack.c.l.bf16 %v4065
      %v4114 = vunpack.c.l.bf16 %v4066
      %v4115 = vunpack.c.l.bf16 %v4067
      %v4116 = vunpack.c.l.bf16 %v4068
      %v4117 = vunpack.c.l.bf16 %v4069
      %v4118 = vunpack.c.l.bf16 %v4070
      %v4135 = vrot.slane %v3847, 3
      %v4136 = vrot.slane %v3528, 3
      %v4137 = vsel %vm2228, %v4135, %v4136
      %v4138 = vrot.slane %v4103, 3
      %v4139 = vsel %vm2228, %v4136, %v4138
      %v4140 = vrot.slane %v3848, 3
      %v4141 = vrot.slane %v3530, 3
      %v4142 = vsel %vm2228, %v4140, %v4141
      %v4143 = vrot.slane %v4104, 3
      %v4144 = vsel %vm2228, %v4141, %v4143
      %v4145 = vrot.slane %v3849, 3
      %v4146 = vrot.slane %v3532, 3
      %v4147 = vsel %vm2228, %v4145, %v4146
      %v4148 = vrot.slane %v4105, 3
      %v4149 = vsel %vm2228, %v4146, %v4148
      %v4150 = vrot.slane %v3850, 3
      %v4151 = vrot.slane %v3534, 3
      %v4152 = vsel %vm2228, %v4150, %v4151
      %v4153 = vrot.slane %v4106, 3
      %v4154 = vsel %vm2228, %v4151, %v4153
      %v4155 = vrot.slane %v3851, 3
      %v4156 = vrot.slane %v3536, 3
      %v4157 = vsel %vm2228, %v4155, %v4156
      %v4158 = vrot.slane %v4107, 3
      %v4159 = vsel %vm2228, %v4156, %v4158
      %v4160 = vrot.slane %v3852, 3
      %v4161 = vrot.slane %v3538, 3
      %v4162 = vsel %vm2228, %v4160, %v4161
      %v4163 = vrot.slane %v4108, 3
      %v4164 = vsel %vm2228, %v4161, %v4163
      %v4165 = vrot.slane %v3853, 3
      %v4166 = vrot.slane %v3540, 3
      %v4167 = vsel %vm2228, %v4165, %v4166
      %v4168 = vrot.slane %v4109, 3
      %v4169 = vsel %vm2228, %v4166, %v4168
      %v4170 = vrot.slane %v3854, 3
      %v4171 = vrot.slane %v3542, 3
      %v4172 = vsel %vm2228, %v4170, %v4171
      %v4173 = vrot.slane %v4110, 3
      %v4174 = vsel %vm2228, %v4171, %v4173
      %v4175 = vrot.slane %v3855, 3
      %v4176 = vrot.slane %v3544, 3
      %v4177 = vsel %vm2228, %v4175, %v4176
      %v4178 = vrot.slane %v4111, 3
      %v4179 = vsel %vm2228, %v4176, %v4178
      %v4180 = vrot.slane %v3856, 3
      %v4181 = vrot.slane %v3546, 3
      %v4182 = vsel %vm2228, %v4180, %v4181
      %v4183 = vrot.slane %v4112, 3
      %v4184 = vsel %vm2228, %v4181, %v4183
      %v4185 = vrot.slane %v3857, 3
      %v4186 = vrot.slane %v3548, 3
      %v4187 = vsel %vm2228, %v4185, %v4186
      %v4188 = vrot.slane %v4113, 3
      %v4189 = vsel %vm2228, %v4186, %v4188
      %v4190 = vrot.slane %v3858, 3
      %v4191 = vrot.slane %v3550, 3
      %v4192 = vsel %vm2228, %v4190, %v4191
      %v4193 = vrot.slane %v4114, 3
      %v4194 = vsel %vm2228, %v4191, %v4193
      %v4195 = vrot.slane %v3859, 3
      %v4196 = vrot.slane %v3552, 3
      %v4197 = vsel %vm2228, %v4195, %v4196
      %v4198 = vrot.slane %v4115, 3
      %v4199 = vsel %vm2228, %v4196, %v4198
      %v4200 = vrot.slane %v3860, 3
      %v4201 = vrot.slane %v3554, 3
      %v4202 = vsel %vm2228, %v4200, %v4201
      %v4203 = vrot.slane %v4116, 3
      %v4204 = vsel %vm2228, %v4201, %v4203
      %v4205 = vrot.slane %v3861, 3
      %v4206 = vrot.slane %v3556, 3
      %v4207 = vsel %vm2228, %v4205, %v4206
      %v4208 = vrot.slane %v4117, 3
      %v4209 = vsel %vm2228, %v4206, %v4208
      %v4210 = vrot.slane %v3862, 3
      %v4211 = vrot.slane %v3558, 3
      %v4212 = vsel %vm2228, %v4210, %v4211
      %v4213 = vrot.slane %v4118, 3
      %v4214 = vsel %vm2228, %v4211, %v4213
      %v4247 = vmax.f32 %v4071, %v4137
      %v4248 = vmax.f32 %v4072, %v4139
      %v4249 = vmax.f32 %v4073, %v4142
      %v4250 = vmax.f32 %v4074, %v4144
      %v4251 = vmax.f32 %v4075, %v4147
      %v4252 = vmax.f32 %v4076, %v4149
      %v4253 = vmax.f32 %v4077, %v4152
      %v4254 = vmax.f32 %v4078, %v4154
      %v4255 = vmax.f32 %v4079, %v4157
      %v4256 = vmax.f32 %v4080, %v4159
      %v4257 = vmax.f32 %v4081, %v4162
      %v4258 = vmax.f32 %v4082, %v4164
      %v4259 = vmax.f32 %v4083, %v4167
      %v4260 = vmax.f32 %v4084, %v4169
      %v4261 = vmax.f32 %v4085, %v4172
      %v4262 = vmax.f32 %v4086, %v4174
      %v4263 = vmax.f32 %v4087, %v4177
      %v4264 = vmax.f32 %v4088, %v4179
      %v4265 = vmax.f32 %v4089, %v4182
      %v4266 = vmax.f32 %v4090, %v4184
      %v4267 = vmax.f32 %v4091, %v4187
      %v4268 = vmax.f32 %v4092, %v4189
      %v4269 = vmax.f32 %v4093, %v4192
      %v4270 = vmax.f32 %v4094, %v4194
      %v4271 = vmax.f32 %v4095, %v4197
      %v4272 = vmax.f32 %v4096, %v4199
      %v4273 = vmax.f32 %v4097, %v4202
      %v4274 = vmax.f32 %v4098, %v4204
      %v4275 = vmax.f32 %v4099, %v4207
      %v4276 = vmax.f32 %v4100, %v4209
      %v4277 = vmax.f32 %v4101, %v4212
      %v4278 = vmax.f32 %v4102, %v4214
      %v4279 = vpack.c.bf16 %v4247, %v4247
      %v4280 = vpack.c.bf16 %v4248, %v4248
      %v4281 = vpack.c.bf16 %v4249, %v4249
      %v4282 = vpack.c.bf16 %v4250, %v4250
      %v4283 = vpack.c.bf16 %v4251, %v4251
      %v4284 = vpack.c.bf16 %v4252, %v4252
      %v4285 = vpack.c.bf16 %v4253, %v4253
      %v4286 = vpack.c.bf16 %v4254, %v4254
      %v4287 = vpack.c.bf16 %v4255, %v4255
      %v4288 = vpack.c.bf16 %v4256, %v4256
      %v4289 = vpack.c.bf16 %v4257, %v4257
      %v4290 = vpack.c.bf16 %v4258, %v4258
      %v4291 = vpack.c.bf16 %v4259, %v4259
      %v4292 = vpack.c.bf16 %v4260, %v4260
      %v4293 = vpack.c.bf16 %v4261, %v4261
      %v4294 = vpack.c.bf16 %v4262, %v4262
      %v4295 = vpack.c.bf16 %v4263, %v4263
      %v4296 = vpack.c.bf16 %v4264, %v4264
      %v4297 = vpack.c.bf16 %v4265, %v4265
      %v4298 = vpack.c.bf16 %v4266, %v4266
      %v4299 = vpack.c.bf16 %v4267, %v4267
      %v4300 = vpack.c.bf16 %v4268, %v4268
      %v4301 = vpack.c.bf16 %v4269, %v4269
      %v4302 = vpack.c.bf16 %v4270, %v4270
      %v4303 = vpack.c.bf16 %v4271, %v4271
      %v4304 = vpack.c.bf16 %v4272, %v4272
      %v4305 = vpack.c.bf16 %v4273, %v4273
      %v4306 = vpack.c.bf16 %v4274, %v4274
      %v4307 = vpack.c.bf16 %v4275, %v4275
      %v4308 = vpack.c.bf16 %v4276, %v4276
      %v4309 = vpack.c.bf16 %v4277, %v4277
      %v4310 = vpack.c.bf16 %v4278, %v4278
      %v4311 = vld [vmem:[#allocation2] sm:$0xc]
      %v4312 = vld [vmem:[#allocation2 + $0xc] sm:$0xc]
      %v4313 = vld [vmem:[#allocation2 + $0x18] sm:$0xc]
      %v4314 = vld [vmem:[#allocation2 + $0x24] sm:$0xc]
      %v4315 = vld [vmem:[#allocation2 + $0x30] sm:$0xc]
      %v4316 = vld [vmem:[#allocation2 + $0x3c] sm:$0xc]
      %v4317 = vld [vmem:[#allocation2 + $0x48] sm:$0xc]
      %v4318 = vld [vmem:[#allocation2 + $0x54] sm:$0xc]
      %v4319 = vld [vmem:[#allocation2 + $0x60] sm:$0xc]
      %v4320 = vld [vmem:[#allocation2 + $0x6c] sm:$0xc]
      %v4321 = vld [vmem:[#allocation2 + $0x78] sm:$0xc]
      %v4322 = vld [vmem:[#allocation2 + $0x84] sm:$0xc]
      %v4323 = vld [vmem:[#allocation2 + $0x90] sm:$0xc]
      %v4324 = vld [vmem:[#allocation2 + $0x9c] sm:$0xc]
      %v4325 = vld [vmem:[#allocation2 + $0xa8] sm:$0xc]
      %v4326 = vld [vmem:[#allocation2 + $0xb4] sm:$0xc]
      %v4327 = vunpack.c.l.bf16 %v4279
      %v4328 = vunpack.c.l.bf16 %v4280
      %v4329 = vunpack.c.l.bf16 %v4281
      %v4330 = vunpack.c.l.bf16 %v4282
      %v4331 = vunpack.c.l.bf16 %v4283
      %v4332 = vunpack.c.l.bf16 %v4284
      %v4333 = vunpack.c.l.bf16 %v4285
      %v4334 = vunpack.c.l.bf16 %v4286
      %v4335 = vunpack.c.l.bf16 %v4287
      %v4336 = vunpack.c.l.bf16 %v4288
      %v4337 = vunpack.c.l.bf16 %v4289
      %v4338 = vunpack.c.l.bf16 %v4290
      %v4339 = vunpack.c.l.bf16 %v4291
      %v4340 = vunpack.c.l.bf16 %v4292
      %v4341 = vunpack.c.l.bf16 %v4293
      %v4342 = vunpack.c.l.bf16 %v4294
      %v4343 = vunpack.c.l.bf16 %v4295
      %v4344 = vunpack.c.l.bf16 %v4296
      %v4345 = vunpack.c.l.bf16 %v4297
      %v4346 = vunpack.c.l.bf16 %v4298
      %v4347 = vunpack.c.l.bf16 %v4299
      %v4348 = vunpack.c.l.bf16 %v4300
      %v4349 = vunpack.c.l.bf16 %v4301
      %v4350 = vunpack.c.l.bf16 %v4302
      %v4351 = vunpack.c.l.bf16 %v4303
      %v4352 = vunpack.c.l.bf16 %v4304
      %v4353 = vunpack.c.l.bf16 %v4305
      %v4354 = vunpack.c.l.bf16 %v4306
      %v4355 = vunpack.c.l.bf16 %v4307
      %v4356 = vunpack.c.l.bf16 %v4308
      %v4357 = vunpack.c.l.bf16 %v4309
      %v4358 = vunpack.c.l.bf16 %v4310
      %v4359 = vunpack.c.l.bf16 %v4311
      %v4360 = vunpack.c.l.bf16 %v4312
      %v4361 = vunpack.c.l.bf16 %v4313
      %v4362 = vunpack.c.l.bf16 %v4314
      %v4363 = vunpack.c.l.bf16 %v4315
      %v4364 = vunpack.c.l.bf16 %v4316
      %v4365 = vunpack.c.l.bf16 %v4317
      %v4366 = vunpack.c.l.bf16 %v4318
      %v4367 = vunpack.c.l.bf16 %v4319
      %v4368 = vunpack.c.l.bf16 %v4320
      %v4369 = vunpack.c.l.bf16 %v4321
      %v4370 = vunpack.c.l.bf16 %v4322
      %v4371 = vunpack.c.l.bf16 %v4323
      %v4372 = vunpack.c.l.bf16 %v4324
      %v4373 = vunpack.c.l.bf16 %v4325
      %v4374 = vunpack.c.l.bf16 %v4326
      %v4391 = vrot.slane %v4359, 4
      %v4392 = vrot.slane %v3528, 4
      %v4393 = vsel %vm2485, %v4391, %v4392
      %v4394 = vrot.slane %v4103, 4
      %v4395 = vsel %vm2485, %v4392, %v4394
      %v4396 = vrot.slane %v4360, 4
      %v4397 = vrot.slane %v3530, 4
      %v4398 = vsel %vm2485, %v4396, %v4397
      %v4399 = vrot.slane %v4104, 4
      %v4400 = vsel %vm2485, %v4397, %v4399
      %v4401 = vrot.slane %v4361, 4
      %v4402 = vrot.slane %v3532, 4
      %v4403 = vsel %vm2485, %v4401, %v4402
      %v4404 = vrot.slane %v4105, 4
      %v4405 = vsel %vm2485, %v4402, %v4404
      %v4406 = vrot.slane %v4362, 4
      %v4407 = vrot.slane %v3534, 4
      %v4408 = vsel %vm2485, %v4406, %v4407
      %v4409 = vrot.slane %v4106, 4
      %v4410 = vsel %vm2485, %v4407, %v4409
      %v4411 = vrot.slane %v4363, 4
      %v4412 = vrot.slane %v3536, 4
      %v4413 = vsel %vm2485, %v4411, %v4412
      %v4414 = vrot.slane %v4107, 4
      %v4415 = vsel %vm2485, %v4412, %v4414
      %v4416 = vrot.slane %v4364, 4
      %v4417 = vrot.slane %v3538, 4
      %v4418 = vsel %vm2485, %v4416, %v4417
      %v4419 = vrot.slane %v4108, 4
      %v4420 = vsel %vm2485, %v4417, %v4419
      %v4421 = vrot.slane %v4365, 4
      %v4422 = vrot.slane %v3540, 4
      %v4423 = vsel %vm2485, %v4421, %v4422
      %v4424 = vrot.slane %v4109, 4
      %v4425 = vsel %vm2485, %v4422, %v4424
      %v4426 = vrot.slane %v4366, 4
      %v4427 = vrot.slane %v3542, 4
      %v4428 = vsel %vm2485, %v4426, %v4427
      %v4429 = vrot.slane %v4110, 4
      %v4430 = vsel %vm2485, %v4427, %v4429
      %v4431 = vrot.slane %v4367, 4
      %v4432 = vrot.slane %v3544, 4
      %v4433 = vsel %vm2485, %v4431, %v4432
      %v4434 = vrot.slane %v4111, 4
      %v4435 = vsel %vm2485, %v4432, %v4434
      %v4436 = vrot.slane %v4368, 4
      %v4437 = vrot.slane %v3546, 4
      %v4438 = vsel %vm2485, %v4436, %v4437
      %v4439 = vrot.slane %v4112, 4
      %v4440 = vsel %vm2485, %v4437, %v4439
      %v4441 = vrot.slane %v4369, 4
      %v4442 = vrot.slane %v3548, 4
      %v4443 = vsel %vm2485, %v4441, %v4442
      %v4444 = vrot.slane %v4113, 4
      %v4445 = vsel %vm2485, %v4442, %v4444
      %v4446 = vrot.slane %v4370, 4
      %v4447 = vrot.slane %v3550, 4
      %v4448 = vsel %vm2485, %v4446, %v4447
      %v4449 = vrot.slane %v4114, 4
      %v4450 = vsel %vm2485, %v4447, %v4449
      %v4451 = vrot.slane %v4371, 4
      %v4452 = vrot.slane %v3552, 4
      %v4453 = vsel %vm2485, %v4451, %v4452
      %v4454 = vrot.slane %v4115, 4
      %v4455 = vsel %vm2485, %v4452, %v4454
      %v4456 = vrot.slane %v4372, 4
      %v4457 = vrot.slane %v3554, 4
      %v4458 = vsel %vm2485, %v4456, %v4457
      %v4459 = vrot.slane %v4116, 4
      %v4460 = vsel %vm2485, %v4457, %v4459
      %v4461 = vrot.slane %v4373, 4
      %v4462 = vrot.slane %v3556, 4
      %v4463 = vsel %vm2485, %v4461, %v4462
      %v4464 = vrot.slane %v4117, 4
      %v4465 = vsel %vm2485, %v4462, %v4464
      %v4466 = vrot.slane %v4374, 4
      %v4467 = vrot.slane %v3558, 4
      %v4468 = vsel %vm2485, %v4466, %v4467
      %v4469 = vrot.slane %v4118, 4
      %v4470 = vsel %vm2485, %v4467, %v4469
      %v4503 = vmax.f32 %v4327, %v4393
      %v4504 = vmax.f32 %v4328, %v4395
      %v4505 = vmax.f32 %v4329, %v4398
      %v4506 = vmax.f32 %v4330, %v4400
      %v4507 = vmax.f32 %v4331, %v4403
      %v4508 = vmax.f32 %v4332, %v4405
      %v4509 = vmax.f32 %v4333, %v4408
      %v4510 = vmax.f32 %v4334, %v4410
      %v4511 = vmax.f32 %v4335, %v4413
      %v4512 = vmax.f32 %v4336, %v4415
      %v4513 = vmax.f32 %v4337, %v4418
      %v4514 = vmax.f32 %v4338, %v4420
      %v4515 = vmax.f32 %v4339, %v4423
      %v4516 = vmax.f32 %v4340, %v4425
      %v4517 = vmax.f32 %v4341, %v4428
      %v4518 = vmax.f32 %v4342, %v4430
      %v4519 = vmax.f32 %v4343, %v4433
      %v4520 = vmax.f32 %v4344, %v4435
      %v4521 = vmax.f32 %v4345, %v4438
      %v4522 = vmax.f32 %v4346, %v4440
      %v4523 = vmax.f32 %v4347, %v4443
      %v4524 = vmax.f32 %v4348, %v4445
      %v4525 = vmax.f32 %v4349, %v4448
      %v4526 = vmax.f32 %v4350, %v4450
      %v4527 = vmax.f32 %v4351, %v4453
      %v4528 = vmax.f32 %v4352, %v4455
      %v4529 = vmax.f32 %v4353, %v4458
      %v4530 = vmax.f32 %v4354, %v4460
      %v4531 = vmax.f32 %v4355, %v4463
      %v4532 = vmax.f32 %v4356, %v4465
      %v4533 = vmax.f32 %v4357, %v4468
      %v4534 = vmax.f32 %v4358, %v4470
      %v4535 = vpack.c.bf16 %v4503, %v4503
      %v4536 = vpack.c.bf16 %v4504, %v4504
      %v4537 = vpack.c.bf16 %v4505, %v4505
      %v4538 = vpack.c.bf16 %v4506, %v4506
      %v4539 = vpack.c.bf16 %v4507, %v4507
      %v4540 = vpack.c.bf16 %v4508, %v4508
      %v4541 = vpack.c.bf16 %v4509, %v4509
      %v4542 = vpack.c.bf16 %v4510, %v4510
      %v4543 = vpack.c.bf16 %v4511, %v4511
      %v4544 = vpack.c.bf16 %v4512, %v4512
      %v4545 = vpack.c.bf16 %v4513, %v4513
      %v4546 = vpack.c.bf16 %v4514, %v4514
      %v4547 = vpack.c.bf16 %v4515, %v4515
      %v4548 = vpack.c.bf16 %v4516, %v4516
      %v4549 = vpack.c.bf16 %v4517, %v4517
      %v4550 = vpack.c.bf16 %v4518, %v4518
      %v4551 = vpack.c.bf16 %v4519, %v4519
      %v4552 = vpack.c.bf16 %v4520, %v4520
      %v4553 = vpack.c.bf16 %v4521, %v4521
      %v4554 = vpack.c.bf16 %v4522, %v4522
      %v4555 = vpack.c.bf16 %v4523, %v4523
      %v4556 = vpack.c.bf16 %v4524, %v4524
      %v4557 = vpack.c.bf16 %v4525, %v4525
      %v4558 = vpack.c.bf16 %v4526, %v4526
      %v4559 = vpack.c.bf16 %v4527, %v4527
      %v4560 = vpack.c.bf16 %v4528, %v4528
      %v4561 = vpack.c.bf16 %v4529, %v4529
      %v4562 = vpack.c.bf16 %v4530, %v4530
      %v4563 = vpack.c.bf16 %v4531, %v4531
      %v4564 = vpack.c.bf16 %v4532, %v4532
      %v4565 = vpack.c.bf16 %v4533, %v4533
      %v4566 = vpack.c.bf16 %v4534, %v4534
      %v4599 = vunpack.c.l.b16 %v4535
      %v4600 = vunpack.c.l.b16 %v4536
      %v4601 = vunpack.c.l.b16 %v4537
      %v4602 = vunpack.c.l.b16 %v4538
      %v4603 = vunpack.c.l.b16 %v4539
      %v4604 = vunpack.c.l.b16 %v4540
      %v4605 = vunpack.c.l.b16 %v4541
      %v4606 = vunpack.c.l.b16 %v4542
      %v4607 = vunpack.c.l.b16 %v4543
      %v4608 = vunpack.c.l.b16 %v4544
      %v4609 = vunpack.c.l.b16 %v4545
      %v4610 = vunpack.c.l.b16 %v4546
      %v4611 = vunpack.c.l.b16 %v4547
      %v4612 = vunpack.c.l.b16 %v4548
      %v4613 = vunpack.c.l.b16 %v4549
      %v4614 = vunpack.c.l.b16 %v4550
      %v4615 = vunpack.c.l.b16 %v4551
      %v4616 = vunpack.c.l.b16 %v4552
      %v4617 = vunpack.c.l.b16 %v4553
      %v4618 = vunpack.c.l.b16 %v4554
      %v4619 = vunpack.c.l.b16 %v4555
      %v4620 = vunpack.c.l.b16 %v4556
      %v4621 = vunpack.c.l.b16 %v4557
      %v4622 = vunpack.c.l.b16 %v4558
      %v4623 = vunpack.c.l.b16 %v4559
      %v4624 = vunpack.c.l.b16 %v4560
      %v4625 = vunpack.c.l.b16 %v4561
      %v4626 = vunpack.c.l.b16 %v4562
      %v4627 = vunpack.c.l.b16 %v4563
      %v4628 = vunpack.c.l.b16 %v4564
      %v4629 = vunpack.c.l.b16 %v4565
      %v4630 = vunpack.c.l.b16 %v4566
      %v4631 = vpack.c.b16 %v4600, %v4599
      %v4632 = vpack.c.b16 %v4602, %v4601
      %v4633 = vpack.c.b16 %v4604, %v4603
      %v4634 = vpack.c.b16 %v4606, %v4605
      %v4635 = vpack.c.b16 %v4608, %v4607
      %v4636 = vpack.c.b16 %v4610, %v4609
      %v4637 = vpack.c.b16 %v4612, %v4611
      %v4638 = vpack.c.b16 %v4614, %v4613
      %v4639 = vpack.c.b16 %v4616, %v4615
      %v4640 = vpack.c.b16 %v4618, %v4617
      %v4641 = vpack.c.b16 %v4620, %v4619
      %v4642 = vpack.c.b16 %v4622, %v4621
      %v4643 = vpack.c.b16 %v4624, %v4623
      %v4644 = vpack.c.b16 %v4626, %v4625
      %v4645 = vpack.c.b16 %v4628, %v4627
      %v4646 = vpack.c.b16 %v4630, %v4629
      %v4663 = vunpack.c.l.bf16 %v4631
      %v4664 = vunpack.c.h.bf16 %v4631
      %v4665 = vunpack.c.l.bf16 %v4632
      %v4666 = vunpack.c.h.bf16 %v4632
      %v4667 = vunpack.c.l.bf16 %v4633
      %v4668 = vunpack.c.h.bf16 %v4633
      %v4669 = vunpack.c.l.bf16 %v4634
      %v4670 = vunpack.c.h.bf16 %v4634
      %v4671 = vunpack.c.l.bf16 %v4635
      %v4672 = vunpack.c.h.bf16 %v4635
      %v4673 = vunpack.c.l.bf16 %v4636
      %v4674 = vunpack.c.h.bf16 %v4636
      %v4675 = vunpack.c.l.bf16 %v4637
      %v4676 = vunpack.c.h.bf16 %v4637
      %v4677 = vunpack.c.l.bf16 %v4638
      %v4678 = vunpack.c.h.bf16 %v4638
      %v4679 = vunpack.c.l.bf16 %v4639
      %v4680 = vunpack.c.h.bf16 %v4639
      %v4681 = vunpack.c.l.bf16 %v4640
      %v4682 = vunpack.c.h.bf16 %v4640
      %v4683 = vunpack.c.l.bf16 %v4641
      %v4684 = vunpack.c.h.bf16 %v4641
      %v4685 = vunpack.c.l.bf16 %v4642
      %v4686 = vunpack.c.h.bf16 %v4642
      %v4687 = vunpack.c.l.bf16 %v4643
      %v4688 = vunpack.c.h.bf16 %v4643
      %v4689 = vunpack.c.l.bf16 %v4644
      %v4690 = vunpack.c.h.bf16 %v4644
      %v4691 = vunpack.c.l.bf16 %v4645
      %v4692 = vunpack.c.h.bf16 %v4645
      %v4693 = vmax.f32 %v2758, %v4663
      %v4694 = vmax.f32 %v2759, %v4664
      %v4695 = vmax.f32 %v4663, %v4665
      %v4696 = vmax.f32 %v4664, %v4666
      %v4697 = vmax.f32 %v4665, %v4667
      %v4698 = vmax.f32 %v4666, %v4668
      %v4699 = vmax.f32 %v4667, %v4669
      %v4700 = vmax.f32 %v4668, %v4670
      %v4701 = vmax.f32 %v4669, %v4671
      %v4702 = vmax.f32 %v4670, %v4672
      %v4703 = vmax.f32 %v4671, %v4673
      %v4704 = vmax.f32 %v4672, %v4674
      %v4705 = vmax.f32 %v4673, %v4675
      %v4706 = vmax.f32 %v4674, %v4676
      %v4707 = vmax.f32 %v4675, %v4677
      %v4708 = vmax.f32 %v4676, %v4678
      %v4709 = vmax.f32 %v4677, %v4679
      %v4710 = vmax.f32 %v4678, %v4680
      %v4711 = vmax.f32 %v4679, %v4681
      %v4712 = vmax.f32 %v4680, %v4682
      %v4713 = vmax.f32 %v4681, %v4683
      %v4714 = vmax.f32 %v4682, %v4684
      %v4715 = vmax.f32 %v4683, %v4685
      %v4716 = vmax.f32 %v4684, %v4686
      %v4717 = vmax.f32 %v4685, %v4687
      %v4718 = vmax.f32 %v4686, %v4688
      %v4719 = vmax.f32 %v4687, %v4689
      %v4720 = vmax.f32 %v4688, %v4690
      %v4721 = vmax.f32 %v4689, %v4691
      %v4722 = vmax.f32 %v4690, %v4692
      %v4723 = vpack.c.bf16 %v4693, %v4693
      %v4724 = vpack.c.bf16 %v4694, %v4694
      %v4725 = vpack.c.bf16 %v4695, %v4695
      %v4726 = vpack.c.bf16 %v4696, %v4696
      %v4727 = vpack.c.bf16 %v4697, %v4697
      %v4728 = vpack.c.bf16 %v4698, %v4698
      %v4729 = vpack.c.bf16 %v4699, %v4699
      %v4730 = vpack.c.bf16 %v4700, %v4700
      %v4731 = vpack.c.bf16 %v4701, %v4701
      %v4732 = vpack.c.bf16 %v4702, %v4702
      %v4733 = vpack.c.bf16 %v4703, %v4703
      %v4734 = vpack.c.bf16 %v4704, %v4704
      %v4735 = vpack.c.bf16 %v4705, %v4705
      %v4736 = vpack.c.bf16 %v4706, %v4706
      %v4737 = vpack.c.bf16 %v4707, %v4707
      %v4738 = vpack.c.bf16 %v4708, %v4708
      %v4739 = vpack.c.bf16 %v4709, %v4709
      %v4740 = vpack.c.bf16 %v4710, %v4710
      %v4741 = vpack.c.bf16 %v4711, %v4711
      %v4742 = vpack.c.bf16 %v4712, %v4712
      %v4743 = vpack.c.bf16 %v4713, %v4713
      %v4744 = vpack.c.bf16 %v4714, %v4714
      %v4745 = vpack.c.bf16 %v4715, %v4715
      %v4746 = vpack.c.bf16 %v4716, %v4716
      %v4747 = vpack.c.bf16 %v4717, %v4717
      %v4748 = vpack.c.bf16 %v4718, %v4718
      %v4749 = vpack.c.bf16 %v4719, %v4719
      %v4750 = vpack.c.bf16 %v4720, %v4720
      %v4751 = vpack.c.bf16 %v4721, %v4721
      %v4752 = vpack.c.bf16 %v4722, %v4722
      %v4753 = vunpack.c.l.bf16 %v4723
      %v4754 = vunpack.c.l.bf16 %v4724
      %v4755 = vunpack.c.l.bf16 %v4725
      %v4756 = vunpack.c.l.bf16 %v4726
      %v4757 = vunpack.c.l.bf16 %v4727
      %v4758 = vunpack.c.l.bf16 %v4728
      %v4759 = vunpack.c.l.bf16 %v4729
      %v4760 = vunpack.c.l.bf16 %v4730
      %v4761 = vunpack.c.l.bf16 %v4731
      %v4762 = vunpack.c.l.bf16 %v4732
      %v4763 = vunpack.c.l.bf16 %v4733
      %v4764 = vunpack.c.l.bf16 %v4734
      %v4765 = vunpack.c.l.bf16 %v4735
      %v4766 = vunpack.c.l.bf16 %v4736
      %v4767 = vunpack.c.l.bf16 %v4737
      %v4768 = vunpack.c.l.bf16 %v4738
      %v4769 = vunpack.c.l.bf16 %v4739
      %v4770 = vunpack.c.l.bf16 %v4740
      %v4771 = vunpack.c.l.bf16 %v4741
      %v4772 = vunpack.c.l.bf16 %v4742
      %v4773 = vunpack.c.l.bf16 %v4743
      %v4774 = vunpack.c.l.bf16 %v4744
      %v4775 = vunpack.c.l.bf16 %v4745
      %v4776 = vunpack.c.l.bf16 %v4746
      %v4777 = vunpack.c.l.bf16 %v4747
      %v4778 = vunpack.c.l.bf16 %v4748
      %v4779 = vunpack.c.l.bf16 %v4749
      %v4780 = vunpack.c.l.bf16 %v4750
      %v4781 = vunpack.c.l.bf16 %v4751
      %v4782 = vunpack.c.l.bf16 %v4752
      %v4783 = vunpack.c.l.bf16 %v4646
      %v4784 = vunpack.c.h.bf16 %v4646
      %v4785 = vmax.f32 %v2852, %v4663
      %v4786 = vmax.f32 %v2853, %v4664
      %v4787 = vmax.f32 %v4753, %v4665
      %v4788 = vmax.f32 %v4754, %v4666
      %v4789 = vmax.f32 %v4755, %v4667
      %v4790 = vmax.f32 %v4756, %v4668
      %v4791 = vmax.f32 %v4757, %v4669
      %v4792 = vmax.f32 %v4758, %v4670
      %v4793 = vmax.f32 %v4759, %v4671
      %v4794 = vmax.f32 %v4760, %v4672
      %v4795 = vmax.f32 %v4761, %v4673
      %v4796 = vmax.f32 %v4762, %v4674
      %v4797 = vmax.f32 %v4763, %v4675
      %v4798 = vmax.f32 %v4764, %v4676
      %v4799 = vmax.f32 %v4765, %v4677
      %v4800 = vmax.f32 %v4766, %v4678
      %v4801 = vmax.f32 %v4767, %v4679
      %v4802 = vmax.f32 %v4768, %v4680
      %v4803 = vmax.f32 %v4769, %v4681
      %v4804 = vmax.f32 %v4770, %v4682
      %v4805 = vmax.f32 %v4771, %v4683
      %v4806 = vmax.f32 %v4772, %v4684
      %v4807 = vmax.f32 %v4773, %v4685
      %v4808 = vmax.f32 %v4774, %v4686
      %v4809 = vmax.f32 %v4775, %v4687
      %v4810 = vmax.f32 %v4776, %v4688
      %v4811 = vmax.f32 %v4777, %v4689
      %v4812 = vmax.f32 %v4778, %v4690
      %v4813 = vmax.f32 %v4779, %v4691
      %v4814 = vmax.f32 %v4780, %v4692
      %v4815 = vmax.f32 %v4781, %v4783
      %v4816 = vmax.f32 %v4782, %v4784
      %v4817 = vpack.c.bf16 %v4785, %v4785
      %v4818 = vpack.c.bf16 %v4786, %v4786
      %v4819 = vpack.c.bf16 %v4787, %v4787
      %v4820 = vpack.c.bf16 %v4788, %v4788
      %v4821 = vpack.c.bf16 %v4789, %v4789
      %v4822 = vpack.c.bf16 %v4790, %v4790
      %v4823 = vpack.c.bf16 %v4791, %v4791
      %v4824 = vpack.c.bf16 %v4792, %v4792
      %v4825 = vpack.c.bf16 %v4793, %v4793
      %v4826 = vpack.c.bf16 %v4794, %v4794
      %v4827 = vpack.c.bf16 %v4795, %v4795
      %v4828 = vpack.c.bf16 %v4796, %v4796
      %v4829 = vpack.c.bf16 %v4797, %v4797
      %v4830 = vpack.c.bf16 %v4798, %v4798
      %v4831 = vpack.c.bf16 %v4799, %v4799
      %v4832 = vpack.c.bf16 %v4800, %v4800
      %v4833 = vpack.c.bf16 %v4801, %v4801
      %v4834 = vpack.c.bf16 %v4802, %v4802
      %v4835 = vpack.c.bf16 %v4803, %v4803
      %v4836 = vpack.c.bf16 %v4804, %v4804
      %v4837 = vpack.c.bf16 %v4805, %v4805
      %v4838 = vpack.c.bf16 %v4806, %v4806
      %v4839 = vpack.c.bf16 %v4807, %v4807
      %v4840 = vpack.c.bf16 %v4808, %v4808
      %v4841 = vpack.c.bf16 %v4809, %v4809
      %v4842 = vpack.c.bf16 %v4810, %v4810
      %v4843 = vpack.c.bf16 %v4811, %v4811
      %v4844 = vpack.c.bf16 %v4812, %v4812
      %v4845 = vpack.c.bf16 %v4813, %v4813
      %v4846 = vpack.c.bf16 %v4814, %v4814
      %v4847 = vpack.c.bf16 %v4815, %v4815
      %v4848 = vpack.c.bf16 %v4816, %v4816
      %v4849 = vunpack.c.l.bf16 %v4817
      %v4850 = vunpack.c.l.bf16 %v4818
      %v4851 = vunpack.c.l.bf16 %v4819
      %v4852 = vunpack.c.l.bf16 %v4820
      %v4853 = vunpack.c.l.bf16 %v4821
      %v4854 = vunpack.c.l.bf16 %v4822
      %v4855 = vunpack.c.l.bf16 %v4823
      %v4856 = vunpack.c.l.bf16 %v4824
      %v4857 = vunpack.c.l.bf16 %v4825
      %v4858 = vunpack.c.l.bf16 %v4826
      %v4859 = vunpack.c.l.bf16 %v4827
      %v4860 = vunpack.c.l.bf16 %v4828
      %v4861 = vunpack.c.l.bf16 %v4829
      %v4862 = vunpack.c.l.bf16 %v4830
      %v4863 = vunpack.c.l.bf16 %v4831
      %v4864 = vunpack.c.l.bf16 %v4832
      %v4865 = vunpack.c.l.bf16 %v4833
      %v4866 = vunpack.c.l.bf16 %v4834
      %v4867 = vunpack.c.l.bf16 %v4835
      %v4868 = vunpack.c.l.bf16 %v4836
      %v4869 = vunpack.c.l.bf16 %v4837
      %v4870 = vunpack.c.l.bf16 %v4838
      %v4871 = vunpack.c.l.bf16 %v4839
      %v4872 = vunpack.c.l.bf16 %v4840
      %v4873 = vunpack.c.l.bf16 %v4841
      %v4874 = vunpack.c.l.bf16 %v4842
      %v4875 = vunpack.c.l.bf16 %v4843
      %v4876 = vunpack.c.l.bf16 %v4844
      %v4877 = vunpack.c.l.bf16 %v4845
      %v4878 = vunpack.c.l.bf16 %v4846
      %v4879 = vunpack.c.l.bf16 %v4847
      %v4880 = vunpack.c.l.bf16 %v4848
      %v4881 = vmax.f32 %v4849, %v4665
      %v4882 = vmax.f32 %v4850, %v4666
      %v4883 = vmax.f32 %v4851, %v4667
      %v4884 = vmax.f32 %v4852, %v4668
      %v4885 = vmax.f32 %v4853, %v4669
      %v4886 = vmax.f32 %v4854, %v4670
      %v4887 = vmax.f32 %v4855, %v4671
      %v4888 = vmax.f32 %v4856, %v4672
      %v4889 = vmax.f32 %v4857, %v4673
      %v4890 = vmax.f32 %v4858, %v4674
      %v4891 = vmax.f32 %v4859, %v4675
      %v4892 = vmax.f32 %v4860, %v4676
      %v4893 = vmax.f32 %v4861, %v4677
      %v4894 = vmax.f32 %v4862, %v4678
      %v4895 = vmax.f32 %v4863, %v4679
      %v4896 = vmax.f32 %v4864, %v4680
      %v4897 = vmax.f32 %v4865, %v4681
      %v4898 = vmax.f32 %v4866, %v4682
      %v4899 = vmax.f32 %v4867, %v4683
      %v4900 = vmax.f32 %v4868, %v4684
      %v4901 = vmax.f32 %v4869, %v4685
      %v4902 = vmax.f32 %v4870, %v4686
      %v4903 = vmax.f32 %v4871, %v4687
      %v4904 = vmax.f32 %v4872, %v4688
      %v4905 = vmax.f32 %v4873, %v4689
      %v4906 = vmax.f32 %v4874, %v4690
      %v4907 = vmax.f32 %v4875, %v4691
      %v4908 = vmax.f32 %v4876, %v4692
      %v4909 = vmax.f32 %v4877, %v4783
      %v4910 = vmax.f32 %v4878, %v4784
      %v4911 = vmax.f32 %v4879, %v2758
      %v4912 = vmax.f32 %v4880, %v2759
      %v4913 = vpack.c.bf16 %v4881, %v4881
      %v4914 = vpack.c.bf16 %v4882, %v4882
      %v4915 = vpack.c.bf16 %v4883, %v4883
      %v4916 = vpack.c.bf16 %v4884, %v4884
      %v4917 = vpack.c.bf16 %v4885, %v4885
      %v4918 = vpack.c.bf16 %v4886, %v4886
      %v4919 = vpack.c.bf16 %v4887, %v4887
      %v4920 = vpack.c.bf16 %v4888, %v4888
      %v4921 = vpack.c.bf16 %v4889, %v4889
      %v4922 = vpack.c.bf16 %v4890, %v4890
      %v4923 = vpack.c.bf16 %v4891, %v4891
      %v4924 = vpack.c.bf16 %v4892, %v4892
      %v4925 = vpack.c.bf16 %v4893, %v4893
      %v4926 = vpack.c.bf16 %v4894, %v4894
      %v4927 = vpack.c.bf16 %v4895, %v4895
      %v4928 = vpack.c.bf16 %v4896, %v4896
      %v4929 = vpack.c.bf16 %v4897, %v4897
      %v4930 = vpack.c.bf16 %v4898, %v4898
      %v4931 = vpack.c.bf16 %v4899, %v4899
      %v4932 = vpack.c.bf16 %v4900, %v4900
      %v4933 = vpack.c.bf16 %v4901, %v4901
      %v4934 = vpack.c.bf16 %v4902, %v4902
      %v4935 = vpack.c.bf16 %v4903, %v4903
      %v4936 = vpack.c.bf16 %v4904, %v4904
      %v4937 = vpack.c.bf16 %v4905, %v4905
      %v4938 = vpack.c.bf16 %v4906, %v4906
      %v4939 = vpack.c.bf16 %v4907, %v4907
      %v4940 = vpack.c.bf16 %v4908, %v4908
      %v4941 = vpack.c.bf16 %v4909, %v4909
      %v4942 = vpack.c.bf16 %v4910, %v4910
      %v4943 = vpack.c.bf16 %v4911, %v4911
      %v4944 = vpack.c.bf16 %v4912, %v4912
      %v4945 = vunpack.c.l.bf16 %v4913
      %v4946 = vunpack.c.l.bf16 %v4914
      %v4947 = vunpack.c.l.bf16 %v4915
      %v4948 = vunpack.c.l.bf16 %v4916
      %v4949 = vunpack.c.l.bf16 %v4917
      %v4950 = vunpack.c.l.bf16 %v4918
      %v4951 = vunpack.c.l.bf16 %v4919
      %v4952 = vunpack.c.l.bf16 %v4920
      %v4953 = vunpack.c.l.bf16 %v4921
      %v4954 = vunpack.c.l.bf16 %v4922
      %v4955 = vunpack.c.l.bf16 %v4923
      %v4956 = vunpack.c.l.bf16 %v4924
      %v4957 = vunpack.c.l.bf16 %v4925
      %v4958 = vunpack.c.l.bf16 %v4926
      %v4959 = vunpack.c.l.bf16 %v4927
      %v4960 = vunpack.c.l.bf16 %v4928
      %v4961 = vunpack.c.l.bf16 %v4929
      %v4962 = vunpack.c.l.bf16 %v4930
      %v4963 = vunpack.c.l.bf16 %v4931
      %v4964 = vunpack.c.l.bf16 %v4932
      %v4965 = vunpack.c.l.bf16 %v4933
      %v4966 = vunpack.c.l.bf16 %v4934
      %v4967 = vunpack.c.l.bf16 %v4935
      %v4968 = vunpack.c.l.bf16 %v4936
      %v4969 = vunpack.c.l.bf16 %v4937
      %v4970 = vunpack.c.l.bf16 %v4938
      %v4971 = vunpack.c.l.bf16 %v4939
      %v4972 = vunpack.c.l.bf16 %v4940
      %v4973 = vunpack.c.l.bf16 %v4941
      %v4974 = vunpack.c.l.bf16 %v4942
      %v4975 = vunpack.c.l.bf16 %v4943
      %v4976 = vunpack.c.l.bf16 %v4944
      %v4977 = vmax.f32 %v4945, %v4667
      %v4978 = vmax.f32 %v4946, %v4668
      %v4979 = vmax.f32 %v4947, %v4669
      %v4980 = vmax.f32 %v4948, %v4670
      %v4981 = vmax.f32 %v4949, %v4671
      %v4982 = vmax.f32 %v4950, %v4672
      %v4983 = vmax.f32 %v4951, %v4673
      %v4984 = vmax.f32 %v4952, %v4674
      %v4985 = vmax.f32 %v4953, %v4675
      %v4986 = vmax.f32 %v4954, %v4676
      %v4987 = vmax.f32 %v4955, %v4677
      %v4988 = vmax.f32 %v4956, %v4678
      %v4989 = vmax.f32 %v4957, %v4679
      %v4990 = vmax.f32 %v4958, %v4680
      %v4991 = vmax.f32 %v4959, %v4681
      %v4992 = vmax.f32 %v4960, %v4682
      %v4993 = vmax.f32 %v4961, %v4683
      %v4994 = vmax.f32 %v4962, %v4684
      %v4995 = vmax.f32 %v4963, %v4685
      %v4996 = vmax.f32 %v4964, %v4686
      %v4997 = vmax.f32 %v4965, %v4687
      %v4998 = vmax.f32 %v4966, %v4688
      %v4999 = vmax.f32 %v4967, %v4689
      %v5000 = vmax.f32 %v4968, %v4690
      %v5001 = vmax.f32 %v4969, %v4691
      %v5002 = vmax.f32 %v4970, %v4692
      %v5003 = vmax.f32 %v4971, %v4783
      %v5004 = vmax.f32 %v4972, %v4784
      %v5005 = vmax.f32 %v4973, %v2758
      %v5006 = vmax.f32 %v4974, %v2759
      %v5007 = vmax.f32 %v4975, %v2758
      %v5008 = vmax.f32 %v4976, %v2759
      %v5009 = vpack.c.bf16 %v4977, %v4977
      %v5010 = vpack.c.bf16 %v4978, %v4978
      %v5011 = vpack.c.bf16 %v4979, %v4979
      %v5012 = vpack.c.bf16 %v4980, %v4980
      %v5013 = vpack.c.bf16 %v4981, %v4981
      %v5014 = vpack.c.bf16 %v4982, %v4982
      %v5015 = vpack.c.bf16 %v4983, %v4983
      %v5016 = vpack.c.bf16 %v4984, %v4984
      %v5017 = vpack.c.bf16 %v4985, %v4985
      %v5018 = vpack.c.bf16 %v4986, %v4986
      %v5019 = vpack.c.bf16 %v4987, %v4987
      %v5020 = vpack.c.bf16 %v4988, %v4988
      %v5021 = vpack.c.bf16 %v4989, %v4989
      %v5022 = vpack.c.bf16 %v4990, %v4990
      %v5023 = vpack.c.bf16 %v4991, %v4991
      %v5024 = vpack.c.bf16 %v4992, %v4992
      %v5025 = vpack.c.bf16 %v4993, %v4993
      %v5026 = vpack.c.bf16 %v4994, %v4994
      %v5027 = vpack.c.bf16 %v4995, %v4995
      %v5028 = vpack.c.bf16 %v4996, %v4996
      %v5029 = vpack.c.bf16 %v4997, %v4997
      %v5030 = vpack.c.bf16 %v4998, %v4998
      %v5031 = vpack.c.bf16 %v4999, %v4999
      %v5032 = vpack.c.bf16 %v5000, %v5000
      %v5033 = vpack.c.bf16 %v5001, %v5001
      %v5034 = vpack.c.bf16 %v5002, %v5002
      %v5035 = vpack.c.bf16 %v5003, %v5003
      %v5036 = vpack.c.bf16 %v5004, %v5004
      %v5037 = vpack.c.bf16 %v5005, %v5005
      %v5038 = vpack.c.bf16 %v5006, %v5006
      %v5039 = vpack.c.bf16 %v5007, %v5007
      %v5040 = vpack.c.bf16 %v5008, %v5008
      %5073 = vrot.lane.b32.xlu0 %v5009, 32
      %v5074 = vpop.permute.xlu0 %5073
      %5075 = vrot.lane.b32.xlu0 %v5010, 32
      %v5076 = vpop.permute.xlu0 %5075
      %5077 = vrot.lane.b32.xlu0 %v5011, 32
      %v5078 = vpop.permute.xlu0 %5077
      %5079 = vrot.lane.b32.xlu0 %v5012, 32
      %v5080 = vpop.permute.xlu0 %5079
      %5081 = vrot.lane.b32.xlu0 %v5013, 32
      %v5082 = vpop.permute.xlu0 %5081
      %5083 = vrot.lane.b32.xlu0 %v5014, 32
      %v5084 = vpop.permute.xlu0 %5083
      %5085 = vrot.lane.b32.xlu0 %v5015, 32
      %v5086 = vpop.permute.xlu0 %5085
      %5087 = vrot.lane.b32.xlu0 %v5016, 32
      %v5088 = vpop.permute.xlu0 %5087
      %5089 = vrot.lane.b32.xlu0 %v5017, 32
      %v5090 = vpop.permute.xlu0 %5089
      %5091 = vrot.lane.b32.xlu0 %v5018, 32
      %v5092 = vpop.permute.xlu0 %5091
      %5093 = vrot.lane.b32.xlu0 %v5019, 32
      %v5094 = vpop.permute.xlu0 %5093
      %5095 = vrot.lane.b32.xlu0 %v5020, 32
      %v5096 = vpop.permute.xlu0 %5095
      %5097 = vrot.lane.b32.xlu0 %v5021, 32
      %v5098 = vpop.permute.xlu0 %5097
      %5099 = vrot.lane.b32.xlu0 %v5022, 32
      %v5100 = vpop.permute.xlu0 %5099
      %5101 = vrot.lane.b32.xlu0 %v5023, 32
      %v5102 = vpop.permute.xlu0 %5101
      %5103 = vrot.lane.b32.xlu0 %v5024, 32
      %v5104 = vpop.permute.xlu0 %5103
      %5105 = vrot.lane.b32.xlu0 %v5025, 32
      %v5106 = vpop.permute.xlu0 %5105
      %5107 = vrot.lane.b32.xlu0 %v5026, 32
      %v5108 = vpop.permute.xlu0 %5107
      %5109 = vrot.lane.b32.xlu0 %v5027, 32
      %v5110 = vpop.permute.xlu0 %5109
      %5111 = vrot.lane.b32.xlu0 %v5028, 32
      %v5112 = vpop.permute.xlu0 %5111
      %5113 = vrot.lane.b32.xlu0 %v5029, 32
      %v5114 = vpop.permute.xlu0 %5113
      %5115 = vrot.lane.b32.xlu0 %v5030, 32
      %v5116 = vpop.permute.xlu0 %5115
      %5117 = vrot.lane.b32.xlu0 %v5031, 32
      %v5118 = vpop.permute.xlu0 %5117
      %5119 = vrot.lane.b32.xlu0 %v5032, 32
      %v5120 = vpop.permute.xlu0 %5119
      %5121 = vrot.lane.b32.xlu0 %v5033, 32
      %v5122 = vpop.permute.xlu0 %5121
      %5123 = vrot.lane.b32.xlu0 %v5034, 32
      %v5124 = vpop.permute.xlu0 %5123
      %5125 = vrot.lane.b32.xlu0 %v5035, 32
      %v5126 = vpop.permute.xlu0 %5125
      %5127 = vrot.lane.b32.xlu0 %v5036, 32
      %v5128 = vpop.permute.xlu0 %5127
      %5129 = vrot.lane.b32.xlu0 %v5037, 32
      %v5130 = vpop.permute.xlu0 %5129
      %5131 = vrot.lane.b32.xlu0 %v5038, 32
      %v5132 = vpop.permute.xlu0 %5131
      %5133 = vrot.lane.b32.xlu0 %v5039, 32
      %v5134 = vpop.permute.xlu0 %5133
      %5135 = vrot.lane.b32.xlu0 %v5040, 32
      %v5136 = vpop.permute.xlu0 %5135
      %vm5169 = vcmask 388352
      %5170 = vst.msk [vmem:[#allocation3] sm:$0xf] %vm5169, %v5074
      %5171 = vst.msk [vmem:[#allocation3 + $0x4] sm:$0xf] %vm5169, %v5076
      %5172 = vst.msk [vmem:[#allocation3 + $0x8] sm:$0xf] %vm5169, %v5078
      %5173 = vst.msk [vmem:[#allocation3 + $0xc] sm:$0xf] %vm5169, %v5080
      %5174 = vst.msk [vmem:[#allocation3 + $0x10] sm:$0xf] %vm5169, %v5082
      %5175 = vst.msk [vmem:[#allocation3 + $0x14] sm:$0xf] %vm5169, %v5084
      %5176 = vst.msk [vmem:[#allocation3 + $0x18] sm:$0xf] %vm5169, %v5086
      %5177 = vst.msk [vmem:[#allocation3 + $0x1c] sm:$0xf] %vm5169, %v5088
      %5178 = vst.msk [vmem:[#allocation3 + $0x20] sm:$0xf] %vm5169, %v5090
      %5179 = vst.msk [vmem:[#allocation3 + $0x24] sm:$0xf] %vm5169, %v5092
      %5180 = vst.msk [vmem:[#allocation3 + $0x28] sm:$0xf] %vm5169, %v5094
      %5181 = vst.msk [vmem:[#allocation3 + $0x2c] sm:$0xf] %vm5169, %v5096
      %5182 = vst.msk [vmem:[#allocation3 + $0x30] sm:$0xf] %vm5169, %v5098
      %5183 = vst.msk [vmem:[#allocation3 + $0x34] sm:$0xf] %vm5169, %v5100
      %5184 = vst.msk [vmem:[#allocation3 + $0x38] sm:$0xf] %vm5169, %v5102
      %5185 = vst.msk [vmem:[#allocation3 + $0x3c] sm:$0xf] %vm5169, %v5104
      %5186 = vst.msk [vmem:[#allocation3 + $0x40] sm:$0xf] %vm5169, %v5106
      %5187 = vst.msk [vmem:[#allocation3 + $0x44] sm:$0xf] %vm5169, %v5108
      %5188 = vst.msk [vmem:[#allocation3 + $0x48] sm:$0xf] %vm5169, %v5110
      %5189 = vst.msk [vmem:[#allocation3 + $0x4c] sm:$0xf] %vm5169, %v5112
      %5190 = vst.msk [vmem:[#allocation3 + $0x50] sm:$0xf] %vm5169, %v5114
      %5191 = vst.msk [vmem:[#allocation3 + $0x54] sm:$0xf] %vm5169, %v5116
      %5192 = vst.msk [vmem:[#allocation3 + $0x58] sm:$0xf] %vm5169, %v5118
      %5193 = vst.msk [vmem:[#allocation3 + $0x5c] sm:$0xf] %vm5169, %v5120
      %5194 = vst.msk [vmem:[#allocation3 + $0x60] sm:$0xf] %vm5169, %v5122
      %5195 = vst.msk [vmem:[#allocation3 + $0x64] sm:$0xf] %vm5169, %v5124
      %5196 = vst.msk [vmem:[#allocation3 + $0x68] sm:$0xf] %vm5169, %v5126
      %5197 = vst.msk [vmem:[#allocation3 + $0x6c] sm:$0xf] %vm5169, %v5128
      %5198 = vst.msk [vmem:[#allocation3 + $0x70] sm:$0xf] %vm5169, %v5130
      %5199 = vst.msk [vmem:[#allocation3 + $0x74] sm:$0xf] %vm5169, %v5132
      %5200 = vst.msk [vmem:[#allocation3 + $0x78] sm:$0xf] %vm5169, %v5134
      %5201 = vst.msk [vmem:[#allocation3 + $0x7c] sm:$0xf] %vm5169, %v5136
      %v5202 = vrot.slane %v5009, 7
      %v5203 = vrot.slane %v5202, 4
      %v5204 = vrot.slane %v5010, 7
      %v5205 = vsel %vm1392, %v5203, %v5204
      %v5206 = vrot.slane %v5204, 4
      %v5207 = vrot.slane %v5011, 7
      %v5208 = vrot.slane %v5207, 4
      %v5209 = vrot.slane %v5012, 7
      %v5210 = vsel %vm1392, %v5208, %v5209
      %v5211 = vrot.slane %v5209, 4
      %v5212 = vrot.slane %v5013, 7
      %v5213 = vrot.slane %v5212, 4
      %v5214 = vrot.slane %v5014, 7
      %v5215 = vsel %vm1392, %v5213, %v5214
      %v5216 = vrot.slane %v5214, 4
      %v5217 = vrot.slane %v5015, 7
      %v5218 = vrot.slane %v5217, 4
      %v5219 = vrot.slane %v5016, 7
      %v5220 = vsel %vm1392, %v5218, %v5219
      %v5221 = vrot.slane %v5219, 4
      %v5222 = vrot.slane %v5017, 7
      %v5223 = vrot.slane %v5222, 4
      %v5224 = vrot.slane %v5018, 7
      %v5225 = vsel %vm1392, %v5223, %v5224
      %v5226 = vrot.slane %v5224, 4
      %v5227 = vrot.slane %v5019, 7
      %v5228 = vrot.slane %v5227, 4
      %v5229 = vrot.slane %v5020, 7
      %v5230 = vsel %vm1392, %v5228, %v5229
      %v5231 = vrot.slane %v5229, 4
      %v5232 = vrot.slane %v5021, 7
      %v5233 = vrot.slane %v5232, 4
      %v5234 = vrot.slane %v5022, 7
      %v5235 = vsel %vm1392, %v5233, %v5234
      %v5236 = vrot.slane %v5234, 4
      %v5237 = vrot.slane %v5023, 7
      %v5238 = vrot.slane %v5237, 4
      %v5239 = vrot.slane %v5024, 7
      %v5240 = vsel %vm1392, %v5238, %v5239
      %v5241 = vrot.slane %v5239, 4
      %v5242 = vrot.slane %v5025, 7
      %v5243 = vrot.slane %v5242, 4
      %v5244 = vrot.slane %v5026, 7
      %v5245 = vsel %vm1392, %v5243, %v5244
      %v5246 = vrot.slane %v5244, 4
      %v5247 = vrot.slane %v5027, 7
      %v5248 = vrot.slane %v5247, 4
      %v5249 = vrot.slane %v5028, 7
      %v5250 = vsel %vm1392, %v5248, %v5249
      %v5251 = vrot.slane %v5249, 4
      %v5252 = vrot.slane %v5029, 7
      %v5253 = vrot.slane %v5252, 4
      %v5254 = vrot.slane %v5030, 7
      %v5255 = vsel %vm1392, %v5253, %v5254
      %v5256 = vrot.slane %v5254, 4
      %v5257 = vrot.slane %v5031, 7
      %v5258 = vrot.slane %v5257, 4
      %v5259 = vrot.slane %v5032, 7
      %v5260 = vsel %vm1392, %v5258, %v5259
      %v5261 = vrot.slane %v5259, 4
      %v5262 = vrot.slane %v5033, 7
      %v5263 = vrot.slane %v5262, 4
      %v5264 = vrot.slane %v5034, 7
      %v5265 = vsel %vm1392, %v5263, %v5264
      %v5266 = vrot.slane %v5264, 4
      %v5267 = vrot.slane %v5035, 7
      %v5268 = vrot.slane %v5267, 4
      %v5269 = vrot.slane %v5036, 7
      %v5270 = vsel %vm1392, %v5268, %v5269
      %v5271 = vrot.slane %v5269, 4
      %v5272 = vrot.slane %v5037, 7
      %v5273 = vrot.slane %v5272, 4
      %v5274 = vrot.slane %v5038, 7
      %v5275 = vsel %vm1392, %v5273, %v5274
      %v5276 = vrot.slane %v5274, 4
      %v5277 = vrot.slane %v5039, 7
      %v5278 = vrot.slane %v5277, 4
      %v5279 = vrot.slane %v5040, 7
      %v5280 = vsel %vm1392, %v5278, %v5279
      %v5281 = vrot.slane %v5279, 4
      %5330 = vst.msk [vmem:[#allocation2] sm:$0xe] %vm1521, %v5202
      %5331 = vst.msk [vmem:[#allocation2 + $0x4] sm:$0xf] %vm1325, %v5205
      %5332 = vst.msk [vmem:[#allocation2 + $0x8] sm:$0x1] %vm281, %v5206
      %5333 = vst.msk [vmem:[#allocation2 + $0xc] sm:$0xe] %vm1521, %v5207
      %5334 = vst.msk [vmem:[#allocation2 + $0x10] sm:$0xf] %vm1325, %v5210
      %5335 = vst.msk [vmem:[#allocation2 + $0x14] sm:$0x1] %vm281, %v5211
      %5336 = vst.msk [vmem:[#allocation2 + $0x18] sm:$0xe] %vm1521, %v5212
      %5337 = vst.msk [vmem:[#allocation2 + $0x1c] sm:$0xf] %vm1325, %v5215
      %5338 = vst.msk [vmem:[#allocation2 + $0x20] sm:$0x1] %vm281, %v5216
      %5339 = vst.msk [vmem:[#allocation2 + $0x24] sm:$0xe] %vm1521, %v5217
      %5340 = vst.msk [vmem:[#allocation2 + $0x28] sm:$0xf] %vm1325, %v5220
      %5341 = vst.msk [vmem:[#allocation2 + $0x2c] sm:$0x1] %vm281, %v5221
      %5342 = vst.msk [vmem:[#allocation2 + $0x30] sm:$0xe] %vm1521, %v5222
      %5343 = vst.msk [vmem:[#allocation2 + $0x34] sm:$0xf] %vm1325, %v5225
      %5344 = vst.msk [vmem:[#allocation2 + $0x38] sm:$0x1] %vm281, %v5226
      %5345 = vst.msk [vmem:[#allocation2 + $0x3c] sm:$0xe] %vm1521, %v5227
      %5346 = vst.msk [vmem:[#allocation2 + $0x40] sm:$0xf] %vm1325, %v5230
      %5347 = vst.msk [vmem:[#allocation2 + $0x44] sm:$0x1] %vm281, %v5231
      %5348 = vst.msk [vmem:[#allocation2 + $0x48] sm:$0xe] %vm1521, %v5232
      %5349 = vst.msk [vmem:[#allocation2 + $0x4c] sm:$0xf] %vm1325, %v5235
      %5350 = vst.msk [vmem:[#allocation2 + $0x50] sm:$0x1] %vm281, %v5236
      %5351 = vst.msk [vmem:[#allocation2 + $0x54] sm:$0xe] %vm1521, %v5237
      %5352 = vst.msk [vmem:[#allocation2 + $0x58] sm:$0xf] %vm1325, %v5240
      %5353 = vst.msk [vmem:[#allocation2 + $0x5c] sm:$0x1] %vm281, %v5241
      %5354 = vst.msk [vmem:[#allocation2 + $0x60] sm:$0xe] %vm1521, %v5242
      %5355 = vst.msk [vmem:[#allocation2 + $0x64] sm:$0xf] %vm1325, %v5245
      %5356 = vst.msk [vmem:[#allocation2 + $0x68] sm:$0x1] %vm281, %v5246
      %5357 = vst.msk [vmem:[#allocation2 + $0x6c] sm:$0xe] %vm1521, %v5247
      %5358 = vst.msk [vmem:[#allocation2 + $0x70] sm:$0xf] %vm1325, %v5250
      %5359 = vst.msk [vmem:[#allocation2 + $0x74] sm:$0x1] %vm281, %v5251
      %5360 = vst.msk [vmem:[#allocation2 + $0x78] sm:$0xe] %vm1521, %v5252
      %5361 = vst.msk [vmem:[#allocation2 + $0x7c] sm:$0xf] %vm1325, %v5255
      %5362 = vst.msk [vmem:[#allocation2 + $0x80] sm:$0x1] %vm281, %v5256
      %5363 = vst.msk [vmem:[#allocation2 + $0x84] sm:$0xe] %vm1521, %v5257
      %5364 = vst.msk [vmem:[#allocation2 + $0x88] sm:$0xf] %vm1325, %v5260
      %5365 = vst.msk [vmem:[#allocation2 + $0x8c] sm:$0x1] %vm281, %v5261
      %5366 = vst.msk [vmem:[#allocation2 + $0x90] sm:$0xe] %vm1521, %v5262
      %5367 = vst.msk [vmem:[#allocation2 + $0x94] sm:$0xf] %vm1325, %v5265
      %5368 = vst.msk [vmem:[#allocation2 + $0x98] sm:$0x1] %vm281, %v5266
      %5369 = vst.msk [vmem:[#allocation2 + $0x9c] sm:$0xe] %vm1521, %v5267
      %5370 = vst.msk [vmem:[#allocation2 + $0xa0] sm:$0xf] %vm1325, %v5270
      %5371 = vst.msk [vmem:[#allocation2 + $0xa4] sm:$0x1] %vm281, %v5271
      %5372 = vst.msk [vmem:[#allocation2 + $0xa8] sm:$0xe] %vm1521, %v5272
      %5373 = vst.msk [vmem:[#allocation2 + $0xac] sm:$0xf] %vm1325, %v5275
      %5374 = vst.msk [vmem:[#allocation2 + $0xb0] sm:$0x1] %vm281, %v5276
      %5375 = vst.msk [vmem:[#allocation2 + $0xb4] sm:$0xe] %vm1521, %v5277
      %5376 = vst.msk [vmem:[#allocation2 + $0xb8] sm:$0xf] %vm1325, %v5280
      %5377 = vst.msk [vmem:[#allocation2 + $0xbc] sm:$0x1] %vm281, %v5281
      %v5378 = vld [vmem:[#allocation2] sm:$0xf]
      %v5379 = vld [vmem:[#allocation2 + $0x4] sm:$0xf]
      %v5380 = vld [vmem:[#allocation2 + $0xc] sm:$0xf]
      %v5381 = vld [vmem:[#allocation2 + $0x10] sm:$0xf]
      %v5382 = vld [vmem:[#allocation2 + $0x18] sm:$0xf]
      %v5383 = vld [vmem:[#allocation2 + $0x1c] sm:$0xf]
      %v5384 = vld [vmem:[#allocation2 + $0x24] sm:$0xf]
      %v5385 = vld [vmem:[#allocation2 + $0x28] sm:$0xf]
      %v5386 = vld [vmem:[#allocation2 + $0x30] sm:$0xf]
      %v5387 = vld [vmem:[#allocation2 + $0x34] sm:$0xf]
      %v5388 = vld [vmem:[#allocation2 + $0x3c] sm:$0xf]
      %v5389 = vld [vmem:[#allocation2 + $0x40] sm:$0xf]
      %v5390 = vld [vmem:[#allocation2 + $0x48] sm:$0xf]
      %v5391 = vld [vmem:[#allocation2 + $0x4c] sm:$0xf]
      %v5392 = vld [vmem:[#allocation2 + $0x54] sm:$0xf]
      %v5393 = vld [vmem:[#allocation2 + $0x58] sm:$0xf]
      %v5394 = vld [vmem:[#allocation2 + $0x60] sm:$0xf]
      %v5395 = vld [vmem:[#allocation2 + $0x64] sm:$0xf]
      %v5396 = vld [vmem:[#allocation2 + $0x6c] sm:$0xf]
      %v5397 = vld [vmem:[#allocation2 + $0x70] sm:$0xf]
      %v5398 = vld [vmem:[#allocation2 + $0x78] sm:$0xf]
      %v5399 = vld [vmem:[#allocation2 + $0x7c] sm:$0xf]
      %v5400 = vld [vmem:[#allocation2 + $0x84] sm:$0xf]
      %v5401 = vld [vmem:[#allocation2 + $0x88] sm:$0xf]
      %v5402 = vld [vmem:[#allocation2 + $0x90] sm:$0xf]
      %v5403 = vld [vmem:[#allocation2 + $0x94] sm:$0xf]
      %v5404 = vld [vmem:[#allocation2 + $0x9c] sm:$0xf]
      %v5405 = vld [vmem:[#allocation2 + $0xa0] sm:$0xf]
      %v5406 = vld [vmem:[#allocation2 + $0xa8] sm:$0xf]
      %v5407 = vld [vmem:[#allocation2 + $0xac] sm:$0xf]
      %v5408 = vld [vmem:[#allocation2 + $0xb4] sm:$0xf]
      %v5409 = vld [vmem:[#allocation2 + $0xb8] sm:$0xf]
      %v5410 = vld [vmem:[#allocation2 + $0x8] sm:$0x1]
      %v5411 = vld [vmem:[#allocation2 + $0x14] sm:$0x1]
      %v5412 = vld [vmem:[#allocation2 + $0x20] sm:$0x1]
      %v5413 = vld [vmem:[#allocation2 + $0x2c] sm:$0x1]
      %v5414 = vld [vmem:[#allocation2 + $0x38] sm:$0x1]
      %v5415 = vld [vmem:[#allocation2 + $0x44] sm:$0x1]
      %v5416 = vld [vmem:[#allocation2 + $0x50] sm:$0x1]
      %v5417 = vld [vmem:[#allocation2 + $0x5c] sm:$0x1]
      %v5418 = vld [vmem:[#allocation2 + $0x68] sm:$0x1]
      %v5419 = vld [vmem:[#allocation2 + $0x74] sm:$0x1]
      %v5420 = vld [vmem:[#allocation2 + $0x80] sm:$0x1]
      %v5421 = vld [vmem:[#allocation2 + $0x8c] sm:$0x1]
      %v5422 = vld [vmem:[#allocation2 + $0x98] sm:$0x1]
      %v5423 = vld [vmem:[#allocation2 + $0xa4] sm:$0x1]
      %v5424 = vld [vmem:[#allocation2 + $0xb0] sm:$0x1]
      %v5425 = vld [vmem:[#allocation2 + $0xbc] sm:$0x1]
      %v5426 = vunpack.c.l.bf16 %v5378
      %v5427 = vunpack.c.l.bf16 %v5379
      %v5428 = vunpack.c.l.bf16 %v5380
      %v5429 = vunpack.c.l.bf16 %v5381
      %v5430 = vunpack.c.l.bf16 %v5382
      %v5431 = vunpack.c.l.bf16 %v5383
      %v5432 = vunpack.c.l.bf16 %v5384
      %v5433 = vunpack.c.l.bf16 %v5385
      %v5434 = vunpack.c.l.bf16 %v5386
      %v5435 = vunpack.c.l.bf16 %v5387
      %v5436 = vunpack.c.l.bf16 %v5388
      %v5437 = vunpack.c.l.bf16 %v5389
      %v5438 = vunpack.c.l.bf16 %v5390
      %v5439 = vunpack.c.l.bf16 %v5391
      %v5440 = vunpack.c.l.bf16 %v5392
      %v5441 = vunpack.c.l.bf16 %v5393
      %v5442 = vunpack.c.l.bf16 %v5394
      %v5443 = vunpack.c.l.bf16 %v5395
      %v5444 = vunpack.c.l.bf16 %v5396
      %v5445 = vunpack.c.l.bf16 %v5397
      %v5446 = vunpack.c.l.bf16 %v5398
      %v5447 = vunpack.c.l.bf16 %v5399
      %v5448 = vunpack.c.l.bf16 %v5400
      %v5449 = vunpack.c.l.bf16 %v5401
      %v5450 = vunpack.c.l.bf16 %v5402
      %v5451 = vunpack.c.l.bf16 %v5403
      %v5452 = vunpack.c.l.bf16 %v5404
      %v5453 = vunpack.c.l.bf16 %v5405
      %v5454 = vunpack.c.l.bf16 %v5406
      %v5455 = vunpack.c.l.bf16 %v5407
      %v5456 = vunpack.c.l.bf16 %v5408
      %v5457 = vunpack.c.l.bf16 %v5409
      %v5458 = vunpack.c.l.bf16 %v5410
      %v5459 = vunpack.c.l.bf16 %v5411
      %v5460 = vunpack.c.l.bf16 %v5412
      %v5461 = vunpack.c.l.bf16 %v5413
      %v5462 = vunpack.c.l.bf16 %v5414
      %v5463 = vunpack.c.l.bf16 %v5415
      %v5464 = vunpack.c.l.bf16 %v5416
      %v5465 = vunpack.c.l.bf16 %v5417
      %v5466 = vunpack.c.l.bf16 %v5418
      %v5467 = vunpack.c.l.bf16 %v5419
      %v5468 = vunpack.c.l.bf16 %v5420
      %v5469 = vunpack.c.l.bf16 %v5421
      %v5470 = vunpack.c.l.bf16 %v5422
      %v5471 = vunpack.c.l.bf16 %v5423
      %v5472 = vunpack.c.l.bf16 %v5424
      %v5473 = vunpack.c.l.bf16 %v5425
      %v5522 = vrot.slane %v5426, 1
      %v5523 = vrot.slane %v5427, 1
      %v5524 = vsel %vm1714, %v5522, %v5523
      %v5525 = vrot.slane %v5458, 1
      %v5526 = vsel %vm1714, %v5523, %v5525
      %v5527 = vrot.slane %v5428, 1
      %v5528 = vrot.slane %v5429, 1
      %v5529 = vsel %vm1714, %v5527, %v5528
      %v5530 = vrot.slane %v5459, 1
      %v5531 = vsel %vm1714, %v5528, %v5530
      %v5532 = vrot.slane %v5430, 1
      %v5533 = vrot.slane %v5431, 1
      %v5534 = vsel %vm1714, %v5532, %v5533
      %v5535 = vrot.slane %v5460, 1
      %v5536 = vsel %vm1714, %v5533, %v5535
      %v5537 = vrot.slane %v5432, 1
      %v5538 = vrot.slane %v5433, 1
      %v5539 = vsel %vm1714, %v5537, %v5538
      %v5540 = vrot.slane %v5461, 1
      %v5541 = vsel %vm1714, %v5538, %v5540
      %v5542 = vrot.slane %v5434, 1
      %v5543 = vrot.slane %v5435, 1
      %v5544 = vsel %vm1714, %v5542, %v5543
      %v5545 = vrot.slane %v5462, 1
      %v5546 = vsel %vm1714, %v5543, %v5545
      %v5547 = vrot.slane %v5436, 1
      %v5548 = vrot.slane %v5437, 1
      %v5549 = vsel %vm1714, %v5547, %v5548
      %v5550 = vrot.slane %v5463, 1
      %v5551 = vsel %vm1714, %v5548, %v5550
      %v5552 = vrot.slane %v5438, 1
      %v5553 = vrot.slane %v5439, 1
      %v5554 = vsel %vm1714, %v5552, %v5553
      %v5555 = vrot.slane %v5464, 1
      %v5556 = vsel %vm1714, %v5553, %v5555
      %v5557 = vrot.slane %v5440, 1
      %v5558 = vrot.slane %v5441, 1
      %v5559 = vsel %vm1714, %v5557, %v5558
      %v5560 = vrot.slane %v5465, 1
      %v5561 = vsel %vm1714, %v5558, %v5560
      %v5562 = vrot.slane %v5442, 1
      %v5563 = vrot.slane %v5443, 1
      %v5564 = vsel %vm1714, %v5562, %v5563
      %v5565 = vrot.slane %v5466, 1
      %v5566 = vsel %vm1714, %v5563, %v5565
      %v5567 = vrot.slane %v5444, 1
      %v5568 = vrot.slane %v5445, 1
      %v5569 = vsel %vm1714, %v5567, %v5568
      %v5570 = vrot.slane %v5467, 1
      %v5571 = vsel %vm1714, %v5568, %v5570
      %v5572 = vrot.slane %v5446, 1
      %v5573 = vrot.slane %v5447, 1
      %v5574 = vsel %vm1714, %v5572, %v5573
      %v5575 = vrot.slane %v5468, 1
      %v5576 = vsel %vm1714, %v5573, %v5575
      %v5577 = vrot.slane %v5448, 1
      %v5578 = vrot.slane %v5449, 1
      %v5579 = vsel %vm1714, %v5577, %v5578
      %v5580 = vrot.slane %v5469, 1
      %v5581 = vsel %vm1714, %v5578, %v5580
      %v5582 = vrot.slane %v5450, 1
      %v5583 = vrot.slane %v5451, 1
      %v5584 = vsel %vm1714, %v5582, %v5583
      %v5585 = vrot.slane %v5470, 1
      %v5586 = vsel %vm1714, %v5583, %v5585
      %v5587 = vrot.slane %v5452, 1
      %v5588 = vrot.slane %v5453, 1
      %v5589 = vsel %vm1714, %v5587, %v5588
      %v5590 = vrot.slane %v5471, 1
      %v5591 = vsel %vm1714, %v5588, %v5590
      %v5592 = vrot.slane %v5454, 1
      %v5593 = vrot.slane %v5455, 1
      %v5594 = vsel %vm1714, %v5592, %v5593
      %v5595 = vrot.slane %v5472, 1
      %v5596 = vsel %vm1714, %v5593, %v5595
      %v5597 = vrot.slane %v5456, 1
      %v5598 = vrot.slane %v5457, 1
      %v5599 = vsel %vm1714, %v5597, %v5598
      %v5600 = vrot.slane %v5473, 1
      %v5601 = vsel %vm1714, %v5598, %v5600
      %v5634 = vmax.f32 %v5426, %v5524
      %v5635 = vmax.f32 %v5427, %v5526
      %v5636 = vmax.f32 %v5428, %v5529
      %v5637 = vmax.f32 %v5429, %v5531
      %v5638 = vmax.f32 %v5430, %v5534
      %v5639 = vmax.f32 %v5431, %v5536
      %v5640 = vmax.f32 %v5432, %v5539
      %v5641 = vmax.f32 %v5433, %v5541
      %v5642 = vmax.f32 %v5434, %v5544
      %v5643 = vmax.f32 %v5435, %v5546
      %v5644 = vmax.f32 %v5436, %v5549
      %v5645 = vmax.f32 %v5437, %v5551
      %v5646 = vmax.f32 %v5438, %v5554
      %v5647 = vmax.f32 %v5439, %v5556
      %v5648 = vmax.f32 %v5440, %v5559
      %v5649 = vmax.f32 %v5441, %v5561
      %v5650 = vmax.f32 %v5442, %v5564
      %v5651 = vmax.f32 %v5443, %v5566
      %v5652 = vmax.f32 %v5444, %v5569
      %v5653 = vmax.f32 %v5445, %v5571
      %v5654 = vmax.f32 %v5446, %v5574
      %v5655 = vmax.f32 %v5447, %v5576
      %v5656 = vmax.f32 %v5448, %v5579
      %v5657 = vmax.f32 %v5449, %v5581
      %v5658 = vmax.f32 %v5450, %v5584
      %v5659 = vmax.f32 %v5451, %v5586
      %v5660 = vmax.f32 %v5452, %v5589
      %v5661 = vmax.f32 %v5453, %v5591
      %v5662 = vmax.f32 %v5454, %v5594
      %v5663 = vmax.f32 %v5455, %v5596
      %v5664 = vmax.f32 %v5456, %v5599
      %v5665 = vmax.f32 %v5457, %v5601
      %v5666 = vpack.c.bf16 %v5634, %v5634
      %v5667 = vpack.c.bf16 %v5635, %v5635
      %v5668 = vpack.c.bf16 %v5636, %v5636
      %v5669 = vpack.c.bf16 %v5637, %v5637
      %v5670 = vpack.c.bf16 %v5638, %v5638
      %v5671 = vpack.c.bf16 %v5639, %v5639
      %v5672 = vpack.c.bf16 %v5640, %v5640
      %v5673 = vpack.c.bf16 %v5641, %v5641
      %v5674 = vpack.c.bf16 %v5642, %v5642
      %v5675 = vpack.c.bf16 %v5643, %v5643
      %v5676 = vpack.c.bf16 %v5644, %v5644
      %v5677 = vpack.c.bf16 %v5645, %v5645
      %v5678 = vpack.c.bf16 %v5646, %v5646
      %v5679 = vpack.c.bf16 %v5647, %v5647
      %v5680 = vpack.c.bf16 %v5648, %v5648
      %v5681 = vpack.c.bf16 %v5649, %v5649
      %v5682 = vpack.c.bf16 %v5650, %v5650
      %v5683 = vpack.c.bf16 %v5651, %v5651
      %v5684 = vpack.c.bf16 %v5652, %v5652
      %v5685 = vpack.c.bf16 %v5653, %v5653
      %v5686 = vpack.c.bf16 %v5654, %v5654
      %v5687 = vpack.c.bf16 %v5655, %v5655
      %v5688 = vpack.c.bf16 %v5656, %v5656
      %v5689 = vpack.c.bf16 %v5657, %v5657
      %v5690 = vpack.c.bf16 %v5658, %v5658
      %v5691 = vpack.c.bf16 %v5659, %v5659
      %v5692 = vpack.c.bf16 %v5660, %v5660
      %v5693 = vpack.c.bf16 %v5661, %v5661
      %v5694 = vpack.c.bf16 %v5662, %v5662
      %v5695 = vpack.c.bf16 %v5663, %v5663
      %v5696 = vpack.c.bf16 %v5664, %v5664
      %v5697 = vpack.c.bf16 %v5665, %v5665
      %v5698 = vld [vmem:[#allocation2] sm:$0xe]
      %v5699 = vld [vmem:[#allocation2 + $0xc] sm:$0xe]
      %v5700 = vld [vmem:[#allocation2 + $0x18] sm:$0xe]
      %v5701 = vld [vmem:[#allocation2 + $0x24] sm:$0xe]
      %v5702 = vld [vmem:[#allocation2 + $0x30] sm:$0xe]
      %v5703 = vld [vmem:[#allocation2 + $0x3c] sm:$0xe]
      %v5704 = vld [vmem:[#allocation2 + $0x48] sm:$0xe]
      %v5705 = vld [vmem:[#allocation2 + $0x54] sm:$0xe]
      %v5706 = vld [vmem:[#allocation2 + $0x60] sm:$0xe]
      %v5707 = vld [vmem:[#allocation2 + $0x6c] sm:$0xe]
      %v5708 = vld [vmem:[#allocation2 + $0x78] sm:$0xe]
      %v5709 = vld [vmem:[#allocation2 + $0x84] sm:$0xe]
      %v5710 = vld [vmem:[#allocation2 + $0x90] sm:$0xe]
      %v5711 = vld [vmem:[#allocation2 + $0x9c] sm:$0xe]
      %v5712 = vld [vmem:[#allocation2 + $0xa8] sm:$0xe]
      %v5713 = vld [vmem:[#allocation2 + $0xb4] sm:$0xe]
      %v5714 = vunpack.c.l.bf16 %v5666
      %v5715 = vunpack.c.l.bf16 %v5667
      %v5716 = vunpack.c.l.bf16 %v5668
      %v5717 = vunpack.c.l.bf16 %v5669
      %v5718 = vunpack.c.l.bf16 %v5670
      %v5719 = vunpack.c.l.bf16 %v5671
      %v5720 = vunpack.c.l.bf16 %v5672
      %v5721 = vunpack.c.l.bf16 %v5673
      %v5722 = vunpack.c.l.bf16 %v5674
      %v5723 = vunpack.c.l.bf16 %v5675
      %v5724 = vunpack.c.l.bf16 %v5676
      %v5725 = vunpack.c.l.bf16 %v5677
      %v5726 = vunpack.c.l.bf16 %v5678
      %v5727 = vunpack.c.l.bf16 %v5679
      %v5728 = vunpack.c.l.bf16 %v5680
      %v5729 = vunpack.c.l.bf16 %v5681
      %v5730 = vunpack.c.l.bf16 %v5682
      %v5731 = vunpack.c.l.bf16 %v5683
      %v5732 = vunpack.c.l.bf16 %v5684
      %v5733 = vunpack.c.l.bf16 %v5685
      %v5734 = vunpack.c.l.bf16 %v5686
      %v5735 = vunpack.c.l.bf16 %v5687
      %v5736 = vunpack.c.l.bf16 %v5688
      %v5737 = vunpack.c.l.bf16 %v5689
      %v5738 = vunpack.c.l.bf16 %v5690
      %v5739 = vunpack.c.l.bf16 %v5691
      %v5740 = vunpack.c.l.bf16 %v5692
      %v5741 = vunpack.c.l.bf16 %v5693
      %v5742 = vunpack.c.l.bf16 %v5694
      %v5743 = vunpack.c.l.bf16 %v5695
      %v5744 = vunpack.c.l.bf16 %v5696
      %v5745 = vunpack.c.l.bf16 %v5697
      %v5746 = vunpack.c.l.bf16 %v5698
      %v5747 = vunpack.c.l.bf16 %v5699
      %v5748 = vunpack.c.l.bf16 %v5700
      %v5749 = vunpack.c.l.bf16 %v5701
      %v5750 = vunpack.c.l.bf16 %v5702
      %v5751 = vunpack.c.l.bf16 %v5703
      %v5752 = vunpack.c.l.bf16 %v5704
      %v5753 = vunpack.c.l.bf16 %v5705
      %v5754 = vunpack.c.l.bf16 %v5706
      %v5755 = vunpack.c.l.bf16 %v5707
      %v5756 = vunpack.c.l.bf16 %v5708
      %v5757 = vunpack.c.l.bf16 %v5709
      %v5758 = vunpack.c.l.bf16 %v5710
      %v5759 = vunpack.c.l.bf16 %v5711
      %v5760 = vunpack.c.l.bf16 %v5712
      %v5761 = vunpack.c.l.bf16 %v5713
      %v5778 = vrot.slane %v5746, 2
      %v5779 = vrot.slane %v5427, 2
      %v5780 = vsel %vm1971, %v5778, %v5779
      %v5781 = vrot.slane %v5458, 2
      %v5782 = vsel %vm1971, %v5779, %v5781
      %v5783 = vrot.slane %v5747, 2
      %v5784 = vrot.slane %v5429, 2
      %v5785 = vsel %vm1971, %v5783, %v5784
      %v5786 = vrot.slane %v5459, 2
      %v5787 = vsel %vm1971, %v5784, %v5786
      %v5788 = vrot.slane %v5748, 2
      %v5789 = vrot.slane %v5431, 2
      %v5790 = vsel %vm1971, %v5788, %v5789
      %v5791 = vrot.slane %v5460, 2
      %v5792 = vsel %vm1971, %v5789, %v5791
      %v5793 = vrot.slane %v5749, 2
      %v5794 = vrot.slane %v5433, 2
      %v5795 = vsel %vm1971, %v5793, %v5794
      %v5796 = vrot.slane %v5461, 2
      %v5797 = vsel %vm1971, %v5794, %v5796
      %v5798 = vrot.slane %v5750, 2
      %v5799 = vrot.slane %v5435, 2
      %v5800 = vsel %vm1971, %v5798, %v5799
      %v5801 = vrot.slane %v5462, 2
      %v5802 = vsel %vm1971, %v5799, %v5801
      %v5803 = vrot.slane %v5751, 2
      %v5804 = vrot.slane %v5437, 2
      %v5805 = vsel %vm1971, %v5803, %v5804
      %v5806 = vrot.slane %v5463, 2
      %v5807 = vsel %vm1971, %v5804, %v5806
      %v5808 = vrot.slane %v5752, 2
      %v5809 = vrot.slane %v5439, 2
      %v5810 = vsel %vm1971, %v5808, %v5809
      %v5811 = vrot.slane %v5464, 2
      %v5812 = vsel %vm1971, %v5809, %v5811
      %v5813 = vrot.slane %v5753, 2
      %v5814 = vrot.slane %v5441, 2
      %v5815 = vsel %vm1971, %v5813, %v5814
      %v5816 = vrot.slane %v5465, 2
      %v5817 = vsel %vm1971, %v5814, %v5816
      %v5818 = vrot.slane %v5754, 2
      %v5819 = vrot.slane %v5443, 2
      %v5820 = vsel %vm1971, %v5818, %v5819
      %v5821 = vrot.slane %v5466, 2
      %v5822 = vsel %vm1971, %v5819, %v5821
      %v5823 = vrot.slane %v5755, 2
      %v5824 = vrot.slane %v5445, 2
      %v5825 = vsel %vm1971, %v5823, %v5824
      %v5826 = vrot.slane %v5467, 2
      %v5827 = vsel %vm1971, %v5824, %v5826
      %v5828 = vrot.slane %v5756, 2
      %v5829 = vrot.slane %v5447, 2
      %v5830 = vsel %vm1971, %v5828, %v5829
      %v5831 = vrot.slane %v5468, 2
      %v5832 = vsel %vm1971, %v5829, %v5831
      %v5833 = vrot.slane %v5757, 2
      %v5834 = vrot.slane %v5449, 2
      %v5835 = vsel %vm1971, %v5833, %v5834
      %v5836 = vrot.slane %v5469, 2
      %v5837 = vsel %vm1971, %v5834, %v5836
      %v5838 = vrot.slane %v5758, 2
      %v5839 = vrot.slane %v5451, 2
      %v5840 = vsel %vm1971, %v5838, %v5839
      %v5841 = vrot.slane %v5470, 2
      %v5842 = vsel %vm1971, %v5839, %v5841
      %v5843 = vrot.slane %v5759, 2
      %v5844 = vrot.slane %v5453, 2
      %v5845 = vsel %vm1971, %v5843, %v5844
      %v5846 = vrot.slane %v5471, 2
      %v5847 = vsel %vm1971, %v5844, %v5846
      %v5848 = vrot.slane %v5760, 2
      %v5849 = vrot.slane %v5455, 2
      %v5850 = vsel %vm1971, %v5848, %v5849
      %v5851 = vrot.slane %v5472, 2
      %v5852 = vsel %vm1971, %v5849, %v5851
      %v5853 = vrot.slane %v5761, 2
      %v5854 = vrot.slane %v5457, 2
      %v5855 = vsel %vm1971, %v5853, %v5854
      %v5856 = vrot.slane %v5473, 2
      %v5857 = vsel %vm1971, %v5854, %v5856
      %v5890 = vmax.f32 %v5714, %v5780
      %v5891 = vmax.f32 %v5715, %v5782
      %v5892 = vmax.f32 %v5716, %v5785
      %v5893 = vmax.f32 %v5717, %v5787
      %v5894 = vmax.f32 %v5718, %v5790
      %v5895 = vmax.f32 %v5719, %v5792
      %v5896 = vmax.f32 %v5720, %v5795
      %v5897 = vmax.f32 %v5721, %v5797
      %v5898 = vmax.f32 %v5722, %v5800
      %v5899 = vmax.f32 %v5723, %v5802
      %v5900 = vmax.f32 %v5724, %v5805
      %v5901 = vmax.f32 %v5725, %v5807
      %v5902 = vmax.f32 %v5726, %v5810
      %v5903 = vmax.f32 %v5727, %v5812
      %v5904 = vmax.f32 %v5728, %v5815
      %v5905 = vmax.f32 %v5729, %v5817
      %v5906 = vmax.f32 %v5730, %v5820
      %v5907 = vmax.f32 %v5731, %v5822
      %v5908 = vmax.f32 %v5732, %v5825
      %v5909 = vmax.f32 %v5733, %v5827
      %v5910 = vmax.f32 %v5734, %v5830
      %v5911 = vmax.f32 %v5735, %v5832
      %v5912 = vmax.f32 %v5736, %v5835
      %v5913 = vmax.f32 %v5737, %v5837
      %v5914 = vmax.f32 %v5738, %v5840
      %v5915 = vmax.f32 %v5739, %v5842
      %v5916 = vmax.f32 %v5740, %v5845
      %v5917 = vmax.f32 %v5741, %v5847
      %v5918 = vmax.f32 %v5742, %v5850
      %v5919 = vmax.f32 %v5743, %v5852
      %v5920 = vmax.f32 %v5744, %v5855
      %v5921 = vmax.f32 %v5745, %v5857
      %v5922 = vpack.c.bf16 %v5890, %v5890
      %v5923 = vpack.c.bf16 %v5891, %v5891
      %v5924 = vpack.c.bf16 %v5892, %v5892
      %v5925 = vpack.c.bf16 %v5893, %v5893
      %v5926 = vpack.c.bf16 %v5894, %v5894
      %v5927 = vpack.c.bf16 %v5895, %v5895
      %v5928 = vpack.c.bf16 %v5896, %v5896
      %v5929 = vpack.c.bf16 %v5897, %v5897
      %v5930 = vpack.c.bf16 %v5898, %v5898
      %v5931 = vpack.c.bf16 %v5899, %v5899
      %v5932 = vpack.c.bf16 %v5900, %v5900
      %v5933 = vpack.c.bf16 %v5901, %v5901
      %v5934 = vpack.c.bf16 %v5902, %v5902
      %v5935 = vpack.c.bf16 %v5903, %v5903
      %v5936 = vpack.c.bf16 %v5904, %v5904
      %v5937 = vpack.c.bf16 %v5905, %v5905
      %v5938 = vpack.c.bf16 %v5906, %v5906
      %v5939 = vpack.c.bf16 %v5907, %v5907
      %v5940 = vpack.c.bf16 %v5908, %v5908
      %v5941 = vpack.c.bf16 %v5909, %v5909
      %v5942 = vpack.c.bf16 %v5910, %v5910
      %v5943 = vpack.c.bf16 %v5911, %v5911
      %v5944 = vpack.c.bf16 %v5912, %v5912
      %v5945 = vpack.c.bf16 %v5913, %v5913
      %v5946 = vpack.c.bf16 %v5914, %v5914
      %v5947 = vpack.c.bf16 %v5915, %v5915
      %v5948 = vpack.c.bf16 %v5916, %v5916
      %v5949 = vpack.c.bf16 %v5917, %v5917
      %v5950 = vpack.c.bf16 %v5918, %v5918
      %v5951 = vpack.c.bf16 %v5919, %v5919
      %v5952 = vpack.c.bf16 %v5920, %v5920
      %v5953 = vpack.c.bf16 %v5921, %v5921
      %v5954 = vld [vmem:[#allocation2 + $0x8] sm:$0x3]
      %v5955 = vld [vmem:[#allocation2 + $0x14] sm:$0x3]
      %v5956 = vld [vmem:[#allocation2 + $0x20] sm:$0x3]
      %v5957 = vld [vmem:[#allocation2 + $0x2c] sm:$0x3]
      %v5958 = vld [vmem:[#allocation2 + $0x38] sm:$0x3]
      %v5959 = vld [vmem:[#allocation2 + $0x44] sm:$0x3]
      %v5960 = vld [vmem:[#allocation2 + $0x50] sm:$0x3]
      %v5961 = vld [vmem:[#allocation2 + $0x5c] sm:$0x3]
      %v5962 = vld [vmem:[#allocation2 + $0x68] sm:$0x3]
      %v5963 = vld [vmem:[#allocation2 + $0x74] sm:$0x3]
      %v5964 = vld [vmem:[#allocation2 + $0x80] sm:$0x3]
      %v5965 = vld [vmem:[#allocation2 + $0x8c] sm:$0x3]
      %v5966 = vld [vmem:[#allocation2 + $0x98] sm:$0x3]
      %v5967 = vld [vmem:[#allocation2 + $0xa4] sm:$0x3]
      %v5968 = vld [vmem:[#allocation2 + $0xb0] sm:$0x3]
      %v5969 = vld [vmem:[#allocation2 + $0xbc] sm:$0x3]
      %v5970 = vunpack.c.l.bf16 %v5922
      %v5971 = vunpack.c.l.bf16 %v5923
      %v5972 = vunpack.c.l.bf16 %v5924
      %v5973 = vunpack.c.l.bf16 %v5925
      %v5974 = vunpack.c.l.bf16 %v5926
      %v5975 = vunpack.c.l.bf16 %v5927
      %v5976 = vunpack.c.l.bf16 %v5928
      %v5977 = vunpack.c.l.bf16 %v5929
      %v5978 = vunpack.c.l.bf16 %v5930
      %v5979 = vunpack.c.l.bf16 %v5931
      %v5980 = vunpack.c.l.bf16 %v5932
      %v5981 = vunpack.c.l.bf16 %v5933
      %v5982 = vunpack.c.l.bf16 %v5934
      %v5983 = vunpack.c.l.bf16 %v5935
      %v5984 = vunpack.c.l.bf16 %v5936
      %v5985 = vunpack.c.l.bf16 %v5937
      %v5986 = vunpack.c.l.bf16 %v5938
      %v5987 = vunpack.c.l.bf16 %v5939
      %v5988 = vunpack.c.l.bf16 %v5940
      %v5989 = vunpack.c.l.bf16 %v5941
      %v5990 = vunpack.c.l.bf16 %v5942
      %v5991 = vunpack.c.l.bf16 %v5943
      %v5992 = vunpack.c.l.bf16 %v5944
      %v5993 = vunpack.c.l.bf16 %v5945
      %v5994 = vunpack.c.l.bf16 %v5946
      %v5995 = vunpack.c.l.bf16 %v5947
      %v5996 = vunpack.c.l.bf16 %v5948
      %v5997 = vunpack.c.l.bf16 %v5949
      %v5998 = vunpack.c.l.bf16 %v5950
      %v5999 = vunpack.c.l.bf16 %v5951
      %v6000 = vunpack.c.l.bf16 %v5952
      %v6001 = vunpack.c.l.bf16 %v5953
      %v6002 = vunpack.c.l.bf16 %v5954
      %v6003 = vunpack.c.l.bf16 %v5955
      %v6004 = vunpack.c.l.bf16 %v5956
      %v6005 = vunpack.c.l.bf16 %v5957
      %v6006 = vunpack.c.l.bf16 %v5958
      %v6007 = vunpack.c.l.bf16 %v5959
      %v6008 = vunpack.c.l.bf16 %v5960
      %v6009 = vunpack.c.l.bf16 %v5961
      %v6010 = vunpack.c.l.bf16 %v5962
      %v6011 = vunpack.c.l.bf16 %v5963
      %v6012 = vunpack.c.l.bf16 %v5964
      %v6013 = vunpack.c.l.bf16 %v5965
      %v6014 = vunpack.c.l.bf16 %v5966
      %v6015 = vunpack.c.l.bf16 %v5967
      %v6016 = vunpack.c.l.bf16 %v5968
      %v6017 = vunpack.c.l.bf16 %v5969
      %v6034 = vrot.slane %v5746, 3
      %v6035 = vrot.slane %v5427, 3
      %v6036 = vsel %vm2228, %v6034, %v6035
      %v6037 = vrot.slane %v6002, 3
      %v6038 = vsel %vm2228, %v6035, %v6037
      %v6039 = vrot.slane %v5747, 3
      %v6040 = vrot.slane %v5429, 3
      %v6041 = vsel %vm2228, %v6039, %v6040
      %v6042 = vrot.slane %v6003, 3
      %v6043 = vsel %vm2228, %v6040, %v6042
      %v6044 = vrot.slane %v5748, 3
      %v6045 = vrot.slane %v5431, 3
      %v6046 = vsel %vm2228, %v6044, %v6045
      %v6047 = vrot.slane %v6004, 3
      %v6048 = vsel %vm2228, %v6045, %v6047
      %v6049 = vrot.slane %v5749, 3
      %v6050 = vrot.slane %v5433, 3
      %v6051 = vsel %vm2228, %v6049, %v6050
      %v6052 = vrot.slane %v6005, 3
      %v6053 = vsel %vm2228, %v6050, %v6052
      %v6054 = vrot.slane %v5750, 3
      %v6055 = vrot.slane %v5435, 3
      %v6056 = vsel %vm2228, %v6054, %v6055
      %v6057 = vrot.slane %v6006, 3
      %v6058 = vsel %vm2228, %v6055, %v6057
      %v6059 = vrot.slane %v5751, 3
      %v6060 = vrot.slane %v5437, 3
      %v6061 = vsel %vm2228, %v6059, %v6060
      %v6062 = vrot.slane %v6007, 3
      %v6063 = vsel %vm2228, %v6060, %v6062
      %v6064 = vrot.slane %v5752, 3
      %v6065 = vrot.slane %v5439, 3
      %v6066 = vsel %vm2228, %v6064, %v6065
      %v6067 = vrot.slane %v6008, 3
      %v6068 = vsel %vm2228, %v6065, %v6067
      %v6069 = vrot.slane %v5753, 3
      %v6070 = vrot.slane %v5441, 3
      %v6071 = vsel %vm2228, %v6069, %v6070
      %v6072 = vrot.slane %v6009, 3
      %v6073 = vsel %vm2228, %v6070, %v6072
      %v6074 = vrot.slane %v5754, 3
      %v6075 = vrot.slane %v5443, 3
      %v6076 = vsel %vm2228, %v6074, %v6075
      %v6077 = vrot.slane %v6010, 3
      %v6078 = vsel %vm2228, %v6075, %v6077
      %v6079 = vrot.slane %v5755, 3
      %v6080 = vrot.slane %v5445, 3
      %v6081 = vsel %vm2228, %v6079, %v6080
      %v6082 = vrot.slane %v6011, 3
      %v6083 = vsel %vm2228, %v6080, %v6082
      %v6084 = vrot.slane %v5756, 3
      %v6085 = vrot.slane %v5447, 3
      %v6086 = vsel %vm2228, %v6084, %v6085
      %v6087 = vrot.slane %v6012, 3
      %v6088 = vsel %vm2228, %v6085, %v6087
      %v6089 = vrot.slane %v5757, 3
      %v6090 = vrot.slane %v5449, 3
      %v6091 = vsel %vm2228, %v6089, %v6090
      %v6092 = vrot.slane %v6013, 3
      %v6093 = vsel %vm2228, %v6090, %v6092
      %v6094 = vrot.slane %v5758, 3
      %v6095 = vrot.slane %v5451, 3
      %v6096 = vsel %vm2228, %v6094, %v6095
      %v6097 = vrot.slane %v6014, 3
      %v6098 = vsel %vm2228, %v6095, %v6097
      %v6099 = vrot.slane %v5759, 3
      %v6100 = vrot.slane %v5453, 3
      %v6101 = vsel %vm2228, %v6099, %v6100
      %v6102 = vrot.slane %v6015, 3
      %v6103 = vsel %vm2228, %v6100, %v6102
      %v6104 = vrot.slane %v5760, 3
      %v6105 = vrot.slane %v5455, 3
      %v6106 = vsel %vm2228, %v6104, %v6105
      %v6107 = vrot.slane %v6016, 3
      %v6108 = vsel %vm2228, %v6105, %v6107
      %v6109 = vrot.slane %v5761, 3
      %v6110 = vrot.slane %v5457, 3
      %v6111 = vsel %vm2228, %v6109, %v6110
      %v6112 = vrot.slane %v6017, 3
      %v6113 = vsel %vm2228, %v6110, %v6112
      %v6146 = vmax.f32 %v5970, %v6036
      %v6147 = vmax.f32 %v5971, %v6038
      %v6148 = vmax.f32 %v5972, %v6041
      %v6149 = vmax.f32 %v5973, %v6043
      %v6150 = vmax.f32 %v5974, %v6046
      %v6151 = vmax.f32 %v5975, %v6048
      %v6152 = vmax.f32 %v5976, %v6051
      %v6153 = vmax.f32 %v5977, %v6053
      %v6154 = vmax.f32 %v5978, %v6056
      %v6155 = vmax.f32 %v5979, %v6058
      %v6156 = vmax.f32 %v5980, %v6061
      %v6157 = vmax.f32 %v5981, %v6063
      %v6158 = vmax.f32 %v5982, %v6066
      %v6159 = vmax.f32 %v5983, %v6068
      %v6160 = vmax.f32 %v5984, %v6071
      %v6161 = vmax.f32 %v5985, %v6073
      %v6162 = vmax.f32 %v5986, %v6076
      %v6163 = vmax.f32 %v5987, %v6078
      %v6164 = vmax.f32 %v5988, %v6081
      %v6165 = vmax.f32 %v5989, %v6083
      %v6166 = vmax.f32 %v5990, %v6086
      %v6167 = vmax.f32 %v5991, %v6088
      %v6168 = vmax.f32 %v5992, %v6091
      %v6169 = vmax.f32 %v5993, %v6093
      %v6170 = vmax.f32 %v5994, %v6096
      %v6171 = vmax.f32 %v5995, %v6098
      %v6172 = vmax.f32 %v5996, %v6101
      %v6173 = vmax.f32 %v5997, %v6103
      %v6174 = vmax.f32 %v5998, %v6106
      %v6175 = vmax.f32 %v5999, %v6108
      %v6176 = vmax.f32 %v6000, %v6111
      %v6177 = vmax.f32 %v6001, %v6113
      %v6178 = vpack.c.bf16 %v6146, %v6146
      %v6179 = vpack.c.bf16 %v6147, %v6147
      %v6180 = vpack.c.bf16 %v6148, %v6148
      %v6181 = vpack.c.bf16 %v6149, %v6149
      %v6182 = vpack.c.bf16 %v6150, %v6150
      %v6183 = vpack.c.bf16 %v6151, %v6151
      %v6184 = vpack.c.bf16 %v6152, %v6152
      %v6185 = vpack.c.bf16 %v6153, %v6153
      %v6186 = vpack.c.bf16 %v6154, %v6154
      %v6187 = vpack.c.bf16 %v6155, %v6155
      %v6188 = vpack.c.bf16 %v6156, %v6156
      %v6189 = vpack.c.bf16 %v6157, %v6157
      %v6190 = vpack.c.bf16 %v6158, %v6158
      %v6191 = vpack.c.bf16 %v6159, %v6159
      %v6192 = vpack.c.bf16 %v6160, %v6160
      %v6193 = vpack.c.bf16 %v6161, %v6161
      %v6194 = vpack.c.bf16 %v6162, %v6162
      %v6195 = vpack.c.bf16 %v6163, %v6163
      %v6196 = vpack.c.bf16 %v6164, %v6164
      %v6197 = vpack.c.bf16 %v6165, %v6165
      %v6198 = vpack.c.bf16 %v6166, %v6166
      %v6199 = vpack.c.bf16 %v6167, %v6167
      %v6200 = vpack.c.bf16 %v6168, %v6168
      %v6201 = vpack.c.bf16 %v6169, %v6169
      %v6202 = vpack.c.bf16 %v6170, %v6170
      %v6203 = vpack.c.bf16 %v6171, %v6171
      %v6204 = vpack.c.bf16 %v6172, %v6172
      %v6205 = vpack.c.bf16 %v6173, %v6173
      %v6206 = vpack.c.bf16 %v6174, %v6174
      %v6207 = vpack.c.bf16 %v6175, %v6175
      %v6208 = vpack.c.bf16 %v6176, %v6176
      %v6209 = vpack.c.bf16 %v6177, %v6177
      %v6210 = vld [vmem:[#allocation2] sm:$0xc]
      %v6211 = vld [vmem:[#allocation2 + $0xc] sm:$0xc]
      %v6212 = vld [vmem:[#allocation2 + $0x18] sm:$0xc]
      %v6213 = vld [vmem:[#allocation2 + $0x24] sm:$0xc]
      %v6214 = vld [vmem:[#allocation2 + $0x30] sm:$0xc]
      %v6215 = vld [vmem:[#allocation2 + $0x3c] sm:$0xc]
      %v6216 = vld [vmem:[#allocation2 + $0x48] sm:$0xc]
      %v6217 = vld [vmem:[#allocation2 + $0x54] sm:$0xc]
      %v6218 = vld [vmem:[#allocation2 + $0x60] sm:$0xc]
      %v6219 = vld [vmem:[#allocation2 + $0x6c] sm:$0xc]
      %v6220 = vld [vmem:[#allocation2 + $0x78] sm:$0xc]
      %v6221 = vld [vmem:[#allocation2 + $0x84] sm:$0xc]
      %v6222 = vld [vmem:[#allocation2 + $0x90] sm:$0xc]
      %v6223 = vld [vmem:[#allocation2 + $0x9c] sm:$0xc]
      %v6224 = vld [vmem:[#allocation2 + $0xa8] sm:$0xc]
      %v6225 = vld [vmem:[#allocation2 + $0xb4] sm:$0xc]
      %v6226 = vunpack.c.l.bf16 %v6178
      %v6227 = vunpack.c.l.bf16 %v6179
      %v6228 = vunpack.c.l.bf16 %v6180
      %v6229 = vunpack.c.l.bf16 %v6181
      %v6230 = vunpack.c.l.bf16 %v6182
      %v6231 = vunpack.c.l.bf16 %v6183
      %v6232 = vunpack.c.l.bf16 %v6184
      %v6233 = vunpack.c.l.bf16 %v6185
      %v6234 = vunpack.c.l.bf16 %v6186
      %v6235 = vunpack.c.l.bf16 %v6187
      %v6236 = vunpack.c.l.bf16 %v6188
      %v6237 = vunpack.c.l.bf16 %v6189
      %v6238 = vunpack.c.l.bf16 %v6190
      %v6239 = vunpack.c.l.bf16 %v6191
      %v6240 = vunpack.c.l.bf16 %v6192
      %v6241 = vunpack.c.l.bf16 %v6193
      %v6242 = vunpack.c.l.bf16 %v6194
      %v6243 = vunpack.c.l.bf16 %v6195
      %v6244 = vunpack.c.l.bf16 %v6196
      %v6245 = vunpack.c.l.bf16 %v6197
      %v6246 = vunpack.c.l.bf16 %v6198
      %v6247 = vunpack.c.l.bf16 %v6199
      %v6248 = vunpack.c.l.bf16 %v6200
      %v6249 = vunpack.c.l.bf16 %v6201
      %v6250 = vunpack.c.l.bf16 %v6202
      %v6251 = vunpack.c.l.bf16 %v6203
      %v6252 = vunpack.c.l.bf16 %v6204
      %v6253 = vunpack.c.l.bf16 %v6205
      %v6254 = vunpack.c.l.bf16 %v6206
      %v6255 = vunpack.c.l.bf16 %v6207
      %v6256 = vunpack.c.l.bf16 %v6208
      %v6257 = vunpack.c.l.bf16 %v6209
      %v6258 = vunpack.c.l.bf16 %v6210
      %v6259 = vunpack.c.l.bf16 %v6211
      %v6260 = vunpack.c.l.bf16 %v6212
      %v6261 = vunpack.c.l.bf16 %v6213
      %v6262 = vunpack.c.l.bf16 %v6214
      %v6263 = vunpack.c.l.bf16 %v6215
      %v6264 = vunpack.c.l.bf16 %v6216
      %v6265 = vunpack.c.l.bf16 %v6217
      %v6266 = vunpack.c.l.bf16 %v6218
      %v6267 = vunpack.c.l.bf16 %v6219
      %v6268 = vunpack.c.l.bf16 %v6220
      %v6269 = vunpack.c.l.bf16 %v6221
      %v6270 = vunpack.c.l.bf16 %v6222
      %v6271 = vunpack.c.l.bf16 %v6223
      %v6272 = vunpack.c.l.bf16 %v6224
      %v6273 = vunpack.c.l.bf16 %v6225
      %v6290 = vrot.slane %v6258, 4
      %v6291 = vrot.slane %v5427, 4
      %v6292 = vsel %vm2485, %v6290, %v6291
      %v6293 = vrot.slane %v6002, 4
      %v6294 = vsel %vm2485, %v6291, %v6293
      %v6295 = vrot.slane %v6259, 4
      %v6296 = vrot.slane %v5429, 4
      %v6297 = vsel %vm2485, %v6295, %v6296
      %v6298 = vrot.slane %v6003, 4
      %v6299 = vsel %vm2485, %v6296, %v6298
      %v6300 = vrot.slane %v6260, 4
      %v6301 = vrot.slane %v5431, 4
      %v6302 = vsel %vm2485, %v6300, %v6301
      %v6303 = vrot.slane %v6004, 4
      %v6304 = vsel %vm2485, %v6301, %v6303
      %v6305 = vrot.slane %v6261, 4
      %v6306 = vrot.slane %v5433, 4
      %v6307 = vsel %vm2485, %v6305, %v6306
      %v6308 = vrot.slane %v6005, 4
      %v6309 = vsel %vm2485, %v6306, %v6308
      %v6310 = vrot.slane %v6262, 4
      %v6311 = vrot.slane %v5435, 4
      %v6312 = vsel %vm2485, %v6310, %v6311
      %v6313 = vrot.slane %v6006, 4
      %v6314 = vsel %vm2485, %v6311, %v6313
      %v6315 = vrot.slane %v6263, 4
      %v6316 = vrot.slane %v5437, 4
      %v6317 = vsel %vm2485, %v6315, %v6316
      %v6318 = vrot.slane %v6007, 4
      %v6319 = vsel %vm2485, %v6316, %v6318
      %v6320 = vrot.slane %v6264, 4
      %v6321 = vrot.slane %v5439, 4
      %v6322 = vsel %vm2485, %v6320, %v6321
      %v6323 = vrot.slane %v6008, 4
      %v6324 = vsel %vm2485, %v6321, %v6323
      %v6325 = vrot.slane %v6265, 4
      %v6326 = vrot.slane %v5441, 4
      %v6327 = vsel %vm2485, %v6325, %v6326
      %v6328 = vrot.slane %v6009, 4
      %v6329 = vsel %vm2485, %v6326, %v6328
      %v6330 = vrot.slane %v6266, 4
      %v6331 = vrot.slane %v5443, 4
      %v6332 = vsel %vm2485, %v6330, %v6331
      %v6333 = vrot.slane %v6010, 4
      %v6334 = vsel %vm2485, %v6331, %v6333
      %v6335 = vrot.slane %v6267, 4
      %v6336 = vrot.slane %v5445, 4
      %v6337 = vsel %vm2485, %v6335, %v6336
      %v6338 = vrot.slane %v6011, 4
      %v6339 = vsel %vm2485, %v6336, %v6338
      %v6340 = vrot.slane %v6268, 4
      %v6341 = vrot.slane %v5447, 4
      %v6342 = vsel %vm2485, %v6340, %v6341
      %v6343 = vrot.slane %v6012, 4
      %v6344 = vsel %vm2485, %v6341, %v6343
      %v6345 = vrot.slane %v6269, 4
      %v6346 = vrot.slane %v5449, 4
      %v6347 = vsel %vm2485, %v6345, %v6346
      %v6348 = vrot.slane %v6013, 4
      %v6349 = vsel %vm2485, %v6346, %v6348
      %v6350 = vrot.slane %v6270, 4
      %v6351 = vrot.slane %v5451, 4
      %v6352 = vsel %vm2485, %v6350, %v6351
      %v6353 = vrot.slane %v6014, 4
      %v6354 = vsel %vm2485, %v6351, %v6353
      %v6355 = vrot.slane %v6271, 4
      %v6356 = vrot.slane %v5453, 4
      %v6357 = vsel %vm2485, %v6355, %v6356
      %v6358 = vrot.slane %v6015, 4
      %v6359 = vsel %vm2485, %v6356, %v6358
      %v6360 = vrot.slane %v6272, 4
      %v6361 = vrot.slane %v5455, 4
      %v6362 = vsel %vm2485, %v6360, %v6361
      %v6363 = vrot.slane %v6016, 4
      %v6364 = vsel %vm2485, %v6361, %v6363
      %v6365 = vrot.slane %v6273, 4
      %v6366 = vrot.slane %v5457, 4
      %v6367 = vsel %vm2485, %v6365, %v6366
      %v6368 = vrot.slane %v6017, 4
      %v6369 = vsel %vm2485, %v6366, %v6368
      %v6402 = vmax.f32 %v6226, %v6292
      %v6403 = vmax.f32 %v6227, %v6294
      %v6404 = vmax.f32 %v6228, %v6297
      %v6405 = vmax.f32 %v6229, %v6299
      %v6406 = vmax.f32 %v6230, %v6302
      %v6407 = vmax.f32 %v6231, %v6304
      %v6408 = vmax.f32 %v6232, %v6307
      %v6409 = vmax.f32 %v6233, %v6309
      %v6410 = vmax.f32 %v6234, %v6312
      %v6411 = vmax.f32 %v6235, %v6314
      %v6412 = vmax.f32 %v6236, %v6317
      %v6413 = vmax.f32 %v6237, %v6319
      %v6414 = vmax.f32 %v6238, %v6322
      %v6415 = vmax.f32 %v6239, %v6324
      %v6416 = vmax.f32 %v6240, %v6327
      %v6417 = vmax.f32 %v6241, %v6329
      %v6418 = vmax.f32 %v6242, %v6332
      %v6419 = vmax.f32 %v6243, %v6334
      %v6420 = vmax.f32 %v6244, %v6337
      %v6421 = vmax.f32 %v6245, %v6339
      %v6422 = vmax.f32 %v6246, %v6342
      %v6423 = vmax.f32 %v6247, %v6344
      %v6424 = vmax.f32 %v6248, %v6347
      %v6425 = vmax.f32 %v6249, %v6349
      %v6426 = vmax.f32 %v6250, %v6352
      %v6427 = vmax.f32 %v6251, %v6354
      %v6428 = vmax.f32 %v6252, %v6357
      %v6429 = vmax.f32 %v6253, %v6359
      %v6430 = vmax.f32 %v6254, %v6362
      %v6431 = vmax.f32 %v6255, %v6364
      %v6432 = vmax.f32 %v6256, %v6367
      %v6433 = vmax.f32 %v6257, %v6369
      %v6434 = vpack.c.bf16 %v6402, %v6402
      %v6435 = vpack.c.bf16 %v6403, %v6403
      %v6436 = vpack.c.bf16 %v6404, %v6404
      %v6437 = vpack.c.bf16 %v6405, %v6405
      %v6438 = vpack.c.bf16 %v6406, %v6406
      %v6439 = vpack.c.bf16 %v6407, %v6407
      %v6440 = vpack.c.bf16 %v6408, %v6408
      %v6441 = vpack.c.bf16 %v6409, %v6409
      %v6442 = vpack.c.bf16 %v6410, %v6410
      %v6443 = vpack.c.bf16 %v6411, %v6411
      %v6444 = vpack.c.bf16 %v6412, %v6412
      %v6445 = vpack.c.bf16 %v6413, %v6413
      %v6446 = vpack.c.bf16 %v6414, %v6414
      %v6447 = vpack.c.bf16 %v6415, %v6415
      %v6448 = vpack.c.bf16 %v6416, %v6416
      %v6449 = vpack.c.bf16 %v6417, %v6417
      %v6450 = vpack.c.bf16 %v6418, %v6418
      %v6451 = vpack.c.bf16 %v6419, %v6419
      %v6452 = vpack.c.bf16 %v6420, %v6420
      %v6453 = vpack.c.bf16 %v6421, %v6421
      %v6454 = vpack.c.bf16 %v6422, %v6422
      %v6455 = vpack.c.bf16 %v6423, %v6423
      %v6456 = vpack.c.bf16 %v6424, %v6424
      %v6457 = vpack.c.bf16 %v6425, %v6425
      %v6458 = vpack.c.bf16 %v6426, %v6426
      %v6459 = vpack.c.bf16 %v6427, %v6427
      %v6460 = vpack.c.bf16 %v6428, %v6428
      %v6461 = vpack.c.bf16 %v6429, %v6429
      %v6462 = vpack.c.bf16 %v6430, %v6430
      %v6463 = vpack.c.bf16 %v6431, %v6431
      %v6464 = vpack.c.bf16 %v6432, %v6432
      %v6465 = vpack.c.bf16 %v6433, %v6433
      %v6498 = vunpack.c.l.b16 %v6434
      %v6499 = vunpack.c.l.b16 %v6435
      %v6500 = vunpack.c.l.b16 %v6436
      %v6501 = vunpack.c.l.b16 %v6437
      %v6502 = vunpack.c.l.b16 %v6438
      %v6503 = vunpack.c.l.b16 %v6439
      %v6504 = vunpack.c.l.b16 %v6440
      %v6505 = vunpack.c.l.b16 %v6441
      %v6506 = vunpack.c.l.b16 %v6442
      %v6507 = vunpack.c.l.b16 %v6443
      %v6508 = vunpack.c.l.b16 %v6444
      %v6509 = vunpack.c.l.b16 %v6445
      %v6510 = vunpack.c.l.b16 %v6446
      %v6511 = vunpack.c.l.b16 %v6447
      %v6512 = vunpack.c.l.b16 %v6448
      %v6513 = vunpack.c.l.b16 %v6449
      %v6514 = vunpack.c.l.b16 %v6450
      %v6515 = vunpack.c.l.b16 %v6451
      %v6516 = vunpack.c.l.b16 %v6452
      %v6517 = vunpack.c.l.b16 %v6453
      %v6518 = vunpack.c.l.b16 %v6454
      %v6519 = vunpack.c.l.b16 %v6455
      %v6520 = vunpack.c.l.b16 %v6456
      %v6521 = vunpack.c.l.b16 %v6457
      %v6522 = vunpack.c.l.b16 %v6458
      %v6523 = vunpack.c.l.b16 %v6459
      %v6524 = vunpack.c.l.b16 %v6460
      %v6525 = vunpack.c.l.b16 %v6461
      %v6526 = vunpack.c.l.b16 %v6462
      %v6527 = vunpack.c.l.b16 %v6463
      %v6528 = vunpack.c.l.b16 %v6464
      %v6529 = vunpack.c.l.b16 %v6465
      %v6530 = vpack.c.b16 %v6499, %v6498
      %v6531 = vpack.c.b16 %v6501, %v6500
      %v6532 = vpack.c.b16 %v6503, %v6502
      %v6533 = vpack.c.b16 %v6505, %v6504
      %v6534 = vpack.c.b16 %v6507, %v6506
      %v6535 = vpack.c.b16 %v6509, %v6508
      %v6536 = vpack.c.b16 %v6511, %v6510
      %v6537 = vpack.c.b16 %v6513, %v6512
      %v6538 = vpack.c.b16 %v6515, %v6514
      %v6539 = vpack.c.b16 %v6517, %v6516
      %v6540 = vpack.c.b16 %v6519, %v6518
      %v6541 = vpack.c.b16 %v6521, %v6520
      %v6542 = vpack.c.b16 %v6523, %v6522
      %v6543 = vpack.c.b16 %v6525, %v6524
      %v6544 = vpack.c.b16 %v6527, %v6526
      %v6545 = vpack.c.b16 %v6529, %v6528
      %v6562 = vunpack.c.l.bf16 %v6530
      %v6563 = vunpack.c.h.bf16 %v6530
      %v6564 = vunpack.c.l.bf16 %v6531
      %v6565 = vunpack.c.h.bf16 %v6531
      %v6566 = vunpack.c.l.bf16 %v6532
      %v6567 = vunpack.c.h.bf16 %v6532
      %v6568 = vunpack.c.l.bf16 %v6533
      %v6569 = vunpack.c.h.bf16 %v6533
      %v6570 = vunpack.c.l.bf16 %v6534
      %v6571 = vunpack.c.h.bf16 %v6534
      %v6572 = vunpack.c.l.bf16 %v6535
      %v6573 = vunpack.c.h.bf16 %v6535
      %v6574 = vunpack.c.l.bf16 %v6536
      %v6575 = vunpack.c.h.bf16 %v6536
      %v6576 = vunpack.c.l.bf16 %v6537
      %v6577 = vunpack.c.h.bf16 %v6537
      %v6578 = vunpack.c.l.bf16 %v6538
      %v6579 = vunpack.c.h.bf16 %v6538
      %v6580 = vunpack.c.l.bf16 %v6539
      %v6581 = vunpack.c.h.bf16 %v6539
      %v6582 = vunpack.c.l.bf16 %v6540
      %v6583 = vunpack.c.h.bf16 %v6540
      %v6584 = vunpack.c.l.bf16 %v6541
      %v6585 = vunpack.c.h.bf16 %v6541
      %v6586 = vunpack.c.l.bf16 %v6542
      %v6587 = vunpack.c.h.bf16 %v6542
      %v6588 = vunpack.c.l.bf16 %v6543
      %v6589 = vunpack.c.h.bf16 %v6543
      %v6590 = vunpack.c.l.bf16 %v6544
      %v6591 = vunpack.c.h.bf16 %v6544
      %v6592 = vmax.f32 %v2758, %v6562
      %v6593 = vmax.f32 %v2759, %v6563
      %v6594 = vmax.f32 %v6562, %v6564
      %v6595 = vmax.f32 %v6563, %v6565
      %v6596 = vmax.f32 %v6564, %v6566
      %v6597 = vmax.f32 %v6565, %v6567
      %v6598 = vmax.f32 %v6566, %v6568
      %v6599 = vmax.f32 %v6567, %v6569
      %v6600 = vmax.f32 %v6568, %v6570
      %v6601 = vmax.f32 %v6569, %v6571
      %v6602 = vmax.f32 %v6570, %v6572
      %v6603 = vmax.f32 %v6571, %v6573
      %v6604 = vmax.f32 %v6572, %v6574
      %v6605 = vmax.f32 %v6573, %v6575
      %v6606 = vmax.f32 %v6574, %v6576
      %v6607 = vmax.f32 %v6575, %v6577
      %v6608 = vmax.f32 %v6576, %v6578
      %v6609 = vmax.f32 %v6577, %v6579
      %v6610 = vmax.f32 %v6578, %v6580
      %v6611 = vmax.f32 %v6579, %v6581
      %v6612 = vmax.f32 %v6580, %v6582
      %v6613 = vmax.f32 %v6581, %v6583
      %v6614 = vmax.f32 %v6582, %v6584
      %v6615 = vmax.f32 %v6583, %v6585
      %v6616 = vmax.f32 %v6584, %v6586
      %v6617 = vmax.f32 %v6585, %v6587
      %v6618 = vmax.f32 %v6586, %v6588
      %v6619 = vmax.f32 %v6587, %v6589
      %v6620 = vmax.f32 %v6588, %v6590
      %v6621 = vmax.f32 %v6589, %v6591
      %v6622 = vpack.c.bf16 %v6592, %v6592
      %v6623 = vpack.c.bf16 %v6593, %v6593
      %v6624 = vpack.c.bf16 %v6594, %v6594
      %v6625 = vpack.c.bf16 %v6595, %v6595
      %v6626 = vpack.c.bf16 %v6596, %v6596
      %v6627 = vpack.c.bf16 %v6597, %v6597
      %v6628 = vpack.c.bf16 %v6598, %v6598
      %v6629 = vpack.c.bf16 %v6599, %v6599
      %v6630 = vpack.c.bf16 %v6600, %v6600
      %v6631 = vpack.c.bf16 %v6601, %v6601
      %v6632 = vpack.c.bf16 %v6602, %v6602
      %v6633 = vpack.c.bf16 %v6603, %v6603
      %v6634 = vpack.c.bf16 %v6604, %v6604
      %v6635 = vpack.c.bf16 %v6605, %v6605
      %v6636 = vpack.c.bf16 %v6606, %v6606
      %v6637 = vpack.c.bf16 %v6607, %v6607
      %v6638 = vpack.c.bf16 %v6608, %v6608
      %v6639 = vpack.c.bf16 %v6609, %v6609
      %v6640 = vpack.c.bf16 %v6610, %v6610
      %v6641 = vpack.c.bf16 %v6611, %v6611
      %v6642 = vpack.c.bf16 %v6612, %v6612
      %v6643 = vpack.c.bf16 %v6613, %v6613
      %v6644 = vpack.c.bf16 %v6614, %v6614
      %v6645 = vpack.c.bf16 %v6615, %v6615
      %v6646 = vpack.c.bf16 %v6616, %v6616
      %v6647 = vpack.c.bf16 %v6617, %v6617
      %v6648 = vpack.c.bf16 %v6618, %v6618
      %v6649 = vpack.c.bf16 %v6619, %v6619
      %v6650 = vpack.c.bf16 %v6620, %v6620
      %v6651 = vpack.c.bf16 %v6621, %v6621
      %v6652 = vunpack.c.l.bf16 %v6622
      %v6653 = vunpack.c.l.bf16 %v6623
      %v6654 = vunpack.c.l.bf16 %v6624
      %v6655 = vunpack.c.l.bf16 %v6625
      %v6656 = vunpack.c.l.bf16 %v6626
      %v6657 = vunpack.c.l.bf16 %v6627
      %v6658 = vunpack.c.l.bf16 %v6628
      %v6659 = vunpack.c.l.bf16 %v6629
      %v6660 = vunpack.c.l.bf16 %v6630
      %v6661 = vunpack.c.l.bf16 %v6631
      %v6662 = vunpack.c.l.bf16 %v6632
      %v6663 = vunpack.c.l.bf16 %v6633
      %v6664 = vunpack.c.l.bf16 %v6634
      %v6665 = vunpack.c.l.bf16 %v6635
      %v6666 = vunpack.c.l.bf16 %v6636
      %v6667 = vunpack.c.l.bf16 %v6637
      %v6668 = vunpack.c.l.bf16 %v6638
      %v6669 = vunpack.c.l.bf16 %v6639
      %v6670 = vunpack.c.l.bf16 %v6640
      %v6671 = vunpack.c.l.bf16 %v6641
      %v6672 = vunpack.c.l.bf16 %v6642
      %v6673 = vunpack.c.l.bf16 %v6643
      %v6674 = vunpack.c.l.bf16 %v6644
      %v6675 = vunpack.c.l.bf16 %v6645
      %v6676 = vunpack.c.l.bf16 %v6646
      %v6677 = vunpack.c.l.bf16 %v6647
      %v6678 = vunpack.c.l.bf16 %v6648
      %v6679 = vunpack.c.l.bf16 %v6649
      %v6680 = vunpack.c.l.bf16 %v6650
      %v6681 = vunpack.c.l.bf16 %v6651
      %v6682 = vunpack.c.l.bf16 %v6545
      %v6683 = vunpack.c.h.bf16 %v6545
      %v6684 = vmax.f32 %v2852, %v6562
      %v6685 = vmax.f32 %v2853, %v6563
      %v6686 = vmax.f32 %v6652, %v6564
      %v6687 = vmax.f32 %v6653, %v6565
      %v6688 = vmax.f32 %v6654, %v6566
      %v6689 = vmax.f32 %v6655, %v6567
      %v6690 = vmax.f32 %v6656, %v6568
      %v6691 = vmax.f32 %v6657, %v6569
      %v6692 = vmax.f32 %v6658, %v6570
      %v6693 = vmax.f32 %v6659, %v6571
      %v6694 = vmax.f32 %v6660, %v6572
      %v6695 = vmax.f32 %v6661, %v6573
      %v6696 = vmax.f32 %v6662, %v6574
      %v6697 = vmax.f32 %v6663, %v6575
      %v6698 = vmax.f32 %v6664, %v6576
      %v6699 = vmax.f32 %v6665, %v6577
      %v6700 = vmax.f32 %v6666, %v6578
      %v6701 = vmax.f32 %v6667, %v6579
      %v6702 = vmax.f32 %v6668, %v6580
      %v6703 = vmax.f32 %v6669, %v6581
      %v6704 = vmax.f32 %v6670, %v6582
      %v6705 = vmax.f32 %v6671, %v6583
      %v6706 = vmax.f32 %v6672, %v6584
      %v6707 = vmax.f32 %v6673, %v6585
      %v6708 = vmax.f32 %v6674, %v6586
      %v6709 = vmax.f32 %v6675, %v6587
      %v6710 = vmax.f32 %v6676, %v6588
      %v6711 = vmax.f32 %v6677, %v6589
      %v6712 = vmax.f32 %v6678, %v6590
      %v6713 = vmax.f32 %v6679, %v6591
      %v6714 = vmax.f32 %v6680, %v6682
      %v6715 = vmax.f32 %v6681, %v6683
      %v6716 = vpack.c.bf16 %v6684, %v6684
      %v6717 = vpack.c.bf16 %v6685, %v6685
      %v6718 = vpack.c.bf16 %v6686, %v6686
      %v6719 = vpack.c.bf16 %v6687, %v6687
      %v6720 = vpack.c.bf16 %v6688, %v6688
      %v6721 = vpack.c.bf16 %v6689, %v6689
      %v6722 = vpack.c.bf16 %v6690, %v6690
      %v6723 = vpack.c.bf16 %v6691, %v6691
      %v6724 = vpack.c.bf16 %v6692, %v6692
      %v6725 = vpack.c.bf16 %v6693, %v6693
      %v6726 = vpack.c.bf16 %v6694, %v6694
      %v6727 = vpack.c.bf16 %v6695, %v6695
      %v6728 = vpack.c.bf16 %v6696, %v6696
      %v6729 = vpack.c.bf16 %v6697, %v6697
      %v6730 = vpack.c.bf16 %v6698, %v6698
      %v6731 = vpack.c.bf16 %v6699, %v6699
      %v6732 = vpack.c.bf16 %v6700, %v6700
      %v6733 = vpack.c.bf16 %v6701, %v6701
      %v6734 = vpack.c.bf16 %v6702, %v6702
      %v6735 = vpack.c.bf16 %v6703, %v6703
      %v6736 = vpack.c.bf16 %v6704, %v6704
      %v6737 = vpack.c.bf16 %v6705, %v6705
      %v6738 = vpack.c.bf16 %v6706, %v6706
      %v6739 = vpack.c.bf16 %v6707, %v6707
      %v6740 = vpack.c.bf16 %v6708, %v6708
      %v6741 = vpack.c.bf16 %v6709, %v6709
      %v6742 = vpack.c.bf16 %v6710, %v6710
      %v6743 = vpack.c.bf16 %v6711, %v6711
      %v6744 = vpack.c.bf16 %v6712, %v6712
      %v6745 = vpack.c.bf16 %v6713, %v6713
      %v6746 = vpack.c.bf16 %v6714, %v6714
      %v6747 = vpack.c.bf16 %v6715, %v6715
      %v6748 = vunpack.c.l.bf16 %v6716
      %v6749 = vunpack.c.l.bf16 %v6717
      %v6750 = vunpack.c.l.bf16 %v6718
      %v6751 = vunpack.c.l.bf16 %v6719
      %v6752 = vunpack.c.l.bf16 %v6720
      %v6753 = vunpack.c.l.bf16 %v6721
      %v6754 = vunpack.c.l.bf16 %v6722
      %v6755 = vunpack.c.l.bf16 %v6723
      %v6756 = vunpack.c.l.bf16 %v6724
      %v6757 = vunpack.c.l.bf16 %v6725
      %v6758 = vunpack.c.l.bf16 %v6726
      %v6759 = vunpack.c.l.bf16 %v6727
      %v6760 = vunpack.c.l.bf16 %v6728
      %v6761 = vunpack.c.l.bf16 %v6729
      %v6762 = vunpack.c.l.bf16 %v6730
      %v6763 = vunpack.c.l.bf16 %v6731
      %v6764 = vunpack.c.l.bf16 %v6732
      %v6765 = vunpack.c.l.bf16 %v6733
      %v6766 = vunpack.c.l.bf16 %v6734
      %v6767 = vunpack.c.l.bf16 %v6735
      %v6768 = vunpack.c.l.bf16 %v6736
      %v6769 = vunpack.c.l.bf16 %v6737
      %v6770 = vunpack.c.l.bf16 %v6738
      %v6771 = vunpack.c.l.bf16 %v6739
      %v6772 = vunpack.c.l.bf16 %v6740
      %v6773 = vunpack.c.l.bf16 %v6741
      %v6774 = vunpack.c.l.bf16 %v6742
      %v6775 = vunpack.c.l.bf16 %v6743
      %v6776 = vunpack.c.l.bf16 %v6744
      %v6777 = vunpack.c.l.bf16 %v6745
      %v6778 = vunpack.c.l.bf16 %v6746
      %v6779 = vunpack.c.l.bf16 %v6747
      %v6780 = vmax.f32 %v6748, %v6564
      %v6781 = vmax.f32 %v6749, %v6565
      %v6782 = vmax.f32 %v6750, %v6566
      %v6783 = vmax.f32 %v6751, %v6567
      %v6784 = vmax.f32 %v6752, %v6568
      %v6785 = vmax.f32 %v6753, %v6569
      %v6786 = vmax.f32 %v6754, %v6570
      %v6787 = vmax.f32 %v6755, %v6571
      %v6788 = vmax.f32 %v6756, %v6572
      %v6789 = vmax.f32 %v6757, %v6573
      %v6790 = vmax.f32 %v6758, %v6574
      %v6791 = vmax.f32 %v6759, %v6575
      %v6792 = vmax.f32 %v6760, %v6576
      %v6793 = vmax.f32 %v6761, %v6577
      %v6794 = vmax.f32 %v6762, %v6578
      %v6795 = vmax.f32 %v6763, %v6579
      %v6796 = vmax.f32 %v6764, %v6580
      %v6797 = vmax.f32 %v6765, %v6581
      %v6798 = vmax.f32 %v6766, %v6582
      %v6799 = vmax.f32 %v6767, %v6583
      %v6800 = vmax.f32 %v6768, %v6584
      %v6801 = vmax.f32 %v6769, %v6585
      %v6802 = vmax.f32 %v6770, %v6586
      %v6803 = vmax.f32 %v6771, %v6587
      %v6804 = vmax.f32 %v6772, %v6588
      %v6805 = vmax.f32 %v6773, %v6589
      %v6806 = vmax.f32 %v6774, %v6590
      %v6807 = vmax.f32 %v6775, %v6591
      %v6808 = vmax.f32 %v6776, %v6682
      %v6809 = vmax.f32 %v6777, %v6683
      %v6810 = vmax.f32 %v6778, %v2758
      %v6811 = vmax.f32 %v6779, %v2759
      %v6812 = vpack.c.bf16 %v6780, %v6780
      %v6813 = vpack.c.bf16 %v6781, %v6781
      %v6814 = vpack.c.bf16 %v6782, %v6782
      %v6815 = vpack.c.bf16 %v6783, %v6783
      %v6816 = vpack.c.bf16 %v6784, %v6784
      %v6817 = vpack.c.bf16 %v6785, %v6785
      %v6818 = vpack.c.bf16 %v6786, %v6786
      %v6819 = vpack.c.bf16 %v6787, %v6787
      %v6820 = vpack.c.bf16 %v6788, %v6788
      %v6821 = vpack.c.bf16 %v6789, %v6789
      %v6822 = vpack.c.bf16 %v6790, %v6790
      %v6823 = vpack.c.bf16 %v6791, %v6791
      %v6824 = vpack.c.bf16 %v6792, %v6792
      %v6825 = vpack.c.bf16 %v6793, %v6793
      %v6826 = vpack.c.bf16 %v6794, %v6794
      %v6827 = vpack.c.bf16 %v6795, %v6795
      %v6828 = vpack.c.bf16 %v6796, %v6796
      %v6829 = vpack.c.bf16 %v6797, %v6797
      %v6830 = vpack.c.bf16 %v6798, %v6798
      %v6831 = vpack.c.bf16 %v6799, %v6799
      %v6832 = vpack.c.bf16 %v6800, %v6800
      %v6833 = vpack.c.bf16 %v6801, %v6801
      %v6834 = vpack.c.bf16 %v6802, %v6802
      %v6835 = vpack.c.bf16 %v6803, %v6803
      %v6836 = vpack.c.bf16 %v6804, %v6804
      %v6837 = vpack.c.bf16 %v6805, %v6805
      %v6838 = vpack.c.bf16 %v6806, %v6806
      %v6839 = vpack.c.bf16 %v6807, %v6807
      %v6840 = vpack.c.bf16 %v6808, %v6808
      %v6841 = vpack.c.bf16 %v6809, %v6809
      %v6842 = vpack.c.bf16 %v6810, %v6810
      %v6843 = vpack.c.bf16 %v6811, %v6811
      %v6844 = vunpack.c.l.bf16 %v6812
      %v6845 = vunpack.c.l.bf16 %v6813
      %v6846 = vunpack.c.l.bf16 %v6814
      %v6847 = vunpack.c.l.bf16 %v6815
      %v6848 = vunpack.c.l.bf16 %v6816
      %v6849 = vunpack.c.l.bf16 %v6817
      %v6850 = vunpack.c.l.bf16 %v6818
      %v6851 = vunpack.c.l.bf16 %v6819
      %v6852 = vunpack.c.l.bf16 %v6820
      %v6853 = vunpack.c.l.bf16 %v6821
      %v6854 = vunpack.c.l.bf16 %v6822
      %v6855 = vunpack.c.l.bf16 %v6823
      %v6856 = vunpack.c.l.bf16 %v6824
      %v6857 = vunpack.c.l.bf16 %v6825
      %v6858 = vunpack.c.l.bf16 %v6826
      %v6859 = vunpack.c.l.bf16 %v6827
      %v6860 = vunpack.c.l.bf16 %v6828
      %v6861 = vunpack.c.l.bf16 %v6829
      %v6862 = vunpack.c.l.bf16 %v6830
      %v6863 = vunpack.c.l.bf16 %v6831
      %v6864 = vunpack.c.l.bf16 %v6832
      %v6865 = vunpack.c.l.bf16 %v6833
      %v6866 = vunpack.c.l.bf16 %v6834
      %v6867 = vunpack.c.l.bf16 %v6835
      %v6868 = vunpack.c.l.bf16 %v6836
      %v6869 = vunpack.c.l.bf16 %v6837
      %v6870 = vunpack.c.l.bf16 %v6838
      %v6871 = vunpack.c.l.bf16 %v6839
      %v6872 = vunpack.c.l.bf16 %v6840
      %v6873 = vunpack.c.l.bf16 %v6841
      %v6874 = vunpack.c.l.bf16 %v6842
      %v6875 = vunpack.c.l.bf16 %v6843
      %v6876 = vmax.f32 %v6844, %v6566
      %v6877 = vmax.f32 %v6845, %v6567
      %v6878 = vmax.f32 %v6846, %v6568
      %v6879 = vmax.f32 %v6847, %v6569
      %v6880 = vmax.f32 %v6848, %v6570
      %v6881 = vmax.f32 %v6849, %v6571
      %v6882 = vmax.f32 %v6850, %v6572
      %v6883 = vmax.f32 %v6851, %v6573
      %v6884 = vmax.f32 %v6852, %v6574
      %v6885 = vmax.f32 %v6853, %v6575
      %v6886 = vmax.f32 %v6854, %v6576
      %v6887 = vmax.f32 %v6855, %v6577
      %v6888 = vmax.f32 %v6856, %v6578
      %v6889 = vmax.f32 %v6857, %v6579
      %v6890 = vmax.f32 %v6858, %v6580
      %v6891 = vmax.f32 %v6859, %v6581
      %v6892 = vmax.f32 %v6860, %v6582
      %v6893 = vmax.f32 %v6861, %v6583
      %v6894 = vmax.f32 %v6862, %v6584
      %v6895 = vmax.f32 %v6863, %v6585
      %v6896 = vmax.f32 %v6864, %v6586
      %v6897 = vmax.f32 %v6865, %v6587
      %v6898 = vmax.f32 %v6866, %v6588
      %v6899 = vmax.f32 %v6867, %v6589
      %v6900 = vmax.f32 %v6868, %v6590
      %v6901 = vmax.f32 %v6869, %v6591
      %v6902 = vmax.f32 %v6870, %v6682
      %v6903 = vmax.f32 %v6871, %v6683
      %v6904 = vmax.f32 %v6872, %v2758
      %v6905 = vmax.f32 %v6873, %v2759
      %v6906 = vmax.f32 %v6874, %v2758
      %v6907 = vmax.f32 %v6875, %v2759
      %v6908 = vpack.c.bf16 %v6876, %v6876
      %v6909 = vpack.c.bf16 %v6877, %v6877
      %v6910 = vpack.c.bf16 %v6878, %v6878
      %v6911 = vpack.c.bf16 %v6879, %v6879
      %v6912 = vpack.c.bf16 %v6880, %v6880
      %v6913 = vpack.c.bf16 %v6881, %v6881
      %v6914 = vpack.c.bf16 %v6882, %v6882
      %v6915 = vpack.c.bf16 %v6883, %v6883
      %v6916 = vpack.c.bf16 %v6884, %v6884
      %v6917 = vpack.c.bf16 %v6885, %v6885
      %v6918 = vpack.c.bf16 %v6886, %v6886
      %v6919 = vpack.c.bf16 %v6887, %v6887
      %v6920 = vpack.c.bf16 %v6888, %v6888
      %v6921 = vpack.c.bf16 %v6889, %v6889
      %v6922 = vpack.c.bf16 %v6890, %v6890
      %v6923 = vpack.c.bf16 %v6891, %v6891
      %v6924 = vpack.c.bf16 %v6892, %v6892
      %v6925 = vpack.c.bf16 %v6893, %v6893
      %v6926 = vpack.c.bf16 %v6894, %v6894
      %v6927 = vpack.c.bf16 %v6895, %v6895
      %v6928 = vpack.c.bf16 %v6896, %v6896
      %v6929 = vpack.c.bf16 %v6897, %v6897
      %v6930 = vpack.c.bf16 %v6898, %v6898
      %v6931 = vpack.c.bf16 %v6899, %v6899
      %v6932 = vpack.c.bf16 %v6900, %v6900
      %v6933 = vpack.c.bf16 %v6901, %v6901
      %v6934 = vpack.c.bf16 %v6902, %v6902
      %v6935 = vpack.c.bf16 %v6903, %v6903
      %v6936 = vpack.c.bf16 %v6904, %v6904
      %v6937 = vpack.c.bf16 %v6905, %v6905
      %v6938 = vpack.c.bf16 %v6906, %v6906
      %v6939 = vpack.c.bf16 %v6907, %v6907
      %6972 = vrot.lane.b32.xlu0 %v6908, 48
      %v6973 = vpop.permute.xlu0 %6972
      %6974 = vrot.lane.b32.xlu0 %v6909, 48
      %v6975 = vpop.permute.xlu0 %6974
      %6976 = vrot.lane.b32.xlu0 %v6910, 48
      %v6977 = vpop.permute.xlu0 %6976
      %6978 = vrot.lane.b32.xlu0 %v6911, 48
      %v6979 = vpop.permute.xlu0 %6978
      %6980 = vrot.lane.b32.xlu0 %v6912, 48
      %v6981 = vpop.permute.xlu0 %6980
      %6982 = vrot.lane.b32.xlu0 %v6913, 48
      %v6983 = vpop.permute.xlu0 %6982
      %6984 = vrot.lane.b32.xlu0 %v6914, 48
      %v6985 = vpop.permute.xlu0 %6984
      %6986 = vrot.lane.b32.xlu0 %v6915, 48
      %v6987 = vpop.permute.xlu0 %6986
      %6988 = vrot.lane.b32.xlu0 %v6916, 48
      %v6989 = vpop.permute.xlu0 %6988
      %6990 = vrot.lane.b32.xlu0 %v6917, 48
      %v6991 = vpop.permute.xlu0 %6990
      %6992 = vrot.lane.b32.xlu0 %v6918, 48
      %v6993 = vpop.permute.xlu0 %6992
      %6994 = vrot.lane.b32.xlu0 %v6919, 48
      %v6995 = vpop.permute.xlu0 %6994
      %6996 = vrot.lane.b32.xlu0 %v6920, 48
      %v6997 = vpop.permute.xlu0 %6996
      %6998 = vrot.lane.b32.xlu0 %v6921, 48
      %v6999 = vpop.permute.xlu0 %6998
      %7000 = vrot.lane.b32.xlu0 %v6922, 48
      %v7001 = vpop.permute.xlu0 %7000
      %7002 = vrot.lane.b32.xlu0 %v6923, 48
      %v7003 = vpop.permute.xlu0 %7002
      %7004 = vrot.lane.b32.xlu0 %v6924, 48
      %v7005 = vpop.permute.xlu0 %7004
      %7006 = vrot.lane.b32.xlu0 %v6925, 48
      %v7007 = vpop.permute.xlu0 %7006
      %7008 = vrot.lane.b32.xlu0 %v6926, 48
      %v7009 = vpop.permute.xlu0 %7008
      %7010 = vrot.lane.b32.xlu0 %v6927, 48
      %v7011 = vpop.permute.xlu0 %7010
      %7012 = vrot.lane.b32.xlu0 %v6928, 48
      %v7013 = vpop.permute.xlu0 %7012
      %7014 = vrot.lane.b32.xlu0 %v6929, 48
      %v7015 = vpop.permute.xlu0 %7014
      %7016 = vrot.lane.b32.xlu0 %v6930, 48
      %v7017 = vpop.permute.xlu0 %7016
      %7018 = vrot.lane.b32.xlu0 %v6931, 48
      %v7019 = vpop.permute.xlu0 %7018
      %7020 = vrot.lane.b32.xlu0 %v6932, 48
      %v7021 = vpop.permute.xlu0 %7020
      %7022 = vrot.lane.b32.xlu0 %v6933, 48
      %v7023 = vpop.permute.xlu0 %7022
      %7024 = vrot.lane.b32.xlu0 %v6934, 48
      %v7025 = vpop.permute.xlu0 %7024
      %7026 = vrot.lane.b32.xlu0 %v6935, 48
      %v7027 = vpop.permute.xlu0 %7026
      %7028 = vrot.lane.b32.xlu0 %v6936, 48
      %v7029 = vpop.permute.xlu0 %7028
      %7030 = vrot.lane.b32.xlu0 %v6937, 48
      %v7031 = vpop.permute.xlu0 %7030
      %7032 = vrot.lane.b32.xlu0 %v6938, 48
      %v7033 = vpop.permute.xlu0 %7032
      %7034 = vrot.lane.b32.xlu0 %v6939, 48
      %v7035 = vpop.permute.xlu0 %7034
      %vm7068 = vcmask 519552
      %7069 = vst.msk [vmem:[#allocation3] sm:$0xf] %vm7068, %v6973
      %7070 = vst.msk [vmem:[#allocation3 + $0x4] sm:$0xf] %vm7068, %v6975
      %7071 = vst.msk [vmem:[#allocation3 + $0x8] sm:$0xf] %vm7068, %v6977
      %7072 = vst.msk [vmem:[#allocation3 + $0xc] sm:$0xf] %vm7068, %v6979
      %7073 = vst.msk [vmem:[#allocation3 + $0x10] sm:$0xf] %vm7068, %v6981
      %7074 = vst.msk [vmem:[#allocation3 + $0x14] sm:$0xf] %vm7068, %v6983
      %7075 = vst.msk [vmem:[#allocation3 + $0x18] sm:$0xf] %vm7068, %v6985
      %7076 = vst.msk [vmem:[#allocation3 + $0x1c] sm:$0xf] %vm7068, %v6987
      %7077 = vst.msk [vmem:[#allocation3 + $0x20] sm:$0xf] %vm7068, %v6989
      %7078 = vst.msk [vmem:[#allocation3 + $0x24] sm:$0xf] %vm7068, %v6991
      %7079 = vst.msk [vmem:[#allocation3 + $0x28] sm:$0xf] %vm7068, %v6993
      %7080 = vst.msk [vmem:[#allocation3 + $0x2c] sm:$0xf] %vm7068, %v6995
      %7081 = vst.msk [vmem:[#allocation3 + $0x30] sm:$0xf] %vm7068, %v6997
      %7082 = vst.msk [vmem:[#allocation3 + $0x34] sm:$0xf] %vm7068, %v6999
      %7083 = vst.msk [vmem:[#allocation3 + $0x38] sm:$0xf] %vm7068, %v7001
      %7084 = vst.msk [vmem:[#allocation3 + $0x3c] sm:$0xf] %vm7068, %v7003
      %7085 = vst.msk [vmem:[#allocation3 + $0x40] sm:$0xf] %vm7068, %v7005
      %7086 = vst.msk [vmem:[#allocation3 + $0x44] sm:$0xf] %vm7068, %v7007
      %7087 = vst.msk [vmem:[#allocation3 + $0x48] sm:$0xf] %vm7068, %v7009
      %7088 = vst.msk [vmem:[#allocation3 + $0x4c] sm:$0xf] %vm7068, %v7011
      %7089 = vst.msk [vmem:[#allocation3 + $0x50] sm:$0xf] %vm7068, %v7013
      %7090 = vst.msk [vmem:[#allocation3 + $0x54] sm:$0xf] %vm7068, %v7015
      %7091 = vst.msk [vmem:[#allocation3 + $0x58] sm:$0xf] %vm7068, %v7017
      %7092 = vst.msk [vmem:[#allocation3 + $0x5c] sm:$0xf] %vm7068, %v7019
      %7093 = vst.msk [vmem:[#allocation3 + $0x60] sm:$0xf] %vm7068, %v7021
      %7094 = vst.msk [vmem:[#allocation3 + $0x64] sm:$0xf] %vm7068, %v7023
      %7095 = vst.msk [vmem:[#allocation3 + $0x68] sm:$0xf] %vm7068, %v7025
      %7096 = vst.msk [vmem:[#allocation3 + $0x6c] sm:$0xf] %vm7068, %v7027
      %7097 = vst.msk [vmem:[#allocation3 + $0x70] sm:$0xf] %vm7068, %v7029
      %7098 = vst.msk [vmem:[#allocation3 + $0x74] sm:$0xf] %vm7068, %v7031
      %7099 = vst.msk [vmem:[#allocation3 + $0x78] sm:$0xf] %vm7068, %v7033
      %7100 = vst.msk [vmem:[#allocation3 + $0x7c] sm:$0xf] %vm7068, %v7035
      %v7101 = vld [vmem:[#allocation3] sm:$0xf]
      %v7102 = vld [vmem:[#allocation3 + $0x4] sm:$0xf]
      %v7103 = vld [vmem:[#allocation3 + $0x8] sm:$0xf]
      %v7104 = vld [vmem:[#allocation3 + $0xc] sm:$0xf]
      %v7105 = vld [vmem:[#allocation3 + $0x10] sm:$0xf]
      %v7106 = vld [vmem:[#allocation3 + $0x14] sm:$0xf]
      %v7107 = vld [vmem:[#allocation3 + $0x18] sm:$0xf]
      %v7108 = vld [vmem:[#allocation3 + $0x1c] sm:$0xf]
      %v7109 = vld [vmem:[#allocation3 + $0x20] sm:$0xf]
      %v7110 = vld [vmem:[#allocation3 + $0x24] sm:$0xf]
      %v7111 = vld [vmem:[#allocation3 + $0x28] sm:$0xf]
      %v7112 = vld [vmem:[#allocation3 + $0x2c] sm:$0xf]
      %v7113 = vld [vmem:[#allocation3 + $0x30] sm:$0xf]
      %v7114 = vld [vmem:[#allocation3 + $0x34] sm:$0xf]
      %v7115 = vld [vmem:[#allocation3 + $0x38] sm:$0xf]
      %v7116 = vld [vmem:[#allocation3 + $0x3c] sm:$0xf]
      %v7117 = vld [vmem:[#allocation3 + $0x40] sm:$0xf]
      %v7118 = vld [vmem:[#allocation3 + $0x44] sm:$0xf]
      %v7119 = vld [vmem:[#allocation3 + $0x48] sm:$0xf]
      %v7120 = vld [vmem:[#allocation3 + $0x4c] sm:$0xf]
      %v7121 = vld [vmem:[#allocation3 + $0x50] sm:$0xf]
      %v7122 = vld [vmem:[#allocation3 + $0x54] sm:$0xf]
      %v7123 = vld [vmem:[#allocation3 + $0x58] sm:$0xf]
      %v7124 = vld [vmem:[#allocation3 + $0x5c] sm:$0xf]
      %v7125 = vld [vmem:[#allocation3 + $0x60] sm:$0xf]
      %v7126 = vld [vmem:[#allocation3 + $0x64] sm:$0xf]
      %v7127 = vld [vmem:[#allocation3 + $0x68] sm:$0xf]
      %v7128 = vld [vmem:[#allocation3 + $0x6c] sm:$0xf]
      %v7129 = vld [vmem:[#allocation3 + $0x70] sm:$0xf]
      %v7130 = vld [vmem:[#allocation3 + $0x74] sm:$0xf]
      %v7131 = vld [vmem:[#allocation3 + $0x78] sm:$0xf]
      %v7132 = vld [vmem:[#allocation3 + $0x7c] sm:$0xf]
      %v7133 = vld [vmem:[%s4] sm:$0xf]
      %v7134 = vld [vmem:[%s4 + $0x4] sm:$0xf]
      %v7135 = vld [vmem:[%s4 + $0x8] sm:$0xf]
      %v7136 = vld [vmem:[%s4 + $0xc] sm:$0xf]
      %v7137 = vld [vmem:[%s4 + $0x10] sm:$0xf]
      %v7138 = vld [vmem:[%s4 + $0x14] sm:$0xf]
      %v7139 = vld [vmem:[%s4 + $0x18] sm:$0xf]
      %v7140 = vld [vmem:[%s4 + $0x1c] sm:$0xf]
      %v7173 = vunpack.c.l.b16 %v7101
      %v7174 = vunpack.c.l.b16 %v7102
      %v7175 = vunpack.c.l.b16 %v7103
      %v7176 = vunpack.c.l.b16 %v7104
      %v7177 = vunpack.c.l.b16 %v7105
      %v7178 = vunpack.c.l.b16 %v7106
      %v7179 = vunpack.c.l.b16 %v7107
      %v7180 = vunpack.c.l.b16 %v7108
      %v7181 = vunpack.c.l.b16 %v7109
      %v7182 = vunpack.c.l.b16 %v7110
      %v7183 = vunpack.c.l.b16 %v7111
      %v7184 = vunpack.c.l.b16 %v7112
      %v7185 = vunpack.c.l.b16 %v7113
      %v7186 = vunpack.c.l.b16 %v7114
      %v7187 = vunpack.c.l.b16 %v7115
      %v7188 = vunpack.c.l.b16 %v7116
      %v7189 = vunpack.c.l.b16 %v7117
      %v7190 = vunpack.c.l.b16 %v7118
      %v7191 = vunpack.c.l.b16 %v7119
      %v7192 = vunpack.c.l.b16 %v7120
      %v7193 = vunpack.c.l.b16 %v7121
      %v7194 = vunpack.c.l.b16 %v7122
      %v7195 = vunpack.c.l.b16 %v7123
      %v7196 = vunpack.c.l.b16 %v7124
      %v7197 = vunpack.c.l.b16 %v7125
      %v7198 = vunpack.c.l.b16 %v7126
      %v7199 = vunpack.c.l.b16 %v7127
      %v7200 = vunpack.c.l.b16 %v7128
      %v7201 = vunpack.c.l.b16 %v7129
      %v7202 = vunpack.c.l.b16 %v7130
      %v7203 = vunpack.c.l.b16 %v7131
      %v7204 = vunpack.c.l.b16 %v7132
      %v7205 = vpack.c.b16 %v7174, %v7173
      %v7206 = vpack.c.b16 %v7176, %v7175
      %v7207 = vpack.c.b16 %v7178, %v7177
      %v7208 = vpack.c.b16 %v7180, %v7179
      %v7209 = vpack.c.b16 %v7182, %v7181
      %v7210 = vpack.c.b16 %v7184, %v7183
      %v7211 = vpack.c.b16 %v7186, %v7185
      %v7212 = vpack.c.b16 %v7188, %v7187
      %v7213 = vpack.c.b16 %v7190, %v7189
      %v7214 = vpack.c.b16 %v7192, %v7191
      %v7215 = vpack.c.b16 %v7194, %v7193
      %v7216 = vpack.c.b16 %v7196, %v7195
      %v7217 = vpack.c.b16 %v7198, %v7197
      %v7218 = vpack.c.b16 %v7200, %v7199
      %v7219 = vpack.c.b16 %v7202, %v7201
      %v7220 = vpack.c.b16 %v7204, %v7203
      %v7229 = vunpack.c.l.b16 %v7133
      %v7230 = vunpack.c.l.b16 %v7134
      %v7231 = vunpack.c.l.b16 %v7135
      %v7232 = vunpack.c.l.b16 %v7136
      %v7233 = vunpack.c.l.b16 %v7137
      %v7234 = vunpack.c.l.b16 %v7138
      %v7235 = vunpack.c.l.b16 %v7139
      %v7236 = vunpack.c.l.b16 %v7140
      %v7237 = vpack.c.b16 %v7230, %v7229
      %v7238 = vpack.c.b16 %v7232, %v7231
      %v7239 = vpack.c.b16 %v7234, %v7233
      %v7240 = vpack.c.b16 %v7236, %v7235
      %vm7245 = vcmask 523264
      %v7247 = vsel %vm7245, %v7205, 0
      %v7250 = vsel %vm7245, %v7206, 0
      %v7253 = vsel %vm7245, %v7207, 0
      %v7256 = vsel %vm7245, %v7208, 0
      %v7259 = vsel %vm7245, %v7209, 0
      %v7262 = vsel %vm7245, %v7210, 0
      %v7265 = vsel %vm7245, %v7211, 0
      %v7268 = vsel %vm7245, %v7212, 0
      %v7271 = vsel %vm7245, %v7213, 0
      %v7274 = vsel %vm7245, %v7214, 0
      %v7277 = vsel %vm7245, %v7215, 0
      %v7280 = vsel %vm7245, %v7216, 0
      %v7283 = vsel %vm7245, %v7217, 0
      %v7286 = vsel %vm7245, %v7218, 0
      %v7289 = vsel %vm7245, %v7219, 0
      %v7292 = vsel %vm7245, %v7220, 0
      %7294 = vmatpush.bf16.msra.mxu0 0
      %7295 = vmatpush.bf16.msra.mxu0 0
      %7296 = vmatpush.bf16.msra.mxu0 0
      %7297 = vmatpush.bf16.msra.mxu0 0
      %7298 = vmatpush.bf16.msra.mxu0 %v7240
      %7299 = vmatpush.bf16.msra.mxu0 %v7239
      %7300 = vmatpush.bf16.msra.mxu0 %v7238
      %7301 = vmatpush.bf16.msra.mxu0 %v7237
      %7302 = vmatmul.bf16.gmra.mxu0 %v7247
      %v7303 = vpop.f32.mrf.mxu0
      %v7304 = vadd.f32 0.0, %v7303
      %v7305 = vpop.f32.mrf.mxu0
      %v7306 = vadd.f32 0.0, %v7305
      %7307 = vmatmul.bf16.gmra.mxu0 %v7250
      %v7308 = vpop.f32.mrf.mxu0
      %v7309 = vadd.f32 0.0, %v7308
      %v7310 = vpop.f32.mrf.mxu0
      %v7311 = vadd.f32 0.0, %v7310
      %7312 = vmatmul.bf16.gmra.mxu0 %v7253
      %v7313 = vpop.f32.mrf.mxu0
      %v7314 = vadd.f32 0.0, %v7313
      %v7315 = vpop.f32.mrf.mxu0
      %v7316 = vadd.f32 0.0, %v7315
      %7317 = vmatmul.bf16.gmra.mxu0 %v7256
      %v7318 = vpop.f32.mrf.mxu0
      %v7319 = vadd.f32 0.0, %v7318
      %v7320 = vpop.f32.mrf.mxu0
      %v7321 = vadd.f32 0.0, %v7320
      %7322 = vmatmul.bf16.gmra.mxu0 %v7259
      %v7323 = vpop.f32.mrf.mxu0
      %v7324 = vadd.f32 0.0, %v7323
      %v7325 = vpop.f32.mrf.mxu0
      %v7326 = vadd.f32 0.0, %v7325
      %7327 = vmatmul.bf16.gmra.mxu0 %v7262
      %v7328 = vpop.f32.mrf.mxu0
      %v7329 = vadd.f32 0.0, %v7328
      %v7330 = vpop.f32.mrf.mxu0
      %v7331 = vadd.f32 0.0, %v7330
      %7332 = vmatmul.bf16.gmra.mxu0 %v7265
      %v7333 = vpop.f32.mrf.mxu0
      %v7334 = vadd.f32 0.0, %v7333
      %v7335 = vpop.f32.mrf.mxu0
      %v7336 = vadd.f32 0.0, %v7335
      %7337 = vmatmul.bf16.gmra.mxu0 %v7268
      %v7338 = vpop.f32.mrf.mxu0
      %v7339 = vadd.f32 0.0, %v7338
      %v7340 = vpop.f32.mrf.mxu0
      %v7341 = vadd.f32 0.0, %v7340
      %7342 = vmatmul.bf16.gmra.mxu0 %v7271
      %v7343 = vpop.f32.mrf.mxu0
      %v7344 = vadd.f32 0.0, %v7343
      %v7345 = vpop.f32.mrf.mxu0
      %v7346 = vadd.f32 0.0, %v7345
      %7347 = vmatmul.bf16.gmra.mxu0 %v7274
      %v7348 = vpop.f32.mrf.mxu0
      %v7349 = vadd.f32 0.0, %v7348
      %v7350 = vpop.f32.mrf.mxu0
      %v7351 = vadd.f32 0.0, %v7350
      %7352 = vmatmul.bf16.gmra.mxu0 %v7277
      %v7353 = vpop.f32.mrf.mxu0
      %v7354 = vadd.f32 0.0, %v7353
      %v7355 = vpop.f32.mrf.mxu0
      %v7356 = vadd.f32 0.0, %v7355
      %7357 = vmatmul.bf16.gmra.mxu0 %v7280
      %v7358 = vpop.f32.mrf.mxu0
      %v7359 = vadd.f32 0.0, %v7358
      %v7360 = vpop.f32.mrf.mxu0
      %v7361 = vadd.f32 0.0, %v7360
      %7362 = vmatmul.bf16.gmra.mxu0 %v7283
      %v7363 = vpop.f32.mrf.mxu0
      %v7364 = vadd.f32 0.0, %v7363
      %v7365 = vpop.f32.mrf.mxu0
      %v7366 = vadd.f32 0.0, %v7365
      %7367 = vmatmul.bf16.gmra.mxu0 %v7286
      %v7368 = vpop.f32.mrf.mxu0
      %v7369 = vadd.f32 0.0, %v7368
      %v7370 = vpop.f32.mrf.mxu0
      %v7371 = vadd.f32 0.0, %v7370
      %7372 = vmatmul.bf16.gmra.mxu0 %v7289
      %v7373 = vpop.f32.mrf.mxu0
      %v7374 = vadd.f32 0.0, %v7373
      %v7375 = vpop.f32.mrf.mxu0
      %v7376 = vadd.f32 0.0, %v7375
      %7377 = vmatmul.bf16.gmra.mxu0 %v7292
      %v7378 = vpop.f32.mrf.mxu0
      %v7379 = vadd.f32 0.0, %v7378
      %v7380 = vpop.f32.mrf.mxu0
      %v7381 = vadd.f32 0.0, %v7380
      %7382 = vdwg.mxu0
      %v7383 = vld [vmem:[%s5] sm:$0x1]
      %v7385 = vperm.slane %v7383, 0
      %v7387 = vmul.f32 %v7304, %v7385
      %v7388 = vmul.f32 %v7306, %v7385
      %v7389 = vmul.f32 %v7309, %v7385
      %v7390 = vmul.f32 %v7311, %v7385
      %v7391 = vmul.f32 %v7314, %v7385
      %v7392 = vmul.f32 %v7316, %v7385
      %v7393 = vmul.f32 %v7319, %v7385
      %v7394 = vmul.f32 %v7321, %v7385
      %v7395 = vmul.f32 %v7324, %v7385
      %v7396 = vmul.f32 %v7326, %v7385
      %v7397 = vmul.f32 %v7329, %v7385
      %v7398 = vmul.f32 %v7331, %v7385
      %v7399 = vmul.f32 %v7334, %v7385
      %v7400 = vmul.f32 %v7336, %v7385
      %v7401 = vmul.f32 %v7339, %v7385
      %v7402 = vmul.f32 %v7341, %v7385
      %v7403 = vmul.f32 %v7344, %v7385
      %v7404 = vmul.f32 %v7346, %v7385
      %v7405 = vmul.f32 %v7349, %v7385
      %v7406 = vmul.f32 %v7351, %v7385
      %v7407 = vmul.f32 %v7354, %v7385
      %v7408 = vmul.f32 %v7356, %v7385
      %v7409 = vmul.f32 %v7359, %v7385
      %v7410 = vmul.f32 %v7361, %v7385
      %v7411 = vmul.f32 %v7364, %v7385
      %v7412 = vmul.f32 %v7366, %v7385
      %v7413 = vmul.f32 %v7369, %v7385
      %v7414 = vmul.f32 %v7371, %v7385
      %v7415 = vmul.f32 %v7374, %v7385
      %v7416 = vmul.f32 %v7376, %v7385
      %v7417 = vmul.f32 %v7379, %v7385
      %v7418 = vmul.f32 %v7381, %v7385
      %v7419 = vld [vmem:[%s6] sm:$0x1]
      %v7421 = vperm.slane %v7419, 0
      %v7423 = vadd.f32 %v7387, %v7421
      %v7424 = vadd.f32 %v7388, %v7421
      %v7425 = vadd.f32 %v7389, %v7421
      %v7426 = vadd.f32 %v7390, %v7421
      %v7427 = vadd.f32 %v7391, %v7421
      %v7428 = vadd.f32 %v7392, %v7421
      %v7429 = vadd.f32 %v7393, %v7421
      %v7430 = vadd.f32 %v7394, %v7421
      %v7431 = vadd.f32 %v7395, %v7421
      %v7432 = vadd.f32 %v7396, %v7421
      %v7433 = vadd.f32 %v7397, %v7421
      %v7434 = vadd.f32 %v7398, %v7421
      %v7435 = vadd.f32 %v7399, %v7421
      %v7436 = vadd.f32 %v7400, %v7421
      %v7437 = vadd.f32 %v7401, %v7421
      %v7438 = vadd.f32 %v7402, %v7421
      %v7439 = vadd.f32 %v7403, %v7421
      %v7440 = vadd.f32 %v7404, %v7421
      %v7441 = vadd.f32 %v7405, %v7421
      %v7442 = vadd.f32 %v7406, %v7421
      %v7443 = vadd.f32 %v7407, %v7421
      %v7444 = vadd.f32 %v7408, %v7421
      %v7445 = vadd.f32 %v7409, %v7421
      %v7446 = vadd.f32 %v7410, %v7421
      %v7447 = vadd.f32 %v7411, %v7421
      %v7448 = vadd.f32 %v7412, %v7421
      %v7449 = vadd.f32 %v7413, %v7421
      %v7450 = vadd.f32 %v7414, %v7421
      %v7451 = vadd.f32 %v7415, %v7421
      %v7452 = vadd.f32 %v7416, %v7421
      %v7453 = vadd.f32 %v7417, %v7421
      %v7454 = vadd.f32 %v7418, %v7421
      %v7455 = vxor.u32 %v7423, 2147483648
      %v7456 = vxor.u32 %v7424, 2147483648
      %v7457 = vxor.u32 %v7425, 2147483648
      %v7458 = vxor.u32 %v7426, 2147483648
      %v7459 = vxor.u32 %v7427, 2147483648
      %v7460 = vxor.u32 %v7428, 2147483648
      %v7461 = vxor.u32 %v7429, 2147483648
      %v7462 = vxor.u32 %v7430, 2147483648
      %v7463 = vxor.u32 %v7431, 2147483648
      %v7464 = vxor.u32 %v7432, 2147483648
      %v7465 = vxor.u32 %v7433, 2147483648
      %v7466 = vxor.u32 %v7434, 2147483648
      %v7467 = vxor.u32 %v7435, 2147483648
      %v7468 = vxor.u32 %v7436, 2147483648
      %v7469 = vxor.u32 %v7437, 2147483648
      %v7470 = vxor.u32 %v7438, 2147483648
      %v7471 = vxor.u32 %v7439, 2147483648
      %v7472 = vxor.u32 %v7440, 2147483648
      %v7473 = vxor.u32 %v7441, 2147483648
      %v7474 = vxor.u32 %v7442, 2147483648
      %v7475 = vxor.u32 %v7443, 2147483648
      %v7476 = vxor.u32 %v7444, 2147483648
      %v7477 = vxor.u32 %v7445, 2147483648
      %v7478 = vxor.u32 %v7446, 2147483648
      %v7479 = vxor.u32 %v7447, 2147483648
      %v7480 = vxor.u32 %v7448, 2147483648
      %v7481 = vxor.u32 %v7449, 2147483648
      %v7482 = vxor.u32 %v7450, 2147483648
      %v7483 = vxor.u32 %v7451, 2147483648
      %v7484 = vxor.u32 %v7452, 2147483648
      %v7485 = vxor.u32 %v7453, 2147483648
      %v7486 = vxor.u32 %v7454, 2147483648
      %v7487 = vmul.f32 %v7455, 1.442695
      %v7488 = vpow.pop %v7487
      %v7489 = vmul.f32 %v7456, 1.442695
      %v7490 = vpow.pop %v7489
      %v7491 = vmul.f32 %v7457, 1.442695
      %v7492 = vpow.pop %v7491
      %v7493 = vmul.f32 %v7458, 1.442695
      %v7494 = vpow.pop %v7493
      %v7495 = vmul.f32 %v7459, 1.442695
      %v7496 = vpow.pop %v7495
      %v7497 = vmul.f32 %v7460, 1.442695
      %v7498 = vpow.pop %v7497
      %v7499 = vmul.f32 %v7461, 1.442695
      %v7500 = vpow.pop %v7499
      %v7501 = vmul.f32 %v7462, 1.442695
      %v7502 = vpow.pop %v7501
      %v7503 = vmul.f32 %v7463, 1.442695
      %v7504 = vpow.pop %v7503
      %v7505 = vmul.f32 %v7464, 1.442695
      %v7506 = vpow.pop %v7505
      %v7507 = vmul.f32 %v7465, 1.442695
      %v7508 = vpow.pop %v7507
      %v7509 = vmul.f32 %v7466, 1.442695
      %v7510 = vpow.pop %v7509
      %v7511 = vmul.f32 %v7467, 1.442695
      %v7512 = vpow.pop %v7511
      %v7513 = vmul.f32 %v7468, 1.442695
      %v7514 = vpow.pop %v7513
      %v7515 = vmul.f32 %v7469, 1.442695
      %v7516 = vpow.pop %v7515
      %v7517 = vmul.f32 %v7470, 1.442695
      %v7518 = vpow.pop %v7517
      %v7519 = vmul.f32 %v7471, 1.442695
      %v7520 = vpow.pop %v7519
      %v7521 = vmul.f32 %v7472, 1.442695
      %v7522 = vpow.pop %v7521
      %v7523 = vmul.f32 %v7473, 1.442695
      %v7524 = vpow.pop %v7523
      %v7525 = vmul.f32 %v7474, 1.442695
      %v7526 = vpow.pop %v7525
      %v7527 = vmul.f32 %v7475, 1.442695
      %v7528 = vpow.pop %v7527
      %v7529 = vmul.f32 %v7476, 1.442695
      %v7530 = vpow.pop %v7529
      %v7531 = vmul.f32 %v7477, 1.442695
      %v7532 = vpow.pop %v7531
      %v7533 = vmul.f32 %v7478, 1.442695
      %v7534 = vpow.pop %v7533
      %v7535 = vmul.f32 %v7479, 1.442695
      %v7536 = vpow.pop %v7535
      %v7537 = vmul.f32 %v7480, 1.442695
      %v7538 = vpow.pop %v7537
      %v7539 = vmul.f32 %v7481, 1.442695
      %v7540 = vpow.pop %v7539
      %v7541 = vmul.f32 %v7482, 1.442695
      %v7542 = vpow.pop %v7541
      %v7543 = vmul.f32 %v7483, 1.442695
      %v7544 = vpow.pop %v7543
      %v7545 = vmul.f32 %v7484, 1.442695
      %v7546 = vpow.pop %v7545
      %v7547 = vmul.f32 %v7485, 1.442695
      %v7548 = vpow.pop %v7547
      %v7549 = vmul.f32 %v7486, 1.442695
      %v7550 = vpow.pop %v7549
      %v7551 = vadd.f32 %v7488, 1.0
      %v7552 = vadd.f32 %v7490, 1.0
      %v7553 = vadd.f32 %v7492, 1.0
      %v7554 = vadd.f32 %v7494, 1.0
      %v7555 = vadd.f32 %v7496, 1.0
      %v7556 = vadd.f32 %v7498, 1.0
      %v7557 = vadd.f32 %v7500, 1.0
      %v7558 = vadd.f32 %v7502, 1.0
      %v7559 = vadd.f32 %v7504, 1.0
      %v7560 = vadd.f32 %v7506, 1.0
      %v7561 = vadd.f32 %v7508, 1.0
      %v7562 = vadd.f32 %v7510, 1.0
      %v7563 = vadd.f32 %v7512, 1.0
      %v7564 = vadd.f32 %v7514, 1.0
      %v7565 = vadd.f32 %v7516, 1.0
      %v7566 = vadd.f32 %v7518, 1.0
      %v7567 = vadd.f32 %v7520, 1.0
      %v7568 = vadd.f32 %v7522, 1.0
      %v7569 = vadd.f32 %v7524, 1.0
      %v7570 = vadd.f32 %v7526, 1.0
      %v7571 = vadd.f32 %v7528, 1.0
      %v7572 = vadd.f32 %v7530, 1.0
      %v7573 = vadd.f32 %v7532, 1.0
      %v7574 = vadd.f32 %v7534, 1.0
      %v7575 = vadd.f32 %v7536, 1.0
      %v7576 = vadd.f32 %v7538, 1.0
      %v7577 = vadd.f32 %v7540, 1.0
      %v7578 = vadd.f32 %v7542, 1.0
      %v7579 = vadd.f32 %v7544, 1.0
      %v7580 = vadd.f32 %v7546, 1.0
      %v7581 = vadd.f32 %v7548, 1.0
      %v7582 = vadd.f32 %v7550, 1.0
      %v7583 = vrcp.pop %v7551
      %v7584 = vmul.f32 %v7551, %v7583
      %v7585 = vsub.f32 1.0, %v7584
      %v7586 = vmul.f32 %v7583, %v7585
      %v7587 = vadd.f32 %v7583, %v7586
      %vm7588 = vweird.f32 %v7551
      %vm7589 = vweird.f32 %v7583
      %vm7590 = vmor %vm7588, %vm7589
      %v7591 = vsel %vm7590, %v7583, %v7587
      %v7592 = vand.u32 2147483647, %v7551
      %vm7593 = vcmp.eq.f32.partialorder %v7592, 8.507059e+37
      %v7594 = vand.u32 %v7551, 2147483648
      %v7595 = vor.u32 1.1754944e-38, %v7594
      %v7596 = vsel %vm7593, %v7595, %v7591
      %v7597 = vmul.f32 1.0, %v7596
      %v7598 = vrcp.pop %v7552
      %v7599 = vmul.f32 %v7552, %v7598
      %v7600 = vsub.f32 1.0, %v7599
      %v7601 = vmul.f32 %v7598, %v7600
      %v7602 = vadd.f32 %v7598, %v7601
      %vm7603 = vweird.f32 %v7552
      %vm7604 = vweird.f32 %v7598
      %vm7605 = vmor %vm7603, %vm7604
      %v7606 = vsel %vm7605, %v7598, %v7602
      %v7607 = vand.u32 2147483647, %v7552
      %vm7608 = vcmp.eq.f32.partialorder %v7607, 8.507059e+37
      %v7609 = vand.u32 %v7552, 2147483648
      %v7610 = vor.u32 1.1754944e-38, %v7609
      %v7611 = vsel %vm7608, %v7610, %v7606
      %v7612 = vmul.f32 1.0, %v7611
      %v7613 = vrcp.pop %v7553
      %v7614 = vmul.f32 %v7553, %v7613
      %v7615 = vsub.f32 1.0, %v7614
      %v7616 = vmul.f32 %v7613, %v7615
      %v7617 = vadd.f32 %v7613, %v7616
      %vm7618 = vweird.f32 %v7553
      %vm7619 = vweird.f32 %v7613
      %vm7620 = vmor %vm7618, %vm7619
      %v7621 = vsel %vm7620, %v7613, %v7617
      %v7622 = vand.u32 2147483647, %v7553
      %vm7623 = vcmp.eq.f32.partialorder %v7622, 8.507059e+37
      %v7624 = vand.u32 %v7553, 2147483648
      %v7625 = vor.u32 1.1754944e-38, %v7624
      %v7626 = vsel %vm7623, %v7625, %v7621
      %v7627 = vmul.f32 1.0, %v7626
      %v7628 = vrcp.pop %v7554
      %v7629 = vmul.f32 %v7554, %v7628
      %v7630 = vsub.f32 1.0, %v7629
      %v7631 = vmul.f32 %v7628, %v7630
      %v7632 = vadd.f32 %v7628, %v7631
      %vm7633 = vweird.f32 %v7554
      %vm7634 = vweird.f32 %v7628
      %vm7635 = vmor %vm7633, %vm7634
      %v7636 = vsel %vm7635, %v7628, %v7632
      %v7637 = vand.u32 2147483647, %v7554
      %vm7638 = vcmp.eq.f32.partialorder %v7637, 8.507059e+37
      %v7639 = vand.u32 %v7554, 2147483648
      %v7640 = vor.u32 1.1754944e-38, %v7639
      %v7641 = vsel %vm7638, %v7640, %v7636
      %v7642 = vmul.f32 1.0, %v7641
      %v7643 = vrcp.pop %v7555
      %v7644 = vmul.f32 %v7555, %v7643
      %v7645 = vsub.f32 1.0, %v7644
      %v7646 = vmul.f32 %v7643, %v7645
      %v7647 = vadd.f32 %v7643, %v7646
      %vm7648 = vweird.f32 %v7555
      %vm7649 = vweird.f32 %v7643
      %vm7650 = vmor %vm7648, %vm7649
      %v7651 = vsel %vm7650, %v7643, %v7647
      %v7652 = vand.u32 2147483647, %v7555
      %vm7653 = vcmp.eq.f32.partialorder %v7652, 8.507059e+37
      %v7654 = vand.u32 %v7555, 2147483648
      %v7655 = vor.u32 1.1754944e-38, %v7654
      %v7656 = vsel %vm7653, %v7655, %v7651
      %v7657 = vmul.f32 1.0, %v7656
      %v7658 = vrcp.pop %v7556
      %v7659 = vmul.f32 %v7556, %v7658
      %v7660 = vsub.f32 1.0, %v7659
      %v7661 = vmul.f32 %v7658, %v7660
      %v7662 = vadd.f32 %v7658, %v7661
      %vm7663 = vweird.f32 %v7556
      %vm7664 = vweird.f32 %v7658
      %vm7665 = vmor %vm7663, %vm7664
      %v7666 = vsel %vm7665, %v7658, %v7662
      %v7667 = vand.u32 2147483647, %v7556
      %vm7668 = vcmp.eq.f32.partialorder %v7667, 8.507059e+37
      %v7669 = vand.u32 %v7556, 2147483648
      %v7670 = vor.u32 1.1754944e-38, %v7669
      %v7671 = vsel %vm7668, %v7670, %v7666
      %v7672 = vmul.f32 1.0, %v7671
      %v7673 = vrcp.pop %v7557
      %v7674 = vmul.f32 %v7557, %v7673
      %v7675 = vsub.f32 1.0, %v7674
      %v7676 = vmul.f32 %v7673, %v7675
      %v7677 = vadd.f32 %v7673, %v7676
      %vm7678 = vweird.f32 %v7557
      %vm7679 = vweird.f32 %v7673
      %vm7680 = vmor %vm7678, %vm7679
      %v7681 = vsel %vm7680, %v7673, %v7677
      %v7682 = vand.u32 2147483647, %v7557
      %vm7683 = vcmp.eq.f32.partialorder %v7682, 8.507059e+37
      %v7684 = vand.u32 %v7557, 2147483648
      %v7685 = vor.u32 1.1754944e-38, %v7684
      %v7686 = vsel %vm7683, %v7685, %v7681
      %v7687 = vmul.f32 1.0, %v7686
      %v7688 = vrcp.pop %v7558
      %v7689 = vmul.f32 %v7558, %v7688
      %v7690 = vsub.f32 1.0, %v7689
      %v7691 = vmul.f32 %v7688, %v7690
      %v7692 = vadd.f32 %v7688, %v7691
      %vm7693 = vweird.f32 %v7558
      %vm7694 = vweird.f32 %v7688
      %vm7695 = vmor %vm7693, %vm7694
      %v7696 = vsel %vm7695, %v7688, %v7692
      %v7697 = vand.u32 2147483647, %v7558
      %vm7698 = vcmp.eq.f32.partialorder %v7697, 8.507059e+37
      %v7699 = vand.u32 %v7558, 2147483648
      %v7700 = vor.u32 1.1754944e-38, %v7699
      %v7701 = vsel %vm7698, %v7700, %v7696
      %v7702 = vmul.f32 1.0, %v7701
      %v7703 = vrcp.pop %v7559
      %v7704 = vmul.f32 %v7559, %v7703
      %v7705 = vsub.f32 1.0, %v7704
      %v7706 = vmul.f32 %v7703, %v7705
      %v7707 = vadd.f32 %v7703, %v7706
      %vm7708 = vweird.f32 %v7559
      %vm7709 = vweird.f32 %v7703
      %vm7710 = vmor %vm7708, %vm7709
      %v7711 = vsel %vm7710, %v7703, %v7707
      %v7712 = vand.u32 2147483647, %v7559
      %vm7713 = vcmp.eq.f32.partialorder %v7712, 8.507059e+37
      %v7714 = vand.u32 %v7559, 2147483648
      %v7715 = vor.u32 1.1754944e-38, %v7714
      %v7716 = vsel %vm7713, %v7715, %v7711
      %v7717 = vmul.f32 1.0, %v7716
      %v7718 = vrcp.pop %v7560
      %v7719 = vmul.f32 %v7560, %v7718
      %v7720 = vsub.f32 1.0, %v7719
      %v7721 = vmul.f32 %v7718, %v7720
      %v7722 = vadd.f32 %v7718, %v7721
      %vm7723 = vweird.f32 %v7560
      %vm7724 = vweird.f32 %v7718
      %vm7725 = vmor %vm7723, %vm7724
      %v7726 = vsel %vm7725, %v7718, %v7722
      %v7727 = vand.u32 2147483647, %v7560
      %vm7728 = vcmp.eq.f32.partialorder %v7727, 8.507059e+37
      %v7729 = vand.u32 %v7560, 2147483648
      %v7730 = vor.u32 1.1754944e-38, %v7729
      %v7731 = vsel %vm7728, %v7730, %v7726
      %v7732 = vmul.f32 1.0, %v7731
      %v7733 = vrcp.pop %v7561
      %v7734 = vmul.f32 %v7561, %v7733
      %v7735 = vsub.f32 1.0, %v7734
      %v7736 = vmul.f32 %v7733, %v7735
      %v7737 = vadd.f32 %v7733, %v7736
      %vm7738 = vweird.f32 %v7561
      %vm7739 = vweird.f32 %v7733
      %vm7740 = vmor %vm7738, %vm7739
      %v7741 = vsel %vm7740, %v7733, %v7737
      %v7742 = vand.u32 2147483647, %v7561
      %vm7743 = vcmp.eq.f32.partialorder %v7742, 8.507059e+37
      %v7744 = vand.u32 %v7561, 2147483648
      %v7745 = vor.u32 1.1754944e-38, %v7744
      %v7746 = vsel %vm7743, %v7745, %v7741
      %v7747 = vmul.f32 1.0, %v7746
      %v7748 = vrcp.pop %v7562
      %v7749 = vmul.f32 %v7562, %v7748
      %v7750 = vsub.f32 1.0, %v7749
      %v7751 = vmul.f32 %v7748, %v7750
      %v7752 = vadd.f32 %v7748, %v7751
      %vm7753 = vweird.f32 %v7562
      %vm7754 = vweird.f32 %v7748
      %vm7755 = vmor %vm7753, %vm7754
      %v7756 = vsel %vm7755, %v7748, %v7752
      %v7757 = vand.u32 2147483647, %v7562
      %vm7758 = vcmp.eq.f32.partialorder %v7757, 8.507059e+37
      %v7759 = vand.u32 %v7562, 2147483648
      %v7760 = vor.u32 1.1754944e-38, %v7759
      %v7761 = vsel %vm7758, %v7760, %v7756
      %v7762 = vmul.f32 1.0, %v7761
      %v7763 = vrcp.pop %v7563
      %v7764 = vmul.f32 %v7563, %v7763
      %v7765 = vsub.f32 1.0, %v7764
      %v7766 = vmul.f32 %v7763, %v7765
      %v7767 = vadd.f32 %v7763, %v7766
      %vm7768 = vweird.f32 %v7563
      %vm7769 = vweird.f32 %v7763
      %vm7770 = vmor %vm7768, %vm7769
      %v7771 = vsel %vm7770, %v7763, %v7767
      %v7772 = vand.u32 2147483647, %v7563
      %vm7773 = vcmp.eq.f32.partialorder %v7772, 8.507059e+37
      %v7774 = vand.u32 %v7563, 2147483648
      %v7775 = vor.u32 1.1754944e-38, %v7774
      %v7776 = vsel %vm7773, %v7775, %v7771
      %v7777 = vmul.f32 1.0, %v7776
      %v7778 = vrcp.pop %v7564
      %v7779 = vmul.f32 %v7564, %v7778
      %v7780 = vsub.f32 1.0, %v7779
      %v7781 = vmul.f32 %v7778, %v7780
      %v7782 = vadd.f32 %v7778, %v7781
      %vm7783 = vweird.f32 %v7564
      %vm7784 = vweird.f32 %v7778
      %vm7785 = vmor %vm7783, %vm7784
      %v7786 = vsel %vm7785, %v7778, %v7782
      %v7787 = vand.u32 2147483647, %v7564
      %vm7788 = vcmp.eq.f32.partialorder %v7787, 8.507059e+37
      %v7789 = vand.u32 %v7564, 2147483648
      %v7790 = vor.u32 1.1754944e-38, %v7789
      %v7791 = vsel %vm7788, %v7790, %v7786
      %v7792 = vmul.f32 1.0, %v7791
      %v7793 = vrcp.pop %v7565
      %v7794 = vmul.f32 %v7565, %v7793
      %v7795 = vsub.f32 1.0, %v7794
      %v7796 = vmul.f32 %v7793, %v7795
      %v7797 = vadd.f32 %v7793, %v7796
      %vm7798 = vweird.f32 %v7565
      %vm7799 = vweird.f32 %v7793
      %vm7800 = vmor %vm7798, %vm7799
      %v7801 = vsel %vm7800, %v7793, %v7797
      %v7802 = vand.u32 2147483647, %v7565
      %vm7803 = vcmp.eq.f32.partialorder %v7802, 8.507059e+37
      %v7804 = vand.u32 %v7565, 2147483648
      %v7805 = vor.u32 1.1754944e-38, %v7804
      %v7806 = vsel %vm7803, %v7805, %v7801
      %v7807 = vmul.f32 1.0, %v7806
      %v7808 = vrcp.pop %v7566
      %v7809 = vmul.f32 %v7566, %v7808
      %v7810 = vsub.f32 1.0, %v7809
      %v7811 = vmul.f32 %v7808, %v7810
      %v7812 = vadd.f32 %v7808, %v7811
      %vm7813 = vweird.f32 %v7566
      %vm7814 = vweird.f32 %v7808
      %vm7815 = vmor %vm7813, %vm7814
      %v7816 = vsel %vm7815, %v7808, %v7812
      %v7817 = vand.u32 2147483647, %v7566
      %vm7818 = vcmp.eq.f32.partialorder %v7817, 8.507059e+37
      %v7819 = vand.u32 %v7566, 2147483648
      %v7820 = vor.u32 1.1754944e-38, %v7819
      %v7821 = vsel %vm7818, %v7820, %v7816
      %v7822 = vmul.f32 1.0, %v7821
      %v7823 = vrcp.pop %v7567
      %v7824 = vmul.f32 %v7567, %v7823
      %v7825 = vsub.f32 1.0, %v7824
      %v7826 = vmul.f32 %v7823, %v7825
      %v7827 = vadd.f32 %v7823, %v7826
      %vm7828 = vweird.f32 %v7567
      %vm7829 = vweird.f32 %v7823
      %vm7830 = vmor %vm7828, %vm7829
      %v7831 = vsel %vm7830, %v7823, %v7827
      %v7832 = vand.u32 2147483647, %v7567
      %vm7833 = vcmp.eq.f32.partialorder %v7832, 8.507059e+37
      %v7834 = vand.u32 %v7567, 2147483648
      %v7835 = vor.u32 1.1754944e-38, %v7834
      %v7836 = vsel %vm7833, %v7835, %v7831
      %v7837 = vmul.f32 1.0, %v7836
      %v7838 = vrcp.pop %v7568
      %v7839 = vmul.f32 %v7568, %v7838
      %v7840 = vsub.f32 1.0, %v7839
      %v7841 = vmul.f32 %v7838, %v7840
      %v7842 = vadd.f32 %v7838, %v7841
      %vm7843 = vweird.f32 %v7568
      %vm7844 = vweird.f32 %v7838
      %vm7845 = vmor %vm7843, %vm7844
      %v7846 = vsel %vm7845, %v7838, %v7842
      %v7847 = vand.u32 2147483647, %v7568
      %vm7848 = vcmp.eq.f32.partialorder %v7847, 8.507059e+37
      %v7849 = vand.u32 %v7568, 2147483648
      %v7850 = vor.u32 1.1754944e-38, %v7849
      %v7851 = vsel %vm7848, %v7850, %v7846
      %v7852 = vmul.f32 1.0, %v7851
      %v7853 = vrcp.pop %v7569
      %v7854 = vmul.f32 %v7569, %v7853
      %v7855 = vsub.f32 1.0, %v7854
      %v7856 = vmul.f32 %v7853, %v7855
      %v7857 = vadd.f32 %v7853, %v7856
      %vm7858 = vweird.f32 %v7569
      %vm7859 = vweird.f32 %v7853
      %vm7860 = vmor %vm7858, %vm7859
      %v7861 = vsel %vm7860, %v7853, %v7857
      %v7862 = vand.u32 2147483647, %v7569
      %vm7863 = vcmp.eq.f32.partialorder %v7862, 8.507059e+37
      %v7864 = vand.u32 %v7569, 2147483648
      %v7865 = vor.u32 1.1754944e-38, %v7864
      %v7866 = vsel %vm7863, %v7865, %v7861
      %v7867 = vmul.f32 1.0, %v7866
      %v7868 = vrcp.pop %v7570
      %v7869 = vmul.f32 %v7570, %v7868
      %v7870 = vsub.f32 1.0, %v7869
      %v7871 = vmul.f32 %v7868, %v7870
      %v7872 = vadd.f32 %v7868, %v7871
      %vm7873 = vweird.f32 %v7570
      %vm7874 = vweird.f32 %v7868
      %vm7875 = vmor %vm7873, %vm7874
      %v7876 = vsel %vm7875, %v7868, %v7872
      %v7877 = vand.u32 2147483647, %v7570
      %vm7878 = vcmp.eq.f32.partialorder %v7877, 8.507059e+37
      %v7879 = vand.u32 %v7570, 2147483648
      %v7880 = vor.u32 1.1754944e-38, %v7879
      %v7881 = vsel %vm7878, %v7880, %v7876
      %v7882 = vmul.f32 1.0, %v7881
      %v7883 = vrcp.pop %v7571
      %v7884 = vmul.f32 %v7571, %v7883
      %v7885 = vsub.f32 1.0, %v7884
      %v7886 = vmul.f32 %v7883, %v7885
      %v7887 = vadd.f32 %v7883, %v7886
      %vm7888 = vweird.f32 %v7571
      %vm7889 = vweird.f32 %v7883
      %vm7890 = vmor %vm7888, %vm7889
      %v7891 = vsel %vm7890, %v7883, %v7887
      %v7892 = vand.u32 2147483647, %v7571
      %vm7893 = vcmp.eq.f32.partialorder %v7892, 8.507059e+37
      %v7894 = vand.u32 %v7571, 2147483648
      %v7895 = vor.u32 1.1754944e-38, %v7894
      %v7896 = vsel %vm7893, %v7895, %v7891
      %v7897 = vmul.f32 1.0, %v7896
      %v7898 = vrcp.pop %v7572
      %v7899 = vmul.f32 %v7572, %v7898
      %v7900 = vsub.f32 1.0, %v7899
      %v7901 = vmul.f32 %v7898, %v7900
      %v7902 = vadd.f32 %v7898, %v7901
      %vm7903 = vweird.f32 %v7572
      %vm7904 = vweird.f32 %v7898
      %vm7905 = vmor %vm7903, %vm7904
      %v7906 = vsel %vm7905, %v7898, %v7902
      %v7907 = vand.u32 2147483647, %v7572
      %vm7908 = vcmp.eq.f32.partialorder %v7907, 8.507059e+37
      %v7909 = vand.u32 %v7572, 2147483648
      %v7910 = vor.u32 1.1754944e-38, %v7909
      %v7911 = vsel %vm7908, %v7910, %v7906
      %v7912 = vmul.f32 1.0, %v7911
      %v7913 = vrcp.pop %v7573
      %v7914 = vmul.f32 %v7573, %v7913
      %v7915 = vsub.f32 1.0, %v7914
      %v7916 = vmul.f32 %v7913, %v7915
      %v7917 = vadd.f32 %v7913, %v7916
      %vm7918 = vweird.f32 %v7573
      %vm7919 = vweird.f32 %v7913
      %vm7920 = vmor %vm7918, %vm7919
      %v7921 = vsel %vm7920, %v7913, %v7917
      %v7922 = vand.u32 2147483647, %v7573
      %vm7923 = vcmp.eq.f32.partialorder %v7922, 8.507059e+37
      %v7924 = vand.u32 %v7573, 2147483648
      %v7925 = vor.u32 1.1754944e-38, %v7924
      %v7926 = vsel %vm7923, %v7925, %v7921
      %v7927 = vmul.f32 1.0, %v7926
      %v7928 = vrcp.pop %v7574
      %v7929 = vmul.f32 %v7574, %v7928
      %v7930 = vsub.f32 1.0, %v7929
      %v7931 = vmul.f32 %v7928, %v7930
      %v7932 = vadd.f32 %v7928, %v7931
      %vm7933 = vweird.f32 %v7574
      %vm7934 = vweird.f32 %v7928
      %vm7935 = vmor %vm7933, %vm7934
      %v7936 = vsel %vm7935, %v7928, %v7932
      %v7937 = vand.u32 2147483647, %v7574
      %vm7938 = vcmp.eq.f32.partialorder %v7937, 8.507059e+37
      %v7939 = vand.u32 %v7574, 2147483648
      %v7940 = vor.u32 1.1754944e-38, %v7939
      %v7941 = vsel %vm7938, %v7940, %v7936
      %v7942 = vmul.f32 1.0, %v7941
      %v7943 = vrcp.pop %v7575
      %v7944 = vmul.f32 %v7575, %v7943
      %v7945 = vsub.f32 1.0, %v7944
      %v7946 = vmul.f32 %v7943, %v7945
      %v7947 = vadd.f32 %v7943, %v7946
      %vm7948 = vweird.f32 %v7575
      %vm7949 = vweird.f32 %v7943
      %vm7950 = vmor %vm7948, %vm7949
      %v7951 = vsel %vm7950, %v7943, %v7947
      %v7952 = vand.u32 2147483647, %v7575
      %vm7953 = vcmp.eq.f32.partialorder %v7952, 8.507059e+37
      %v7954 = vand.u32 %v7575, 2147483648
      %v7955 = vor.u32 1.1754944e-38, %v7954
      %v7956 = vsel %vm7953, %v7955, %v7951
      %v7957 = vmul.f32 1.0, %v7956
      %v7958 = vrcp.pop %v7576
      %v7959 = vmul.f32 %v7576, %v7958
      %v7960 = vsub.f32 1.0, %v7959
      %v7961 = vmul.f32 %v7958, %v7960
      %v7962 = vadd.f32 %v7958, %v7961
      %vm7963 = vweird.f32 %v7576
      %vm7964 = vweird.f32 %v7958
      %vm7965 = vmor %vm7963, %vm7964
      %v7966 = vsel %vm7965, %v7958, %v7962
      %v7967 = vand.u32 2147483647, %v7576
      %vm7968 = vcmp.eq.f32.partialorder %v7967, 8.507059e+37
      %v7969 = vand.u32 %v7576, 2147483648
      %v7970 = vor.u32 1.1754944e-38, %v7969
      %v7971 = vsel %vm7968, %v7970, %v7966
      %v7972 = vmul.f32 1.0, %v7971
      %v7973 = vrcp.pop %v7577
      %v7974 = vmul.f32 %v7577, %v7973
      %v7975 = vsub.f32 1.0, %v7974
      %v7976 = vmul.f32 %v7973, %v7975
      %v7977 = vadd.f32 %v7973, %v7976
      %vm7978 = vweird.f32 %v7577
      %vm7979 = vweird.f32 %v7973
      %vm7980 = vmor %vm7978, %vm7979
      %v7981 = vsel %vm7980, %v7973, %v7977
      %v7982 = vand.u32 2147483647, %v7577
      %vm7983 = vcmp.eq.f32.partialorder %v7982, 8.507059e+37
      %v7984 = vand.u32 %v7577, 2147483648
      %v7985 = vor.u32 1.1754944e-38, %v7984
      %v7986 = vsel %vm7983, %v7985, %v7981
      %v7987 = vmul.f32 1.0, %v7986
      %v7988 = vrcp.pop %v7578
      %v7989 = vmul.f32 %v7578, %v7988
      %v7990 = vsub.f32 1.0, %v7989
      %v7991 = vmul.f32 %v7988, %v7990
      %v7992 = vadd.f32 %v7988, %v7991
      %vm7993 = vweird.f32 %v7578
      %vm7994 = vweird.f32 %v7988
      %vm7995 = vmor %vm7993, %vm7994
      %v7996 = vsel %vm7995, %v7988, %v7992
      %v7997 = vand.u32 2147483647, %v7578
      %vm7998 = vcmp.eq.f32.partialorder %v7997, 8.507059e+37
      %v7999 = vand.u32 %v7578, 2147483648
      %v8000 = vor.u32 1.1754944e-38, %v7999
      %v8001 = vsel %vm7998, %v8000, %v7996
      %v8002 = vmul.f32 1.0, %v8001
      %v8003 = vrcp.pop %v7579
      %v8004 = vmul.f32 %v7579, %v8003
      %v8005 = vsub.f32 1.0, %v8004
      %v8006 = vmul.f32 %v8003, %v8005
      %v8007 = vadd.f32 %v8003, %v8006
      %vm8008 = vweird.f32 %v7579
      %vm8009 = vweird.f32 %v8003
      %vm8010 = vmor %vm8008, %vm8009
      %v8011 = vsel %vm8010, %v8003, %v8007
      %v8012 = vand.u32 2147483647, %v7579
      %vm8013 = vcmp.eq.f32.partialorder %v8012, 8.507059e+37
      %v8014 = vand.u32 %v7579, 2147483648
      %v8015 = vor.u32 1.1754944e-38, %v8014
      %v8016 = vsel %vm8013, %v8015, %v8011
      %v8017 = vmul.f32 1.0, %v8016
      %v8018 = vrcp.pop %v7580
      %v8019 = vmul.f32 %v7580, %v8018
      %v8020 = vsub.f32 1.0, %v8019
      %v8021 = vmul.f32 %v8018, %v8020
      %v8022 = vadd.f32 %v8018, %v8021
      %vm8023 = vweird.f32 %v7580
      %vm8024 = vweird.f32 %v8018
      %vm8025 = vmor %vm8023, %vm8024
      %v8026 = vsel %vm8025, %v8018, %v8022
      %v8027 = vand.u32 2147483647, %v7580
      %vm8028 = vcmp.eq.f32.partialorder %v8027, 8.507059e+37
      %v8029 = vand.u32 %v7580, 2147483648
      %v8030 = vor.u32 1.1754944e-38, %v8029
      %v8031 = vsel %vm8028, %v8030, %v8026
      %v8032 = vmul.f32 1.0, %v8031
      %v8033 = vrcp.pop %v7581
      %v8034 = vmul.f32 %v7581, %v8033
      %v8035 = vsub.f32 1.0, %v8034
      %v8036 = vmul.f32 %v8033, %v8035
      %v8037 = vadd.f32 %v8033, %v8036
      %vm8038 = vweird.f32 %v7581
      %vm8039 = vweird.f32 %v8033
      %vm8040 = vmor %vm8038, %vm8039
      %v8041 = vsel %vm8040, %v8033, %v8037
      %v8042 = vand.u32 2147483647, %v7581
      %vm8043 = vcmp.eq.f32.partialorder %v8042, 8.507059e+37
      %v8044 = vand.u32 %v7581, 2147483648
      %v8045 = vor.u32 1.1754944e-38, %v8044
      %v8046 = vsel %vm8043, %v8045, %v8041
      %v8047 = vmul.f32 1.0, %v8046
      %v8048 = vrcp.pop %v7582
      %v8049 = vmul.f32 %v7582, %v8048
      %v8050 = vsub.f32 1.0, %v8049
      %v8051 = vmul.f32 %v8048, %v8050
      %v8052 = vadd.f32 %v8048, %v8051
      %vm8053 = vweird.f32 %v7582
      %vm8054 = vweird.f32 %v8048
      %vm8055 = vmor %vm8053, %vm8054
      %v8056 = vsel %vm8055, %v8048, %v8052
      %v8057 = vand.u32 2147483647, %v7582
      %vm8058 = vcmp.eq.f32.partialorder %v8057, 8.507059e+37
      %v8059 = vand.u32 %v7582, 2147483648
      %v8060 = vor.u32 1.1754944e-38, %v8059
      %v8061 = vsel %vm8058, %v8060, %v8056
      %v8062 = vmul.f32 1.0, %v8061
      %v8063 = vmul.f32 %v7423, %v7597
      %v8064 = vmul.f32 %v7424, %v7612
      %v8065 = vmul.f32 %v7425, %v7627
      %v8066 = vmul.f32 %v7426, %v7642
      %v8067 = vmul.f32 %v7427, %v7657
      %v8068 = vmul.f32 %v7428, %v7672
      %v8069 = vmul.f32 %v7429, %v7687
      %v8070 = vmul.f32 %v7430, %v7702
      %v8071 = vmul.f32 %v7431, %v7717
      %v8072 = vmul.f32 %v7432, %v7732
      %v8073 = vmul.f32 %v7433, %v7747
      %v8074 = vmul.f32 %v7434, %v7762
      %v8075 = vmul.f32 %v7435, %v7777
      %v8076 = vmul.f32 %v7436, %v7792
      %v8077 = vmul.f32 %v7437, %v7807
      %v8078 = vmul.f32 %v7438, %v7822
      %v8079 = vmul.f32 %v7439, %v7837
      %v8080 = vmul.f32 %v7440, %v7852
      %v8081 = vmul.f32 %v7441, %v7867
      %v8082 = vmul.f32 %v7442, %v7882
      %v8083 = vmul.f32 %v7443, %v7897
      %v8084 = vmul.f32 %v7444, %v7912
      %v8085 = vmul.f32 %v7445, %v7927
      %v8086 = vmul.f32 %v7446, %v7942
      %v8087 = vmul.f32 %v7447, %v7957
      %v8088 = vmul.f32 %v7448, %v7972
      %v8089 = vmul.f32 %v7449, %v7987
      %v8090 = vmul.f32 %v7450, %v8002
      %v8091 = vmul.f32 %v7451, %v8017
      %v8092 = vmul.f32 %v7452, %v8032
      %v8093 = vmul.f32 %v7453, %v8047
      %v8094 = vmul.f32 %v7454, %v8062
      %v8095 = vpack.c.bf16 %v8063, %v8063
      %v8096 = vpack.c.bf16 %v8064, %v8064
      %v8097 = vpack.c.bf16 %v8065, %v8065
      %v8098 = vpack.c.bf16 %v8066, %v8066
      %v8099 = vpack.c.bf16 %v8067, %v8067
      %v8100 = vpack.c.bf16 %v8068, %v8068
      %v8101 = vpack.c.bf16 %v8069, %v8069
      %v8102 = vpack.c.bf16 %v8070, %v8070
      %v8103 = vpack.c.bf16 %v8071, %v8071
      %v8104 = vpack.c.bf16 %v8072, %v8072
      %v8105 = vpack.c.bf16 %v8073, %v8073
      %v8106 = vpack.c.bf16 %v8074, %v8074
      %v8107 = vpack.c.bf16 %v8075, %v8075
      %v8108 = vpack.c.bf16 %v8076, %v8076
      %v8109 = vpack.c.bf16 %v8077, %v8077
      %v8110 = vpack.c.bf16 %v8078, %v8078
      %v8111 = vpack.c.bf16 %v8079, %v8079
      %v8112 = vpack.c.bf16 %v8080, %v8080
      %v8113 = vpack.c.bf16 %v8081, %v8081
      %v8114 = vpack.c.bf16 %v8082, %v8082
      %v8115 = vpack.c.bf16 %v8083, %v8083
      %v8116 = vpack.c.bf16 %v8084, %v8084
      %v8117 = vpack.c.bf16 %v8085, %v8085
      %v8118 = vpack.c.bf16 %v8086, %v8086
      %v8119 = vpack.c.bf16 %v8087, %v8087
      %v8120 = vpack.c.bf16 %v8088, %v8088
      %v8121 = vpack.c.bf16 %v8089, %v8089
      %v8122 = vpack.c.bf16 %v8090, %v8090
      %v8123 = vpack.c.bf16 %v8091, %v8091
      %v8124 = vpack.c.bf16 %v8092, %v8092
      %v8125 = vpack.c.bf16 %v8093, %v8093
      %v8126 = vpack.c.bf16 %v8094, %v8094
      %vm8127 = vcmask 257024
      %8128 = vst.msk [vmem:[%s278] sm:$0xf] %vm8127, %v8095
      %8129 = vst.msk [vmem:[%s278 + $0x4] sm:$0xf] %vm8127, %v8096
      %8130 = vst.msk [vmem:[%s278 + $0x8] sm:$0xf] %vm8127, %v8097
      %8131 = vst.msk [vmem:[%s278 + $0xc] sm:$0xf] %vm8127, %v8098
      %8132 = vst.msk [vmem:[%s278 + $0x10] sm:$0xf] %vm8127, %v8099
      %8133 = vst.msk [vmem:[%s278 + $0x14] sm:$0xf] %vm8127, %v8100
      %8134 = vst.msk [vmem:[%s278 + $0x18] sm:$0xf] %vm8127, %v8101
      %8135 = vst.msk [vmem:[%s278 + $0x1c] sm:$0xf] %vm8127, %v8102
      %8136 = vst.msk [vmem:[%s278 + $0x20] sm:$0xf] %vm8127, %v8103
      %8137 = vst.msk [vmem:[%s278 + $0x24] sm:$0xf] %vm8127, %v8104
      %8138 = vst.msk [vmem:[%s278 + $0x28] sm:$0xf] %vm8127, %v8105
      %8139 = vst.msk [vmem:[%s278 + $0x2c] sm:$0xf] %vm8127, %v8106
      %8140 = vst.msk [vmem:[%s278 + $0x30] sm:$0xf] %vm8127, %v8107
      %8141 = vst.msk [vmem:[%s278 + $0x34] sm:$0xf] %vm8127, %v8108
      %8142 = vst.msk [vmem:[%s278 + $0x38] sm:$0xf] %vm8127, %v8109
      %8143 = vst.msk [vmem:[%s278 + $0x3c] sm:$0xf] %vm8127, %v8110
      %8144 = vst.msk [vmem:[%s278 + $0x40] sm:$0xf] %vm8127, %v8111
      %8145 = vst.msk [vmem:[%s278 + $0x44] sm:$0xf] %vm8127, %v8112
      %8146 = vst.msk [vmem:[%s278 + $0x48] sm:$0xf] %vm8127, %v8113
      %8147 = vst.msk [vmem:[%s278 + $0x4c] sm:$0xf] %vm8127, %v8114
      %8148 = vst.msk [vmem:[%s278 + $0x50] sm:$0xf] %vm8127, %v8115
      %8149 = vst.msk [vmem:[%s278 + $0x54] sm:$0xf] %vm8127, %v8116
      %8150 = vst.msk [vmem:[%s278 + $0x58] sm:$0xf] %vm8127, %v8117
      %8151 = vst.msk [vmem:[%s278 + $0x5c] sm:$0xf] %vm8127, %v8118
      %8152 = vst.msk [vmem:[%s278 + $0x60] sm:$0xf] %vm8127, %v8119
      %8153 = vst.msk [vmem:[%s278 + $0x64] sm:$0xf] %vm8127, %v8120
      %8154 = vst.msk [vmem:[%s278 + $0x68] sm:$0xf] %vm8127, %v8121
      %8155 = vst.msk [vmem:[%s278 + $0x6c] sm:$0xf] %vm8127, %v8122
      %8156 = vst.msk [vmem:[%s278 + $0x70] sm:$0xf] %vm8127, %v8123
      %8157 = vst.msk [vmem:[%s278 + $0x74] sm:$0xf] %vm8127, %v8124
      %8158 = vst.msk [vmem:[%s278 + $0x78] sm:$0xf] %vm8127, %v8125
      %8159 = vst.msk [vmem:[%s278 + $0x7c] sm:$0xf] %vm8127, %v8126
      %p8160 = scmp.lt.s32.totalorder %s18, 1
      %s8161 = scalar_select %p8160, %s18, 1
      %s8162 = smul.addr %s8161, 32
      %s8163 = smul.addr %s8162, 4
      %s8164 = scalar_lea.vmem %s7, %s8163
      // Predicated region
      $region49: #{tpu_custom_call.1} parent=47 // pred_check
        %p8165 = pneg %p188
      $region50: #{tpu_custom_call.1} parent=47 // pred_check_branch
        %8167 = sbr.rel (%p8165) target = $region52
      $region51: #{tpu_custom_call.1} parent=47 // pred_region
        _
      $region52: #{tpu_custom_call.1} parent=47 // pred_fallthru
        _
    $region48: #{tpu_custom_call.1} parent=5 // pred_fallthru
      _
    %p8168 = scmp.le.s32.totalorder 2, %s13
    // Predicated region
    $region53: #{tpu_custom_call.1} parent=5 // pred_check
      %p8169 = pneg %p8168
    $region54: #{tpu_custom_call.1} parent=5 // pred_check_branch
      %8171 = sbr.rel (%p8169) target = $region56
    $region55: #{tpu_custom_call.1} parent=5 // pred_region
      %s8172 = ssub.s32 %s13, 2
      // Predicated region
      $region57: #{tpu_custom_call.1} parent=55 // pred_check
        %p8173 = pneg %p194
      $region58: #{tpu_custom_call.1} parent=55 // pred_check_branch
        %8175 = sbr.rel (%p8173) target = $region60
      $region59: #{tpu_custom_call.1} parent=55 // pred_region
        %p8176 = scmp.lt.s32.totalorder %s19, 1
        %s8177 = scalar_select %p8176, %s19, 1
        %s8178 = smul.addr %s8177, 32
        %s8179 = smul.addr %s8178, 4
        %s8180 = scalar_lea.vmem %s7, %s8179
      $region60: #{tpu_custom_call.1} parent=55 // pred_fallthru
        _
    $region56: #{tpu_custom_call.1} parent=5 // pred_fallthru
      _
  $region6: #{tpu_custom_call.1} parent=0 // loop_footer
    %s17 = sadd.s32 1, %s13
  $region7: #{tpu_custom_call.1} parent=0 // loop_footer_branch
    %12 = sbr.rel target = $region3
  $region8: #{tpu_custom_call.1} parent=0 // loop_exit
    _

</llo_original>
